<compile_context>
chip_gen: v7x
topology: tpu7x:2x2x1
jax: 0.10.0
libtpu: 0.0.40
codegen_flags: <defaults>
</compile_context>

<pallas_src>
import jax
import jax.numpy as jnp
from jax import lax
from jax.experimental import pallas as pl
from jax.experimental.pallas import tpu as pltpu

H = W = 156
HALF = 78                 # number of nested windows == pooled channels
DIM = 4                   # attention dim (the 2x2 adaptive-pool positions)
HEADS = 2
HEAD_DIM = DIM // HEADS
C1D_OUT = 64
SCALE = HEAD_DIM ** (-0.5)
NEG = float(jnp.finfo(jnp.float32).min)

assert H == 2 * HALF


def _mm(a, b):
    # MXU matmul, f32 accumulate.
    return jnp.dot(a, b, preferred_element_type=jnp.float32)


def _mm_nt(a, b):
    # a (m,k) @ b (n,k)^T -> (m,n), f32 accumulate.
    return lax.dot_general(a, b, (((1,), (1,)), ((), ())),
                           preferred_element_type=jnp.float32)


def _make_kernel(bblk):
    """Kernel processing `bblk` batch elements per grid step."""

    def kernel(ct_ref, ctt_ref, pre_ref, invcnt_ref,
               wc2_ref, bc2_ref,
               wqv_ref, k_ref, wp_ref, bp_ref,
               w1d_ref, b1d_ref,
               wa_ref, ba_ref, wb_ref, bb_ref,
               out_ref):

        # ------------------------------------------------------------------
        # Constant masks (shared by every element of the batch block).
        # Ring decomposition: quadrant square for window i is the union of
        # "L-rings" k=0..i;  ring k = (row at distance k from the anchor,
        # cols at distance <= k)  U  (col at distance k, rows at distance < k).
        # ------------------------------------------------------------------
        def iota(shape, d):
            return lax.broadcasted_iota(jnp.int32, shape, d)

        a88, b88 = iota((HALF, HALF), 0), iota((HALF, HALF), 1)              # (78,78)
        a99, b99 = iota((HALF + 1, HALF + 1), 0), iota((HALF + 1, HALF + 1), 1)
        a89, b89 = iota((HALF, HALF + 1), 0), iota((HALF, HALF + 1), 1)      # (78,79)
        a98, b98 = iota((HALF + 1, HALF), 0), iota((HALF + 1, HALF), 1)      # (79,78)

        m_le_88, m_lt_88 = a88 <= b88, a88 < b88
        m_ge_99, m_gt_99 = a99 >= b99, a99 > b99
        m_sle_89, m_slt_89 = (a89 + b89) <= HALF, (a89 + b89) < HALF
        m_sge_98, m_sgt_98 = (a98 + b98) >= HALF, (a98 + b98) > HALF

        # prefix-combine masks: output row j corresponds to window i = j+1
        cm_pref = b88 <= a88 + 1                  # ring k contributes iff k <= j+1
        cm_suff = (a89 + b89) >= HALF - 1         # ring 78-r contributes iff r+j >= 77
        last_row = iota((HALF, 1), 0) == HALF - 1  # j == 77  (the clipped i=78 window)

        inv_cnt = invcnt_ref[...]                 # (78,1) 1/(window element count)

        def masked_sum0(blk, m):
            return jnp.sum(jnp.where(m, blk, 0.0), axis=0, keepdims=True)

        def masked_max0(blk, m):
            return jnp.max(jnp.where(m, blk, NEG), axis=0, keepdims=True)

        def comb_sum(vrow, cm):
            return jnp.sum(jnp.where(cm, vrow, 0.0), axis=1, keepdims=True)

        def comb_max(vrow, cm):
            return jnp.max(jnp.where(cm, vrow, NEG), axis=1, keepdims=True)

        def quad(A, At, mu, mw_max, mw_sum, cu, cw, corner):
            # A  : quadrant block in image orientation, At : its transpose
            #      (sliced from the pre-transposed image, so only sublane reduces
            #       are needed and every partial lands lane-indexed).
            u_s, u_m = masked_sum0(At, mu), masked_max0(At, mu)      # row rings
            w_s, w_m = masked_sum0(A, mw_sum), masked_max0(A, mw_max)  # col rings
            sq_sum = comb_sum(u_s, cu) + comb_sum(w_s, cw)           # (78,1)
            sq_max = jnp.maximum(comb_max(u_m, cu), comb_max(w_m, cw))
            # window i == 78 is the only non-nested case: a full 78x78 corner block
            sq_sum = jnp.where(last_row, jnp.sum(corner), sq_sum)
            sq_max = jnp.where(last_row, jnp.max(corner), sq_max)
            return sq_sum * inv_cnt, sq_max

        # ------------------------------------------------------------------
        # Stage 1: multi-scale nested adaptive avg/max pooling, per element.
        # ------------------------------------------------------------------
        pool_cols = []
        for e in range(bblk):
            x = ct_ref[e]                                    # (156,156)
            xt = ctt_ref[e]                                  # (156,156) = x^T

            x_tl = x[0:HALF + 1, 0:HALF + 1]                 # (79,79)
            x_tr = x[0:HALF + 1, HALF:W]                     # (79,78)
            x_bl = x[HALF:H, 0:HALF + 1]                     # (78,79)
            x_br = x[HALF:H, HALF:W]                         # (78,78)
            t_tl = xt[0:HALF + 1, 0:HALF + 1]                # = x_tl^T
            t_tr = xt[HALF:H, 0:HALF + 1]                    # = x_tr^T  (78,79)
            t_bl = xt[0:HALF + 1, HALF:W]                    # = x_bl^T  (79,78)
            t_br = xt[HALF:H, HALF:W]                        # = x_br^T

            avg_tl, max_tl = quad(x_tl, t_tl, m_ge_99, m_ge_99, m_gt_99,
                                  cm_suff, cm_suff, x_tl[0:HALF, 0:HALF])
            avg_tr, max_tr = quad(x_tr, t_tr, m_sle_89, m_sge_98, m_sgt_98,
                                  cm_suff, cm_pref, x_tr[0:HALF, :])
            avg_bl, max_bl = quad(x_bl, t_bl, m_sge_98, m_sle_89, m_slt_89,
                                  cm_pref, cm_suff, x_bl[:, 0:HALF])
            avg_br, max_br = quad(x_br, t_br, m_le_88, m_le_88, m_lt_88,
                                  cm_pref, cm_pref, x_br)

            pool_cols.append(jnp.concatenate(
                [jnp.concatenate([avg_tl, avg_tr, avg_bl, avg_br], axis=1),
                 jnp.concatenate([max_tl, max_tr, max_bl, max_br], axis=1)],
                axis=0))                                     # (156, 4)

        pool_block = jnp.concatenate(pool_cols, axis=1)      # (156, 4*bblk)

        # ------------------------------------------------------------------
        # 1x1 Conv2d(156 -> 78) + ReLU  (lane-dense over the batch block).
        # ------------------------------------------------------------------
        cinfo = jnp.maximum(_mm(wc2_ref[...], pool_block) + bc2_ref[...], 0.0)

        # ------------------------------------------------------------------
        # Wind_Cross_Atten(dim=4, heads=2), per element.  q,v from one matmul;
        # k is batch-invariant and precomputed; head concat folded into proj.
        # ------------------------------------------------------------------
        attn_cols = []
        for e in range(bblk):
            ci = cinfo[:, DIM * e:DIM * (e + 1)]             # (78,4)
            qv = _mm_nt(ci, wqv_ref[...])                    # (78,8) = [q | v]
            proj = bp_ref[...]                               # (1,4) bias
            for h in range(HEADS):
                q_h = qv[:, HEAD_DIM * h:HEAD_DIM * (h + 1)]
                v_h = qv[:, DIM + HEAD_DIM * h:DIM + HEAD_DIM * (h + 1)]
                att = _mm_nt(q_h, k_ref[h]) * SCALE          # (78,78)
                att = jnp.exp(att - jnp.max(att, axis=-1, keepdims=True))
                att = att * pl.reciprocal(
                    jnp.sum(att, axis=-1, keepdims=True), approx=True)
                o_h = _mm(att, v_h)                          # (78,2)
                proj = proj + _mm_nt(o_h, wp_ref[h])         # (78,4)
            attn_cols.append(proj)
        attn_block = jnp.concatenate(attn_cols, axis=1)      # (78, 4*bblk)

        # ------------------------------------------------------------------
        # Conv1d(78 -> 64, k=1) + ReLU  (lane-dense over the batch block).
        # ------------------------------------------------------------------
        z = jnp.maximum(_mm(w1d_ref[...], attn_block) + b1d_ref[...], 0.0)

        # ------------------------------------------------------------------
        # pre2w gate: Linear(1,2) -> tanh -> Linear(2,4) -> tanh, batched.
        # ------------------------------------------------------------------
        a1 = jnp.tanh(pre_ref[...] * wa_ref[...] + ba_ref[...])   # (bblk,2)
        a2 = jnp.tanh(_mm_nt(a1, wb_ref[...]) + bb_ref[...])      # (bblk,4)
        gate = jnp.concatenate([a2[e:e + 1, :] for e in range(bblk)], axis=1)

        out_ref[...] = z * gate                              # (64, 4*bblk)

    return kernel


def wind_tcp_forward(cloud_top, pre, P, clen, block_b=8):
    b = cloud_top.shape[0]
    bblk = max(1, min(block_b, b))
    g = -(-b // bblk)
    bpad = g * bblk
    if bpad != b:
        cloud_top = jnp.concatenate(
            [cloud_top, jnp.zeros((bpad - b, H, W), cloud_top.dtype)], axis=0)
        pre = jnp.concatenate(
            [pre, jnp.zeros((bpad - b, 1), pre.dtype)], axis=0)
    cloud_top_t = jnp.swapaxes(cloud_top, 1, 2)   # transposed copy for column rings

    # window element counts: (i+1)^2 for i=1..77, 78*78 for the clipped i=78 window
    cnt = jnp.concatenate([jnp.arange(2, HALF + 1, dtype=jnp.float32) ** 2,
                           jnp.array([float(HALF * HALF)], jnp.float32)])
    inv_cnt = (1.0 / cnt).reshape(HALF, 1)

    # batch-invariant attention keys (clen is a constant) - hoisted out of the kernel
    k_full = jnp.matmul(clen, P['Wk'].T, precision=jax.lax.Precision.HIGHEST)
    k_heads = jnp.stack([k_full[:, 0:HEAD_DIM], k_full[:, HEAD_DIM:DIM]], axis=0)
    wp_heads = jnp.stack([P['Wp'][:, 0:HEAD_DIM], P['Wp'][:, HEAD_DIM:DIM]], axis=0)

    args = (cloud_top, cloud_top_t, pre, inv_cnt,
            P['Wc2'], P['bc2'].reshape(HALF, 1),
            P['Wqv'], k_heads, wp_heads, P['bp'].reshape(1, DIM),
            P['W1d'], P['b1d'].reshape(C1D_OUT, 1),
            P['Wa'].reshape(1, 2), P['ba'].reshape(1, 2),
            P['Wb'], P['bb'].reshape(1, DIM))

    def full(shape):
        n = len(shape)
        return pl.BlockSpec(shape, lambda i, _n=n: (0,) * _n)

    in_specs = [
        pl.BlockSpec((bblk, H, W), lambda i: (i, 0, 0)),      # cloud_top block
        pl.BlockSpec((bblk, H, W), lambda i: (i, 0, 0)),      # cloud_top^T block
        pl.BlockSpec((bblk, 1), lambda i: (i, 0)),            # pre block
        full((HALF, 1)),                                      # 1/counts
        full((HALF, 2 * HALF)), full((HALF, 1)),              # conv2d
        full((2 * DIM, DIM)),                                 # Wqv
        full((HEADS, HALF, HEAD_DIM)),                        # precomputed k
        full((HEADS, DIM, HEAD_DIM)), full((1, DIM)),         # proj (per head), bias
        full((C1D_OUT, HALF)), full((C1D_OUT, 1)),            # conv1d
        full((1, 2)), full((1, 2)),                           # pre2w linear 1
        full((DIM, 2)), full((1, DIM)),                       # pre2w linear 2
    ]

    out = pl.pallas_call(
        _make_kernel(bblk),
        out_shape=jax.ShapeDtypeStruct((g, C1D_OUT, DIM * bblk), jnp.float32),
        grid=(g,),
        in_specs=in_specs,
        out_specs=pl.BlockSpec((None, C1D_OUT, DIM * bblk), lambda i: (i, 0, 0)),
        compiler_params=pltpu.CompilerParams(
            dimension_semantics=("parallel",)),
    )(*args)

    out = out.reshape(g, C1D_OUT, bblk, DIM)
    out = jnp.transpose(out, (0, 2, 1, 3)).reshape(bpad, C1D_OUT, DIM)[:b]
    return out.reshape(b, C1D_OUT, 2, 2)


def reference_forward(cloud_top, pre, P, clen):
    """Plain-JAX replica of Wind_TCP.forward for validation."""
    b = cloud_top.shape[0]
    avg_l, max_l = [], []
    for i in range(1, HALF + 1):
        r0t, r1t = HALF - i, (HALF + 1 if i < HALF else HALF)
        r0b, r1b = HALF, min(HALF + 1 + i, H)
        regs = [(r0t, r1t, r0t, r1t), (r0t, r1t, r0b, r1b),
                (r0b, r1b, r0t, r1t), (r0b, r1b, r0b, r1b)]
        avg_l.append(jnp.stack([cloud_top[:, a:c, d:e].mean(axis=(1, 2))
                                for a, c, d, e in regs], axis=-1))
        max_l.append(jnp.stack([cloud_top[:, a:c, d:e].max(axis=(1, 2))
                                for a, c, d, e in regs], axis=-1))
    pool_x = jnp.concatenate([jnp.stack(avg_l, axis=1),
                              jnp.stack(max_l, axis=1)], axis=1)   # (b,156,4)
    cinfo = jax.nn.relu(jnp.einsum('oc,bcs->bos', P['Wc2'], pool_x)
                        + P['bc2'][None, :, None])                 # (b,78,4)
    clen_b = jnp.broadcast_to(clen, (b, HALF, DIM))
    k = clen_b @ P['Wk'].T
    qv = cinfo @ P['Wqv'].T
    q = qv[..., :DIM].reshape(b, HALF, HEADS, HEAD_DIM).transpose(0, 2, 1, 3)
    v = qv[..., DIM:].reshape(b, HALF, HEADS, HEAD_DIM).transpose(0, 2, 1, 3)
    kk = k.reshape(b, HALF, HEADS, HEAD_DIM).transpose(0, 2, 1, 3)
    att = jnp.einsum('bhnd,bhmd->bhnm', q, kk) * (HEAD_DIM ** -0.5)
    att = jax.nn.softmax(att, axis=-1)
    xx = jnp.einsum('bhnm,bhmd->bhnd', att, v).transpose(0, 2, 1, 3)
    xx = xx.reshape(b, HALF, DIM) @ P['Wp'].T + P['bp']
    z = jax.nn.relu(jnp.einsum('oc,bcl->bol', P['W1d'], xx)
                    + P['b1d'][None, :, None])                     # (b,64,4)
    p1 = jnp.tanh(pre @ P['Wa'].T + P['ba'])
    p2 = jnp.tanh(p1 @ P['Wb'].T + P['bb'])
    return z.reshape(b, C1D_OUT, 2, 2) * p2.reshape(b, 1, 2, 2)


if __name__ == "__main__":
    key = jax.random.PRNGKey(0)
    ks = jax.random.split(key, 12)
    b = 2
    cloud_top = jax.random.normal(ks[0], (b, H, W), jnp.float32)
    pre = jax.random.normal(ks[1], (b, 1), jnp.float32)

    params = {
        'Wc2': 0.05 * jax.random.normal(ks[2], (HALF, 2 * HALF), jnp.float32),
        'bc2': 0.05 * jax.random.normal(ks[3], (HALF,), jnp.float32),
        'Wk':  0.30 * jax.random.normal(ks[4], (DIM, DIM), jnp.float32),
        'Wqv': 0.30 * jax.random.normal(ks[5], (2 * DIM, DIM), jnp.float32),
        'Wp':  0.30 * jax.random.normal(ks[6], (DIM, DIM), jnp.float32),
        'bp':  0.05 * jax.random.normal(ks[7], (DIM,), jnp.float32),
        'W1d': 0.10 * jax.random.normal(ks[8], (C1D_OUT, HALF), jnp.float32),
        'b1d': 0.05 * jax.random.normal(ks[9], (C1D_OUT,), jnp.float32),
        'Wa':  0.50 * jax.random.normal(ks[10], (2, 1), jnp.float32),
        'ba':  jnp.array([0.01, -0.02], jnp.float32),
        'Wb':  0.50 * jax.random.normal(ks[11], (DIM, 2), jnp.float32),
        'bb':  jnp.array([0.03, -0.01, 0.02, 0.0], jnp.float32),
    }

    # clen = normalized (range(1,79) * 2.7), broadcast to 4 features
    clen = (jnp.arange(1, HALF + 1, dtype=jnp.float32) * 2.7 - 2.7) / (HALF * 2.7 - 2.7)
    clen = jnp.tile(clen[:, None], (1, DIM))                 # (78, 4)

    out = wind_tcp_forward(cloud_top, pre, params, clen)
    out = jax.block_until_ready(out)

    # Reference at HIGHEST matmul precision (accurate f32 ground truth).
    with jax.default_matmul_precision("highest"):
        ref = jax.block_until_ready(reference_forward(cloud_top, pre, params, clen))

    max_err = float(jnp.max(jnp.abs(out - ref)))
    assert out.shape == (b, C1D_OUT, 2, 2), out.shape
    assert bool(jnp.all(jnp.isfinite(out))), "non-finite output"
    # Tolerance tightened 5x vs v1.  Remaining gap: kernel matmuls run on the MXU at
    # Mosaic's default f32 precision and the softmax uses the approximate EUP
    # reciprocal, while the reference runs at HIGHEST precision.
    assert max_err < 1e-2, f"mismatch vs reference, max abs err = {max_err}"
    print("KERNEL_OK")
</pallas_src>

<mosaic_0001>
module attributes {stable_mosaic.version = 11 : i64} {
  func.func @kernel(%arg0: i32, %arg1: memref<2x156x156xf32, #tpu.memory_space<vmem>>, %arg2: memref<2x156x156xf32, #tpu.memory_space<vmem>>, %arg3: memref<2x1xf32, #tpu.memory_space<vmem>>, %arg4: memref<78x1xf32, #tpu.memory_space<vmem>>, %arg5: memref<78x156xf32, #tpu.memory_space<vmem>>, %arg6: memref<78x1xf32, #tpu.memory_space<vmem>>, %arg7: memref<8x4xf32, #tpu.memory_space<vmem>>, %arg8: memref<2x78x2xf32, #tpu.memory_space<vmem>>, %arg9: memref<2x4x2xf32, #tpu.memory_space<vmem>>, %arg10: memref<1x4xf32, #tpu.memory_space<vmem>>, %arg11: memref<64x78xf32, #tpu.memory_space<vmem>>, %arg12: memref<64x1xf32, #tpu.memory_space<vmem>>, %arg13: memref<1x2xf32, #tpu.memory_space<vmem>>, %arg14: memref<1x2xf32, #tpu.memory_space<vmem>>, %arg15: memref<4x2xf32, #tpu.memory_space<vmem>>, %arg16: memref<1x4xf32, #tpu.memory_space<vmem>>, %arg17: memref<1x64x8xf32, #tpu.memory_space<vmem>>) attributes {dimension_semantics = [#tpu.dimension_semantics<parallel>], iteration_bounds = array<i64: 1>, scalar_prefetch = 0 : i64, scratch_operands = 0 : i64, tpu.core_type = #tpu.core_type<tc>, window_params = [{transform_indices = @transform_0, window_bounds = array<i64: 2, 156, 156>}, {transform_indices = @transform_1, window_bounds = array<i64: 2, 156, 156>}, {transform_indices = @transform_2, window_bounds = array<i64: 2, 1>}, {pipeline_mode = #tpu.pipeline_mode<synchronous>, transform_indices = @transform_3, window_bounds = array<i64: 78, 1>}, {pipeline_mode = #tpu.pipeline_mode<synchronous>, transform_indices = @transform_4, window_bounds = array<i64: 78, 156>}, {pipeline_mode = #tpu.pipeline_mode<synchronous>, transform_indices = @transform_5, window_bounds = array<i64: 78, 1>}, {pipeline_mode = #tpu.pipeline_mode<synchronous>, transform_indices = @transform_6, window_bounds = array<i64: 8, 4>}, {pipeline_mode = #tpu.pipeline_mode<synchronous>, transform_indices = @transform_7, window_bounds = array<i64: 2, 78, 2>}, {pipeline_mode = #tpu.pipeline_mode<synchronous>, transform_indices = @transform_8, window_bounds = array<i64: 2, 4, 2>}, {pipeline_mode = #tpu.pipeline_mode<synchronous>, transform_indices = @transform_9, window_bounds = array<i64: 1, 4>}, {pipeline_mode = #tpu.pipeline_mode<synchronous>, transform_indices = @transform_10, window_bounds = array<i64: 64, 78>}, {pipeline_mode = #tpu.pipeline_mode<synchronous>, transform_indices = @transform_11, window_bounds = array<i64: 64, 1>}, {pipeline_mode = #tpu.pipeline_mode<synchronous>, transform_indices = @transform_12, window_bounds = array<i64: 1, 2>}, {pipeline_mode = #tpu.pipeline_mode<synchronous>, transform_indices = @transform_13, window_bounds = array<i64: 1, 2>}, {pipeline_mode = #tpu.pipeline_mode<synchronous>, transform_indices = @transform_14, window_bounds = array<i64: 4, 2>}, {pipeline_mode = #tpu.pipeline_mode<synchronous>, transform_indices = @transform_15, window_bounds = array<i64: 1, 4>}, {transform_indices = @transform_16, window_bounds = array<i64: 1, 64, 8>}]} {
    %0 = tpu.iota {dimensions = array<i32: 0>} : vector<78x78xi32>
    %1 = tpu.iota {dimensions = array<i32: 1>} : vector<78x78xi32>
    %2 = tpu.iota {dimensions = array<i32: 0>} : vector<79x79xi32>
    %3 = tpu.iota {dimensions = array<i32: 1>} : vector<79x79xi32>
    %4 = tpu.iota {dimensions = array<i32: 0>} : vector<78x79xi32>
    %5 = tpu.iota {dimensions = array<i32: 1>} : vector<78x79xi32>
    %6 = tpu.iota {dimensions = array<i32: 0>} : vector<79x78xi32>
    %7 = tpu.iota {dimensions = array<i32: 1>} : vector<79x78xi32>
    %8 = arith.cmpi sle, %0, %1 : vector<78x78xi32>
    %9 = arith.cmpi slt, %0, %1 : vector<78x78xi32>
    %10 = arith.cmpi sge, %2, %3 : vector<79x79xi32>
    %11 = arith.cmpi sgt, %2, %3 : vector<79x79xi32>
    %12 = arith.addi %4, %5 : vector<78x79xi32>
    %c78_i32 = arith.constant 78 : i32
    %13 = vector.broadcast %c78_i32 : i32 to vector<78x79xi32>
    %14 = arith.cmpi sle, %12, %13 : vector<78x79xi32>
    %15 = arith.addi %4, %5 : vector<78x79xi32>
    %c78_i32_0 = arith.constant 78 : i32
    %16 = vector.broadcast %c78_i32_0 : i32 to vector<78x79xi32>
    %17 = arith.cmpi slt, %15, %16 : vector<78x79xi32>
    %18 = arith.addi %6, %7 : vector<79x78xi32>
    %c78_i32_1 = arith.constant 78 : i32
    %19 = vector.broadcast %c78_i32_1 : i32 to vector<79x78xi32>
    %20 = arith.cmpi sge, %18, %19 : vector<79x78xi32>
    %21 = arith.addi %6, %7 : vector<79x78xi32>
    %c78_i32_2 = arith.constant 78 : i32
    %22 = vector.broadcast %c78_i32_2 : i32 to vector<79x78xi32>
    %23 = arith.cmpi sgt, %21, %22 : vector<79x78xi32>
    %c1_i32 = arith.constant 1 : i32
    %24 = vector.broadcast %c1_i32 : i32 to vector<78x78xi32>
    %25 = arith.addi %0, %24 : vector<78x78xi32>
    %26 = arith.cmpi sle, %1, %25 : vector<78x78xi32>
    %27 = arith.addi %4, %5 : vector<78x79xi32>
    %c77_i32 = arith.constant 77 : i32
    %28 = vector.broadcast %c77_i32 : i32 to vector<78x79xi32>
    %29 = arith.cmpi sge, %27, %28 : vector<78x79xi32>
    %30 = tpu.iota {dimensions = array<i32: 0>} : vector<78x1xi32>
    %c77_i32_3 = arith.constant 77 : i32
    %31 = vector.broadcast %c77_i32_3 : i32 to vector<78x1xi32>
    %32 = arith.cmpi eq, %30, %31 : vector<78x1xi32>
    %c0 = arith.constant 0 : index
    %c0_4 = arith.constant 0 : index
    %33 = vector.load %arg4[%c0, %c0_4] : memref<78x1xf32, #tpu.memory_space<vmem>>, vector<78x1xf32>
    %c0_5 = arith.constant 0 : index
    %c0_6 = arith.constant 0 : index
    %c0_7 = arith.constant 0 : index
    %34 = vector.load %arg1[%c0_5, %c0_6, %c0_7] : memref<2x156x156xf32, #tpu.memory_space<vmem>>, vector<1x156x156xf32>
    %35 = vector.shape_cast %34 : vector<1x156x156xf32> to vector<156x156xf32>
    %c0_8 = arith.constant 0 : index
    %c0_9 = arith.constant 0 : index
    %c0_10 = arith.constant 0 : index
    %36 = vector.load %arg2[%c0_8, %c0_9, %c0_10] : memref<2x156x156xf32, #tpu.memory_space<vmem>>, vector<1x156x156xf32>
    %37 = vector.shape_cast %36 : vector<1x156x156xf32> to vector<156x156xf32>
    %38 = vector.extract_strided_slice %35 {offsets = [0, 0], sizes = [79, 79], strides = [1, 1]} : vector<156x156xf32> to vector<79x79xf32>
    %39 = vector.extract_strided_slice %35 {offsets = [0, 78], sizes = [79, 78], strides = [1, 1]} : vector<156x156xf32> to vector<79x78xf32>
    %40 = vector.extract_strided_slice %35 {offsets = [78, 0], sizes = [78, 79], strides = [1, 1]} : vector<156x156xf32> to vector<78x79xf32>
    %41 = vector.extract_strided_slice %35 {offsets = [78, 78], sizes = [78, 78], strides = [1, 1]} : vector<156x156xf32> to vector<78x78xf32>
    %42 = vector.extract_strided_slice %37 {offsets = [0, 0], sizes = [79, 79], strides = [1, 1]} : vector<156x156xf32> to vector<79x79xf32>
    %43 = vector.extract_strided_slice %37 {offsets = [78, 0], sizes = [78, 79], strides = [1, 1]} : vector<156x156xf32> to vector<78x79xf32>
    %44 = vector.extract_strided_slice %37 {offsets = [0, 78], sizes = [79, 78], strides = [1, 1]} : vector<156x156xf32> to vector<79x78xf32>
    %45 = vector.extract_strided_slice %37 {offsets = [78, 78], sizes = [78, 78], strides = [1, 1]} : vector<156x156xf32> to vector<78x78xf32>
    %46 = vector.extract_strided_slice %38 {offsets = [0, 0], sizes = [78, 78], strides = [1, 1]} : vector<79x79xf32> to vector<78x78xf32>
    %cst = arith.constant 0.000000e+00 : f32
    %47 = vector.broadcast %cst : f32 to vector<79x79xf32>
    %48 = arith.select %10, %42, %47 : vector<79x79xi1>, vector<79x79xf32>
    %cst_11 = arith.constant dense<0.000000e+00> : vector<79xf32>
    %49 = vector.multi_reduction <add>, %48, %cst_11 [0] : vector<79x79xf32> to vector<79xf32>
    %50 = vector.shape_cast %49 : vector<79xf32> to vector<1x79xf32>
    %cst_12 = arith.constant -3.40282347E+38 : f32
    %51 = vector.broadcast %cst_12 : f32 to vector<79x79xf32>
    %52 = arith.select %10, %42, %51 : vector<79x79xi1>, vector<79x79xf32>
    %cst_13 = arith.constant dense<0xFF800000> : vector<79xf32>
    %53 = vector.multi_reduction <maximumf>, %52, %cst_13 [0] : vector<79x79xf32> to vector<79xf32>
    %54 = vector.shape_cast %53 : vector<79xf32> to vector<1x79xf32>
    %cst_14 = arith.constant 0.000000e+00 : f32
    %55 = vector.broadcast %cst_14 : f32 to vector<79x79xf32>
    %56 = arith.select %11, %38, %55 : vector<79x79xi1>, vector<79x79xf32>
    %cst_15 = arith.constant dense<0.000000e+00> : vector<79xf32>
    %57 = vector.multi_reduction <add>, %56, %cst_15 [0] : vector<79x79xf32> to vector<79xf32>
    %58 = vector.shape_cast %57 : vector<79xf32> to vector<1x79xf32>
    %cst_16 = arith.constant -3.40282347E+38 : f32
    %59 = vector.broadcast %cst_16 : f32 to vector<79x79xf32>
    %60 = arith.select %10, %38, %59 : vector<79x79xi1>, vector<79x79xf32>
    %cst_17 = arith.constant dense<0xFF800000> : vector<79xf32>
    %61 = vector.multi_reduction <maximumf>, %60, %cst_17 [0] : vector<79x79xf32> to vector<79xf32>
    %62 = vector.shape_cast %61 : vector<79xf32> to vector<1x79xf32>
    %cst_18 = arith.constant 0.000000e+00 : f32
    %63 = vector.shape_cast %50 : vector<1x79xf32> to vector<1x79xf32>
    %64 = vector.broadcast %63 : vector<1x79xf32> to vector<78x79xf32>
    %65 = vector.broadcast %cst_18 : f32 to vector<78x79xf32>
    %66 = arith.select %29, %64, %65 : vector<78x79xi1>, vector<78x79xf32>
    %cst_19 = arith.constant dense<0.000000e+00> : vector<78xf32>
    %67 = vector.multi_reduction <add>, %66, %cst_19 [1] : vector<78x79xf32> to vector<78xf32>
    %68 = vector.shape_cast %67 : vector<78xf32> to vector<78x1xf32>
    %cst_20 = arith.constant 0.000000e+00 : f32
    %69 = vector.shape_cast %58 : vector<1x79xf32> to vector<1x79xf32>
    %70 = vector.broadcast %69 : vector<1x79xf32> to vector<78x79xf32>
    %71 = vector.broadcast %cst_20 : f32 to vector<78x79xf32>
    %72 = arith.select %29, %70, %71 : vector<78x79xi1>, vector<78x79xf32>
    %cst_21 = arith.constant dense<0.000000e+00> : vector<78xf32>
    %73 = vector.multi_reduction <add>, %72, %cst_21 [1] : vector<78x79xf32> to vector<78xf32>
    %74 = vector.shape_cast %73 : vector<78xf32> to vector<78x1xf32>
    %75 = arith.addf %68, %74 : vector<78x1xf32>
    %cst_22 = arith.constant -3.40282347E+38 : f32
    %76 = vector.shape_cast %54 : vector<1x79xf32> to vector<1x79xf32>
    %77 = vector.broadcast %76 : vector<1x79xf32> to vector<78x79xf32>
    %78 = vector.broadcast %cst_22 : f32 to vector<78x79xf32>
    %79 = arith.select %29, %77, %78 : vector<78x79xi1>, vector<78x79xf32>
    %cst_23 = arith.constant dense<0xFF800000> : vector<78xf32>
    %80 = vector.multi_reduction <maximumf>, %79, %cst_23 [1] : vector<78x79xf32> to vector<78xf32>
    %81 = vector.shape_cast %80 : vector<78xf32> to vector<78x1xf32>
    %cst_24 = arith.constant -3.40282347E+38 : f32
    %82 = vector.shape_cast %62 : vector<1x79xf32> to vector<1x79xf32>
    %83 = vector.broadcast %82 : vector<1x79xf32> to vector<78x79xf32>
    %84 = vector.broadcast %cst_24 : f32 to vector<78x79xf32>
    %85 = arith.select %29, %83, %84 : vector<78x79xi1>, vector<78x79xf32>
    %cst_25 = arith.constant dense<0xFF800000> : vector<78xf32>
    %86 = vector.multi_reduction <maximumf>, %85, %cst_25 [1] : vector<78x79xf32> to vector<78xf32>
    %87 = vector.shape_cast %86 : vector<78xf32> to vector<78x1xf32>
    %88 = arith.maximumf %81, %87 : vector<78x1xf32>
    %89 = vector.shape_cast %46 : vector<78x78xf32> to vector<1x78x78xf32>
    %cst_26 = arith.constant dense<0.000000e+00> : vector<1xf32>
    %90 = vector.multi_reduction <add>, %89, %cst_26 [1, 2] : vector<1x78x78xf32> to vector<1xf32>
    %91 = vector.shape_cast %90 : vector<1xf32> to vector<1x1x1xf32>
    %92 = vector.extract %91[0, 0, 0] : f32 from vector<1x1x1xf32>
    %93 = vector.broadcast %92 : f32 to vector<78x1xf32>
    %94 = arith.select %32, %93, %75 : vector<78x1xi1>, vector<78x1xf32>
    %95 = vector.shape_cast %46 : vector<78x78xf32> to vector<1x78x78xf32>
    %cst_27 = arith.constant dense<0xFF800000> : vector<1xf32>
    %96 = vector.multi_reduction <maximumf>, %95, %cst_27 [1, 2] : vector<1x78x78xf32> to vector<1xf32>
    %97 = vector.shape_cast %96 : vector<1xf32> to vector<1x1x1xf32>
    %98 = vector.extract %97[0, 0, 0] : f32 from vector<1x1x1xf32>
    %99 = vector.broadcast %98 : f32 to vector<78x1xf32>
    %100 = arith.select %32, %99, %88 : vector<78x1xi1>, vector<78x1xf32>
    %101 = arith.mulf %94, %33 : vector<78x1xf32>
    %102 = vector.extract_strided_slice %39 {offsets = [0, 0], sizes = [78, 78], strides = [1, 1]} : vector<79x78xf32> to vector<78x78xf32>
    %cst_28 = arith.constant 0.000000e+00 : f32
    %103 = vector.broadcast %cst_28 : f32 to vector<78x79xf32>
    %104 = arith.select %14, %43, %103 : vector<78x79xi1>, vector<78x79xf32>
    %cst_29 = arith.constant dense<0.000000e+00> : vector<79xf32>
    %105 = vector.multi_reduction <add>, %104, %cst_29 [0] : vector<78x79xf32> to vector<79xf32>
    %106 = vector.shape_cast %105 : vector<79xf32> to vector<1x79xf32>
    %cst_30 = arith.constant -3.40282347E+38 : f32
    %107 = vector.broadcast %cst_30 : f32 to vector<78x79xf32>
    %108 = arith.select %14, %43, %107 : vector<78x79xi1>, vector<78x79xf32>
    %cst_31 = arith.constant dense<0xFF800000> : vector<79xf32>
    %109 = vector.multi_reduction <maximumf>, %108, %cst_31 [0] : vector<78x79xf32> to vector<79xf32>
    %110 = vector.shape_cast %109 : vector<79xf32> to vector<1x79xf32>
    %cst_32 = arith.constant 0.000000e+00 : f32
    %111 = vector.broadcast %cst_32 : f32 to vector<79x78xf32>
    %112 = arith.select %23, %39, %111 : vector<79x78xi1>, vector<79x78xf32>
    %cst_33 = arith.constant dense<0.000000e+00> : vector<78xf32>
    %113 = vector.multi_reduction <add>, %112, %cst_33 [0] : vector<79x78xf32> to vector<78xf32>
    %114 = vector.shape_cast %113 : vector<78xf32> to vector<1x78xf32>
    %cst_34 = arith.constant -3.40282347E+38 : f32
    %115 = vector.broadcast %cst_34 : f32 to vector<79x78xf32>
    %116 = arith.select %20, %39, %115 : vector<79x78xi1>, vector<79x78xf32>
    %cst_35 = arith.constant dense<0xFF800000> : vector<78xf32>
    %117 = vector.multi_reduction <maximumf>, %116, %cst_35 [0] : vector<79x78xf32> to vector<78xf32>
    %118 = vector.shape_cast %117 : vector<78xf32> to vector<1x78xf32>
    %cst_36 = arith.constant 0.000000e+00 : f32
    %119 = vector.shape_cast %106 : vector<1x79xf32> to vector<1x79xf32>
    %120 = vector.broadcast %119 : vector<1x79xf32> to vector<78x79xf32>
    %121 = vector.broadcast %cst_36 : f32 to vector<78x79xf32>
    %122 = arith.select %29, %120, %121 : vector<78x79xi1>, vector<78x79xf32>
    %cst_37 = arith.constant dense<0.000000e+00> : vector<78xf32>
    %123 = vector.multi_reduction <add>, %122, %cst_37 [1] : vector<78x79xf32> to vector<78xf32>
    %124 = vector.shape_cast %123 : vector<78xf32> to vector<78x1xf32>
    %cst_38 = arith.constant 0.000000e+00 : f32
    %125 = vector.shape_cast %114 : vector<1x78xf32> to vector<1x78xf32>
    %126 = vector.broadcast %125 : vector<1x78xf32> to vector<78x78xf32>
    %127 = vector.broadcast %cst_38 : f32 to vector<78x78xf32>
    %128 = arith.select %26, %126, %127 : vector<78x78xi1>, vector<78x78xf32>
    %cst_39 = arith.constant dense<0.000000e+00> : vector<78xf32>
    %129 = vector.multi_reduction <add>, %128, %cst_39 [1] : vector<78x78xf32> to vector<78xf32>
    %130 = vector.shape_cast %129 : vector<78xf32> to vector<78x1xf32>
    %131 = arith.addf %124, %130 : vector<78x1xf32>
    %cst_40 = arith.constant -3.40282347E+38 : f32
    %132 = vector.shape_cast %110 : vector<1x79xf32> to vector<1x79xf32>
    %133 = vector.broadcast %132 : vector<1x79xf32> to vector<78x79xf32>
    %134 = vector.broadcast %cst_40 : f32 to vector<78x79xf32>
    %135 = arith.select %29, %133, %134 : vector<78x79xi1>, vector<78x79xf32>
    %cst_41 = arith.constant dense<0xFF800000> : vector<78xf32>
    %136 = vector.multi_reduction <maximumf>, %135, %cst_41 [1] : vector<78x79xf32> to vector<78xf32>
    %137 = vector.shape_cast %136 : vector<78xf32> to vector<78x1xf32>
    %cst_42 = arith.constant -3.40282347E+38 : f32
    %138 = vector.shape_cast %118 : vector<1x78xf32> to vector<1x78xf32>
    %139 = vector.broadcast %138 : vector<1x78xf32> to vector<78x78xf32>
    %140 = vector.broadcast %cst_42 : f32 to vector<78x78xf32>
    %141 = arith.select %26, %139, %140 : vector<78x78xi1>, vector<78x78xf32>
    %cst_43 = arith.constant dense<0xFF800000> : vector<78xf32>
    %142 = vector.multi_reduction <maximumf>, %141, %cst_43 [1] : vector<78x78xf32> to vector<78xf32>
    %143 = vector.shape_cast %142 : vector<78xf32> to vector<78x1xf32>
    %144 = arith.maximumf %137, %143 : vector<78x1xf32>
    %145 = vector.shape_cast %102 : vector<78x78xf32> to vector<1x78x78xf32>
    %cst_44 = arith.constant dense<0.000000e+00> : vector<1xf32>
    %146 = vector.multi_reduction <add>, %145, %cst_44 [1, 2] : vector<1x78x78xf32> to vector<1xf32>
    %147 = vector.shape_cast %146 : vector<1xf32> to vector<1x1x1xf32>
    %148 = vector.extract %147[0, 0, 0] : f32 from vector<1x1x1xf32>
    %149 = vector.broadcast %148 : f32 to vector<78x1xf32>
    %150 = arith.select %32, %149, %131 : vector<78x1xi1>, vector<78x1xf32>
    %151 = vector.shape_cast %102 : vector<78x78xf32> to vector<1x78x78xf32>
    %cst_45 = arith.constant dense<0xFF800000> : vector<1xf32>
    %152 = vector.multi_reduction <maximumf>, %151, %cst_45 [1, 2] : vector<1x78x78xf32> to vector<1xf32>
    %153 = vector.shape_cast %152 : vector<1xf32> to vector<1x1x1xf32>
    %154 = vector.extract %153[0, 0, 0] : f32 from vector<1x1x1xf32>
    %155 = vector.broadcast %154 : f32 to vector<78x1xf32>
    %156 = arith.select %32, %155, %144 : vector<78x1xi1>, vector<78x1xf32>
    %157 = arith.mulf %150, %33 : vector<78x1xf32>
    %158 = vector.extract_strided_slice %40 {offsets = [0, 0], sizes = [78, 78], strides = [1, 1]} : vector<78x79xf32> to vector<78x78xf32>
    %cst_46 = arith.constant 0.000000e+00 : f32
    %159 = vector.broadcast %cst_46 : f32 to vector<79x78xf32>
    %160 = arith.select %20, %44, %159 : vector<79x78xi1>, vector<79x78xf32>
    %cst_47 = arith.constant dense<0.000000e+00> : vector<78xf32>
    %161 = vector.multi_reduction <add>, %160, %cst_47 [0] : vector<79x78xf32> to vector<78xf32>
    %162 = vector.shape_cast %161 : vector<78xf32> to vector<1x78xf32>
    %cst_48 = arith.constant -3.40282347E+38 : f32
    %163 = vector.broadcast %cst_48 : f32 to vector<79x78xf32>
    %164 = arith.select %20, %44, %163 : vector<79x78xi1>, vector<79x78xf32>
    %cst_49 = arith.constant dense<0xFF800000> : vector<78xf32>
    %165 = vector.multi_reduction <maximumf>, %164, %cst_49 [0] : vector<79x78xf32> to vector<78xf32>
    %166 = vector.shape_cast %165 : vector<78xf32> to vector<1x78xf32>
    %cst_50 = arith.constant 0.000000e+00 : f32
    %167 = vector.broadcast %cst_50 : f32 to vector<78x79xf32>
    %168 = arith.select %17, %40, %167 : vector<78x79xi1>, vector<78x79xf32>
    %cst_51 = arith.constant dense<0.000000e+00> : vector<79xf32>
    %169 = vector.multi_reduction <add>, %168, %cst_51 [0] : vector<78x79xf32> to vector<79xf32>
    %170 = vector.shape_cast %169 : vector<79xf32> to vector<1x79xf32>
    %cst_52 = arith.constant -3.40282347E+38 : f32
    %171 = vector.broadcast %cst_52 : f32 to vector<78x79xf32>
    %172 = arith.select %14, %40, %171 : vector<78x79xi1>, vector<78x79xf32>
    %cst_53 = arith.constant dense<0xFF800000> : vector<79xf32>
    %173 = vector.multi_reduction <maximumf>, %172, %cst_53 [0] : vector<78x79xf32> to vector<79xf32>
    %174 = vector.shape_cast %173 : vector<79xf32> to vector<1x79xf32>
    %cst_54 = arith.constant 0.000000e+00 : f32
    %175 = vector.shape_cast %162 : vector<1x78xf32> to vector<1x78xf32>
    %176 = vector.broadcast %175 : vector<1x78xf32> to vector<78x78xf32>
    %177 = vector.broadcast %cst_54 : f32 to vector<78x78xf32>
    %178 = arith.select %26, %176, %177 : vector<78x78xi1>, vector<78x78xf32>
    %cst_55 = arith.constant dense<0.000000e+00> : vector<78xf32>
    %179 = vector.multi_reduction <add>, %178, %cst_55 [1] : vector<78x78xf32> to vector<78xf32>
    %180 = vector.shape_cast %179 : vector<78xf32> to vector<78x1xf32>
    %cst_56 = arith.constant 0.000000e+00 : f32
    %181 = vector.shape_cast %170 : vector<1x79xf32> to vector<1x79xf32>
    %182 = vector.broadcast %181 : vector<1x79xf32> to vector<78x79xf32>
    %183 = vector.broadcast %cst_56 : f32 to vector<78x79xf32>
    %184 = arith.select %29, %182, %183 : vector<78x79xi1>, vector<78x79xf32>
    %cst_57 = arith.constant dense<0.000000e+00> : vector<78xf32>
    %185 = vector.multi_reduction <add>, %184, %cst_57 [1] : vector<78x79xf32> to vector<78xf32>
    %186 = vector.shape_cast %185 : vector<78xf32> to vector<78x1xf32>
    %187 = arith.addf %180, %186 : vector<78x1xf32>
    %cst_58 = arith.constant -3.40282347E+38 : f32
    %188 = vector.shape_cast %166 : vector<1x78xf32> to vector<1x78xf32>
    %189 = vector.broadcast %188 : vector<1x78xf32> to vector<78x78xf32>
    %190 = vector.broadcast %cst_58 : f32 to vector<78x78xf32>
    %191 = arith.select %26, %189, %190 : vector<78x78xi1>, vector<78x78xf32>
    %cst_59 = arith.constant dense<0xFF800000> : vector<78xf32>
    %192 = vector.multi_reduction <maximumf>, %191, %cst_59 [1] : vector<78x78xf32> to vector<78xf32>
    %193 = vector.shape_cast %192 : vector<78xf32> to vector<78x1xf32>
    %cst_60 = arith.constant -3.40282347E+38 : f32
    %194 = vector.shape_cast %174 : vector<1x79xf32> to vector<1x79xf32>
    %195 = vector.broadcast %194 : vector<1x79xf32> to vector<78x79xf32>
    %196 = vector.broadcast %cst_60 : f32 to vector<78x79xf32>
    %197 = arith.select %29, %195, %196 : vector<78x79xi1>, vector<78x79xf32>
    %cst_61 = arith.constant dense<0xFF800000> : vector<78xf32>
    %198 = vector.multi_reduction <maximumf>, %197, %cst_61 [1] : vector<78x79xf32> to vector<78xf32>
    %199 = vector.shape_cast %198 : vector<78xf32> to vector<78x1xf32>
    %200 = arith.maximumf %193, %199 : vector<78x1xf32>
    %201 = vector.shape_cast %158 : vector<78x78xf32> to vector<1x78x78xf32>
    %cst_62 = arith.constant dense<0.000000e+00> : vector<1xf32>
    %202 = vector.multi_reduction <add>, %201, %cst_62 [1, 2] : vector<1x78x78xf32> to vector<1xf32>
    %203 = vector.shape_cast %202 : vector<1xf32> to vector<1x1x1xf32>
    %204 = vector.extract %203[0, 0, 0] : f32 from vector<1x1x1xf32>
    %205 = vector.broadcast %204 : f32 to vector<78x1xf32>
    %206 = arith.select %32, %205, %187 : vector<78x1xi1>, vector<78x1xf32>
    %207 = vector.shape_cast %158 : vector<78x78xf32> to vector<1x78x78xf32>
    %cst_63 = arith.constant dense<0xFF800000> : vector<1xf32>
    %208 = vector.multi_reduction <maximumf>, %207, %cst_63 [1, 2] : vector<1x78x78xf32> to vector<1xf32>
    %209 = vector.shape_cast %208 : vector<1xf32> to vector<1x1x1xf32>
    %210 = vector.extract %209[0, 0, 0] : f32 from vector<1x1x1xf32>
    %211 = vector.broadcast %210 : f32 to vector<78x1xf32>
    %212 = arith.select %32, %211, %200 : vector<78x1xi1>, vector<78x1xf32>
    %213 = arith.mulf %206, %33 : vector<78x1xf32>
    %cst_64 = arith.constant 0.000000e+00 : f32
    %214 = vector.broadcast %cst_64 : f32 to vector<78x78xf32>
    %215 = arith.select %8, %45, %214 : vector<78x78xi1>, vector<78x78xf32>
    %cst_65 = arith.constant dense<0.000000e+00> : vector<78xf32>
    %216 = vector.multi_reduction <add>, %215, %cst_65 [0] : vector<78x78xf32> to vector<78xf32>
    %217 = vector.shape_cast %216 : vector<78xf32> to vector<1x78xf32>
    %cst_66 = arith.constant -3.40282347E+38 : f32
    %218 = vector.broadcast %cst_66 : f32 to vector<78x78xf32>
    %219 = arith.select %8, %45, %218 : vector<78x78xi1>, vector<78x78xf32>
    %cst_67 = arith.constant dense<0xFF800000> : vector<78xf32>
    %220 = vector.multi_reduction <maximumf>, %219, %cst_67 [0] : vector<78x78xf32> to vector<78xf32>
    %221 = vector.shape_cast %220 : vector<78xf32> to vector<1x78xf32>
    %cst_68 = arith.constant 0.000000e+00 : f32
    %222 = vector.broadcast %cst_68 : f32 to vector<78x78xf32>
    %223 = arith.select %9, %41, %222 : vector<78x78xi1>, vector<78x78xf32>
    %cst_69 = arith.constant dense<0.000000e+00> : vector<78xf32>
    %224 = vector.multi_reduction <add>, %223, %cst_69 [0] : vector<78x78xf32> to vector<78xf32>
    %225 = vector.shape_cast %224 : vector<78xf32> to vector<1x78xf32>
    %cst_70 = arith.constant -3.40282347E+38 : f32
    %226 = vector.broadcast %cst_70 : f32 to vector<78x78xf32>
    %227 = arith.select %8, %41, %226 : vector<78x78xi1>, vector<78x78xf32>
    %cst_71 = arith.constant dense<0xFF800000> : vector<78xf32>
    %228 = vector.multi_reduction <maximumf>, %227, %cst_71 [0] : vector<78x78xf32> to vector<78xf32>
    %229 = vector.shape_cast %228 : vector<78xf32> to vector<1x78xf32>
    %cst_72 = arith.constant 0.000000e+00 : f32
    %230 = vector.shape_cast %217 : vector<1x78xf32> to vector<1x78xf32>
    %231 = vector.broadcast %230 : vector<1x78xf32> to vector<78x78xf32>
    %232 = vector.broadcast %cst_72 : f32 to vector<78x78xf32>
    %233 = arith.select %26, %231, %232 : vector<78x78xi1>, vector<78x78xf32>
    %cst_73 = arith.constant dense<0.000000e+00> : vector<78xf32>
    %234 = vector.multi_reduction <add>, %233, %cst_73 [1] : vector<78x78xf32> to vector<78xf32>
    %235 = vector.shape_cast %234 : vector<78xf32> to vector<78x1xf32>
    %cst_74 = arith.constant 0.000000e+00 : f32
    %236 = vector.shape_cast %225 : vector<1x78xf32> to vector<1x78xf32>
    %237 = vector.broadcast %236 : vector<1x78xf32> to vector<78x78xf32>
    %238 = vector.broadcast %cst_74 : f32 to vector<78x78xf32>
    %239 = arith.select %26, %237, %238 : vector<78x78xi1>, vector<78x78xf32>
    %cst_75 = arith.constant dense<0.000000e+00> : vector<78xf32>
    %240 = vector.multi_reduction <add>, %239, %cst_75 [1] : vector<78x78xf32> to vector<78xf32>
    %241 = vector.shape_cast %240 : vector<78xf32> to vector<78x1xf32>
    %242 = arith.addf %235, %241 : vector<78x1xf32>
    %cst_76 = arith.constant -3.40282347E+38 : f32
    %243 = vector.shape_cast %221 : vector<1x78xf32> to vector<1x78xf32>
    %244 = vector.broadcast %243 : vector<1x78xf32> to vector<78x78xf32>
    %245 = vector.broadcast %cst_76 : f32 to vector<78x78xf32>
    %246 = arith.select %26, %244, %245 : vector<78x78xi1>, vector<78x78xf32>
    %cst_77 = arith.constant dense<0xFF800000> : vector<78xf32>
    %247 = vector.multi_reduction <maximumf>, %246, %cst_77 [1] : vector<78x78xf32> to vector<78xf32>
    %248 = vector.shape_cast %247 : vector<78xf32> to vector<78x1xf32>
    %cst_78 = arith.constant -3.40282347E+38 : f32
    %249 = vector.shape_cast %229 : vector<1x78xf32> to vector<1x78xf32>
    %250 = vector.broadcast %249 : vector<1x78xf32> to vector<78x78xf32>
    %251 = vector.broadcast %cst_78 : f32 to vector<78x78xf32>
    %252 = arith.select %26, %250, %251 : vector<78x78xi1>, vector<78x78xf32>
    %cst_79 = arith.constant dense<0xFF800000> : vector<78xf32>
    %253 = vector.multi_reduction <maximumf>, %252, %cst_79 [1] : vector<78x78xf32> to vector<78xf32>
    %254 = vector.shape_cast %253 : vector<78xf32> to vector<78x1xf32>
    %255 = arith.maximumf %248, %254 : vector<78x1xf32>
    %256 = vector.shape_cast %41 : vector<78x78xf32> to vector<1x78x78xf32>
    %cst_80 = arith.constant dense<0.000000e+00> : vector<1xf32>
    %257 = vector.multi_reduction <add>, %256, %cst_80 [1, 2] : vector<1x78x78xf32> to vector<1xf32>
    %258 = vector.shape_cast %257 : vector<1xf32> to vector<1x1x1xf32>
    %259 = vector.extract %258[0, 0, 0] : f32 from vector<1x1x1xf32>
    %260 = vector.broadcast %259 : f32 to vector<78x1xf32>
    %261 = arith.select %32, %260, %242 : vector<78x1xi1>, vector<78x1xf32>
    %262 = vector.shape_cast %41 : vector<78x78xf32> to vector<1x78x78xf32>
    %cst_81 = arith.constant dense<0xFF800000> : vector<1xf32>
    %263 = vector.multi_reduction <maximumf>, %262, %cst_81 [1, 2] : vector<1x78x78xf32> to vector<1xf32>
    %264 = vector.shape_cast %263 : vector<1xf32> to vector<1x1x1xf32>
    %265 = vector.extract %264[0, 0, 0] : f32 from vector<1x1x1xf32>
    %266 = vector.broadcast %265 : f32 to vector<78x1xf32>
    %267 = arith.select %32, %266, %255 : vector<78x1xi1>, vector<78x1xf32>
    %268 = arith.mulf %261, %33 : vector<78x1xf32>
    %269 = tpu.concatenate %101, %157, %213, %268 in 1 : vector<78x1xf32>, vector<78x1xf32>, vector<78x1xf32>, vector<78x1xf32> -> vector<78x4xf32>
    %270 = tpu.concatenate %100, %156, %212, %267 in 1 : vector<78x1xf32>, vector<78x1xf32>, vector<78x1xf32>, vector<78x1xf32> -> vector<78x4xf32>
    %271 = tpu.concatenate %269, %270 in 0 : vector<78x4xf32>, vector<78x4xf32> -> vector<156x4xf32>
    %c1 = arith.constant 1 : index
    %c0_82 = arith.constant 0 : index
    %c0_83 = arith.constant 0 : index
    %272 = vector.load %arg1[%c1, %c0_82, %c0_83] : memref<2x156x156xf32, #tpu.memory_space<vmem>>, vector<1x156x156xf32>
    %273 = vector.shape_cast %272 : vector<1x156x156xf32> to vector<156x156xf32>
    %c1_84 = arith.constant 1 : index
    %c0_85 = arith.constant 0 : index
    %c0_86 = arith.constant 0 : index
    %274 = vector.load %arg2[%c1_84, %c0_85, %c0_86] : memref<2x156x156xf32, #tpu.memory_space<vmem>>, vector<1x156x156xf32>
    %275 = vector.shape_cast %274 : vector<1x156x156xf32> to vector<156x156xf32>
    %276 = vector.extract_strided_slice %273 {offsets = [0, 0], sizes = [79, 79], strides = [1, 1]} : vector<156x156xf32> to vector<79x79xf32>
    %277 = vector.extract_strided_slice %273 {offsets = [0, 78], sizes = [79, 78], strides = [1, 1]} : vector<156x156xf32> to vector<79x78xf32>
    %278 = vector.extract_strided_slice %273 {offsets = [78, 0], sizes = [78, 79], strides = [1, 1]} : vector<156x156xf32> to vector<78x79xf32>
    %279 = vector.extract_strided_slice %273 {offsets = [78, 78], sizes = [78, 78], strides = [1, 1]} : vector<156x156xf32> to vector<78x78xf32>
    %280 = vector.extract_strided_slice %275 {offsets = [0, 0], sizes = [79, 79], strides = [1, 1]} : vector<156x156xf32> to vector<79x79xf32>
    %281 = vector.extract_strided_slice %275 {offsets = [78, 0], sizes = [78, 79], strides = [1, 1]} : vector<156x156xf32> to vector<78x79xf32>
    %282 = vector.extract_strided_slice %275 {offsets = [0, 78], sizes = [79, 78], strides = [1, 1]} : vector<156x156xf32> to vector<79x78xf32>
    %283 = vector.extract_strided_slice %275 {offsets = [78, 78], sizes = [78, 78], strides = [1, 1]} : vector<156x156xf32> to vector<78x78xf32>
    %284 = vector.extract_strided_slice %276 {offsets = [0, 0], sizes = [78, 78], strides = [1, 1]} : vector<79x79xf32> to vector<78x78xf32>
    %cst_87 = arith.constant 0.000000e+00 : f32
    %285 = vector.broadcast %cst_87 : f32 to vector<79x79xf32>
    %286 = arith.select %10, %280, %285 : vector<79x79xi1>, vector<79x79xf32>
    %cst_88 = arith.constant dense<0.000000e+00> : vector<79xf32>
    %287 = vector.multi_reduction <add>, %286, %cst_88 [0] : vector<79x79xf32> to vector<79xf32>
    %288 = vector.shape_cast %287 : vector<79xf32> to vector<1x79xf32>
    %cst_89 = arith.constant -3.40282347E+38 : f32
    %289 = vector.broadcast %cst_89 : f32 to vector<79x79xf32>
    %290 = arith.select %10, %280, %289 : vector<79x79xi1>, vector<79x79xf32>
    %cst_90 = arith.constant dense<0xFF800000> : vector<79xf32>
    %291 = vector.multi_reduction <maximumf>, %290, %cst_90 [0] : vector<79x79xf32> to vector<79xf32>
    %292 = vector.shape_cast %291 : vector<79xf32> to vector<1x79xf32>
    %cst_91 = arith.constant 0.000000e+00 : f32
    %293 = vector.broadcast %cst_91 : f32 to vector<79x79xf32>
    %294 = arith.select %11, %276, %293 : vector<79x79xi1>, vector<79x79xf32>
    %cst_92 = arith.constant dense<0.000000e+00> : vector<79xf32>
    %295 = vector.multi_reduction <add>, %294, %cst_92 [0] : vector<79x79xf32> to vector<79xf32>
    %296 = vector.shape_cast %295 : vector<79xf32> to vector<1x79xf32>
    %cst_93 = arith.constant -3.40282347E+38 : f32
    %297 = vector.broadcast %cst_93 : f32 to vector<79x79xf32>
    %298 = arith.select %10, %276, %297 : vector<79x79xi1>, vector<79x79xf32>
    %cst_94 = arith.constant dense<0xFF800000> : vector<79xf32>
    %299 = vector.multi_reduction <maximumf>, %298, %cst_94 [0] : vector<79x79xf32> to vector<79xf32>
    %300 = vector.shape_cast %299 : vector<79xf32> to vector<1x79xf32>
    %cst_95 = arith.constant 0.000000e+00 : f32
    %301 = vector.shape_cast %288 : vector<1x79xf32> to vector<1x79xf32>
    %302 = vector.broadcast %301 : vector<1x79xf32> to vector<78x79xf32>
    %303 = vector.broadcast %cst_95 : f32 to vector<78x79xf32>
    %304 = arith.select %29, %302, %303 : vector<78x79xi1>, vector<78x79xf32>
    %cst_96 = arith.constant dense<0.000000e+00> : vector<78xf32>
    %305 = vector.multi_reduction <add>, %304, %cst_96 [1] : vector<78x79xf32> to vector<78xf32>
    %306 = vector.shape_cast %305 : vector<78xf32> to vector<78x1xf32>
    %cst_97 = arith.constant 0.000000e+00 : f32
    %307 = vector.shape_cast %296 : vector<1x79xf32> to vector<1x79xf32>
    %308 = vector.broadcast %307 : vector<1x79xf32> to vector<78x79xf32>
    %309 = vector.broadcast %cst_97 : f32 to vector<78x79xf32>
    %310 = arith.select %29, %308, %309 : vector<78x79xi1>, vector<78x79xf32>
    %cst_98 = arith.constant dense<0.000000e+00> : vector<78xf32>
    %311 = vector.multi_reduction <add>, %310, %cst_98 [1] : vector<78x79xf32> to vector<78xf32>
    %312 = vector.shape_cast %311 : vector<78xf32> to vector<78x1xf32>
    %313 = arith.addf %306, %312 : vector<78x1xf32>
    %cst_99 = arith.constant -3.40282347E+38 : f32
    %314 = vector.shape_cast %292 : vector<1x79xf32> to vector<1x79xf32>
    %315 = vector.broadcast %314 : vector<1x79xf32> to vector<78x79xf32>
    %316 = vector.broadcast %cst_99 : f32 to vector<78x79xf32>
    %317 = arith.select %29, %315, %316 : vector<78x79xi1>, vector<78x79xf32>
    %cst_100 = arith.constant dense<0xFF800000> : vector<78xf32>
    %318 = vector.multi_reduction <maximumf>, %317, %cst_100 [1] : vector<78x79xf32> to vector<78xf32>
    %319 = vector.shape_cast %318 : vector<78xf32> to vector<78x1xf32>
    %cst_101 = arith.constant -3.40282347E+38 : f32
    %320 = vector.shape_cast %300 : vector<1x79xf32> to vector<1x79xf32>
    %321 = vector.broadcast %320 : vector<1x79xf32> to vector<78x79xf32>
    %322 = vector.broadcast %cst_101 : f32 to vector<78x79xf32>
    %323 = arith.select %29, %321, %322 : vector<78x79xi1>, vector<78x79xf32>
    %cst_102 = arith.constant dense<0xFF800000> : vector<78xf32>
    %324 = vector.multi_reduction <maximumf>, %323, %cst_102 [1] : vector<78x79xf32> to vector<78xf32>
    %325 = vector.shape_cast %324 : vector<78xf32> to vector<78x1xf32>
    %326 = arith.maximumf %319, %325 : vector<78x1xf32>
    %327 = vector.shape_cast %284 : vector<78x78xf32> to vector<1x78x78xf32>
    %cst_103 = arith.constant dense<0.000000e+00> : vector<1xf32>
    %328 = vector.multi_reduction <add>, %327, %cst_103 [1, 2] : vector<1x78x78xf32> to vector<1xf32>
    %329 = vector.shape_cast %328 : vector<1xf32> to vector<1x1x1xf32>
    %330 = vector.extract %329[0, 0, 0] : f32 from vector<1x1x1xf32>
    %331 = vector.broadcast %330 : f32 to vector<78x1xf32>
    %332 = arith.select %32, %331, %313 : vector<78x1xi1>, vector<78x1xf32>
    %333 = vector.shape_cast %284 : vector<78x78xf32> to vector<1x78x78xf32>
    %cst_104 = arith.constant dense<0xFF800000> : vector<1xf32>
    %334 = vector.multi_reduction <maximumf>, %333, %cst_104 [1, 2] : vector<1x78x78xf32> to vector<1xf32>
    %335 = vector.shape_cast %334 : vector<1xf32> to vector<1x1x1xf32>
    %336 = vector.extract %335[0, 0, 0] : f32 from vector<1x1x1xf32>
    %337 = vector.broadcast %336 : f32 to vector<78x1xf32>
    %338 = arith.select %32, %337, %326 : vector<78x1xi1>, vector<78x1xf32>
    %339 = arith.mulf %332, %33 : vector<78x1xf32>
    %340 = vector.extract_strided_slice %277 {offsets = [0, 0], sizes = [78, 78], strides = [1, 1]} : vector<79x78xf32> to vector<78x78xf32>
    %cst_105 = arith.constant 0.000000e+00 : f32
    %341 = vector.broadcast %cst_105 : f32 to vector<78x79xf32>
    %342 = arith.select %14, %281, %341 : vector<78x79xi1>, vector<78x79xf32>
    %cst_106 = arith.constant dense<0.000000e+00> : vector<79xf32>
    %343 = vector.multi_reduction <add>, %342, %cst_106 [0] : vector<78x79xf32> to vector<79xf32>
    %344 = vector.shape_cast %343 : vector<79xf32> to vector<1x79xf32>
    %cst_107 = arith.constant -3.40282347E+38 : f32
    %345 = vector.broadcast %cst_107 : f32 to vector<78x79xf32>
    %346 = arith.select %14, %281, %345 : vector<78x79xi1>, vector<78x79xf32>
    %cst_108 = arith.constant dense<0xFF800000> : vector<79xf32>
    %347 = vector.multi_reduction <maximumf>, %346, %cst_108 [0] : vector<78x79xf32> to vector<79xf32>
    %348 = vector.shape_cast %347 : vector<79xf32> to vector<1x79xf32>
    %cst_109 = arith.constant 0.000000e+00 : f32
    %349 = vector.broadcast %cst_109 : f32 to vector<79x78xf32>
    %350 = arith.select %23, %277, %349 : vector<79x78xi1>, vector<79x78xf32>
    %cst_110 = arith.constant dense<0.000000e+00> : vector<78xf32>
    %351 = vector.multi_reduction <add>, %350, %cst_110 [0] : vector<79x78xf32> to vector<78xf32>
    %352 = vector.shape_cast %351 : vector<78xf32> to vector<1x78xf32>
    %cst_111 = arith.constant -3.40282347E+38 : f32
    %353 = vector.broadcast %cst_111 : f32 to vector<79x78xf32>
    %354 = arith.select %20, %277, %353 : vector<79x78xi1>, vector<79x78xf32>
    %cst_112 = arith.constant dense<0xFF800000> : vector<78xf32>
    %355 = vector.multi_reduction <maximumf>, %354, %cst_112 [0] : vector<79x78xf32> to vector<78xf32>
    %356 = vector.shape_cast %355 : vector<78xf32> to vector<1x78xf32>
    %cst_113 = arith.constant 0.000000e+00 : f32
    %357 = vector.shape_cast %344 : vector<1x79xf32> to vector<1x79xf32>
    %358 = vector.broadcast %357 : vector<1x79xf32> to vector<78x79xf32>
    %359 = vector.broadcast %cst_113 : f32 to vector<78x79xf32>
    %360 = arith.select %29, %358, %359 : vector<78x79xi1>, vector<78x79xf32>
    %cst_114 = arith.constant dense<0.000000e+00> : vector<78xf32>
    %361 = vector.multi_reduction <add>, %360, %cst_114 [1] : vector<78x79xf32> to vector<78xf32>
    %362 = vector.shape_cast %361 : vector<78xf32> to vector<78x1xf32>
    %cst_115 = arith.constant 0.000000e+00 : f32
    %363 = vector.shape_cast %352 : vector<1x78xf32> to vector<1x78xf32>
    %364 = vector.broadcast %363 : vector<1x78xf32> to vector<78x78xf32>
    %365 = vector.broadcast %cst_115 : f32 to vector<78x78xf32>
    %366 = arith.select %26, %364, %365 : vector<78x78xi1>, vector<78x78xf32>
    %cst_116 = arith.constant dense<0.000000e+00> : vector<78xf32>
    %367 = vector.multi_reduction <add>, %366, %cst_116 [1] : vector<78x78xf32> to vector<78xf32>
    %368 = vector.shape_cast %367 : vector<78xf32> to vector<78x1xf32>
    %369 = arith.addf %362, %368 : vector<78x1xf32>
    %cst_117 = arith.constant -3.40282347E+38 : f32
    %370 = vector.shape_cast %348 : vector<1x79xf32> to vector<1x79xf32>
    %371 = vector.broadcast %370 : vector<1x79xf32> to vector<78x79xf32>
    %372 = vector.broadcast %cst_117 : f32 to vector<78x79xf32>
    %373 = arith.select %29, %371, %372 : vector<78x79xi1>, vector<78x79xf32>
    %cst_118 = arith.constant dense<0xFF800000> : vector<78xf32>
    %374 = vector.multi_reduction <maximumf>, %373, %cst_118 [1] : vector<78x79xf32> to vector<78xf32>
    %375 = vector.shape_cast %374 : vector<78xf32> to vector<78x1xf32>
    %cst_119 = arith.constant -3.40282347E+38 : f32
    %376 = vector.shape_cast %356 : vector<1x78xf32> to vector<1x78xf32>
    %377 = vector.broadcast %376 : vector<1x78xf32> to vector<78x78xf32>
    %378 = vector.broadcast %cst_119 : f32 to vector<78x78xf32>
    %379 = arith.select %26, %377, %378 : vector<78x78xi1>, vector<78x78xf32>
    %cst_120 = arith.constant dense<0xFF800000> : vector<78xf32>
    %380 = vector.multi_reduction <maximumf>, %379, %cst_120 [1] : vector<78x78xf32> to vector<78xf32>
    %381 = vector.shape_cast %380 : vector<78xf32> to vector<78x1xf32>
    %382 = arith.maximumf %375, %381 : vector<78x1xf32>
    %383 = vector.shape_cast %340 : vector<78x78xf32> to vector<1x78x78xf32>
    %cst_121 = arith.constant dense<0.000000e+00> : vector<1xf32>
    %384 = vector.multi_reduction <add>, %383, %cst_121 [1, 2] : vector<1x78x78xf32> to vector<1xf32>
    %385 = vector.shape_cast %384 : vector<1xf32> to vector<1x1x1xf32>
    %386 = vector.extract %385[0, 0, 0] : f32 from vector<1x1x1xf32>
    %387 = vector.broadcast %386 : f32 to vector<78x1xf32>
    %388 = arith.select %32, %387, %369 : vector<78x1xi1>, vector<78x1xf32>
    %389 = vector.shape_cast %340 : vector<78x78xf32> to vector<1x78x78xf32>
    %cst_122 = arith.constant dense<0xFF800000> : vector<1xf32>
    %390 = vector.multi_reduction <maximumf>, %389, %cst_122 [1, 2] : vector<1x78x78xf32> to vector<1xf32>
    %391 = vector.shape_cast %390 : vector<1xf32> to vector<1x1x1xf32>
    %392 = vector.extract %391[0, 0, 0] : f32 from vector<1x1x1xf32>
    %393 = vector.broadcast %392 : f32 to vector<78x1xf32>
    %394 = arith.select %32, %393, %382 : vector<78x1xi1>, vector<78x1xf32>
    %395 = arith.mulf %388, %33 : vector<78x1xf32>
    %396 = vector.extract_strided_slice %278 {offsets = [0, 0], sizes = [78, 78], strides = [1, 1]} : vector<78x79xf32> to vector<78x78xf32>
    %cst_123 = arith.constant 0.000000e+00 : f32
    %397 = vector.broadcast %cst_123 : f32 to vector<79x78xf32>
    %398 = arith.select %20, %282, %397 : vector<79x78xi1>, vector<79x78xf32>
    %cst_124 = arith.constant dense<0.000000e+00> : vector<78xf32>
    %399 = vector.multi_reduction <add>, %398, %cst_124 [0] : vector<79x78xf32> to vector<78xf32>
    %400 = vector.shape_cast %399 : vector<78xf32> to vector<1x78xf32>
    %cst_125 = arith.constant -3.40282347E+38 : f32
    %401 = vector.broadcast %cst_125 : f32 to vector<79x78xf32>
    %402 = arith.select %20, %282, %401 : vector<79x78xi1>, vector<79x78xf32>
    %cst_126 = arith.constant dense<0xFF800000> : vector<78xf32>
    %403 = vector.multi_reduction <maximumf>, %402, %cst_126 [0] : vector<79x78xf32> to vector<78xf32>
    %404 = vector.shape_cast %403 : vector<78xf32> to vector<1x78xf32>
    %cst_127 = arith.constant 0.000000e+00 : f32
    %405 = vector.broadcast %cst_127 : f32 to vector<78x79xf32>
    %406 = arith.select %17, %278, %405 : vector<78x79xi1>, vector<78x79xf32>
    %cst_128 = arith.constant dense<0.000000e+00> : vector<79xf32>
    %407 = vector.multi_reduction <add>, %406, %cst_128 [0] : vector<78x79xf32> to vector<79xf32>
    %408 = vector.shape_cast %407 : vector<79xf32> to vector<1x79xf32>
    %cst_129 = arith.constant -3.40282347E+38 : f32
    %409 = vector.broadcast %cst_129 : f32 to vector<78x79xf32>
    %410 = arith.select %14, %278, %409 : vector<78x79xi1>, vector<78x79xf32>
    %cst_130 = arith.constant dense<0xFF800000> : vector<79xf32>
    %411 = vector.multi_reduction <maximumf>, %410, %cst_130 [0] : vector<78x79xf32> to vector<79xf32>
    %412 = vector.shape_cast %411 : vector<79xf32> to vector<1x79xf32>
    %cst_131 = arith.constant 0.000000e+00 : f32
    %413 = vector.shape_cast %400 : vector<1x78xf32> to vector<1x78xf32>
    %414 = vector.broadcast %413 : vector<1x78xf32> to vector<78x78xf32>
    %415 = vector.broadcast %cst_131 : f32 to vector<78x78xf32>
    %416 = arith.select %26, %414, %415 : vector<78x78xi1>, vector<78x78xf32>
    %cst_132 = arith.constant dense<0.000000e+00> : vector<78xf32>
    %417 = vector.multi_reduction <add>, %416, %cst_132 [1] : vector<78x78xf32> to vector<78xf32>
    %418 = vector.shape_cast %417 : vector<78xf32> to vector<78x1xf32>
    %cst_133 = arith.constant 0.000000e+00 : f32
    %419 = vector.shape_cast %408 : vector<1x79xf32> to vector<1x79xf32>
    %420 = vector.broadcast %419 : vector<1x79xf32> to vector<78x79xf32>
    %421 = vector.broadcast %cst_133 : f32 to vector<78x79xf32>
    %422 = arith.select %29, %420, %421 : vector<78x79xi1>, vector<78x79xf32>
    %cst_134 = arith.constant dense<0.000000e+00> : vector<78xf32>
    %423 = vector.multi_reduction <add>, %422, %cst_134 [1] : vector<78x79xf32> to vector<78xf32>
    %424 = vector.shape_cast %423 : vector<78xf32> to vector<78x1xf32>
    %425 = arith.addf %418, %424 : vector<78x1xf32>
    %cst_135 = arith.constant -3.40282347E+38 : f32
    %426 = vector.shape_cast %404 : vector<1x78xf32> to vector<1x78xf32>
    %427 = vector.broadcast %426 : vector<1x78xf32> to vector<78x78xf32>
    %428 = vector.broadcast %cst_135 : f32 to vector<78x78xf32>
    %429 = arith.select %26, %427, %428 : vector<78x78xi1>, vector<78x78xf32>
    %cst_136 = arith.constant dense<0xFF800000> : vector<78xf32>
    %430 = vector.multi_reduction <maximumf>, %429, %cst_136 [1] : vector<78x78xf32> to vector<78xf32>
    %431 = vector.shape_cast %430 : vector<78xf32> to vector<78x1xf32>
    %cst_137 = arith.constant -3.40282347E+38 : f32
    %432 = vector.shape_cast %412 : vector<1x79xf32> to vector<1x79xf32>
    %433 = vector.broadcast %432 : vector<1x79xf32> to vector<78x79xf32>
    %434 = vector.broadcast %cst_137 : f32 to vector<78x79xf32>
    %435 = arith.select %29, %433, %434 : vector<78x79xi1>, vector<78x79xf32>
    %cst_138 = arith.constant dense<0xFF800000> : vector<78xf32>
    %436 = vector.multi_reduction <maximumf>, %435, %cst_138 [1] : vector<78x79xf32> to vector<78xf32>
    %437 = vector.shape_cast %436 : vector<78xf32> to vector<78x1xf32>
    %438 = arith.maximumf %431, %437 : vector<78x1xf32>
    %439 = vector.shape_cast %396 : vector<78x78xf32> to vector<1x78x78xf32>
    %cst_139 = arith.constant dense<0.000000e+00> : vector<1xf32>
    %440 = vector.multi_reduction <add>, %439, %cst_139 [1, 2] : vector<1x78x78xf32> to vector<1xf32>
    %441 = vector.shape_cast %440 : vector<1xf32> to vector<1x1x1xf32>
    %442 = vector.extract %441[0, 0, 0] : f32 from vector<1x1x1xf32>
    %443 = vector.broadcast %442 : f32 to vector<78x1xf32>
    %444 = arith.select %32, %443, %425 : vector<78x1xi1>, vector<78x1xf32>
    %445 = vector.shape_cast %396 : vector<78x78xf32> to vector<1x78x78xf32>
    %cst_140 = arith.constant dense<0xFF800000> : vector<1xf32>
    %446 = vector.multi_reduction <maximumf>, %445, %cst_140 [1, 2] : vector<1x78x78xf32> to vector<1xf32>
    %447 = vector.shape_cast %446 : vector<1xf32> to vector<1x1x1xf32>
    %448 = vector.extract %447[0, 0, 0] : f32 from vector<1x1x1xf32>
    %449 = vector.broadcast %448 : f32 to vector<78x1xf32>
    %450 = arith.select %32, %449, %438 : vector<78x1xi1>, vector<78x1xf32>
    %451 = arith.mulf %444, %33 : vector<78x1xf32>
    %cst_141 = arith.constant 0.000000e+00 : f32
    %452 = vector.broadcast %cst_141 : f32 to vector<78x78xf32>
    %453 = arith.select %8, %283, %452 : vector<78x78xi1>, vector<78x78xf32>
    %cst_142 = arith.constant dense<0.000000e+00> : vector<78xf32>
    %454 = vector.multi_reduction <add>, %453, %cst_142 [0] : vector<78x78xf32> to vector<78xf32>
    %455 = vector.shape_cast %454 : vector<78xf32> to vector<1x78xf32>
    %cst_143 = arith.constant -3.40282347E+38 : f32
    %456 = vector.broadcast %cst_143 : f32 to vector<78x78xf32>
    %457 = arith.select %8, %283, %456 : vector<78x78xi1>, vector<78x78xf32>
    %cst_144 = arith.constant dense<0xFF800000> : vector<78xf32>
    %458 = vector.multi_reduction <maximumf>, %457, %cst_144 [0] : vector<78x78xf32> to vector<78xf32>
    %459 = vector.shape_cast %458 : vector<78xf32> to vector<1x78xf32>
    %cst_145 = arith.constant 0.000000e+00 : f32
    %460 = vector.broadcast %cst_145 : f32 to vector<78x78xf32>
    %461 = arith.select %9, %279, %460 : vector<78x78xi1>, vector<78x78xf32>
    %cst_146 = arith.constant dense<0.000000e+00> : vector<78xf32>
    %462 = vector.multi_reduction <add>, %461, %cst_146 [0] : vector<78x78xf32> to vector<78xf32>
    %463 = vector.shape_cast %462 : vector<78xf32> to vector<1x78xf32>
    %cst_147 = arith.constant -3.40282347E+38 : f32
    %464 = vector.broadcast %cst_147 : f32 to vector<78x78xf32>
    %465 = arith.select %8, %279, %464 : vector<78x78xi1>, vector<78x78xf32>
    %cst_148 = arith.constant dense<0xFF800000> : vector<78xf32>
    %466 = vector.multi_reduction <maximumf>, %465, %cst_148 [0] : vector<78x78xf32> to vector<78xf32>
    %467 = vector.shape_cast %466 : vector<78xf32> to vector<1x78xf32>
    %cst_149 = arith.constant 0.000000e+00 : f32
    %468 = vector.shape_cast %455 : vector<1x78xf32> to vector<1x78xf32>
    %469 = vector.broadcast %468 : vector<1x78xf32> to vector<78x78xf32>
    %470 = vector.broadcast %cst_149 : f32 to vector<78x78xf32>
    %471 = arith.select %26, %469, %470 : vector<78x78xi1>, vector<78x78xf32>
    %cst_150 = arith.constant dense<0.000000e+00> : vector<78xf32>
    %472 = vector.multi_reduction <add>, %471, %cst_150 [1] : vector<78x78xf32> to vector<78xf32>
    %473 = vector.shape_cast %472 : vector<78xf32> to vector<78x1xf32>
    %cst_151 = arith.constant 0.000000e+00 : f32
    %474 = vector.shape_cast %463 : vector<1x78xf32> to vector<1x78xf32>
    %475 = vector.broadcast %474 : vector<1x78xf32> to vector<78x78xf32>
    %476 = vector.broadcast %cst_151 : f32 to vector<78x78xf32>
    %477 = arith.select %26, %475, %476 : vector<78x78xi1>, vector<78x78xf32>
    %cst_152 = arith.constant dense<0.000000e+00> : vector<78xf32>
    %478 = vector.multi_reduction <add>, %477, %cst_152 [1] : vector<78x78xf32> to vector<78xf32>
    %479 = vector.shape_cast %478 : vector<78xf32> to vector<78x1xf32>
    %480 = arith.addf %473, %479 : vector<78x1xf32>
    %cst_153 = arith.constant -3.40282347E+38 : f32
    %481 = vector.shape_cast %459 : vector<1x78xf32> to vector<1x78xf32>
    %482 = vector.broadcast %481 : vector<1x78xf32> to vector<78x78xf32>
    %483 = vector.broadcast %cst_153 : f32 to vector<78x78xf32>
    %484 = arith.select %26, %482, %483 : vector<78x78xi1>, vector<78x78xf32>
    %cst_154 = arith.constant dense<0xFF800000> : vector<78xf32>
    %485 = vector.multi_reduction <maximumf>, %484, %cst_154 [1] : vector<78x78xf32> to vector<78xf32>
    %486 = vector.shape_cast %485 : vector<78xf32> to vector<78x1xf32>
    %cst_155 = arith.constant -3.40282347E+38 : f32
    %487 = vector.shape_cast %467 : vector<1x78xf32> to vector<1x78xf32>
    %488 = vector.broadcast %487 : vector<1x78xf32> to vector<78x78xf32>
    %489 = vector.broadcast %cst_155 : f32 to vector<78x78xf32>
    %490 = arith.select %26, %488, %489 : vector<78x78xi1>, vector<78x78xf32>
    %cst_156 = arith.constant dense<0xFF800000> : vector<78xf32>
    %491 = vector.multi_reduction <maximumf>, %490, %cst_156 [1] : vector<78x78xf32> to vector<78xf32>
    %492 = vector.shape_cast %491 : vector<78xf32> to vector<78x1xf32>
    %493 = arith.maximumf %486, %492 : vector<78x1xf32>
    %494 = vector.shape_cast %279 : vector<78x78xf32> to vector<1x78x78xf32>
    %cst_157 = arith.constant dense<0.000000e+00> : vector<1xf32>
    %495 = vector.multi_reduction <add>, %494, %cst_157 [1, 2] : vector<1x78x78xf32> to vector<1xf32>
    %496 = vector.shape_cast %495 : vector<1xf32> to vector<1x1x1xf32>
    %497 = vector.extract %496[0, 0, 0] : f32 from vector<1x1x1xf32>
    %498 = vector.broadcast %497 : f32 to vector<78x1xf32>
    %499 = arith.select %32, %498, %480 : vector<78x1xi1>, vector<78x1xf32>
    %500 = vector.shape_cast %279 : vector<78x78xf32> to vector<1x78x78xf32>
    %cst_158 = arith.constant dense<0xFF800000> : vector<1xf32>
    %501 = vector.multi_reduction <maximumf>, %500, %cst_158 [1, 2] : vector<1x78x78xf32> to vector<1xf32>
    %502 = vector.shape_cast %501 : vector<1xf32> to vector<1x1x1xf32>
    %503 = vector.extract %502[0, 0, 0] : f32 from vector<1x1x1xf32>
    %504 = vector.broadcast %503 : f32 to vector<78x1xf32>
    %505 = arith.select %32, %504, %493 : vector<78x1xi1>, vector<78x1xf32>
    %506 = arith.mulf %499, %33 : vector<78x1xf32>
    %507 = tpu.concatenate %339, %395, %451, %506 in 1 : vector<78x1xf32>, vector<78x1xf32>, vector<78x1xf32>, vector<78x1xf32> -> vector<78x4xf32>
    %508 = tpu.concatenate %338, %394, %450, %505 in 1 : vector<78x1xf32>, vector<78x1xf32>, vector<78x1xf32>, vector<78x1xf32> -> vector<78x4xf32>
    %509 = tpu.concatenate %507, %508 in 0 : vector<78x4xf32>, vector<78x4xf32> -> vector<156x4xf32>
    %510 = tpu.concatenate %271, %509 in 1 : vector<156x4xf32>, vector<156x4xf32> -> vector<156x8xf32>
    %c0_159 = arith.constant 0 : index
    %c0_160 = arith.constant 0 : index
    %511 = vector.load %arg5[%c0_159, %c0_160] : memref<78x156xf32, #tpu.memory_space<vmem>>, vector<78x156xf32>
    %cst_161 = arith.constant dense<0.000000e+00> : vector<78x8xf32>
    %512 = tpu.matmul %511, %510, %cst_161 {dimension_numbers = #tpu.dot_dimension_numbers<[1], [0], [0], [1], [0, 0, 1, 1], [], []>} : vector<78x156xf32>, vector<156x8xf32>, vector<78x8xf32> -> vector<78x8xf32>
    %c0_162 = arith.constant 0 : index
    %c0_163 = arith.constant 0 : index
    %513 = vector.load %arg6[%c0_162, %c0_163] : memref<78x1xf32, #tpu.memory_space<vmem>>, vector<78x1xf32>
    %514 = vector.broadcast %513 : vector<78x1xf32> to vector<78x8xf32>
    %515 = arith.addf %512, %514 : vector<78x8xf32>
    %cst_164 = arith.constant 0.000000e+00 : f32
    %516 = vector.broadcast %cst_164 : f32 to vector<78x8xf32>
    %517 = arith.maximumf %515, %516 : vector<78x8xf32>
    %518 = vector.extract_strided_slice %517 {offsets = [0, 0], sizes = [78, 4], strides = [1, 1]} : vector<78x8xf32> to vector<78x4xf32>
    %c0_165 = arith.constant 0 : index
    %c0_166 = arith.constant 0 : index
    %519 = vector.load %arg7[%c0_165, %c0_166] : memref<8x4xf32, #tpu.memory_space<vmem>>, vector<8x4xf32>
    %cst_167 = arith.constant dense<0.000000e+00> : vector<78x8xf32>
    %520 = tpu.matmul %518, %519, %cst_167 {dimension_numbers = #tpu.dot_dimension_numbers<[1], [1], [0], [0], [0, 0, 1, 0], [], []>} : vector<78x4xf32>, vector<8x4xf32>, vector<78x8xf32> -> vector<78x8xf32>
    %c0_168 = arith.constant 0 : index
    %c0_169 = arith.constant 0 : index
    %521 = vector.load %arg10[%c0_168, %c0_169] : memref<1x4xf32, #tpu.memory_space<vmem>>, vector<1x4xf32>
    %522 = vector.extract_strided_slice %520 {offsets = [0, 0], sizes = [78, 2], strides = [1, 1]} : vector<78x8xf32> to vector<78x2xf32>
    %523 = vector.extract_strided_slice %520 {offsets = [0, 4], sizes = [78, 2], strides = [1, 1]} : vector<78x8xf32> to vector<78x2xf32>
    %c0_170 = arith.constant 0 : index
    %c0_171 = arith.constant 0 : index
    %c0_172 = arith.constant 0 : index
    %524 = vector.load %arg8[%c0_170, %c0_171, %c0_172] : memref<2x78x2xf32, #tpu.memory_space<vmem>>, vector<1x78x2xf32>
    %525 = vector.shape_cast %524 : vector<1x78x2xf32> to vector<78x2xf32>
    %cst_173 = arith.constant dense<0.000000e+00> : vector<78x78xf32>
    %526 = tpu.matmul %522, %525, %cst_173 {dimension_numbers = #tpu.dot_dimension_numbers<[1], [1], [0], [0], [0, 0, 1, 0], [], []>} : vector<78x2xf32>, vector<78x2xf32>, vector<78x78xf32> -> vector<78x78xf32>
    %cst_174 = arith.constant 0.707106769 : f32
    %527 = vector.broadcast %cst_174 : f32 to vector<78x78xf32>
    %528 = arith.mulf %526, %527 : vector<78x78xf32>
    %cst_175 = arith.constant dense<0xFF800000> : vector<78xf32>
    %529 = vector.multi_reduction <maximumf>, %528, %cst_175 [1] : vector<78x78xf32> to vector<78xf32>
    %530 = vector.shape_cast %529 : vector<78xf32> to vector<78x1xf32>
    %531 = vector.broadcast %530 : vector<78x1xf32> to vector<78x78xf32>
    %532 = arith.subf %528, %531 : vector<78x78xf32>
    %533 = math.exp %532 : vector<78x78xf32>
    %cst_176 = arith.constant dense<0.000000e+00> : vector<78xf32>
    %534 = vector.multi_reduction <add>, %533, %cst_176 [1] : vector<78x78xf32> to vector<78xf32>
    %535 = vector.shape_cast %534 : vector<78xf32> to vector<78x1xf32>
    %536 = tpu.reciprocal %535 {approx = true} : vector<78x1xf32> -> vector<78x1xf32>
    %537 = vector.broadcast %536 : vector<78x1xf32> to vector<78x78xf32>
    %538 = arith.mulf %533, %537 : vector<78x78xf32>
    %cst_177 = arith.constant dense<0.000000e+00> : vector<78x2xf32>
    %539 = tpu.matmul %538, %523, %cst_177 {dimension_numbers = #tpu.dot_dimension_numbers<[1], [0], [0], [1], [0, 0, 1, 1], [], []>} : vector<78x78xf32>, vector<78x2xf32>, vector<78x2xf32> -> vector<78x2xf32>
    %c0_178 = arith.constant 0 : index
    %c0_179 = arith.constant 0 : index
    %c0_180 = arith.constant 0 : index
    %540 = vector.load %arg9[%c0_178, %c0_179, %c0_180] : memref<2x4x2xf32, #tpu.memory_space<vmem>>, vector<1x4x2xf32>
    %541 = vector.shape_cast %540 : vector<1x4x2xf32> to vector<4x2xf32>
    %cst_181 = arith.constant dense<0.000000e+00> : vector<78x4xf32>
    %542 = tpu.matmul %539, %541, %cst_181 {dimension_numbers = #tpu.dot_dimension_numbers<[1], [1], [0], [0], [0, 0, 1, 0], [], []>} : vector<78x2xf32>, vector<4x2xf32>, vector<78x4xf32> -> vector<78x4xf32>
    %543 = vector.broadcast %521 : vector<1x4xf32> to vector<78x4xf32>
    %544 = arith.addf %543, %542 : vector<78x4xf32>
    %545 = vector.extract_strided_slice %520 {offsets = [0, 2], sizes = [78, 2], strides = [1, 1]} : vector<78x8xf32> to vector<78x2xf32>
    %546 = vector.extract_strided_slice %520 {offsets = [0, 6], sizes = [78, 2], strides = [1, 1]} : vector<78x8xf32> to vector<78x2xf32>
    %c1_182 = arith.constant 1 : index
    %c0_183 = arith.constant 0 : index
    %c0_184 = arith.constant 0 : index
    %547 = vector.load %arg8[%c1_182, %c0_183, %c0_184] : memref<2x78x2xf32, #tpu.memory_space<vmem>>, vector<1x78x2xf32>
    %548 = vector.shape_cast %547 : vector<1x78x2xf32> to vector<78x2xf32>
    %cst_185 = arith.constant dense<0.000000e+00> : vector<78x78xf32>
    %549 = tpu.matmul %545, %548, %cst_185 {dimension_numbers = #tpu.dot_dimension_numbers<[1], [1], [0], [0], [0, 0, 1, 0], [], []>} : vector<78x2xf32>, vector<78x2xf32>, vector<78x78xf32> -> vector<78x78xf32>
    %cst_186 = arith.constant 0.707106769 : f32
    %550 = vector.broadcast %cst_186 : f32 to vector<78x78xf32>
    %551 = arith.mulf %549, %550 : vector<78x78xf32>
    %cst_187 = arith.constant dense<0xFF800000> : vector<78xf32>
    %552 = vector.multi_reduction <maximumf>, %551, %cst_187 [1] : vector<78x78xf32> to vector<78xf32>
    %553 = vector.shape_cast %552 : vector<78xf32> to vector<78x1xf32>
    %554 = vector.broadcast %553 : vector<78x1xf32> to vector<78x78xf32>
    %555 = arith.subf %551, %554 : vector<78x78xf32>
    %556 = math.exp %555 : vector<78x78xf32>
    %cst_188 = arith.constant dense<0.000000e+00> : vector<78xf32>
    %557 = vector.multi_reduction <add>, %556, %cst_188 [1] : vector<78x78xf32> to vector<78xf32>
    %558 = vector.shape_cast %557 : vector<78xf32> to vector<78x1xf32>
    %559 = tpu.reciprocal %558 {approx = true} : vector<78x1xf32> -> vector<78x1xf32>
    %560 = vector.broadcast %559 : vector<78x1xf32> to vector<78x78xf32>
    %561 = arith.mulf %556, %560 : vector<78x78xf32>
    %cst_189 = arith.constant dense<0.000000e+00> : vector<78x2xf32>
    %562 = tpu.matmul %561, %546, %cst_189 {dimension_numbers = #tpu.dot_dimension_numbers<[1], [0], [0], [1], [0, 0, 1, 1], [], []>} : vector<78x78xf32>, vector<78x2xf32>, vector<78x2xf32> -> vector<78x2xf32>
    %c1_190 = arith.constant 1 : index
    %c0_191 = arith.constant 0 : index
    %c0_192 = arith.constant 0 : index
    %563 = vector.load %arg9[%c1_190, %c0_191, %c0_192] : memref<2x4x2xf32, #tpu.memory_space<vmem>>, vector<1x4x2xf32>
    %564 = vector.shape_cast %563 : vector<1x4x2xf32> to vector<4x2xf32>
    %cst_193 = arith.constant dense<0.000000e+00> : vector<78x4xf32>
    %565 = tpu.matmul %562, %564, %cst_193 {dimension_numbers = #tpu.dot_dimension_numbers<[1], [1], [0], [0], [0, 0, 1, 0], [], []>} : vector<78x2xf32>, vector<4x2xf32>, vector<78x4xf32> -> vector<78x4xf32>
    %566 = arith.addf %544, %565 : vector<78x4xf32>
    %567 = vector.extract_strided_slice %517 {offsets = [0, 4], sizes = [78, 4], strides = [1, 1]} : vector<78x8xf32> to vector<78x4xf32>
    %c0_194 = arith.constant 0 : index
    %c0_195 = arith.constant 0 : index
    %568 = vector.load %arg7[%c0_194, %c0_195] : memref<8x4xf32, #tpu.memory_space<vmem>>, vector<8x4xf32>
    %cst_196 = arith.constant dense<0.000000e+00> : vector<78x8xf32>
    %569 = tpu.matmul %567, %568, %cst_196 {dimension_numbers = #tpu.dot_dimension_numbers<[1], [1], [0], [0], [0, 0, 1, 0], [], []>} : vector<78x4xf32>, vector<8x4xf32>, vector<78x8xf32> -> vector<78x8xf32>
    %c0_197 = arith.constant 0 : index
    %c0_198 = arith.constant 0 : index
    %570 = vector.load %arg10[%c0_197, %c0_198] : memref<1x4xf32, #tpu.memory_space<vmem>>, vector<1x4xf32>
    %571 = vector.extract_strided_slice %569 {offsets = [0, 0], sizes = [78, 2], strides = [1, 1]} : vector<78x8xf32> to vector<78x2xf32>
    %572 = vector.extract_strided_slice %569 {offsets = [0, 4], sizes = [78, 2], strides = [1, 1]} : vector<78x8xf32> to vector<78x2xf32>
    %c0_199 = arith.constant 0 : index
    %c0_200 = arith.constant 0 : index
    %c0_201 = arith.constant 0 : index
    %573 = vector.load %arg8[%c0_199, %c0_200, %c0_201] : memref<2x78x2xf32, #tpu.memory_space<vmem>>, vector<1x78x2xf32>
    %574 = vector.shape_cast %573 : vector<1x78x2xf32> to vector<78x2xf32>
    %cst_202 = arith.constant dense<0.000000e+00> : vector<78x78xf32>
    %575 = tpu.matmul %571, %574, %cst_202 {dimension_numbers = #tpu.dot_dimension_numbers<[1], [1], [0], [0], [0, 0, 1, 0], [], []>} : vector<78x2xf32>, vector<78x2xf32>, vector<78x78xf32> -> vector<78x78xf32>
    %cst_203 = arith.constant 0.707106769 : f32
    %576 = vector.broadcast %cst_203 : f32 to vector<78x78xf32>
    %577 = arith.mulf %575, %576 : vector<78x78xf32>
    %cst_204 = arith.constant dense<0xFF800000> : vector<78xf32>
    %578 = vector.multi_reduction <maximumf>, %577, %cst_204 [1] : vector<78x78xf32> to vector<78xf32>
    %579 = vector.shape_cast %578 : vector<78xf32> to vector<78x1xf32>
    %580 = vector.broadcast %579 : vector<78x1xf32> to vector<78x78xf32>
    %581 = arith.subf %577, %580 : vector<78x78xf32>
    %582 = math.exp %581 : vector<78x78xf32>
    %cst_205 = arith.constant dense<0.000000e+00> : vector<78xf32>
    %583 = vector.multi_reduction <add>, %582, %cst_205 [1] : vector<78x78xf32> to vector<78xf32>
    %584 = vector.shape_cast %583 : vector<78xf32> to vector<78x1xf32>
    %585 = tpu.reciprocal %584 {approx = true} : vector<78x1xf32> -> vector<78x1xf32>
    %586 = vector.broadcast %585 : vector<78x1xf32> to vector<78x78xf32>
    %587 = arith.mulf %582, %586 : vector<78x78xf32>
    %cst_206 = arith.constant dense<0.000000e+00> : vector<78x2xf32>
    %588 = tpu.matmul %587, %572, %cst_206 {dimension_numbers = #tpu.dot_dimension_numbers<[1], [0], [0], [1], [0, 0, 1, 1], [], []>} : vector<78x78xf32>, vector<78x2xf32>, vector<78x2xf32> -> vector<78x2xf32>
    %c0_207 = arith.constant 0 : index
    %c0_208 = arith.constant 0 : index
    %c0_209 = arith.constant 0 : index
    %589 = vector.load %arg9[%c0_207, %c0_208, %c0_209] : memref<2x4x2xf32, #tpu.memory_space<vmem>>, vector<1x4x2xf32>
    %590 = vector.shape_cast %589 : vector<1x4x2xf32> to vector<4x2xf32>
    %cst_210 = arith.constant dense<0.000000e+00> : vector<78x4xf32>
    %591 = tpu.matmul %588, %590, %cst_210 {dimension_numbers = #tpu.dot_dimension_numbers<[1], [1], [0], [0], [0, 0, 1, 0], [], []>} : vector<78x2xf32>, vector<4x2xf32>, vector<78x4xf32> -> vector<78x4xf32>
    %592 = vector.broadcast %570 : vector<1x4xf32> to vector<78x4xf32>
    %593 = arith.addf %592, %591 : vector<78x4xf32>
    %594 = vector.extract_strided_slice %569 {offsets = [0, 2], sizes = [78, 2], strides = [1, 1]} : vector<78x8xf32> to vector<78x2xf32>
    %595 = vector.extract_strided_slice %569 {offsets = [0, 6], sizes = [78, 2], strides = [1, 1]} : vector<78x8xf32> to vector<78x2xf32>
    %c1_211 = arith.constant 1 : index
    %c0_212 = arith.constant 0 : index
    %c0_213 = arith.constant 0 : index
    %596 = vector.load %arg8[%c1_211, %c0_212, %c0_213] : memref<2x78x2xf32, #tpu.memory_space<vmem>>, vector<1x78x2xf32>
    %597 = vector.shape_cast %596 : vector<1x78x2xf32> to vector<78x2xf32>
    %cst_214 = arith.constant dense<0.000000e+00> : vector<78x78xf32>
    %598 = tpu.matmul %594, %597, %cst_214 {dimension_numbers = #tpu.dot_dimension_numbers<[1], [1], [0], [0], [0, 0, 1, 0], [], []>} : vector<78x2xf32>, vector<78x2xf32>, vector<78x78xf32> -> vector<78x78xf32>
    %cst_215 = arith.constant 0.707106769 : f32
    %599 = vector.broadcast %cst_215 : f32 to vector<78x78xf32>
    %600 = arith.mulf %598, %599 : vector<78x78xf32>
    %cst_216 = arith.constant dense<0xFF800000> : vector<78xf32>
    %601 = vector.multi_reduction <maximumf>, %600, %cst_216 [1] : vector<78x78xf32> to vector<78xf32>
    %602 = vector.shape_cast %601 : vector<78xf32> to vector<78x1xf32>
    %603 = vector.broadcast %602 : vector<78x1xf32> to vector<78x78xf32>
    %604 = arith.subf %600, %603 : vector<78x78xf32>
    %605 = math.exp %604 : vector<78x78xf32>
    %cst_217 = arith.constant dense<0.000000e+00> : vector<78xf32>
    %606 = vector.multi_reduction <add>, %605, %cst_217 [1] : vector<78x78xf32> to vector<78xf32>
    %607 = vector.shape_cast %606 : vector<78xf32> to vector<78x1xf32>
    %608 = tpu.reciprocal %607 {approx = true} : vector<78x1xf32> -> vector<78x1xf32>
    %609 = vector.broadcast %608 : vector<78x1xf32> to vector<78x78xf32>
    %610 = arith.mulf %605, %609 : vector<78x78xf32>
    %cst_218 = arith.constant dense<0.000000e+00> : vector<78x2xf32>
    %611 = tpu.matmul %610, %595, %cst_218 {dimension_numbers = #tpu.dot_dimension_numbers<[1], [0], [0], [1], [0, 0, 1, 1], [], []>} : vector<78x78xf32>, vector<78x2xf32>, vector<78x2xf32> -> vector<78x2xf32>
    %c1_219 = arith.constant 1 : index
    %c0_220 = arith.constant 0 : index
    %c0_221 = arith.constant 0 : index
    %612 = vector.load %arg9[%c1_219, %c0_220, %c0_221] : memref<2x4x2xf32, #tpu.memory_space<vmem>>, vector<1x4x2xf32>
    %613 = vector.shape_cast %612 : vector<1x4x2xf32> to vector<4x2xf32>
    %cst_222 = arith.constant dense<0.000000e+00> : vector<78x4xf32>
    %614 = tpu.matmul %611, %613, %cst_222 {dimension_numbers = #tpu.dot_dimension_numbers<[1], [1], [0], [0], [0, 0, 1, 0], [], []>} : vector<78x2xf32>, vector<4x2xf32>, vector<78x4xf32> -> vector<78x4xf32>
    %615 = arith.addf %593, %614 : vector<78x4xf32>
    %616 = tpu.concatenate %566, %615 in 1 : vector<78x4xf32>, vector<78x4xf32> -> vector<78x8xf32>
    %c0_223 = arith.constant 0 : index
    %c0_224 = arith.constant 0 : index
    %617 = vector.load %arg11[%c0_223, %c0_224] : memref<64x78xf32, #tpu.memory_space<vmem>>, vector<64x78xf32>
    %cst_225 = arith.constant dense<0.000000e+00> : vector<64x8xf32>
    %618 = tpu.matmul %617, %616, %cst_225 {dimension_numbers = #tpu.dot_dimension_numbers<[1], [0], [0], [1], [0, 0, 1, 1], [], []>} : vector<64x78xf32>, vector<78x8xf32>, vector<64x8xf32> -> vector<64x8xf32>
    %c0_226 = arith.constant 0 : index
    %c0_227 = arith.constant 0 : index
    %619 = vector.load %arg12[%c0_226, %c0_227] : memref<64x1xf32, #tpu.memory_space<vmem>>, vector<64x1xf32>
    %620 = vector.broadcast %619 : vector<64x1xf32> to vector<64x8xf32>
    %621 = arith.addf %618, %620 : vector<64x8xf32>
    %cst_228 = arith.constant 0.000000e+00 : f32
    %622 = vector.broadcast %cst_228 : f32 to vector<64x8xf32>
    %623 = arith.maximumf %621, %622 : vector<64x8xf32>
    %c0_229 = arith.constant 0 : index
    %c0_230 = arith.constant 0 : index
    %624 = vector.load %arg3[%c0_229, %c0_230] : memref<2x1xf32, #tpu.memory_space<vmem>>, vector<2x1xf32>
    %c0_231 = arith.constant 0 : index
    %c0_232 = arith.constant 0 : index
    %625 = vector.load %arg13[%c0_231, %c0_232] : memref<1x2xf32, #tpu.memory_space<vmem>>, vector<1x2xf32>
    %626 = vector.broadcast %624 : vector<2x1xf32> to vector<2x2xf32>
    %627 = vector.broadcast %625 : vector<1x2xf32> to vector<2x2xf32>
    %628 = arith.mulf %626, %627 : vector<2x2xf32>
    %c0_233 = arith.constant 0 : index
    %c0_234 = arith.constant 0 : index
    %629 = vector.load %arg14[%c0_233, %c0_234] : memref<1x2xf32, #tpu.memory_space<vmem>>, vector<1x2xf32>
    %630 = vector.broadcast %629 : vector<1x2xf32> to vector<2x2xf32>
    %631 = arith.addf %628, %630 : vector<2x2xf32>
    %632 = math.tanh %631 : vector<2x2xf32>
    %c0_235 = arith.constant 0 : index
    %c0_236 = arith.constant 0 : index
    %633 = vector.load %arg15[%c0_235, %c0_236] : memref<4x2xf32, #tpu.memory_space<vmem>>, vector<4x2xf32>
    %cst_237 = arith.constant dense<0.000000e+00> : vector<2x4xf32>
    %634 = tpu.matmul %632, %633, %cst_237 {dimension_numbers = #tpu.dot_dimension_numbers<[1], [1], [0], [0], [0, 0, 1, 0], [], []>} : vector<2x2xf32>, vector<4x2xf32>, vector<2x4xf32> -> vector<2x4xf32>
    %c0_238 = arith.constant 0 : index
    %c0_239 = arith.constant 0 : index
    %635 = vector.load %arg16[%c0_238, %c0_239] : memref<1x4xf32, #tpu.memory_space<vmem>>, vector<1x4xf32>
    %636 = vector.broadcast %635 : vector<1x4xf32> to vector<2x4xf32>
    %637 = arith.addf %634, %636 : vector<2x4xf32>
    %638 = math.tanh %637 : vector<2x4xf32>
    %639 = vector.extract_strided_slice %638 {offsets = [0, 0], sizes = [1, 4], strides = [1, 1]} : vector<2x4xf32> to vector<1x4xf32>
    %640 = vector.extract_strided_slice %638 {offsets = [1, 0], sizes = [1, 4], strides = [1, 1]} : vector<2x4xf32> to vector<1x4xf32>
    %641 = tpu.concatenate %639, %640 in 1 : vector<1x4xf32>, vector<1x4xf32> -> vector<1x8xf32>
    %642 = vector.broadcast %641 : vector<1x8xf32> to vector<64x8xf32>
    %643 = arith.mulf %623, %642 : vector<64x8xf32>
    %c0_240 = arith.constant 0 : index
    %c0_241 = arith.constant 0 : index
    %c0_242 = arith.constant 0 : index
    %644 = vector.load %arg17[%c0_240, %c0_241, %c0_242] : memref<1x64x8xf32, #tpu.memory_space<vmem>>, vector<1x64x8xf32>
    %645 = vector.shape_cast %644 : vector<1x64x8xf32> to vector<64x8xf32>
    %646 = vector.shape_cast %643 : vector<64x8xf32> to vector<1x64x8xf32>
    tpu.vector_store %arg17[%c0_240, %c0_241, %c0_242], %646 {strides = array<i32>} : memref<1x64x8xf32, #tpu.memory_space<vmem>>, vector<1x64x8xf32>,
    return
  }
  func.func @transform_0(%arg0: i32) -> (i32, i32, i32) {
    %c0_i32 = arith.constant 0 : i32
    %c0_i32_0 = arith.constant 0 : i32
    %c0_i32_1 = arith.constant 0 : i32
    return %arg0, %c0_i32, %c0_i32_0 : i32, i32, i32
  }
  func.func @transform_1(%arg0: i32) -> (i32, i32, i32) {
    %c0_i32 = arith.constant 0 : i32
    %c0_i32_0 = arith.constant 0 : i32
    %c0_i32_1 = arith.constant 0 : i32
    return %arg0, %c0_i32, %c0_i32_0 : i32, i32, i32
  }
  func.func @transform_2(%arg0: i32) -> (i32, i32) {
    %c0_i32 = arith.constant 0 : i32
    %c0_i32_0 = arith.constant 0 : i32
    return %arg0, %c0_i32 : i32, i32
  }
  func.func @transform_3(%arg0: i32) -> (i32, i32) {
    %c0_i32 = arith.constant 0 : i32
    %c0_i32_0 = arith.constant 0 : i32
    %c0_i32_1 = arith.constant 0 : i32
    return %c0_i32, %c0_i32_0 : i32, i32
  }
  func.func @transform_4(%arg0: i32) -> (i32, i32) {
    %c0_i32 = arith.constant 0 : i32
    %c0_i32_0 = arith.constant 0 : i32
    %c0_i32_1 = arith.constant 0 : i32
    return %c0_i32, %c0_i32_0 : i32, i32
  }
  func.func @transform_5(%arg0: i32) -> (i32, i32) {
    %c0_i32 = arith.constant 0 : i32
    %c0_i32_0 = arith.constant 0 : i32
    %c0_i32_1 = arith.constant 0 : i32
    return %c0_i32, %c0_i32_0 : i32, i32
  }
  func.func @transform_6(%arg0: i32) -> (i32, i32) {
    %c0_i32 = arith.constant 0 : i32
    %c0_i32_0 = arith.constant 0 : i32
    %c0_i32_1 = arith.constant 0 : i32
    return %c0_i32, %c0_i32_0 : i32, i32
  }
  func.func @transform_7(%arg0: i32) -> (i32, i32, i32) {
    %c0_i32 = arith.constant 0 : i32
    %c0_i32_0 = arith.constant 0 : i32
    %c0_i32_1 = arith.constant 0 : i32
    %c0_i32_2 = arith.constant 0 : i32
    return %c0_i32, %c0_i32_0, %c0_i32_1 : i32, i32, i32
  }
  func.func @transform_8(%arg0: i32) -> (i32, i32, i32) {
    %c0_i32 = arith.constant 0 : i32
    %c0_i32_0 = arith.constant 0 : i32
    %c0_i32_1 = arith.constant 0 : i32
    %c0_i32_2 = arith.constant 0 : i32
    return %c0_i32, %c0_i32_0, %c0_i32_1 : i32, i32, i32
  }
  func.func @transform_9(%arg0: i32) -> (i32, i32) {
    %c0_i32 = arith.constant 0 : i32
    %c0_i32_0 = arith.constant 0 : i32
    %c0_i32_1 = arith.constant 0 : i32
    return %c0_i32, %c0_i32_0 : i32, i32
  }
  func.func @transform_10(%arg0: i32) -> (i32, i32) {
    %c0_i32 = arith.constant 0 : i32
    %c0_i32_0 = arith.constant 0 : i32
    %c0_i32_1 = arith.constant 0 : i32
    return %c0_i32, %c0_i32_0 : i32, i32
  }
  func.func @transform_11(%arg0: i32) -> (i32, i32) {
    %c0_i32 = arith.constant 0 : i32
    %c0_i32_0 = arith.constant 0 : i32
    %c0_i32_1 = arith.constant 0 : i32
    return %c0_i32, %c0_i32_0 : i32, i32
  }
  func.func @transform_12(%arg0: i32) -> (i32, i32) {
    %c0_i32 = arith.constant 0 : i32
    %c0_i32_0 = arith.constant 0 : i32
    %c0_i32_1 = arith.constant 0 : i32
    return %c0_i32, %c0_i32_0 : i32, i32
  }
  func.func @transform_13(%arg0: i32) -> (i32, i32) {
    %c0_i32 = arith.constant 0 : i32
    %c0_i32_0 = arith.constant 0 : i32
    %c0_i32_1 = arith.constant 0 : i32
    return %c0_i32, %c0_i32_0 : i32, i32
  }
  func.func @transform_14(%arg0: i32) -> (i32, i32) {
    %c0_i32 = arith.constant 0 : i32
    %c0_i32_0 = arith.constant 0 : i32
    %c0_i32_1 = arith.constant 0 : i32
    return %c0_i32, %c0_i32_0 : i32, i32
  }
  func.func @transform_15(%arg0: i32) -> (i32, i32) {
    %c0_i32 = arith.constant 0 : i32
    %c0_i32_0 = arith.constant 0 : i32
    %c0_i32_1 = arith.constant 0 : i32
    return %c0_i32, %c0_i32_0 : i32, i32
  }
  func.func @transform_16(%arg0: i32) -> (i32, i32, i32) {
    %c0_i32 = arith.constant 0 : i32
    %c0_i32_0 = arith.constant 0 : i32
    %c0_i32_1 = arith.constant 0 : i32
    return %arg0, %c0_i32, %c0_i32_0 : i32, i32, i32
  }
}

</mosaic_0001>

<llo_original>
// kernel: tpu_custom_call.1
$region0: #{tpu_custom_call.1}
  #allocation0 [shape = 'u32[]', space=smem, size = 0x4, offset = 0x4, fixed_abs, tag = 'smem constant byte address 0x4 - core index']
  #allocation1 [shape = 'u32[144,128]{1,0:T(1,128)}', space=vmem, size = 0x12000, scoped, tag = 'internal scratch']
  %s0 = inlined_call_operand.vmem [shape: f32[2,156,156], index: 0, kind: input, shape index: {}]
  %s1 = inlined_call_operand.vmem [shape: f32[2,156,156], index: 1, kind: input, shape index: {}]
  %s2 = inlined_call_operand.vmem [shape: f32[2,1], index: 2, kind: input, shape index: {}]
  %s3 = inlined_call_operand.vmem [shape: f32[78,1], index: 3, kind: input, shape index: {}]
  %s4 = inlined_call_operand.vmem [shape: f32[78,156], index: 4, kind: input, shape index: {}]
  %s5 = inlined_call_operand.vmem [shape: f32[78,1], index: 5, kind: input, shape index: {}]
  %s6 = inlined_call_operand.vmem [shape: f32[8,4], index: 6, kind: input, shape index: {}]
  %s7 = inlined_call_operand.vmem [shape: f32[2,78,2], index: 7, kind: input, shape index: {}]
  %s8 = inlined_call_operand.vmem [shape: f32[2,4,2], index: 8, kind: input, shape index: {}]
  %s9 = inlined_call_operand.vmem [shape: f32[1,4], index: 9, kind: input, shape index: {}]
  %s10 = inlined_call_operand.vmem [shape: f32[64,78], index: 10, kind: input, shape index: {}]
  %s11 = inlined_call_operand.vmem [shape: f32[64,1], index: 11, kind: input, shape index: {}]
  %s12 = inlined_call_operand.vmem [shape: f32[1,2], index: 12, kind: input, shape index: {}]
  %s13 = inlined_call_operand.vmem [shape: f32[1,2], index: 13, kind: input, shape index: {}]
  %s14 = inlined_call_operand.vmem [shape: f32[4,2], index: 14, kind: input, shape index: {}]
  %s15 = inlined_call_operand.vmem [shape: f32[1,4], index: 15, kind: input, shape index: {}]
  %s16 = inlined_call_operand.vmem [shape: f32[1,64,8], index: 16, kind: output, shape index: {}]
  %s17 = sld [smem:[#allocation0]]
  $region74: #{tpu_custom_call.1} parent=0
    _
  %s19 = ssub.s32 1, %s17
  %s20 = scalar_select 0, %s19, %s17
  // Predicated region
  $region2: #{tpu_custom_call.1} parent=0 // pred_check
    _
  $region3: #{tpu_custom_call.1} parent=0 // pred_check_branch
    %22 = sbr.rel (0) target = $region5
  $region4: #{tpu_custom_call.1} parent=0 // pred_region
    _
  $region5: #{tpu_custom_call.1} parent=0 // pred_fallthru
    _
  // Predicated region
  $region6: #{tpu_custom_call.1} parent=0 // pred_check
    _
  $region7: #{tpu_custom_call.1} parent=0 // pred_check_branch
    %24 = sbr.rel (0) target = $region9
  $region8: #{tpu_custom_call.1} parent=0 // pred_region
    _
  $region9: #{tpu_custom_call.1} parent=0 // pred_fallthru
    _
  // Predicated region
  $region10: #{tpu_custom_call.1} parent=0 // pred_check
    _
  $region11: #{tpu_custom_call.1} parent=0 // pred_check_branch
    %26 = sbr.rel (0) target = $region13
  $region12: #{tpu_custom_call.1} parent=0 // pred_region
    _
  $region13: #{tpu_custom_call.1} parent=0 // pred_fallthru
    _
  // Predicated region
  $region14: #{tpu_custom_call.1} parent=0 // pred_check
    _
  $region15: #{tpu_custom_call.1} parent=0 // pred_check_branch
    %28 = sbr.rel (0) target = $region17
  $region16: #{tpu_custom_call.1} parent=0 // pred_region
    _
  $region17: #{tpu_custom_call.1} parent=0 // pred_fallthru
    _
  // Predicated region
  $region18: #{tpu_custom_call.1} parent=0 // pred_check
    _
  $region19: #{tpu_custom_call.1} parent=0 // pred_check_branch
    %30 = sbr.rel (0) target = $region21
  $region20: #{tpu_custom_call.1} parent=0 // pred_region
    _
  $region21: #{tpu_custom_call.1} parent=0 // pred_fallthru
    _
  // Predicated region
  $region22: #{tpu_custom_call.1} parent=0 // pred_check
    _
  $region23: #{tpu_custom_call.1} parent=0 // pred_check_branch
    %32 = sbr.rel (0) target = $region25
  $region24: #{tpu_custom_call.1} parent=0 // pred_region
    _
  $region25: #{tpu_custom_call.1} parent=0 // pred_fallthru
    _
  // Predicated region
  $region26: #{tpu_custom_call.1} parent=0 // pred_check
    _
  $region27: #{tpu_custom_call.1} parent=0 // pred_check_branch
    %34 = sbr.rel (0) target = $region29
  $region28: #{tpu_custom_call.1} parent=0 // pred_region
    _
  $region29: #{tpu_custom_call.1} parent=0 // pred_fallthru
    _
  // Predicated region
  $region30: #{tpu_custom_call.1} parent=0 // pred_check
    _
  $region31: #{tpu_custom_call.1} parent=0 // pred_check_branch
    %36 = sbr.rel (0) target = $region33
  $region32: #{tpu_custom_call.1} parent=0 // pred_region
    _
  $region33: #{tpu_custom_call.1} parent=0 // pred_fallthru
    _
  // Predicated region
  $region34: #{tpu_custom_call.1} parent=0 // pred_check
    _
  $region35: #{tpu_custom_call.1} parent=0 // pred_check_branch
    %38 = sbr.rel (0) target = $region37
  $region36: #{tpu_custom_call.1} parent=0 // pred_region
    _
  $region37: #{tpu_custom_call.1} parent=0 // pred_fallthru
    _
  // Predicated region
  $region38: #{tpu_custom_call.1} parent=0 // pred_check
    _
  $region39: #{tpu_custom_call.1} parent=0 // pred_check_branch
    %40 = sbr.rel (0) target = $region41
  $region40: #{tpu_custom_call.1} parent=0 // pred_region
    _
  $region41: #{tpu_custom_call.1} parent=0 // pred_fallthru
    _
  // Predicated region
  $region42: #{tpu_custom_call.1} parent=0 // pred_check
    _
  $region43: #{tpu_custom_call.1} parent=0 // pred_check_branch
    %42 = sbr.rel (0) target = $region45
  $region44: #{tpu_custom_call.1} parent=0 // pred_region
    _
  $region45: #{tpu_custom_call.1} parent=0 // pred_fallthru
    _
  // Predicated region
  $region46: #{tpu_custom_call.1} parent=0 // pred_check
    _
  $region47: #{tpu_custom_call.1} parent=0 // pred_check_branch
    %44 = sbr.rel (0) target = $region49
  $region48: #{tpu_custom_call.1} parent=0 // pred_region
    _
  $region49: #{tpu_custom_call.1} parent=0 // pred_fallthru
    _
  // Predicated region
  $region50: #{tpu_custom_call.1} parent=0 // pred_check
    _
  $region51: #{tpu_custom_call.1} parent=0 // pred_check_branch
    %46 = sbr.rel (0) target = $region53
  $region52: #{tpu_custom_call.1} parent=0 // pred_region
    _
  $region53: #{tpu_custom_call.1} parent=0 // pred_fallthru
    _
  // Predicated region
  $region54: #{tpu_custom_call.1} parent=0 // pred_check
    _
  $region55: #{tpu_custom_call.1} parent=0 // pred_check_branch
    %48 = sbr.rel (0) target = $region57
  $region56: #{tpu_custom_call.1} parent=0 // pred_region
    _
  $region57: #{tpu_custom_call.1} parent=0 // pred_fallthru
    _
  // Predicated region
  $region58: #{tpu_custom_call.1} parent=0 // pred_check
    _
  $region59: #{tpu_custom_call.1} parent=0 // pred_check_branch
    %50 = sbr.rel (0) target = $region61
  $region60: #{tpu_custom_call.1} parent=0 // pred_region
    _
  $region61: #{tpu_custom_call.1} parent=0 // pred_fallthru
    _
  // Predicated region
  $region62: #{tpu_custom_call.1} parent=0 // pred_check
    _
  $region63: #{tpu_custom_call.1} parent=0 // pred_check_branch
    %52 = sbr.rel (0) target = $region65
  $region64: #{tpu_custom_call.1} parent=0 // pred_region
    _
  $region65: #{tpu_custom_call.1} parent=0 // pred_fallthru
    _
  %v53 = vlaneseq
  %v54 = vshrl.u32 %v53, 7
  %v55 = vadd.s32 %v54, 8
  %v56 = vadd.s32 %v54, 16
  %v57 = vadd.s32 %v54, 24
  %v58 = vadd.s32 %v54, 32
  %v59 = vadd.s32 %v54, 40
  %v60 = vadd.s32 %v54, 48
  %v61 = vadd.s32 %v54, 56
  %v62 = vadd.s32 %v54, 64
  %v63 = vadd.s32 %v54, 72
  %v64 = vlaneseq
  %v65 = vand.u32 %v64, 127
  %vm66 = vcmp.le.s32.totalorder %v54, %v65
  %vm67 = vcmp.le.s32.totalorder %v55, %v65
  %vm68 = vcmp.le.s32.totalorder %v56, %v65
  %vm69 = vcmp.le.s32.totalorder %v57, %v65
  %vm70 = vcmp.le.s32.totalorder %v58, %v65
  %vm71 = vcmp.le.s32.totalorder %v59, %v65
  %vm72 = vcmp.le.s32.totalorder %v60, %v65
  %vm73 = vcmp.le.s32.totalorder %v61, %v65
  %vm74 = vcmp.le.s32.totalorder %v62, %v65
  %vm75 = vcmp.le.s32.totalorder %v63, %v65
  %vm76 = vcmp.lt.s32.totalorder %v54, %v65
  %vm77 = vcmp.lt.s32.totalorder %v55, %v65
  %vm78 = vcmp.lt.s32.totalorder %v56, %v65
  %vm79 = vcmp.lt.s32.totalorder %v57, %v65
  %vm80 = vcmp.lt.s32.totalorder %v58, %v65
  %vm81 = vcmp.lt.s32.totalorder %v59, %v65
  %vm82 = vcmp.lt.s32.totalorder %v60, %v65
  %vm83 = vcmp.lt.s32.totalorder %v61, %v65
  %vm84 = vcmp.lt.s32.totalorder %v62, %v65
  %vm85 = vcmp.lt.s32.totalorder %v63, %v65
  %vm86 = vcmp.ge.s32.totalorder %v54, %v65
  %vm87 = vcmp.ge.s32.totalorder %v55, %v65
  %vm88 = vcmp.ge.s32.totalorder %v56, %v65
  %vm89 = vcmp.ge.s32.totalorder %v57, %v65
  %vm90 = vcmp.ge.s32.totalorder %v58, %v65
  %vm91 = vcmp.ge.s32.totalorder %v59, %v65
  %vm92 = vcmp.ge.s32.totalorder %v60, %v65
  %vm93 = vcmp.ge.s32.totalorder %v61, %v65
  %vm94 = vcmp.ge.s32.totalorder %v62, %v65
  %vm95 = vcmp.ge.s32.totalorder %v63, %v65
  %vm96 = vcmp.gt.s32.totalorder %v54, %v65
  %vm97 = vcmp.gt.s32.totalorder %v55, %v65
  %vm98 = vcmp.gt.s32.totalorder %v56, %v65
  %vm99 = vcmp.gt.s32.totalorder %v57, %v65
  %vm100 = vcmp.gt.s32.totalorder %v58, %v65
  %vm101 = vcmp.gt.s32.totalorder %v59, %v65
  %vm102 = vcmp.gt.s32.totalorder %v60, %v65
  %vm103 = vcmp.gt.s32.totalorder %v61, %v65
  %vm104 = vcmp.gt.s32.totalorder %v62, %v65
  %vm105 = vcmp.gt.s32.totalorder %v63, %v65
  %v106 = vadd.s32 %v54, %v65
  %v107 = vadd.s32 %v55, %v65
  %v108 = vadd.s32 %v56, %v65
  %v109 = vadd.s32 %v57, %v65
  %v110 = vadd.s32 %v58, %v65
  %v111 = vadd.s32 %v59, %v65
  %v112 = vadd.s32 %v60, %v65
  %v113 = vadd.s32 %v61, %v65
  %v114 = vadd.s32 %v62, %v65
  %v115 = vadd.s32 %v63, %v65
  %vm116 = vcmp.le.s32.totalorder %v106, 78
  %vm117 = vcmp.le.s32.totalorder %v107, 78
  %vm118 = vcmp.le.s32.totalorder %v108, 78
  %vm119 = vcmp.le.s32.totalorder %v109, 78
  %vm120 = vcmp.le.s32.totalorder %v110, 78
  %vm121 = vcmp.le.s32.totalorder %v111, 78
  %vm122 = vcmp.le.s32.totalorder %v112, 78
  %vm123 = vcmp.le.s32.totalorder %v113, 78
  %vm124 = vcmp.le.s32.totalorder %v114, 78
  %vm125 = vcmp.le.s32.totalorder %v115, 78
  %vm126 = vcmp.lt.s32.totalorder %v106, 78
  %vm127 = vcmp.lt.s32.totalorder %v107, 78
  %vm128 = vcmp.lt.s32.totalorder %v108, 78
  %vm129 = vcmp.lt.s32.totalorder %v109, 78
  %vm130 = vcmp.lt.s32.totalorder %v110, 78
  %vm131 = vcmp.lt.s32.totalorder %v111, 78
  %vm132 = vcmp.lt.s32.totalorder %v112, 78
  %vm133 = vcmp.lt.s32.totalorder %v113, 78
  %vm134 = vcmp.lt.s32.totalorder %v114, 78
  %vm135 = vcmp.lt.s32.totalorder %v115, 78
  %vm136 = vcmp.ge.s32.totalorder %v106, 78
  %vm137 = vcmp.ge.s32.totalorder %v107, 78
  %vm138 = vcmp.ge.s32.totalorder %v108, 78
  %vm139 = vcmp.ge.s32.totalorder %v109, 78
  %vm140 = vcmp.ge.s32.totalorder %v110, 78
  %vm141 = vcmp.ge.s32.totalorder %v111, 78
  %vm142 = vcmp.ge.s32.totalorder %v112, 78
  %vm143 = vcmp.ge.s32.totalorder %v113, 78
  %vm144 = vcmp.ge.s32.totalorder %v114, 78
  %vm145 = vcmp.ge.s32.totalorder %v115, 78
  %vm146 = vcmp.gt.s32.totalorder %v106, 78
  %vm147 = vcmp.gt.s32.totalorder %v107, 78
  %vm148 = vcmp.gt.s32.totalorder %v108, 78
  %vm149 = vcmp.gt.s32.totalorder %v109, 78
  %vm150 = vcmp.gt.s32.totalorder %v110, 78
  %vm151 = vcmp.gt.s32.totalorder %v111, 78
  %vm152 = vcmp.gt.s32.totalorder %v112, 78
  %vm153 = vcmp.gt.s32.totalorder %v113, 78
  %vm154 = vcmp.gt.s32.totalorder %v114, 78
  %vm155 = vcmp.gt.s32.totalorder %v115, 78
  %v156 = vadd.s32 %v54, 1
  %v157 = vadd.s32 %v55, 1
  %v158 = vadd.s32 %v56, 1
  %v159 = vadd.s32 %v57, 1
  %v160 = vadd.s32 %v58, 1
  %v161 = vadd.s32 %v59, 1
  %v162 = vadd.s32 %v60, 1
  %v163 = vadd.s32 %v61, 1
  %v164 = vadd.s32 %v62, 1
  %v165 = vadd.s32 %v63, 1
  %vm166 = vcmp.le.s32.totalorder %v65, %v156
  %vm167 = vcmp.le.s32.totalorder %v65, %v157
  %vm168 = vcmp.le.s32.totalorder %v65, %v158
  %vm169 = vcmp.le.s32.totalorder %v65, %v159
  %vm170 = vcmp.le.s32.totalorder %v65, %v160
  %vm171 = vcmp.le.s32.totalorder %v65, %v161
  %vm172 = vcmp.le.s32.totalorder %v65, %v162
  %vm173 = vcmp.le.s32.totalorder %v65, %v163
  %vm174 = vcmp.le.s32.totalorder %v65, %v164
  %vm175 = vcmp.le.s32.totalorder %v65, %v165
  %vm176 = vcmp.ge.s32.totalorder %v106, 77
  %vm177 = vcmp.ge.s32.totalorder %v107, 77
  %vm178 = vcmp.ge.s32.totalorder %v108, 77
  %vm179 = vcmp.ge.s32.totalorder %v109, 77
  %vm180 = vcmp.ge.s32.totalorder %v110, 77
  %vm181 = vcmp.ge.s32.totalorder %v111, 77
  %vm182 = vcmp.ge.s32.totalorder %v112, 77
  %vm183 = vcmp.ge.s32.totalorder %v113, 77
  %vm184 = vcmp.ge.s32.totalorder %v114, 77
  %vm185 = vcmp.ge.s32.totalorder %v115, 77
  %vm186 = vcmp.eq.s32.totalorder %v54, 77
  %vm187 = vcmp.eq.s32.totalorder %v55, 77
  %vm188 = vcmp.eq.s32.totalorder %v56, 77
  %vm189 = vcmp.eq.s32.totalorder %v57, 77
  %vm190 = vcmp.eq.s32.totalorder %v58, 77
  %vm191 = vcmp.eq.s32.totalorder %v59, 77
  %vm192 = vcmp.eq.s32.totalorder %v60, 77
  %vm193 = vcmp.eq.s32.totalorder %v61, 77
  %vm194 = vcmp.eq.s32.totalorder %v62, 77
  %vm195 = vcmp.eq.s32.totalorder %v63, 77
  %v196 = vld [vmem:[%s3] sm:$0xff]
  %v197 = vld [vmem:[%s3 + $0x8] sm:$0xff]
  %v198 = vld [vmem:[%s3 + $0x10] sm:$0xff]
  %v199 = vld [vmem:[%s3 + $0x18] sm:$0xff]
  %v200 = vld [vmem:[%s3 + $0x20] sm:$0xff]
  %v201 = vld [vmem:[%s3 + $0x28] sm:$0xff]
  %v202 = vld [vmem:[%s3 + $0x30] sm:$0xff]
  %v203 = vld [vmem:[%s3 + $0x38] sm:$0xff]
  %v204 = vld [vmem:[%s3 + $0x40] sm:$0xff]
  %v205 = vld [vmem:[%s3 + $0x48] sm:$0x3f]
  %v206 = vld [vmem:[%s0] sm:$0xff]
  %v207 = vld [vmem:[%s0 + $0x8] sm:$0xff]
  %v208 = vld [vmem:[%s0 + $0x10] sm:$0xff]
  %v209 = vld [vmem:[%s0 + $0x18] sm:$0xff]
  %v210 = vld [vmem:[%s0 + $0x20] sm:$0xff]
  %v211 = vld [vmem:[%s0 + $0x28] sm:$0xff]
  %v212 = vld [vmem:[%s0 + $0x30] sm:$0xff]
  %v213 = vld [vmem:[%s0 + $0x38] sm:$0xff]
  %v214 = vld [vmem:[%s0 + $0x40] sm:$0xff]
  %v215 = vld [vmem:[%s0 + $0x48] sm:$0xff]
  %v216 = vld [vmem:[%s0 + $0x50] sm:$0xff]
  %v217 = vld [vmem:[%s0 + $0x58] sm:$0xff]
  %v218 = vld [vmem:[%s0 + $0x60] sm:$0xff]
  %v219 = vld [vmem:[%s0 + $0x68] sm:$0xff]
  %v220 = vld [vmem:[%s0 + $0x70] sm:$0xff]
  %v221 = vld [vmem:[%s0 + $0x78] sm:$0xff]
  %v222 = vld [vmem:[%s0 + $0x80] sm:$0xff]
  %v223 = vld [vmem:[%s0 + $0x88] sm:$0xff]
  %v224 = vld [vmem:[%s0 + $0x90] sm:$0xff]
  %v225 = vld [vmem:[%s0 + $0x98] sm:$0xff]
  %v226 = vld [vmem:[%s0 + $0xa0] sm:$0xff]
  %v227 = vld [vmem:[%s0 + $0xa8] sm:$0xff]
  %v228 = vld [vmem:[%s0 + $0xb0] sm:$0xff]
  %v229 = vld [vmem:[%s0 + $0xb8] sm:$0xff]
  %v230 = vld [vmem:[%s0 + $0xc0] sm:$0xff]
  %v231 = vld [vmem:[%s0 + $0xc8] sm:$0xff]
  %v232 = vld [vmem:[%s0 + $0xd0] sm:$0xff]
  %v233 = vld [vmem:[%s0 + $0xd8] sm:$0xff]
  %v234 = vld [vmem:[%s0 + $0xe0] sm:$0xff]
  %v235 = vld [vmem:[%s0 + $0xe8] sm:$0xff]
  %v236 = vld [vmem:[%s0 + $0xf0] sm:$0xff]
  %v237 = vld [vmem:[%s0 + $0xf8] sm:$0xff]
  %v238 = vld [vmem:[%s0 + $0x100] sm:$0xff]
  %v239 = vld [vmem:[%s0 + $0x108] sm:$0xff]
  %v240 = vld [vmem:[%s0 + $0x110] sm:$0xff]
  %v241 = vld [vmem:[%s0 + $0x118] sm:$0xff]
  %v242 = vld [vmem:[%s0 + $0x120] sm:$0xff]
  %v243 = vld [vmem:[%s0 + $0x128] sm:$0xff]
  %v244 = vld [vmem:[%s0 + $0x130] sm:$0xf]
  %v245 = vld [vmem:[%s0 + $0x138] sm:$0xf]
  %v246 = vld [vmem:[%s1] sm:$0xff]
  %v247 = vld [vmem:[%s1 + $0x8] sm:$0xff]
  %v248 = vld [vmem:[%s1 + $0x10] sm:$0xff]
  %v249 = vld [vmem:[%s1 + $0x18] sm:$0xff]
  %v250 = vld [vmem:[%s1 + $0x20] sm:$0xff]
  %v251 = vld [vmem:[%s1 + $0x28] sm:$0xff]
  %v252 = vld [vmem:[%s1 + $0x30] sm:$0xff]
  %v253 = vld [vmem:[%s1 + $0x38] sm:$0xff]
  %v254 = vld [vmem:[%s1 + $0x40] sm:$0xff]
  %v255 = vld [vmem:[%s1 + $0x48] sm:$0xff]
  %v256 = vld [vmem:[%s1 + $0x50] sm:$0xff]
  %v257 = vld [vmem:[%s1 + $0x58] sm:$0xff]
  %v258 = vld [vmem:[%s1 + $0x60] sm:$0xff]
  %v259 = vld [vmem:[%s1 + $0x68] sm:$0xff]
  %v260 = vld [vmem:[%s1 + $0x70] sm:$0xff]
  %v261 = vld [vmem:[%s1 + $0x78] sm:$0xff]
  %v262 = vld [vmem:[%s1 + $0x80] sm:$0xff]
  %v263 = vld [vmem:[%s1 + $0x88] sm:$0xff]
  %v264 = vld [vmem:[%s1 + $0x90] sm:$0xff]
  %v265 = vld [vmem:[%s1 + $0x98] sm:$0xff]
  %v266 = vld [vmem:[%s1 + $0xa0] sm:$0xff]
  %v267 = vld [vmem:[%s1 + $0xa8] sm:$0xff]
  %v268 = vld [vmem:[%s1 + $0xb0] sm:$0xff]
  %v269 = vld [vmem:[%s1 + $0xb8] sm:$0xff]
  %v270 = vld [vmem:[%s1 + $0xc0] sm:$0xff]
  %v271 = vld [vmem:[%s1 + $0xc8] sm:$0xff]
  %v272 = vld [vmem:[%s1 + $0xd0] sm:$0xff]
  %v273 = vld [vmem:[%s1 + $0xd8] sm:$0xff]
  %v274 = vld [vmem:[%s1 + $0xe0] sm:$0xff]
  %v275 = vld [vmem:[%s1 + $0xe8] sm:$0xff]
  %v276 = vld [vmem:[%s1 + $0xf0] sm:$0xff]
  %v277 = vld [vmem:[%s1 + $0xf8] sm:$0xff]
  %v278 = vld [vmem:[%s1 + $0x100] sm:$0xff]
  %v279 = vld [vmem:[%s1 + $0x108] sm:$0xff]
  %v280 = vld [vmem:[%s1 + $0x110] sm:$0xff]
  %v281 = vld [vmem:[%s1 + $0x118] sm:$0xff]
  %v282 = vld [vmem:[%s1 + $0x120] sm:$0xff]
  %v283 = vld [vmem:[%s1 + $0x128] sm:$0xff]
  %v284 = vld [vmem:[%s1 + $0x130] sm:$0xf]
  %v285 = vld [vmem:[%s1 + $0x138] sm:$0xf]
  %v286 = vsel %vm86, %v246, 0.0
  %v287 = vsel %vm87, %v248, 0.0
  %v288 = vsel %vm88, %v250, 0.0
  %v289 = vsel %vm89, %v252, 0.0
  %v290 = vsel %vm90, %v254, 0.0
  %v291 = vsel %vm91, %v256, 0.0
  %v292 = vsel %vm92, %v258, 0.0
  %v293 = vsel %vm93, %v260, 0.0
  %v294 = vsel %vm94, %v262, 0.0
  %v295 = vsel %vm95, %v264, 0.0
  %vm296 = vcmask 646144
  %v297 = vsel %vm296, %v286, 0.0
  %v298 = vsel %vm296, %v287, 0.0
  %v299 = vadd.f32 %v297, %v298
  %v300 = vsel %vm296, %v288, 0.0
  %v301 = vadd.f32 %v299, %v300
  %v302 = vsel %vm296, %v289, 0.0
  %v303 = vadd.f32 %v301, %v302
  %v304 = vsel %vm296, %v290, 0.0
  %v305 = vadd.f32 %v303, %v304
  %v306 = vsel %vm296, %v291, 0.0
  %v307 = vadd.f32 %v305, %v306
  %v308 = vsel %vm296, %v292, 0.0
  %v309 = vadd.f32 %v307, %v308
  %v310 = vsel %vm296, %v293, 0.0
  %v311 = vadd.f32 %v309, %v310
  %v312 = vsel %vm296, %v294, 0.0
  %v313 = vadd.f32 %v311, %v312
  %vm314 = vcmask 645120
  %v315 = vsel %vm314, %v295, 0.0
  %v316 = vadd.f32 %v313, %v315
  %v317 = vrot.slane %v316, 4
  %v318 = vadd.f32 %v316, %v317
  %v319 = vrot.slane %v318, 2
  %v320 = vadd.f32 %v318, %v319
  %v321 = vrot.slane %v320, 1
  %v322 = vadd.f32 %v320, %v321
  %v323 = vsel %vm86, %v246, -3.4028235e+38
  %v324 = vsel %vm87, %v248, -3.4028235e+38
  %v325 = vsel %vm88, %v250, -3.4028235e+38
  %v326 = vsel %vm89, %v252, -3.4028235e+38
  %v327 = vsel %vm90, %v254, -3.4028235e+38
  %v328 = vsel %vm91, %v256, -3.4028235e+38
  %v329 = vsel %vm92, %v258, -3.4028235e+38
  %v330 = vsel %vm93, %v260, -3.4028235e+38
  %v331 = vsel %vm94, %v262, -3.4028235e+38
  %v332 = vsel %vm95, %v264, -3.4028235e+38
  %v333 = vsel %vm296, %v323, -inf
  %v334 = vsel %vm296, %v324, -inf
  %v335 = vsel %vm296, %v325, -inf
  %v336 = vsel %vm296, %v326, -inf
  %v337 = vsel %vm296, %v327, -inf
  %v338 = vmax.f32 %v333, %v337
  %v339 = vsel %vm296, %v328, -inf
  %v340 = vmax.f32 %v334, %v339
  %v341 = vsel %vm296, %v329, -inf
  %v342 = vmax.f32 %v335, %v341
  %v343 = vsel %vm296, %v330, -inf
  %v344 = vmax.f32 %v336, %v343
  %v345 = vsel %vm296, %v331, -inf
  %v346 = vmax.f32 %v338, %v345
  %v347 = vsel %vm314, %v332, -inf
  %v348 = vmax.f32 %v340, %v347
  %v349 = vmax.f32 %v346, %v348
  %v350 = vmax.f32 %v342, %v344
  %v351 = vmax.f32 %v349, %v350
  %v352 = vrot.slane %v351, 4
  %v353 = vmax.f32 %v351, %v352
  %v354 = vrot.slane %v353, 2
  %v355 = vmax.f32 %v353, %v354
  %v356 = vrot.slane %v355, 1
  %v357 = vmax.f32 %v355, %v356
  %v358 = vsel %vm96, %v206, 0.0
  %v359 = vsel %vm97, %v208, 0.0
  %v360 = vsel %vm98, %v210, 0.0
  %v361 = vsel %vm99, %v212, 0.0
  %v362 = vsel %vm100, %v214, 0.0
  %v363 = vsel %vm101, %v216, 0.0
  %v364 = vsel %vm102, %v218, 0.0
  %v365 = vsel %vm103, %v220, 0.0
  %v366 = vsel %vm104, %v222, 0.0
  %v367 = vsel %vm105, %v224, 0.0
  %v368 = vsel %vm296, %v358, 0.0
  %v369 = vsel %vm296, %v359, 0.0
  %v370 = vadd.f32 %v368, %v369
  %v371 = vsel %vm296, %v360, 0.0
  %v372 = vadd.f32 %v370, %v371
  %v373 = vsel %vm296, %v361, 0.0
  %v374 = vadd.f32 %v372, %v373
  %v375 = vsel %vm296, %v362, 0.0
  %v376 = vadd.f32 %v374, %v375
  %v377 = vsel %vm296, %v363, 0.0
  %v378 = vadd.f32 %v376, %v377
  %v379 = vsel %vm296, %v364, 0.0
  %v380 = vadd.f32 %v378, %v379
  %v381 = vsel %vm296, %v365, 0.0
  %v382 = vadd.f32 %v380, %v381
  %v383 = vsel %vm296, %v366, 0.0
  %v384 = vadd.f32 %v382, %v383
  %v385 = vsel %vm314, %v367, 0.0
  %v386 = vadd.f32 %v384, %v385
  %v387 = vrot.slane %v386, 4
  %v388 = vadd.f32 %v386, %v387
  %v389 = vrot.slane %v388, 2
  %v390 = vadd.f32 %v388, %v389
  %v391 = vrot.slane %v390, 1
  %v392 = vadd.f32 %v390, %v391
  %v393 = vsel %vm86, %v206, -3.4028235e+38
  %v394 = vsel %vm87, %v208, -3.4028235e+38
  %v395 = vsel %vm88, %v210, -3.4028235e+38
  %v396 = vsel %vm89, %v212, -3.4028235e+38
  %v397 = vsel %vm90, %v214, -3.4028235e+38
  %v398 = vsel %vm91, %v216, -3.4028235e+38
  %v399 = vsel %vm92, %v218, -3.4028235e+38
  %v400 = vsel %vm93, %v220, -3.4028235e+38
  %v401 = vsel %vm94, %v222, -3.4028235e+38
  %v402 = vsel %vm95, %v224, -3.4028235e+38
  %v403 = vsel %vm296, %v393, -inf
  %v404 = vsel %vm296, %v394, -inf
  %v405 = vsel %vm296, %v395, -inf
  %v406 = vsel %vm296, %v396, -inf
  %v407 = vsel %vm296, %v397, -inf
  %v408 = vmax.f32 %v403, %v407
  %v409 = vsel %vm296, %v398, -inf
  %v410 = vmax.f32 %v404, %v409
  %v411 = vsel %vm296, %v399, -inf
  %v412 = vmax.f32 %v405, %v411
  %v413 = vsel %vm296, %v400, -inf
  %v414 = vmax.f32 %v406, %v413
  %v415 = vsel %vm296, %v401, -inf
  %v416 = vmax.f32 %v408, %v415
  %v417 = vsel %vm314, %v402, -inf
  %v418 = vmax.f32 %v410, %v417
  %v419 = vmax.f32 %v416, %v418
  %v420 = vmax.f32 %v412, %v414
  %v421 = vmax.f32 %v419, %v420
  %v422 = vrot.slane %v421, 4
  %v423 = vmax.f32 %v421, %v422
  %v424 = vrot.slane %v423, 2
  %v425 = vmax.f32 %v423, %v424
  %v426 = vrot.slane %v425, 1
  %v427 = vmax.f32 %v425, %v426
  %v428 = vsel %vm176, %v322, 0.0
  %v429 = vsel %vm177, %v322, 0.0
  %v430 = vsel %vm178, %v322, 0.0
  %v431 = vsel %vm179, %v322, 0.0
  %v432 = vsel %vm180, %v322, 0.0
  %v433 = vsel %vm181, %v322, 0.0
  %v434 = vsel %vm182, %v322, 0.0
  %v435 = vsel %vm183, %v322, 0.0
  %v436 = vsel %vm184, %v322, 0.0
  %v437 = vsel %vm185, %v322, 0.0
  %v438 = vsel %vm296, %v428, 0.0
  %439 = vadd.xlane.f32.xlu0 %v438
  %v440 = vpop.xlane.xlu0 %439
  %v441 = vsel %vm296, %v429, 0.0
  %442 = vadd.xlane.f32.xlu0 %v441
  %v443 = vpop.xlane.xlu0 %442
  %v444 = vsel %vm296, %v430, 0.0
  %445 = vadd.xlane.f32.xlu0 %v444
  %v446 = vpop.xlane.xlu0 %445
  %v447 = vsel %vm296, %v431, 0.0
  %448 = vadd.xlane.f32.xlu0 %v447
  %v449 = vpop.xlane.xlu0 %448
  %v450 = vsel %vm296, %v432, 0.0
  %451 = vadd.xlane.f32.xlu0 %v450
  %v452 = vpop.xlane.xlu0 %451
  %v453 = vsel %vm296, %v433, 0.0
  %454 = vadd.xlane.f32.xlu0 %v453
  %v455 = vpop.xlane.xlu0 %454
  %v456 = vsel %vm296, %v434, 0.0
  %457 = vadd.xlane.f32.xlu0 %v456
  %v458 = vpop.xlane.xlu0 %457
  %v459 = vsel %vm296, %v435, 0.0
  %460 = vadd.xlane.f32.xlu0 %v459
  %v461 = vpop.xlane.xlu0 %460
  %v462 = vsel %vm296, %v436, 0.0
  %463 = vadd.xlane.f32.xlu0 %v462
  %v464 = vpop.xlane.xlu0 %463
  %vm465 = vcmask 644096
  %v466 = vsel %vm465, %v437, 0.0
  %467 = vadd.xlane.f32.xlu0 %v466
  %v468 = vpop.xlane.xlu0 %467
  %v469 = vsel %vm176, %v392, 0.0
  %v470 = vsel %vm177, %v392, 0.0
  %v471 = vsel %vm178, %v392, 0.0
  %v472 = vsel %vm179, %v392, 0.0
  %v473 = vsel %vm180, %v392, 0.0
  %v474 = vsel %vm181, %v392, 0.0
  %v475 = vsel %vm182, %v392, 0.0
  %v476 = vsel %vm183, %v392, 0.0
  %v477 = vsel %vm184, %v392, 0.0
  %v478 = vsel %vm185, %v392, 0.0
  %v479 = vsel %vm296, %v469, 0.0
  %480 = vadd.xlane.f32.xlu0 %v479
  %v481 = vpop.xlane.xlu0 %480
  %v482 = vsel %vm296, %v470, 0.0
  %483 = vadd.xlane.f32.xlu0 %v482
  %v484 = vpop.xlane.xlu0 %483
  %v485 = vsel %vm296, %v471, 0.0
  %486 = vadd.xlane.f32.xlu0 %v485
  %v487 = vpop.xlane.xlu0 %486
  %v488 = vsel %vm296, %v472, 0.0
  %489 = vadd.xlane.f32.xlu0 %v488
  %v490 = vpop.xlane.xlu0 %489
  %v491 = vsel %vm296, %v473, 0.0
  %492 = vadd.xlane.f32.xlu0 %v491
  %v493 = vpop.xlane.xlu0 %492
  %v494 = vsel %vm296, %v474, 0.0
  %495 = vadd.xlane.f32.xlu0 %v494
  %v496 = vpop.xlane.xlu0 %495
  %v497 = vsel %vm296, %v475, 0.0
  %498 = vadd.xlane.f32.xlu0 %v497
  %v499 = vpop.xlane.xlu0 %498
  %v500 = vsel %vm296, %v476, 0.0
  %501 = vadd.xlane.f32.xlu0 %v500
  %v502 = vpop.xlane.xlu0 %501
  %v503 = vsel %vm296, %v477, 0.0
  %504 = vadd.xlane.f32.xlu0 %v503
  %v505 = vpop.xlane.xlu0 %504
  %v506 = vsel %vm465, %v478, 0.0
  %507 = vadd.xlane.f32.xlu0 %v506
  %v508 = vpop.xlane.xlu0 %507
  %v509 = vadd.f32 %v440, %v481
  %v510 = vadd.f32 %v443, %v484
  %v511 = vadd.f32 %v446, %v487
  %v512 = vadd.f32 %v449, %v490
  %v513 = vadd.f32 %v452, %v493
  %v514 = vadd.f32 %v455, %v496
  %v515 = vadd.f32 %v458, %v499
  %v516 = vadd.f32 %v461, %v502
  %v517 = vadd.f32 %v464, %v505
  %v518 = vadd.f32 %v468, %v508
  %v519 = vsel %vm176, %v357, -3.4028235e+38
  %v520 = vsel %vm177, %v357, -3.4028235e+38
  %v521 = vsel %vm178, %v357, -3.4028235e+38
  %v522 = vsel %vm179, %v357, -3.4028235e+38
  %v523 = vsel %vm180, %v357, -3.4028235e+38
  %v524 = vsel %vm181, %v357, -3.4028235e+38
  %v525 = vsel %vm182, %v357, -3.4028235e+38
  %v526 = vsel %vm183, %v357, -3.4028235e+38
  %v527 = vsel %vm184, %v357, -3.4028235e+38
  %v528 = vsel %vm185, %v357, -3.4028235e+38
  %v529 = vsel %vm296, %v519, -inf
  %530 = vmax.xlane.f32.xlu0 %v529
  %v531 = vpop.xlane.xlu0 %530
  %v532 = vsel %vm296, %v520, -inf
  %533 = vmax.xlane.f32.xlu0 %v532
  %v534 = vpop.xlane.xlu0 %533
  %v535 = vsel %vm296, %v521, -inf
  %536 = vmax.xlane.f32.xlu0 %v535
  %v537 = vpop.xlane.xlu0 %536
  %v538 = vsel %vm296, %v522, -inf
  %539 = vmax.xlane.f32.xlu0 %v538
  %v540 = vpop.xlane.xlu0 %539
  %v541 = vsel %vm296, %v523, -inf
  %542 = vmax.xlane.f32.xlu0 %v541
  %v543 = vpop.xlane.xlu0 %542
  %v544 = vsel %vm296, %v524, -inf
  %545 = vmax.xlane.f32.xlu0 %v544
  %v546 = vpop.xlane.xlu0 %545
  %v547 = vsel %vm296, %v525, -inf
  %548 = vmax.xlane.f32.xlu0 %v547
  %v549 = vpop.xlane.xlu0 %548
  %v550 = vsel %vm296, %v526, -inf
  %551 = vmax.xlane.f32.xlu0 %v550
  %v552 = vpop.xlane.xlu0 %551
  %v553 = vsel %vm296, %v527, -inf
  %554 = vmax.xlane.f32.xlu0 %v553
  %v555 = vpop.xlane.xlu0 %554
  %v556 = vsel %vm465, %v528, -inf
  %557 = vmax.xlane.f32.xlu0 %v556
  %v558 = vpop.xlane.xlu0 %557
  %v559 = vsel %vm176, %v427, -3.4028235e+38
  %v560 = vsel %vm177, %v427, -3.4028235e+38
  %v561 = vsel %vm178, %v427, -3.4028235e+38
  %v562 = vsel %vm179, %v427, -3.4028235e+38
  %v563 = vsel %vm180, %v427, -3.4028235e+38
  %v564 = vsel %vm181, %v427, -3.4028235e+38
  %v565 = vsel %vm182, %v427, -3.4028235e+38
  %v566 = vsel %vm183, %v427, -3.4028235e+38
  %v567 = vsel %vm184, %v427, -3.4028235e+38
  %v568 = vsel %vm185, %v427, -3.4028235e+38
  %v569 = vsel %vm296, %v559, -inf
  %570 = vmax.xlane.f32.xlu0 %v569
  %v571 = vpop.xlane.xlu0 %570
  %v572 = vsel %vm296, %v560, -inf
  %573 = vmax.xlane.f32.xlu0 %v572
  %v574 = vpop.xlane.xlu0 %573
  %v575 = vsel %vm296, %v561, -inf
  %576 = vmax.xlane.f32.xlu0 %v575
  %v577 = vpop.xlane.xlu0 %576
  %v578 = vsel %vm296, %v562, -inf
  %579 = vmax.xlane.f32.xlu0 %v578
  %v580 = vpop.xlane.xlu0 %579
  %v581 = vsel %vm296, %v563, -inf
  %582 = vmax.xlane.f32.xlu0 %v581
  %v583 = vpop.xlane.xlu0 %582
  %v584 = vsel %vm296, %v564, -inf
  %585 = vmax.xlane.f32.xlu0 %v584
  %v586 = vpop.xlane.xlu0 %585
  %v587 = vsel %vm296, %v565, -inf
  %588 = vmax.xlane.f32.xlu0 %v587
  %v589 = vpop.xlane.xlu0 %588
  %v590 = vsel %vm296, %v566, -inf
  %591 = vmax.xlane.f32.xlu0 %v590
  %v592 = vpop.xlane.xlu0 %591
  %v593 = vsel %vm296, %v567, -inf
  %594 = vmax.xlane.f32.xlu0 %v593
  %v595 = vpop.xlane.xlu0 %594
  %v596 = vsel %vm465, %v568, -inf
  %597 = vmax.xlane.f32.xlu0 %v596
  %v598 = vpop.xlane.xlu0 %597
  %v599 = vmax.f32 %v531, %v571
  %v600 = vmax.f32 %v534, %v574
  %v601 = vmax.f32 %v537, %v577
  %v602 = vmax.f32 %v540, %v580
  %v603 = vmax.f32 %v543, %v583
  %v604 = vmax.f32 %v546, %v586
  %v605 = vmax.f32 %v549, %v589
  %v606 = vmax.f32 %v552, %v592
  %v607 = vmax.f32 %v555, %v595
  %v608 = vmax.f32 %v558, %v598
  %vm609 = vcmask 637952
  %v610 = vsel %vm609, %v206, 0.0
  %v611 = vsel %vm609, %v208, 0.0
  %v612 = vadd.f32 %v610, %v611
  %v613 = vsel %vm609, %v210, 0.0
  %v614 = vadd.f32 %v612, %v613
  %v615 = vsel %vm609, %v212, 0.0
  %v616 = vadd.f32 %v614, %v615
  %v617 = vsel %vm609, %v214, 0.0
  %v618 = vadd.f32 %v616, %v617
  %v619 = vsel %vm609, %v216, 0.0
  %v620 = vadd.f32 %v618, %v619
  %v621 = vsel %vm609, %v218, 0.0
  %v622 = vadd.f32 %v620, %v621
  %v623 = vsel %vm609, %v220, 0.0
  %v624 = vadd.f32 %v622, %v623
  %v625 = vsel %vm609, %v222, 0.0
  %v626 = vadd.f32 %v624, %v625
  %vm627 = vcmask 635904
  %v628 = vsel %vm627, %v224, 0.0
  %v629 = vadd.f32 %v626, %v628
  %630 = vadd.xlane.f32.xlu0 %v629
  %v631 = vpop.xlane.xlu0 %630
  %v632 = vrot.slane %v631, 4
  %v633 = vadd.f32 %v631, %v632
  %v634 = vrot.slane %v633, 2
  %v635 = vadd.f32 %v633, %v634
  %v636 = vrot.slane %v635, 1
  %v637 = vadd.f32 %v635, %v636
  %s638 = vtos %v637
  %v639 = vstv %s638
  %v640 = vsel %vm186, %v639, %v509
  %v641 = vsel %vm187, %v639, %v510
  %v642 = vsel %vm188, %v639, %v511
  %v643 = vsel %vm189, %v639, %v512
  %v644 = vsel %vm190, %v639, %v513
  %v645 = vsel %vm191, %v639, %v514
  %v646 = vsel %vm192, %v639, %v515
  %v647 = vsel %vm193, %v639, %v516
  %v648 = vsel %vm194, %v639, %v517
  %v649 = vsel %vm195, %v639, %v518
  %v650 = vsel %vm609, %v206, -inf
  %v651 = vsel %vm609, %v208, -inf
  %v652 = vsel %vm609, %v210, -inf
  %v653 = vsel %vm609, %v212, -inf
  %v654 = vsel %vm609, %v214, -inf
  %v655 = vmax.f32 %v650, %v654
  %v656 = vsel %vm609, %v216, -inf
  %v657 = vmax.f32 %v651, %v656
  %v658 = vsel %vm609, %v218, -inf
  %v659 = vmax.f32 %v652, %v658
  %v660 = vsel %vm609, %v220, -inf
  %v661 = vmax.f32 %v653, %v660
  %v662 = vsel %vm609, %v222, -inf
  %v663 = vmax.f32 %v655, %v662
  %v664 = vsel %vm627, %v224, -inf
  %v665 = vmax.f32 %v657, %v664
  %v666 = vmax.f32 %v663, %v665
  %v667 = vmax.f32 %v659, %v661
  %v668 = vmax.f32 %v666, %v667
  %669 = vmax.xlane.f32.xlu0 %v668
  %v670 = vpop.xlane.xlu0 %669
  %v671 = vrot.slane %v670, 4
  %v672 = vmax.f32 %v670, %v671
  %v673 = vrot.slane %v672, 2
  %v674 = vmax.f32 %v672, %v673
  %v675 = vrot.slane %v674, 1
  %v676 = vmax.f32 %v674, %v675
  %s677 = vtos %v676
  %v678 = vstv %s677
  %v679 = vsel %vm186, %v678, %v599
  %v680 = vsel %vm187, %v678, %v600
  %v681 = vsel %vm188, %v678, %v601
  %v682 = vsel %vm189, %v678, %v602
  %v683 = vsel %vm190, %v678, %v603
  %v684 = vsel %vm191, %v678, %v604
  %v685 = vsel %vm192, %v678, %v605
  %v686 = vsel %vm193, %v678, %v606
  %v687 = vsel %vm194, %v678, %v607
  %v688 = vsel %vm195, %v678, %v608
  %v689 = vmul.f32 %v640, %v196
  %v690 = vmul.f32 %v641, %v197
  %v691 = vmul.f32 %v642, %v198
  %v692 = vmul.f32 %v643, %v199
  %v693 = vmul.f32 %v644, %v200
  %v694 = vmul.f32 %v645, %v201
  %v695 = vmul.f32 %v646, %v202
  %v696 = vmul.f32 %v647, %v203
  %v697 = vmul.f32 %v648, %v204
  %v698 = vmul.f32 %v649, %v205
  %vm710 = vcmask 1041408
  %v711 = vrot.slane %v264, 6
  %v712 = vrot.slane %v266, 6
  %v713 = vsel %vm710, %v711, %v712
  %v714 = vrot.slane %v268, 6
  %v715 = vsel %vm710, %v712, %v714
  %v716 = vrot.slane %v270, 6
  %v717 = vsel %vm710, %v714, %v716
  %v718 = vrot.slane %v272, 6
  %v719 = vsel %vm710, %v716, %v718
  %v720 = vrot.slane %v274, 6
  %v721 = vsel %vm710, %v718, %v720
  %v722 = vrot.slane %v276, 6
  %v723 = vsel %vm710, %v720, %v722
  %v724 = vrot.slane %v278, 6
  %v725 = vsel %vm710, %v722, %v724
  %v726 = vrot.slane %v280, 6
  %v727 = vsel %vm710, %v724, %v726
  %v728 = vrot.slane %v282, 6
  %v729 = vsel %vm710, %v726, %v728
  %v730 = vrot.slane %v284, 6
  %v731 = vsel %vm710, %v728, %v730
  %v742 = vsel %vm116, %v713, 0.0
  %v743 = vsel %vm117, %v715, 0.0
  %v744 = vsel %vm118, %v717, 0.0
  %v745 = vsel %vm119, %v719, 0.0
  %v746 = vsel %vm120, %v721, 0.0
  %v747 = vsel %vm121, %v723, 0.0
  %v748 = vsel %vm122, %v725, 0.0
  %v749 = vsel %vm123, %v727, 0.0
  %v750 = vsel %vm124, %v729, 0.0
  %v751 = vsel %vm125, %v731, 0.0
  %v752 = vsel %vm296, %v742, 0.0
  %v753 = vsel %vm296, %v743, 0.0
  %v754 = vadd.f32 %v752, %v753
  %v755 = vsel %vm296, %v744, 0.0
  %v756 = vadd.f32 %v754, %v755
  %v757 = vsel %vm296, %v745, 0.0
  %v758 = vadd.f32 %v756, %v757
  %v759 = vsel %vm296, %v746, 0.0
  %v760 = vadd.f32 %v758, %v759
  %v761 = vsel %vm296, %v747, 0.0
  %v762 = vadd.f32 %v760, %v761
  %v763 = vsel %vm296, %v748, 0.0
  %v764 = vadd.f32 %v762, %v763
  %v765 = vsel %vm296, %v749, 0.0
  %v766 = vadd.f32 %v764, %v765
  %v767 = vsel %vm296, %v750, 0.0
  %v768 = vadd.f32 %v766, %v767
  %v769 = vsel %vm465, %v751, 0.0
  %v770 = vadd.f32 %v768, %v769
  %v771 = vrot.slane %v770, 4
  %v772 = vadd.f32 %v770, %v771
  %v773 = vrot.slane %v772, 2
  %v774 = vadd.f32 %v772, %v773
  %v775 = vrot.slane %v774, 1
  %v776 = vadd.f32 %v774, %v775
  %v777 = vsel %vm116, %v713, -3.4028235e+38
  %v778 = vsel %vm117, %v715, -3.4028235e+38
  %v779 = vsel %vm118, %v717, -3.4028235e+38
  %v780 = vsel %vm119, %v719, -3.4028235e+38
  %v781 = vsel %vm120, %v721, -3.4028235e+38
  %v782 = vsel %vm121, %v723, -3.4028235e+38
  %v783 = vsel %vm122, %v725, -3.4028235e+38
  %v784 = vsel %vm123, %v727, -3.4028235e+38
  %v785 = vsel %vm124, %v729, -3.4028235e+38
  %v786 = vsel %vm125, %v731, -3.4028235e+38
  %v787 = vsel %vm296, %v777, -inf
  %v788 = vsel %vm296, %v778, -inf
  %v789 = vsel %vm296, %v779, -inf
  %v790 = vsel %vm296, %v780, -inf
  %v791 = vsel %vm296, %v781, -inf
  %v792 = vmax.f32 %v787, %v791
  %v793 = vsel %vm296, %v782, -inf
  %v794 = vmax.f32 %v788, %v793
  %v795 = vsel %vm296, %v783, -inf
  %v796 = vmax.f32 %v789, %v795
  %v797 = vsel %vm296, %v784, -inf
  %v798 = vmax.f32 %v790, %v797
  %v799 = vsel %vm296, %v785, -inf
  %v800 = vmax.f32 %v792, %v799
  %v801 = vsel %vm465, %v786, -inf
  %v802 = vmax.f32 %v794, %v801
  %v803 = vmax.f32 %v800, %v802
  %v804 = vmax.f32 %v796, %v798
  %v805 = vmax.f32 %v803, %v804
  %v806 = vrot.slane %v805, 4
  %v807 = vmax.f32 %v805, %v806
  %v808 = vrot.slane %v807, 2
  %v809 = vmax.f32 %v807, %v808
  %v810 = vrot.slane %v809, 1
  %v811 = vmax.f32 %v809, %v810
  %832 = vrot.lane.b32.xlu0 %v206, 50
  %v833 = vpop.permute.xlu0 %832
  %834 = vrot.lane.b32.xlu0 %v207, 50
  %v835 = vpop.permute.xlu0 %834
  %836 = vrot.lane.b32.xlu0 %v208, 50
  %v837 = vpop.permute.xlu0 %836
  %838 = vrot.lane.b32.xlu0 %v209, 50
  %v839 = vpop.permute.xlu0 %838
  %840 = vrot.lane.b32.xlu0 %v210, 50
  %v841 = vpop.permute.xlu0 %840
  %842 = vrot.lane.b32.xlu0 %v211, 50
  %v843 = vpop.permute.xlu0 %842
  %844 = vrot.lane.b32.xlu0 %v212, 50
  %v845 = vpop.permute.xlu0 %844
  %846 = vrot.lane.b32.xlu0 %v213, 50
  %v847 = vpop.permute.xlu0 %846
  %848 = vrot.lane.b32.xlu0 %v214, 50
  %v849 = vpop.permute.xlu0 %848
  %850 = vrot.lane.b32.xlu0 %v215, 50
  %v851 = vpop.permute.xlu0 %850
  %852 = vrot.lane.b32.xlu0 %v216, 50
  %v853 = vpop.permute.xlu0 %852
  %854 = vrot.lane.b32.xlu0 %v217, 50
  %v855 = vpop.permute.xlu0 %854
  %856 = vrot.lane.b32.xlu0 %v218, 50
  %v857 = vpop.permute.xlu0 %856
  %858 = vrot.lane.b32.xlu0 %v219, 50
  %v859 = vpop.permute.xlu0 %858
  %860 = vrot.lane.b32.xlu0 %v220, 50
  %v861 = vpop.permute.xlu0 %860
  %862 = vrot.lane.b32.xlu0 %v221, 50
  %v863 = vpop.permute.xlu0 %862
  %864 = vrot.lane.b32.xlu0 %v222, 50
  %v865 = vpop.permute.xlu0 %864
  %866 = vrot.lane.b32.xlu0 %v223, 50
  %v867 = vpop.permute.xlu0 %866
  %868 = vrot.lane.b32.xlu0 %v224, 50
  %v869 = vpop.permute.xlu0 %868
  %870 = vrot.lane.b32.xlu0 %v225, 50
  %v871 = vpop.permute.xlu0 %870
  %vm872 = vcmask 408576
  %v873 = vsel %vm872, %v833, %v835
  %v874 = vsel %vm872, %v837, %v839
  %v875 = vsel %vm872, %v841, %v843
  %v876 = vsel %vm872, %v845, %v847
  %v877 = vsel %vm872, %v849, %v851
  %v878 = vsel %vm872, %v853, %v855
  %v879 = vsel %vm872, %v857, %v859
  %v880 = vsel %vm872, %v861, %v863
  %v881 = vsel %vm872, %v865, %v867
  %v882 = vsel %vm872, %v869, %v871
  %v893 = vsel %vm146, %v873, 0.0
  %v894 = vsel %vm147, %v874, 0.0
  %v895 = vsel %vm148, %v875, 0.0
  %v896 = vsel %vm149, %v876, 0.0
  %v897 = vsel %vm150, %v877, 0.0
  %v898 = vsel %vm151, %v878, 0.0
  %v899 = vsel %vm152, %v879, 0.0
  %v900 = vsel %vm153, %v880, 0.0
  %v901 = vsel %vm154, %v881, 0.0
  %v902 = vsel %vm155, %v882, 0.0
  %v903 = vsel %vm609, %v893, 0.0
  %v904 = vsel %vm609, %v894, 0.0
  %v905 = vadd.f32 %v903, %v904
  %v906 = vsel %vm609, %v895, 0.0
  %v907 = vadd.f32 %v905, %v906
  %v908 = vsel %vm609, %v896, 0.0
  %v909 = vadd.f32 %v907, %v908
  %v910 = vsel %vm609, %v897, 0.0
  %v911 = vadd.f32 %v909, %v910
  %v912 = vsel %vm609, %v898, 0.0
  %v913 = vadd.f32 %v911, %v912
  %v914 = vsel %vm609, %v899, 0.0
  %v915 = vadd.f32 %v913, %v914
  %v916 = vsel %vm609, %v900, 0.0
  %v917 = vadd.f32 %v915, %v916
  %v918 = vsel %vm609, %v901, 0.0
  %v919 = vadd.f32 %v917, %v918
  %vm920 = vcmask 636928
  %v921 = vsel %vm920, %v902, 0.0
  %v922 = vadd.f32 %v919, %v921
  %v923 = vrot.slane %v922, 4
  %v924 = vadd.f32 %v922, %v923
  %v925 = vrot.slane %v924, 2
  %v926 = vadd.f32 %v924, %v925
  %v927 = vrot.slane %v926, 1
  %v928 = vadd.f32 %v926, %v927
  %v929 = vsel %vm136, %v873, -3.4028235e+38
  %v930 = vsel %vm137, %v874, -3.4028235e+38
  %v931 = vsel %vm138, %v875, -3.4028235e+38
  %v932 = vsel %vm139, %v876, -3.4028235e+38
  %v933 = vsel %vm140, %v877, -3.4028235e+38
  %v934 = vsel %vm141, %v878, -3.4028235e+38
  %v935 = vsel %vm142, %v879, -3.4028235e+38
  %v936 = vsel %vm143, %v880, -3.4028235e+38
  %v937 = vsel %vm144, %v881, -3.4028235e+38
  %v938 = vsel %vm145, %v882, -3.4028235e+38
  %v939 = vsel %vm609, %v929, -inf
  %v940 = vsel %vm609, %v930, -inf
  %v941 = vsel %vm609, %v931, -inf
  %v942 = vsel %vm609, %v932, -inf
  %v943 = vsel %vm609, %v933, -inf
  %v944 = vmax.f32 %v939, %v943
  %v945 = vsel %vm609, %v934, -inf
  %v946 = vmax.f32 %v940, %v945
  %v947 = vsel %vm609, %v935, -inf
  %v948 = vmax.f32 %v941, %v947
  %v949 = vsel %vm609, %v936, -inf
  %v950 = vmax.f32 %v942, %v949
  %v951 = vsel %vm609, %v937, -inf
  %v952 = vmax.f32 %v944, %v951
  %v953 = vsel %vm920, %v938, -inf
  %v954 = vmax.f32 %v946, %v953
  %v955 = vmax.f32 %v952, %v954
  %v956 = vmax.f32 %v948, %v950
  %v957 = vmax.f32 %v955, %v956
  %v958 = vrot.slane %v957, 4
  %v959 = vmax.f32 %v957, %v958
  %v960 = vrot.slane %v959, 2
  %v961 = vmax.f32 %v959, %v960
  %v962 = vrot.slane %v961, 1
  %v963 = vmax.f32 %v961, %v962
  %v964 = vsel %vm176, %v776, 0.0
  %v965 = vsel %vm177, %v776, 0.0
  %v966 = vsel %vm178, %v776, 0.0
  %v967 = vsel %vm179, %v776, 0.0
  %v968 = vsel %vm180, %v776, 0.0
  %v969 = vsel %vm181, %v776, 0.0
  %v970 = vsel %vm182, %v776, 0.0
  %v971 = vsel %vm183, %v776, 0.0
  %v972 = vsel %vm184, %v776, 0.0
  %v973 = vsel %vm185, %v776, 0.0
  %v974 = vsel %vm296, %v964, 0.0
  %975 = vadd.xlane.f32.xlu0 %v974
  %v976 = vpop.xlane.xlu0 %975
  %v977 = vsel %vm296, %v965, 0.0
  %978 = vadd.xlane.f32.xlu0 %v977
  %v979 = vpop.xlane.xlu0 %978
  %v980 = vsel %vm296, %v966, 0.0
  %981 = vadd.xlane.f32.xlu0 %v980
  %v982 = vpop.xlane.xlu0 %981
  %v983 = vsel %vm296, %v967, 0.0
  %984 = vadd.xlane.f32.xlu0 %v983
  %v985 = vpop.xlane.xlu0 %984
  %v986 = vsel %vm296, %v968, 0.0
  %987 = vadd.xlane.f32.xlu0 %v986
  %v988 = vpop.xlane.xlu0 %987
  %v989 = vsel %vm296, %v969, 0.0
  %990 = vadd.xlane.f32.xlu0 %v989
  %v991 = vpop.xlane.xlu0 %990
  %v992 = vsel %vm296, %v970, 0.0
  %993 = vadd.xlane.f32.xlu0 %v992
  %v994 = vpop.xlane.xlu0 %993
  %v995 = vsel %vm296, %v971, 0.0
  %996 = vadd.xlane.f32.xlu0 %v995
  %v997 = vpop.xlane.xlu0 %996
  %v998 = vsel %vm296, %v972, 0.0
  %999 = vadd.xlane.f32.xlu0 %v998
  %v1000 = vpop.xlane.xlu0 %999
  %v1001 = vsel %vm465, %v973, 0.0
  %1002 = vadd.xlane.f32.xlu0 %v1001
  %v1003 = vpop.xlane.xlu0 %1002
  %v1004 = vsel %vm166, %v928, 0.0
  %v1005 = vsel %vm167, %v928, 0.0
  %v1006 = vsel %vm168, %v928, 0.0
  %v1007 = vsel %vm169, %v928, 0.0
  %v1008 = vsel %vm170, %v928, 0.0
  %v1009 = vsel %vm171, %v928, 0.0
  %v1010 = vsel %vm172, %v928, 0.0
  %v1011 = vsel %vm173, %v928, 0.0
  %v1012 = vsel %vm174, %v928, 0.0
  %v1013 = vsel %vm175, %v928, 0.0
  %v1014 = vsel %vm609, %v1004, 0.0
  %1015 = vadd.xlane.f32.xlu0 %v1014
  %v1016 = vpop.xlane.xlu0 %1015
  %v1017 = vsel %vm609, %v1005, 0.0
  %1018 = vadd.xlane.f32.xlu0 %v1017
  %v1019 = vpop.xlane.xlu0 %1018
  %v1020 = vsel %vm609, %v1006, 0.0
  %1021 = vadd.xlane.f32.xlu0 %v1020
  %v1022 = vpop.xlane.xlu0 %1021
  %v1023 = vsel %vm609, %v1007, 0.0
  %1024 = vadd.xlane.f32.xlu0 %v1023
  %v1025 = vpop.xlane.xlu0 %1024
  %v1026 = vsel %vm609, %v1008, 0.0
  %1027 = vadd.xlane.f32.xlu0 %v1026
  %v1028 = vpop.xlane.xlu0 %1027
  %v1029 = vsel %vm609, %v1009, 0.0
  %1030 = vadd.xlane.f32.xlu0 %v1029
  %v1031 = vpop.xlane.xlu0 %1030
  %v1032 = vsel %vm609, %v1010, 0.0
  %1033 = vadd.xlane.f32.xlu0 %v1032
  %v1034 = vpop.xlane.xlu0 %1033
  %v1035 = vsel %vm609, %v1011, 0.0
  %1036 = vadd.xlane.f32.xlu0 %v1035
  %v1037 = vpop.xlane.xlu0 %1036
  %v1038 = vsel %vm609, %v1012, 0.0
  %1039 = vadd.xlane.f32.xlu0 %v1038
  %v1040 = vpop.xlane.xlu0 %1039
  %v1041 = vsel %vm627, %v1013, 0.0
  %1042 = vadd.xlane.f32.xlu0 %v1041
  %v1043 = vpop.xlane.xlu0 %1042
  %v1044 = vadd.f32 %v976, %v1016
  %v1045 = vadd.f32 %v979, %v1019
  %v1046 = vadd.f32 %v982, %v1022
  %v1047 = vadd.f32 %v985, %v1025
  %v1048 = vadd.f32 %v988, %v1028
  %v1049 = vadd.f32 %v991, %v1031
  %v1050 = vadd.f32 %v994, %v1034
  %v1051 = vadd.f32 %v997, %v1037
  %v1052 = vadd.f32 %v1000, %v1040
  %v1053 = vadd.f32 %v1003, %v1043
  %v1054 = vsel %vm176, %v811, -3.4028235e+38
  %v1055 = vsel %vm177, %v811, -3.4028235e+38
  %v1056 = vsel %vm178, %v811, -3.4028235e+38
  %v1057 = vsel %vm179, %v811, -3.4028235e+38
  %v1058 = vsel %vm180, %v811, -3.4028235e+38
  %v1059 = vsel %vm181, %v811, -3.4028235e+38
  %v1060 = vsel %vm182, %v811, -3.4028235e+38
  %v1061 = vsel %vm183, %v811, -3.4028235e+38
  %v1062 = vsel %vm184, %v811, -3.4028235e+38
  %v1063 = vsel %vm185, %v811, -3.4028235e+38
  %v1064 = vsel %vm296, %v1054, -inf
  %1065 = vmax.xlane.f32.xlu0 %v1064
  %v1066 = vpop.xlane.xlu0 %1065
  %v1067 = vsel %vm296, %v1055, -inf
  %1068 = vmax.xlane.f32.xlu0 %v1067
  %v1069 = vpop.xlane.xlu0 %1068
  %v1070 = vsel %vm296, %v1056, -inf
  %1071 = vmax.xlane.f32.xlu0 %v1070
  %v1072 = vpop.xlane.xlu0 %1071
  %v1073 = vsel %vm296, %v1057, -inf
  %1074 = vmax.xlane.f32.xlu0 %v1073
  %v1075 = vpop.xlane.xlu0 %1074
  %v1076 = vsel %vm296, %v1058, -inf
  %1077 = vmax.xlane.f32.xlu0 %v1076
  %v1078 = vpop.xlane.xlu0 %1077
  %v1079 = vsel %vm296, %v1059, -inf
  %1080 = vmax.xlane.f32.xlu0 %v1079
  %v1081 = vpop.xlane.xlu0 %1080
  %v1082 = vsel %vm296, %v1060, -inf
  %1083 = vmax.xlane.f32.xlu0 %v1082
  %v1084 = vpop.xlane.xlu0 %1083
  %v1085 = vsel %vm296, %v1061, -inf
  %1086 = vmax.xlane.f32.xlu0 %v1085
  %v1087 = vpop.xlane.xlu0 %1086
  %v1088 = vsel %vm296, %v1062, -inf
  %1089 = vmax.xlane.f32.xlu0 %v1088
  %v1090 = vpop.xlane.xlu0 %1089
  %v1091 = vsel %vm465, %v1063, -inf
  %1092 = vmax.xlane.f32.xlu0 %v1091
  %v1093 = vpop.xlane.xlu0 %1092
  %v1094 = vsel %vm166, %v963, -3.4028235e+38
  %v1095 = vsel %vm167, %v963, -3.4028235e+38
  %v1096 = vsel %vm168, %v963, -3.4028235e+38
  %v1097 = vsel %vm169, %v963, -3.4028235e+38
  %v1098 = vsel %vm170, %v963, -3.4028235e+38
  %v1099 = vsel %vm171, %v963, -3.4028235e+38
  %v1100 = vsel %vm172, %v963, -3.4028235e+38
  %v1101 = vsel %vm173, %v963, -3.4028235e+38
  %v1102 = vsel %vm174, %v963, -3.4028235e+38
  %v1103 = vsel %vm175, %v963, -3.4028235e+38
  %v1104 = vsel %vm609, %v1094, -inf
  %1105 = vmax.xlane.f32.xlu0 %v1104
  %v1106 = vpop.xlane.xlu0 %1105
  %v1107 = vsel %vm609, %v1095, -inf
  %1108 = vmax.xlane.f32.xlu0 %v1107
  %v1109 = vpop.xlane.xlu0 %1108
  %v1110 = vsel %vm609, %v1096, -inf
  %1111 = vmax.xlane.f32.xlu0 %v1110
  %v1112 = vpop.xlane.xlu0 %1111
  %v1113 = vsel %vm609, %v1097, -inf
  %1114 = vmax.xlane.f32.xlu0 %v1113
  %v1115 = vpop.xlane.xlu0 %1114
  %v1116 = vsel %vm609, %v1098, -inf
  %1117 = vmax.xlane.f32.xlu0 %v1116
  %v1118 = vpop.xlane.xlu0 %1117
  %v1119 = vsel %vm609, %v1099, -inf
  %1120 = vmax.xlane.f32.xlu0 %v1119
  %v1121 = vpop.xlane.xlu0 %1120
  %v1122 = vsel %vm609, %v1100, -inf
  %1123 = vmax.xlane.f32.xlu0 %v1122
  %v1124 = vpop.xlane.xlu0 %1123
  %v1125 = vsel %vm609, %v1101, -inf
  %1126 = vmax.xlane.f32.xlu0 %v1125
  %v1127 = vpop.xlane.xlu0 %1126
  %v1128 = vsel %vm609, %v1102, -inf
  %1129 = vmax.xlane.f32.xlu0 %v1128
  %v1130 = vpop.xlane.xlu0 %1129
  %v1131 = vsel %vm627, %v1103, -inf
  %1132 = vmax.xlane.f32.xlu0 %v1131
  %v1133 = vpop.xlane.xlu0 %1132
  %v1134 = vmax.f32 %v1066, %v1106
  %v1135 = vmax.f32 %v1069, %v1109
  %v1136 = vmax.f32 %v1072, %v1112
  %v1137 = vmax.f32 %v1075, %v1115
  %v1138 = vmax.f32 %v1078, %v1118
  %v1139 = vmax.f32 %v1081, %v1121
  %v1140 = vmax.f32 %v1084, %v1124
  %v1141 = vmax.f32 %v1087, %v1127
  %v1142 = vmax.f32 %v1090, %v1130
  %v1143 = vmax.f32 %v1093, %v1133
  %v1144 = vsel %vm609, %v873, 0.0
  %v1145 = vsel %vm609, %v874, 0.0
  %v1146 = vadd.f32 %v1144, %v1145
  %v1147 = vsel %vm609, %v875, 0.0
  %v1148 = vadd.f32 %v1146, %v1147
  %v1149 = vsel %vm609, %v876, 0.0
  %v1150 = vadd.f32 %v1148, %v1149
  %v1151 = vsel %vm609, %v877, 0.0
  %v1152 = vadd.f32 %v1150, %v1151
  %v1153 = vsel %vm609, %v878, 0.0
  %v1154 = vadd.f32 %v1152, %v1153
  %v1155 = vsel %vm609, %v879, 0.0
  %v1156 = vadd.f32 %v1154, %v1155
  %v1157 = vsel %vm609, %v880, 0.0
  %v1158 = vadd.f32 %v1156, %v1157
  %v1159 = vsel %vm609, %v881, 0.0
  %v1160 = vadd.f32 %v1158, %v1159
  %v1161 = vsel %vm627, %v882, 0.0
  %v1162 = vadd.f32 %v1160, %v1161
  %1163 = vadd.xlane.f32.xlu0 %v1162
  %v1164 = vpop.xlane.xlu0 %1163
  %v1165 = vrot.slane %v1164, 4
  %v1166 = vadd.f32 %v1164, %v1165
  %v1167 = vrot.slane %v1166, 2
  %v1168 = vadd.f32 %v1166, %v1167
  %v1169 = vrot.slane %v1168, 1
  %v1170 = vadd.f32 %v1168, %v1169
  %s1171 = vtos %v1170
  %v1172 = vstv %s1171
  %v1173 = vsel %vm186, %v1172, %v1044
  %v1174 = vsel %vm187, %v1172, %v1045
  %v1175 = vsel %vm188, %v1172, %v1046
  %v1176 = vsel %vm189, %v1172, %v1047
  %v1177 = vsel %vm190, %v1172, %v1048
  %v1178 = vsel %vm191, %v1172, %v1049
  %v1179 = vsel %vm192, %v1172, %v1050
  %v1180 = vsel %vm193, %v1172, %v1051
  %v1181 = vsel %vm194, %v1172, %v1052
  %v1182 = vsel %vm195, %v1172, %v1053
  %vm1183 = vcmask 1048176
  %v1184 = vsel %vm1183, %v206, -inf
  %vm1185 = vcmask 228352
  %v1186 = vsel %vm1185, %v207, -inf
  %v1187 = vsel %vm1183, %v208, -inf
  %v1188 = vsel %vm1185, %v209, -inf
  %v1189 = vsel %vm1183, %v210, -inf
  %v1190 = vmax.f32 %v1184, %v1189
  %v1191 = vsel %vm1185, %v211, -inf
  %v1192 = vmax.f32 %v1186, %v1191
  %v1193 = vsel %vm1183, %v212, -inf
  %v1194 = vmax.f32 %v1187, %v1193
  %v1195 = vsel %vm1185, %v213, -inf
  %v1196 = vmax.f32 %v1188, %v1195
  %v1197 = vsel %vm1183, %v214, -inf
  %v1198 = vmax.f32 %v1190, %v1197
  %v1199 = vsel %vm1185, %v215, -inf
  %v1200 = vmax.f32 %v1192, %v1199
  %v1201 = vsel %vm1183, %v216, -inf
  %v1202 = vmax.f32 %v1194, %v1201
  %v1203 = vsel %vm1185, %v217, -inf
  %v1204 = vmax.f32 %v1196, %v1203
  %v1205 = vsel %vm1183, %v218, -inf
  %v1206 = vmax.f32 %v1198, %v1205
  %v1207 = vsel %vm1185, %v219, -inf
  %v1208 = vmax.f32 %v1200, %v1207
  %v1209 = vsel %vm1183, %v220, -inf
  %v1210 = vmax.f32 %v1202, %v1209
  %v1211 = vsel %vm1185, %v221, -inf
  %v1212 = vmax.f32 %v1204, %v1211
  %v1213 = vsel %vm1183, %v222, -inf
  %v1214 = vmax.f32 %v1206, %v1213
  %v1215 = vsel %vm1185, %v223, -inf
  %v1216 = vmax.f32 %v1208, %v1215
  %vm1217 = vcmask 1046128
  %v1218 = vsel %vm1217, %v224, -inf
  %v1219 = vmax.f32 %v1210, %v1218
  %vm1220 = vcmask 226304
  %v1221 = vsel %vm1220, %v225, -inf
  %v1222 = vmax.f32 %v1212, %v1221
  %v1223 = vmax.f32 %v1214, %v1216
  %v1224 = vmax.f32 %v1219, %v1222
  %v1225 = vmax.f32 %v1223, %v1224
  %1226 = vmax.xlane.f32.xlu0 %v1225
  %v1227 = vpop.xlane.xlu0 %1226
  %v1228 = vrot.slane %v1227, 4
  %v1229 = vmax.f32 %v1227, %v1228
  %v1230 = vrot.slane %v1229, 2
  %v1231 = vmax.f32 %v1229, %v1230
  %v1232 = vrot.slane %v1231, 1
  %v1233 = vmax.f32 %v1231, %v1232
  %s1234 = vtos %v1233
  %v1235 = vstv %s1234
  %v1236 = vsel %vm186, %v1235, %v1134
  %v1237 = vsel %vm187, %v1235, %v1135
  %v1238 = vsel %vm188, %v1235, %v1136
  %v1239 = vsel %vm189, %v1235, %v1137
  %v1240 = vsel %vm190, %v1235, %v1138
  %v1241 = vsel %vm191, %v1235, %v1139
  %v1242 = vsel %vm192, %v1235, %v1140
  %v1243 = vsel %vm193, %v1235, %v1141
  %v1244 = vsel %vm194, %v1235, %v1142
  %v1245 = vsel %vm195, %v1235, %v1143
  %v1246 = vmul.f32 %v1173, %v196
  %v1247 = vmul.f32 %v1174, %v197
  %v1248 = vmul.f32 %v1175, %v198
  %v1249 = vmul.f32 %v1176, %v199
  %v1250 = vmul.f32 %v1177, %v200
  %v1251 = vmul.f32 %v1178, %v201
  %v1252 = vmul.f32 %v1179, %v202
  %v1253 = vmul.f32 %v1180, %v203
  %v1254 = vmul.f32 %v1181, %v204
  %v1255 = vmul.f32 %v1182, %v205
  %1275 = vrot.lane.b32.xlu0 %v246, 50
  %v1276 = vpop.permute.xlu0 %1275
  %1277 = vrot.lane.b32.xlu0 %v247, 50
  %v1278 = vpop.permute.xlu0 %1277
  %1279 = vrot.lane.b32.xlu0 %v248, 50
  %v1280 = vpop.permute.xlu0 %1279
  %1281 = vrot.lane.b32.xlu0 %v249, 50
  %v1282 = vpop.permute.xlu0 %1281
  %1283 = vrot.lane.b32.xlu0 %v250, 50
  %v1284 = vpop.permute.xlu0 %1283
  %1285 = vrot.lane.b32.xlu0 %v251, 50
  %v1286 = vpop.permute.xlu0 %1285
  %1287 = vrot.lane.b32.xlu0 %v252, 50
  %v1288 = vpop.permute.xlu0 %1287
  %1289 = vrot.lane.b32.xlu0 %v253, 50
  %v1290 = vpop.permute.xlu0 %1289
  %1291 = vrot.lane.b32.xlu0 %v254, 50
  %v1292 = vpop.permute.xlu0 %1291
  %1293 = vrot.lane.b32.xlu0 %v255, 50
  %v1294 = vpop.permute.xlu0 %1293
  %1295 = vrot.lane.b32.xlu0 %v256, 50
  %v1296 = vpop.permute.xlu0 %1295
  %1297 = vrot.lane.b32.xlu0 %v257, 50
  %v1298 = vpop.permute.xlu0 %1297
  %1299 = vrot.lane.b32.xlu0 %v258, 50
  %v1300 = vpop.permute.xlu0 %1299
  %1301 = vrot.lane.b32.xlu0 %v259, 50
  %v1302 = vpop.permute.xlu0 %1301
  %1303 = vrot.lane.b32.xlu0 %v260, 50
  %v1304 = vpop.permute.xlu0 %1303
  %1305 = vrot.lane.b32.xlu0 %v261, 50
  %v1306 = vpop.permute.xlu0 %1305
  %1307 = vrot.lane.b32.xlu0 %v262, 50
  %v1308 = vpop.permute.xlu0 %1307
  %1309 = vrot.lane.b32.xlu0 %v263, 50
  %v1310 = vpop.permute.xlu0 %1309
  %1311 = vrot.lane.b32.xlu0 %v264, 50
  %v1312 = vpop.permute.xlu0 %1311
  %1313 = vrot.lane.b32.xlu0 %v265, 50
  %v1314 = vpop.permute.xlu0 %1313
  %v1315 = vsel %vm872, %v1276, %v1278
  %v1316 = vsel %vm872, %v1280, %v1282
  %v1317 = vsel %vm872, %v1284, %v1286
  %v1318 = vsel %vm872, %v1288, %v1290
  %v1319 = vsel %vm872, %v1292, %v1294
  %v1320 = vsel %vm872, %v1296, %v1298
  %v1321 = vsel %vm872, %v1300, %v1302
  %v1322 = vsel %vm872, %v1304, %v1306
  %v1323 = vsel %vm872, %v1308, %v1310
  %v1324 = vsel %vm872, %v1312, %v1314
  %v1335 = vsel %vm136, %v1315, 0.0
  %v1336 = vsel %vm137, %v1316, 0.0
  %v1337 = vsel %vm138, %v1317, 0.0
  %v1338 = vsel %vm139, %v1318, 0.0
  %v1339 = vsel %vm140, %v1319, 0.0
  %v1340 = vsel %vm141, %v1320, 0.0
  %v1341 = vsel %vm142, %v1321, 0.0
  %v1342 = vsel %vm143, %v1322, 0.0
  %v1343 = vsel %vm144, %v1323, 0.0
  %v1344 = vsel %vm145, %v1324, 0.0
  %v1345 = vsel %vm609, %v1335, 0.0
  %v1346 = vsel %vm609, %v1336, 0.0
  %v1347 = vadd.f32 %v1345, %v1346
  %v1348 = vsel %vm609, %v1337, 0.0
  %v1349 = vadd.f32 %v1347, %v1348
  %v1350 = vsel %vm609, %v1338, 0.0
  %v1351 = vadd.f32 %v1349, %v1350
  %v1352 = vsel %vm609, %v1339, 0.0
  %v1353 = vadd.f32 %v1351, %v1352
  %v1354 = vsel %vm609, %v1340, 0.0
  %v1355 = vadd.f32 %v1353, %v1354
  %v1356 = vsel %vm609, %v1341, 0.0
  %v1357 = vadd.f32 %v1355, %v1356
  %v1358 = vsel %vm609, %v1342, 0.0
  %v1359 = vadd.f32 %v1357, %v1358
  %v1360 = vsel %vm609, %v1343, 0.0
  %v1361 = vadd.f32 %v1359, %v1360
  %v1362 = vsel %vm920, %v1344, 0.0
  %v1363 = vadd.f32 %v1361, %v1362
  %v1364 = vrot.slane %v1363, 4
  %v1365 = vadd.f32 %v1363, %v1364
  %v1366 = vrot.slane %v1365, 2
  %v1367 = vadd.f32 %v1365, %v1366
  %v1368 = vrot.slane %v1367, 1
  %v1369 = vadd.f32 %v1367, %v1368
  %v1370 = vsel %vm136, %v1315, -3.4028235e+38
  %v1371 = vsel %vm137, %v1316, -3.4028235e+38
  %v1372 = vsel %vm138, %v1317, -3.4028235e+38
  %v1373 = vsel %vm139, %v1318, -3.4028235e+38
  %v1374 = vsel %vm140, %v1319, -3.4028235e+38
  %v1375 = vsel %vm141, %v1320, -3.4028235e+38
  %v1376 = vsel %vm142, %v1321, -3.4028235e+38
  %v1377 = vsel %vm143, %v1322, -3.4028235e+38
  %v1378 = vsel %vm144, %v1323, -3.4028235e+38
  %v1379 = vsel %vm145, %v1324, -3.4028235e+38
  %v1380 = vsel %vm609, %v1370, -inf
  %v1381 = vsel %vm609, %v1371, -inf
  %v1382 = vsel %vm609, %v1372, -inf
  %v1383 = vsel %vm609, %v1373, -inf
  %v1384 = vsel %vm609, %v1374, -inf
  %v1385 = vmax.f32 %v1380, %v1384
  %v1386 = vsel %vm609, %v1375, -inf
  %v1387 = vmax.f32 %v1381, %v1386
  %v1388 = vsel %vm609, %v1376, -inf
  %v1389 = vmax.f32 %v1382, %v1388
  %v1390 = vsel %vm609, %v1377, -inf
  %v1391 = vmax.f32 %v1383, %v1390
  %v1392 = vsel %vm609, %v1378, -inf
  %v1393 = vmax.f32 %v1385, %v1392
  %v1394 = vsel %vm920, %v1379, -inf
  %v1395 = vmax.f32 %v1387, %v1394
  %v1396 = vmax.f32 %v1393, %v1395
  %v1397 = vmax.f32 %v1389, %v1391
  %v1398 = vmax.f32 %v1396, %v1397
  %v1399 = vrot.slane %v1398, 4
  %v1400 = vmax.f32 %v1398, %v1399
  %v1401 = vrot.slane %v1400, 2
  %v1402 = vmax.f32 %v1400, %v1401
  %v1403 = vrot.slane %v1402, 1
  %v1404 = vmax.f32 %v1402, %v1403
  %v1415 = vrot.slane %v224, 6
  %v1416 = vrot.slane %v226, 6
  %v1417 = vsel %vm710, %v1415, %v1416
  %v1418 = vrot.slane %v228, 6
  %v1419 = vsel %vm710, %v1416, %v1418
  %v1420 = vrot.slane %v230, 6
  %v1421 = vsel %vm710, %v1418, %v1420
  %v1422 = vrot.slane %v232, 6
  %v1423 = vsel %vm710, %v1420, %v1422
  %v1424 = vrot.slane %v234, 6
  %v1425 = vsel %vm710, %v1422, %v1424
  %v1426 = vrot.slane %v236, 6
  %v1427 = vsel %vm710, %v1424, %v1426
  %v1428 = vrot.slane %v238, 6
  %v1429 = vsel %vm710, %v1426, %v1428
  %v1430 = vrot.slane %v240, 6
  %v1431 = vsel %vm710, %v1428, %v1430
  %v1432 = vrot.slane %v242, 6
  %v1433 = vsel %vm710, %v1430, %v1432
  %v1434 = vrot.slane %v244, 6
  %v1435 = vsel %vm710, %v1432, %v1434
  %v1446 = vsel %vm126, %v1417, 0.0
  %v1447 = vsel %vm127, %v1419, 0.0
  %v1448 = vsel %vm128, %v1421, 0.0
  %v1449 = vsel %vm129, %v1423, 0.0
  %v1450 = vsel %vm130, %v1425, 0.0
  %v1451 = vsel %vm131, %v1427, 0.0
  %v1452 = vsel %vm132, %v1429, 0.0
  %v1453 = vsel %vm133, %v1431, 0.0
  %v1454 = vsel %vm134, %v1433, 0.0
  %v1455 = vsel %vm135, %v1435, 0.0
  %v1456 = vsel %vm296, %v1446, 0.0
  %v1457 = vsel %vm296, %v1447, 0.0
  %v1458 = vadd.f32 %v1456, %v1457
  %v1459 = vsel %vm296, %v1448, 0.0
  %v1460 = vadd.f32 %v1458, %v1459
  %v1461 = vsel %vm296, %v1449, 0.0
  %v1462 = vadd.f32 %v1460, %v1461
  %v1463 = vsel %vm296, %v1450, 0.0
  %v1464 = vadd.f32 %v1462, %v1463
  %v1465 = vsel %vm296, %v1451, 0.0
  %v1466 = vadd.f32 %v1464, %v1465
  %v1467 = vsel %vm296, %v1452, 0.0
  %v1468 = vadd.f32 %v1466, %v1467
  %v1469 = vsel %vm296, %v1453, 0.0
  %v1470 = vadd.f32 %v1468, %v1469
  %v1471 = vsel %vm296, %v1454, 0.0
  %v1472 = vadd.f32 %v1470, %v1471
  %v1473 = vsel %vm465, %v1455, 0.0
  %v1474 = vadd.f32 %v1472, %v1473
  %v1475 = vrot.slane %v1474, 4
  %v1476 = vadd.f32 %v1474, %v1475
  %v1477 = vrot.slane %v1476, 2
  %v1478 = vadd.f32 %v1476, %v1477
  %v1479 = vrot.slane %v1478, 1
  %v1480 = vadd.f32 %v1478, %v1479
  %v1481 = vsel %vm116, %v1417, -3.4028235e+38
  %v1482 = vsel %vm117, %v1419, -3.4028235e+38
  %v1483 = vsel %vm118, %v1421, -3.4028235e+38
  %v1484 = vsel %vm119, %v1423, -3.4028235e+38
  %v1485 = vsel %vm120, %v1425, -3.4028235e+38
  %v1486 = vsel %vm121, %v1427, -3.4028235e+38
  %v1487 = vsel %vm122, %v1429, -3.4028235e+38
  %v1488 = vsel %vm123, %v1431, -3.4028235e+38
  %v1489 = vsel %vm124, %v1433, -3.4028235e+38
  %v1490 = vsel %vm125, %v1435, -3.4028235e+38
  %v1491 = vsel %vm296, %v1481, -inf
  %v1492 = vsel %vm296, %v1482, -inf
  %v1493 = vsel %vm296, %v1483, -inf
  %v1494 = vsel %vm296, %v1484, -inf
  %v1495 = vsel %vm296, %v1485, -inf
  %v1496 = vmax.f32 %v1491, %v1495
  %v1497 = vsel %vm296, %v1486, -inf
  %v1498 = vmax.f32 %v1492, %v1497
  %v1499 = vsel %vm296, %v1487, -inf
  %v1500 = vmax.f32 %v1493, %v1499
  %v1501 = vsel %vm296, %v1488, -inf
  %v1502 = vmax.f32 %v1494, %v1501
  %v1503 = vsel %vm296, %v1489, -inf
  %v1504 = vmax.f32 %v1496, %v1503
  %v1505 = vsel %vm465, %v1490, -inf
  %v1506 = vmax.f32 %v1498, %v1505
  %v1507 = vmax.f32 %v1504, %v1506
  %v1508 = vmax.f32 %v1500, %v1502
  %v1509 = vmax.f32 %v1507, %v1508
  %v1510 = vrot.slane %v1509, 4
  %v1511 = vmax.f32 %v1509, %v1510
  %v1512 = vrot.slane %v1511, 2
  %v1513 = vmax.f32 %v1511, %v1512
  %v1514 = vrot.slane %v1513, 1
  %v1515 = vmax.f32 %v1513, %v1514
  %v1516 = vsel %vm166, %v1369, 0.0
  %v1517 = vsel %vm167, %v1369, 0.0
  %v1518 = vsel %vm168, %v1369, 0.0
  %v1519 = vsel %vm169, %v1369, 0.0
  %v1520 = vsel %vm170, %v1369, 0.0
  %v1521 = vsel %vm171, %v1369, 0.0
  %v1522 = vsel %vm172, %v1369, 0.0
  %v1523 = vsel %vm173, %v1369, 0.0
  %v1524 = vsel %vm174, %v1369, 0.0
  %v1525 = vsel %vm175, %v1369, 0.0
  %v1526 = vsel %vm609, %v1516, 0.0
  %1527 = vadd.xlane.f32.xlu0 %v1526
  %v1528 = vpop.xlane.xlu0 %1527
  %v1529 = vsel %vm609, %v1517, 0.0
  %1530 = vadd.xlane.f32.xlu0 %v1529
  %v1531 = vpop.xlane.xlu0 %1530
  %v1532 = vsel %vm609, %v1518, 0.0
  %1533 = vadd.xlane.f32.xlu0 %v1532
  %v1534 = vpop.xlane.xlu0 %1533
  %v1535 = vsel %vm609, %v1519, 0.0
  %1536 = vadd.xlane.f32.xlu0 %v1535
  %v1537 = vpop.xlane.xlu0 %1536
  %v1538 = vsel %vm609, %v1520, 0.0
  %1539 = vadd.xlane.f32.xlu0 %v1538
  %v1540 = vpop.xlane.xlu0 %1539
  %v1541 = vsel %vm609, %v1521, 0.0
  %1542 = vadd.xlane.f32.xlu0 %v1541
  %v1543 = vpop.xlane.xlu0 %1542
  %v1544 = vsel %vm609, %v1522, 0.0
  %1545 = vadd.xlane.f32.xlu0 %v1544
  %v1546 = vpop.xlane.xlu0 %1545
  %v1547 = vsel %vm609, %v1523, 0.0
  %1548 = vadd.xlane.f32.xlu0 %v1547
  %v1549 = vpop.xlane.xlu0 %1548
  %v1550 = vsel %vm609, %v1524, 0.0
  %1551 = vadd.xlane.f32.xlu0 %v1550
  %v1552 = vpop.xlane.xlu0 %1551
  %v1553 = vsel %vm627, %v1525, 0.0
  %1554 = vadd.xlane.f32.xlu0 %v1553
  %v1555 = vpop.xlane.xlu0 %1554
  %v1556 = vsel %vm176, %v1480, 0.0
  %v1557 = vsel %vm177, %v1480, 0.0
  %v1558 = vsel %vm178, %v1480, 0.0
  %v1559 = vsel %vm179, %v1480, 0.0
  %v1560 = vsel %vm180, %v1480, 0.0
  %v1561 = vsel %vm181, %v1480, 0.0
  %v1562 = vsel %vm182, %v1480, 0.0
  %v1563 = vsel %vm183, %v1480, 0.0
  %v1564 = vsel %vm184, %v1480, 0.0
  %v1565 = vsel %vm185, %v1480, 0.0
  %v1566 = vsel %vm296, %v1556, 0.0
  %1567 = vadd.xlane.f32.xlu0 %v1566
  %v1568 = vpop.xlane.xlu0 %1567
  %v1569 = vsel %vm296, %v1557, 0.0
  %1570 = vadd.xlane.f32.xlu0 %v1569
  %v1571 = vpop.xlane.xlu0 %1570
  %v1572 = vsel %vm296, %v1558, 0.0
  %1573 = vadd.xlane.f32.xlu0 %v1572
  %v1574 = vpop.xlane.xlu0 %1573
  %v1575 = vsel %vm296, %v1559, 0.0
  %1576 = vadd.xlane.f32.xlu0 %v1575
  %v1577 = vpop.xlane.xlu0 %1576
  %v1578 = vsel %vm296, %v1560, 0.0
  %1579 = vadd.xlane.f32.xlu0 %v1578
  %v1580 = vpop.xlane.xlu0 %1579
  %v1581 = vsel %vm296, %v1561, 0.0
  %1582 = vadd.xlane.f32.xlu0 %v1581
  %v1583 = vpop.xlane.xlu0 %1582
  %v1584 = vsel %vm296, %v1562, 0.0
  %1585 = vadd.xlane.f32.xlu0 %v1584
  %v1586 = vpop.xlane.xlu0 %1585
  %v1587 = vsel %vm296, %v1563, 0.0
  %1588 = vadd.xlane.f32.xlu0 %v1587
  %v1589 = vpop.xlane.xlu0 %1588
  %v1590 = vsel %vm296, %v1564, 0.0
  %1591 = vadd.xlane.f32.xlu0 %v1590
  %v1592 = vpop.xlane.xlu0 %1591
  %v1593 = vsel %vm465, %v1565, 0.0
  %1594 = vadd.xlane.f32.xlu0 %v1593
  %v1595 = vpop.xlane.xlu0 %1594
  %v1596 = vadd.f32 %v1528, %v1568
  %v1597 = vadd.f32 %v1531, %v1571
  %v1598 = vadd.f32 %v1534, %v1574
  %v1599 = vadd.f32 %v1537, %v1577
  %v1600 = vadd.f32 %v1540, %v1580
  %v1601 = vadd.f32 %v1543, %v1583
  %v1602 = vadd.f32 %v1546, %v1586
  %v1603 = vadd.f32 %v1549, %v1589
  %v1604 = vadd.f32 %v1552, %v1592
  %v1605 = vadd.f32 %v1555, %v1595
  %v1606 = vsel %vm166, %v1404, -3.4028235e+38
  %v1607 = vsel %vm167, %v1404, -3.4028235e+38
  %v1608 = vsel %vm168, %v1404, -3.4028235e+38
  %v1609 = vsel %vm169, %v1404, -3.4028235e+38
  %v1610 = vsel %vm170, %v1404, -3.4028235e+38
  %v1611 = vsel %vm171, %v1404, -3.4028235e+38
  %v1612 = vsel %vm172, %v1404, -3.4028235e+38
  %v1613 = vsel %vm173, %v1404, -3.4028235e+38
  %v1614 = vsel %vm174, %v1404, -3.4028235e+38
  %v1615 = vsel %vm175, %v1404, -3.4028235e+38
  %v1616 = vsel %vm609, %v1606, -inf
  %1617 = vmax.xlane.f32.xlu0 %v1616
  %v1618 = vpop.xlane.xlu0 %1617
  %v1619 = vsel %vm609, %v1607, -inf
  %1620 = vmax.xlane.f32.xlu0 %v1619
  %v1621 = vpop.xlane.xlu0 %1620
  %v1622 = vsel %vm609, %v1608, -inf
  %1623 = vmax.xlane.f32.xlu0 %v1622
  %v1624 = vpop.xlane.xlu0 %1623
  %v1625 = vsel %vm609, %v1609, -inf
  %1626 = vmax.xlane.f32.xlu0 %v1625
  %v1627 = vpop.xlane.xlu0 %1626
  %v1628 = vsel %vm609, %v1610, -inf
  %1629 = vmax.xlane.f32.xlu0 %v1628
  %v1630 = vpop.xlane.xlu0 %1629
  %v1631 = vsel %vm609, %v1611, -inf
  %1632 = vmax.xlane.f32.xlu0 %v1631
  %v1633 = vpop.xlane.xlu0 %1632
  %v1634 = vsel %vm609, %v1612, -inf
  %1635 = vmax.xlane.f32.xlu0 %v1634
  %v1636 = vpop.xlane.xlu0 %1635
  %v1637 = vsel %vm609, %v1613, -inf
  %1638 = vmax.xlane.f32.xlu0 %v1637
  %v1639 = vpop.xlane.xlu0 %1638
  %v1640 = vsel %vm609, %v1614, -inf
  %1641 = vmax.xlane.f32.xlu0 %v1640
  %v1642 = vpop.xlane.xlu0 %1641
  %v1643 = vsel %vm627, %v1615, -inf
  %1644 = vmax.xlane.f32.xlu0 %v1643
  %v1645 = vpop.xlane.xlu0 %1644
  %v1646 = vsel %vm176, %v1515, -3.4028235e+38
  %v1647 = vsel %vm177, %v1515, -3.4028235e+38
  %v1648 = vsel %vm178, %v1515, -3.4028235e+38
  %v1649 = vsel %vm179, %v1515, -3.4028235e+38
  %v1650 = vsel %vm180, %v1515, -3.4028235e+38
  %v1651 = vsel %vm181, %v1515, -3.4028235e+38
  %v1652 = vsel %vm182, %v1515, -3.4028235e+38
  %v1653 = vsel %vm183, %v1515, -3.4028235e+38
  %v1654 = vsel %vm184, %v1515, -3.4028235e+38
  %v1655 = vsel %vm185, %v1515, -3.4028235e+38
  %v1656 = vsel %vm296, %v1646, -inf
  %1657 = vmax.xlane.f32.xlu0 %v1656
  %v1658 = vpop.xlane.xlu0 %1657
  %v1659 = vsel %vm296, %v1647, -inf
  %1660 = vmax.xlane.f32.xlu0 %v1659
  %v1661 = vpop.xlane.xlu0 %1660
  %v1662 = vsel %vm296, %v1648, -inf
  %1663 = vmax.xlane.f32.xlu0 %v1662
  %v1664 = vpop.xlane.xlu0 %1663
  %v1665 = vsel %vm296, %v1649, -inf
  %1666 = vmax.xlane.f32.xlu0 %v1665
  %v1667 = vpop.xlane.xlu0 %1666
  %v1668 = vsel %vm296, %v1650, -inf
  %1669 = vmax.xlane.f32.xlu0 %v1668
  %v1670 = vpop.xlane.xlu0 %1669
  %v1671 = vsel %vm296, %v1651, -inf
  %1672 = vmax.xlane.f32.xlu0 %v1671
  %v1673 = vpop.xlane.xlu0 %1672
  %v1674 = vsel %vm296, %v1652, -inf
  %1675 = vmax.xlane.f32.xlu0 %v1674
  %v1676 = vpop.xlane.xlu0 %1675
  %v1677 = vsel %vm296, %v1653, -inf
  %1678 = vmax.xlane.f32.xlu0 %v1677
  %v1679 = vpop.xlane.xlu0 %1678
  %v1680 = vsel %vm296, %v1654, -inf
  %1681 = vmax.xlane.f32.xlu0 %v1680
  %v1682 = vpop.xlane.xlu0 %1681
  %v1683 = vsel %vm465, %v1655, -inf
  %1684 = vmax.xlane.f32.xlu0 %v1683
  %v1685 = vpop.xlane.xlu0 %1684
  %v1686 = vmax.f32 %v1618, %v1658
  %v1687 = vmax.f32 %v1621, %v1661
  %v1688 = vmax.f32 %v1624, %v1664
  %v1689 = vmax.f32 %v1627, %v1667
  %v1690 = vmax.f32 %v1630, %v1670
  %v1691 = vmax.f32 %v1633, %v1673
  %v1692 = vmax.f32 %v1636, %v1676
  %v1693 = vmax.f32 %v1639, %v1679
  %v1694 = vmax.f32 %v1642, %v1682
  %v1695 = vmax.f32 %v1645, %v1685
  %v1696 = vsel %vm609, %v1417, 0.0
  %v1697 = vsel %vm609, %v1419, 0.0
  %v1698 = vadd.f32 %v1696, %v1697
  %v1699 = vsel %vm609, %v1421, 0.0
  %v1700 = vadd.f32 %v1698, %v1699
  %v1701 = vsel %vm609, %v1423, 0.0
  %v1702 = vadd.f32 %v1700, %v1701
  %v1703 = vsel %vm609, %v1425, 0.0
  %v1704 = vadd.f32 %v1702, %v1703
  %v1705 = vsel %vm609, %v1427, 0.0
  %v1706 = vadd.f32 %v1704, %v1705
  %v1707 = vsel %vm609, %v1429, 0.0
  %v1708 = vadd.f32 %v1706, %v1707
  %v1709 = vsel %vm609, %v1431, 0.0
  %v1710 = vadd.f32 %v1708, %v1709
  %v1711 = vsel %vm609, %v1433, 0.0
  %v1712 = vadd.f32 %v1710, %v1711
  %v1713 = vsel %vm627, %v1435, 0.0
  %v1714 = vadd.f32 %v1712, %v1713
  %1715 = vadd.xlane.f32.xlu0 %v1714
  %v1716 = vpop.xlane.xlu0 %1715
  %v1717 = vrot.slane %v1716, 4
  %v1718 = vadd.f32 %v1716, %v1717
  %v1719 = vrot.slane %v1718, 2
  %v1720 = vadd.f32 %v1718, %v1719
  %v1721 = vrot.slane %v1720, 1
  %v1722 = vadd.f32 %v1720, %v1721
  %s1723 = vtos %v1722
  %v1724 = vstv %s1723
  %v1725 = vsel %vm186, %v1724, %v1596
  %v1726 = vsel %vm187, %v1724, %v1597
  %v1727 = vsel %vm188, %v1724, %v1598
  %v1728 = vsel %vm189, %v1724, %v1599
  %v1729 = vsel %vm190, %v1724, %v1600
  %v1730 = vsel %vm191, %v1724, %v1601
  %v1731 = vsel %vm192, %v1724, %v1602
  %v1732 = vsel %vm193, %v1724, %v1603
  %v1733 = vsel %vm194, %v1724, %v1604
  %v1734 = vsel %vm195, %v1724, %v1605
  %vm1735 = vcmask 637958
  %v1736 = vsel %vm1735, %v224, -inf
  %v1737 = vsel %vm609, %v226, -inf
  %v1738 = vsel %vm609, %v228, -inf
  %v1739 = vsel %vm609, %v230, -inf
  %v1740 = vsel %vm609, %v232, -inf
  %v1741 = vmax.f32 %v1736, %v1740
  %v1742 = vsel %vm609, %v234, -inf
  %v1743 = vmax.f32 %v1737, %v1742
  %v1744 = vsel %vm609, %v236, -inf
  %v1745 = vmax.f32 %v1738, %v1744
  %v1746 = vsel %vm609, %v238, -inf
  %v1747 = vmax.f32 %v1739, %v1746
  %v1748 = vsel %vm609, %v240, -inf
  %v1749 = vmax.f32 %v1741, %v1748
  %v1750 = vsel %vm609, %v242, -inf
  %v1751 = vmax.f32 %v1743, %v1750
  %vm1752 = vcmask 633856
  %v1753 = vsel %vm1752, %v244, -inf
  %v1754 = vmax.f32 %v1745, %v1753
  %v1755 = vmax.f32 %v1749, %v1751
  %v1756 = vmax.f32 %v1754, %v1747
  %v1757 = vmax.f32 %v1755, %v1756
  %1758 = vmax.xlane.f32.xlu0 %v1757
  %v1759 = vpop.xlane.xlu0 %1758
  %v1760 = vrot.slane %v1759, 4
  %v1761 = vmax.f32 %v1759, %v1760
  %v1762 = vrot.slane %v1761, 2
  %v1763 = vmax.f32 %v1761, %v1762
  %v1764 = vrot.slane %v1763, 1
  %v1765 = vmax.f32 %v1763, %v1764
  %s1766 = vtos %v1765
  %v1767 = vstv %s1766
  %v1768 = vsel %vm186, %v1767, %v1686
  %v1769 = vsel %vm187, %v1767, %v1687
  %v1770 = vsel %vm188, %v1767, %v1688
  %v1771 = vsel %vm189, %v1767, %v1689
  %v1772 = vsel %vm190, %v1767, %v1690
  %v1773 = vsel %vm191, %v1767, %v1691
  %v1774 = vsel %vm192, %v1767, %v1692
  %v1775 = vsel %vm193, %v1767, %v1693
  %v1776 = vsel %vm194, %v1767, %v1694
  %v1777 = vsel %vm195, %v1767, %v1695
  %v1778 = vmul.f32 %v1725, %v196
  %v1779 = vmul.f32 %v1726, %v197
  %v1780 = vmul.f32 %v1727, %v198
  %v1781 = vmul.f32 %v1728, %v199
  %v1782 = vmul.f32 %v1729, %v200
  %v1783 = vmul.f32 %v1730, %v201
  %v1784 = vmul.f32 %v1731, %v202
  %v1785 = vmul.f32 %v1732, %v203
  %v1786 = vmul.f32 %v1733, %v204
  %v1787 = vmul.f32 %v1734, %v205
  %v1798 = vrot.slane %v265, 6
  %v1799 = vrot.slane %v267, 6
  %v1800 = vsel %vm710, %v1798, %v1799
  %v1801 = vrot.slane %v269, 6
  %v1802 = vsel %vm710, %v1799, %v1801
  %v1803 = vrot.slane %v271, 6
  %v1804 = vsel %vm710, %v1801, %v1803
  %v1805 = vrot.slane %v273, 6
  %v1806 = vsel %vm710, %v1803, %v1805
  %v1807 = vrot.slane %v275, 6
  %v1808 = vsel %vm710, %v1805, %v1807
  %v1809 = vrot.slane %v277, 6
  %v1810 = vsel %vm710, %v1807, %v1809
  %v1811 = vrot.slane %v279, 6
  %v1812 = vsel %vm710, %v1809, %v1811
  %v1813 = vrot.slane %v281, 6
  %v1814 = vsel %vm710, %v1811, %v1813
  %v1815 = vrot.slane %v283, 6
  %v1816 = vsel %vm710, %v1813, %v1815
  %v1817 = vrot.slane %v285, 6
  %v1818 = vsel %vm710, %v1815, %v1817
  %1819 = vrot.lane.b32.xlu0 %v713, 50
  %v1820 = vpop.permute.xlu0 %1819
  %1821 = vrot.lane.b32.xlu0 %v1800, 50
  %v1822 = vpop.permute.xlu0 %1821
  %1823 = vrot.lane.b32.xlu0 %v715, 50
  %v1824 = vpop.permute.xlu0 %1823
  %1825 = vrot.lane.b32.xlu0 %v1802, 50
  %v1826 = vpop.permute.xlu0 %1825
  %1827 = vrot.lane.b32.xlu0 %v717, 50
  %v1828 = vpop.permute.xlu0 %1827
  %1829 = vrot.lane.b32.xlu0 %v1804, 50
  %v1830 = vpop.permute.xlu0 %1829
  %1831 = vrot.lane.b32.xlu0 %v719, 50
  %v1832 = vpop.permute.xlu0 %1831
  %1833 = vrot.lane.b32.xlu0 %v1806, 50
  %v1834 = vpop.permute.xlu0 %1833
  %1835 = vrot.lane.b32.xlu0 %v721, 50
  %v1836 = vpop.permute.xlu0 %1835
  %1837 = vrot.lane.b32.xlu0 %v1808, 50
  %v1838 = vpop.permute.xlu0 %1837
  %1839 = vrot.lane.b32.xlu0 %v723, 50
  %v1840 = vpop.permute.xlu0 %1839
  %1841 = vrot.lane.b32.xlu0 %v1810, 50
  %v1842 = vpop.permute.xlu0 %1841
  %1843 = vrot.lane.b32.xlu0 %v725, 50
  %v1844 = vpop.permute.xlu0 %1843
  %1845 = vrot.lane.b32.xlu0 %v1812, 50
  %v1846 = vpop.permute.xlu0 %1845
  %1847 = vrot.lane.b32.xlu0 %v727, 50
  %v1848 = vpop.permute.xlu0 %1847
  %1849 = vrot.lane.b32.xlu0 %v1814, 50
  %v1850 = vpop.permute.xlu0 %1849
  %1851 = vrot.lane.b32.xlu0 %v729, 50
  %v1852 = vpop.permute.xlu0 %1851
  %1853 = vrot.lane.b32.xlu0 %v1816, 50
  %v1854 = vpop.permute.xlu0 %1853
  %1855 = vrot.lane.b32.xlu0 %v731, 50
  %v1856 = vpop.permute.xlu0 %1855
  %1857 = vrot.lane.b32.xlu0 %v1818, 50
  %v1858 = vpop.permute.xlu0 %1857
  %v1859 = vsel %vm872, %v1820, %v1822
  %v1860 = vsel %vm872, %v1824, %v1826
  %v1861 = vsel %vm872, %v1828, %v1830
  %v1862 = vsel %vm872, %v1832, %v1834
  %v1863 = vsel %vm872, %v1836, %v1838
  %v1864 = vsel %vm872, %v1840, %v1842
  %v1865 = vsel %vm872, %v1844, %v1846
  %v1866 = vsel %vm872, %v1848, %v1850
  %v1867 = vsel %vm872, %v1852, %v1854
  %v1868 = vsel %vm872, %v1856, %v1858
  %v1879 = vsel %vm66, %v1859, 0.0
  %v1880 = vsel %vm67, %v1860, 0.0
  %v1881 = vsel %vm68, %v1861, 0.0
  %v1882 = vsel %vm69, %v1862, 0.0
  %v1883 = vsel %vm70, %v1863, 0.0
  %v1884 = vsel %vm71, %v1864, 0.0
  %v1885 = vsel %vm72, %v1865, 0.0
  %v1886 = vsel %vm73, %v1866, 0.0
  %v1887 = vsel %vm74, %v1867, 0.0
  %v1888 = vsel %vm75, %v1868, 0.0
  %v1889 = vsel %vm609, %v1879, 0.0
  %v1890 = vsel %vm609, %v1880, 0.0
  %v1891 = vadd.f32 %v1889, %v1890
  %v1892 = vsel %vm609, %v1881, 0.0
  %v1893 = vadd.f32 %v1891, %v1892
  %v1894 = vsel %vm609, %v1882, 0.0
  %v1895 = vadd.f32 %v1893, %v1894
  %v1896 = vsel %vm609, %v1883, 0.0
  %v1897 = vadd.f32 %v1895, %v1896
  %v1898 = vsel %vm609, %v1884, 0.0
  %v1899 = vadd.f32 %v1897, %v1898
  %v1900 = vsel %vm609, %v1885, 0.0
  %v1901 = vadd.f32 %v1899, %v1900
  %v1902 = vsel %vm609, %v1886, 0.0
  %v1903 = vadd.f32 %v1901, %v1902
  %v1904 = vsel %vm609, %v1887, 0.0
  %v1905 = vadd.f32 %v1903, %v1904
  %v1906 = vsel %vm627, %v1888, 0.0
  %v1907 = vadd.f32 %v1905, %v1906
  %v1908 = vrot.slane %v1907, 4
  %v1909 = vadd.f32 %v1907, %v1908
  %v1910 = vrot.slane %v1909, 2
  %v1911 = vadd.f32 %v1909, %v1910
  %v1912 = vrot.slane %v1911, 1
  %v1913 = vadd.f32 %v1911, %v1912
  %v1914 = vsel %vm66, %v1859, -3.4028235e+38
  %v1915 = vsel %vm67, %v1860, -3.4028235e+38
  %v1916 = vsel %vm68, %v1861, -3.4028235e+38
  %v1917 = vsel %vm69, %v1862, -3.4028235e+38
  %v1918 = vsel %vm70, %v1863, -3.4028235e+38
  %v1919 = vsel %vm71, %v1864, -3.4028235e+38
  %v1920 = vsel %vm72, %v1865, -3.4028235e+38
  %v1921 = vsel %vm73, %v1866, -3.4028235e+38
  %v1922 = vsel %vm74, %v1867, -3.4028235e+38
  %v1923 = vsel %vm75, %v1868, -3.4028235e+38
  %v1924 = vsel %vm609, %v1914, -inf
  %v1925 = vsel %vm609, %v1915, -inf
  %v1926 = vsel %vm609, %v1916, -inf
  %v1927 = vsel %vm609, %v1917, -inf
  %v1928 = vsel %vm609, %v1918, -inf
  %v1929 = vmax.f32 %v1924, %v1928
  %v1930 = vsel %vm609, %v1919, -inf
  %v1931 = vmax.f32 %v1925, %v1930
  %v1932 = vsel %vm609, %v1920, -inf
  %v1933 = vmax.f32 %v1926, %v1932
  %v1934 = vsel %vm609, %v1921, -inf
  %v1935 = vmax.f32 %v1927, %v1934
  %v1936 = vsel %vm609, %v1922, -inf
  %v1937 = vmax.f32 %v1929, %v1936
  %v1938 = vsel %vm627, %v1923, -inf
  %v1939 = vmax.f32 %v1931, %v1938
  %v1940 = vmax.f32 %v1937, %v1939
  %v1941 = vmax.f32 %v1933, %v1935
  %v1942 = vmax.f32 %v1940, %v1941
  %v1943 = vrot.slane %v1942, 4
  %v1944 = vmax.f32 %v1942, %v1943
  %v1945 = vrot.slane %v1944, 2
  %v1946 = vmax.f32 %v1944, %v1945
  %v1947 = vrot.slane %v1946, 1
  %v1948 = vmax.f32 %v1946, %v1947
  %v1959 = vrot.slane %v225, 6
  %v1960 = vrot.slane %v227, 6
  %v1961 = vsel %vm710, %v1959, %v1960
  %v1962 = vrot.slane %v229, 6
  %v1963 = vsel %vm710, %v1960, %v1962
  %v1964 = vrot.slane %v231, 6
  %v1965 = vsel %vm710, %v1962, %v1964
  %v1966 = vrot.slane %v233, 6
  %v1967 = vsel %vm710, %v1964, %v1966
  %v1968 = vrot.slane %v235, 6
  %v1969 = vsel %vm710, %v1966, %v1968
  %v1970 = vrot.slane %v237, 6
  %v1971 = vsel %vm710, %v1968, %v1970
  %v1972 = vrot.slane %v239, 6
  %v1973 = vsel %vm710, %v1970, %v1972
  %v1974 = vrot.slane %v241, 6
  %v1975 = vsel %vm710, %v1972, %v1974
  %v1976 = vrot.slane %v243, 6
  %v1977 = vsel %vm710, %v1974, %v1976
  %v1978 = vrot.slane %v245, 6
  %v1979 = vsel %vm710, %v1976, %v1978
  %1980 = vrot.lane.b32.xlu0 %v1417, 50
  %v1981 = vpop.permute.xlu0 %1980
  %1982 = vrot.lane.b32.xlu0 %v1961, 50
  %v1983 = vpop.permute.xlu0 %1982
  %1984 = vrot.lane.b32.xlu0 %v1419, 50
  %v1985 = vpop.permute.xlu0 %1984
  %1986 = vrot.lane.b32.xlu0 %v1963, 50
  %v1987 = vpop.permute.xlu0 %1986
  %1988 = vrot.lane.b32.xlu0 %v1421, 50
  %v1989 = vpop.permute.xlu0 %1988
  %1990 = vrot.lane.b32.xlu0 %v1965, 50
  %v1991 = vpop.permute.xlu0 %1990
  %1992 = vrot.lane.b32.xlu0 %v1423, 50
  %v1993 = vpop.permute.xlu0 %1992
  %1994 = vrot.lane.b32.xlu0 %v1967, 50
  %v1995 = vpop.permute.xlu0 %1994
  %1996 = vrot.lane.b32.xlu0 %v1425, 50
  %v1997 = vpop.permute.xlu0 %1996
  %1998 = vrot.lane.b32.xlu0 %v1969, 50
  %v1999 = vpop.permute.xlu0 %1998
  %2000 = vrot.lane.b32.xlu0 %v1427, 50
  %v2001 = vpop.permute.xlu0 %2000
  %2002 = vrot.lane.b32.xlu0 %v1971, 50
  %v2003 = vpop.permute.xlu0 %2002
  %2004 = vrot.lane.b32.xlu0 %v1429, 50
  %v2005 = vpop.permute.xlu0 %2004
  %2006 = vrot.lane.b32.xlu0 %v1973, 50
  %v2007 = vpop.permute.xlu0 %2006
  %2008 = vrot.lane.b32.xlu0 %v1431, 50
  %v2009 = vpop.permute.xlu0 %2008
  %2010 = vrot.lane.b32.xlu0 %v1975, 50
  %v2011 = vpop.permute.xlu0 %2010
  %2012 = vrot.lane.b32.xlu0 %v1433, 50
  %v2013 = vpop.permute.xlu0 %2012
  %2014 = vrot.lane.b32.xlu0 %v1977, 50
  %v2015 = vpop.permute.xlu0 %2014
  %2016 = vrot.lane.b32.xlu0 %v1435, 50
  %v2017 = vpop.permute.xlu0 %2016
  %2018 = vrot.lane.b32.xlu0 %v1979, 50
  %v2019 = vpop.permute.xlu0 %2018
  %v2020 = vsel %vm872, %v1981, %v1983
  %v2021 = vsel %vm872, %v1985, %v1987
  %v2022 = vsel %vm872, %v1989, %v1991
  %v2023 = vsel %vm872, %v1993, %v1995
  %v2024 = vsel %vm872, %v1997, %v1999
  %v2025 = vsel %vm872, %v2001, %v2003
  %v2026 = vsel %vm872, %v2005, %v2007
  %v2027 = vsel %vm872, %v2009, %v2011
  %v2028 = vsel %vm872, %v2013, %v2015
  %v2029 = vsel %vm872, %v2017, %v2019
  %v2040 = vsel %vm76, %v2020, 0.0
  %v2041 = vsel %vm77, %v2021, 0.0
  %v2042 = vsel %vm78, %v2022, 0.0
  %v2043 = vsel %vm79, %v2023, 0.0
  %v2044 = vsel %vm80, %v2024, 0.0
  %v2045 = vsel %vm81, %v2025, 0.0
  %v2046 = vsel %vm82, %v2026, 0.0
  %v2047 = vsel %vm83, %v2027, 0.0
  %v2048 = vsel %vm84, %v2028, 0.0
  %v2049 = vsel %vm85, %v2029, 0.0
  %v2050 = vsel %vm609, %v2040, 0.0
  %v2051 = vsel %vm609, %v2041, 0.0
  %v2052 = vadd.f32 %v2050, %v2051
  %v2053 = vsel %vm609, %v2042, 0.0
  %v2054 = vadd.f32 %v2052, %v2053
  %v2055 = vsel %vm609, %v2043, 0.0
  %v2056 = vadd.f32 %v2054, %v2055
  %v2057 = vsel %vm609, %v2044, 0.0
  %v2058 = vadd.f32 %v2056, %v2057
  %v2059 = vsel %vm609, %v2045, 0.0
  %v2060 = vadd.f32 %v2058, %v2059
  %v2061 = vsel %vm609, %v2046, 0.0
  %v2062 = vadd.f32 %v2060, %v2061
  %v2063 = vsel %vm609, %v2047, 0.0
  %v2064 = vadd.f32 %v2062, %v2063
  %v2065 = vsel %vm609, %v2048, 0.0
  %v2066 = vadd.f32 %v2064, %v2065
  %v2067 = vsel %vm627, %v2049, 0.0
  %v2068 = vadd.f32 %v2066, %v2067
  %v2069 = vrot.slane %v2068, 4
  %v2070 = vadd.f32 %v2068, %v2069
  %v2071 = vrot.slane %v2070, 2
  %v2072 = vadd.f32 %v2070, %v2071
  %v2073 = vrot.slane %v2072, 1
  %v2074 = vadd.f32 %v2072, %v2073
  %v2075 = vsel %vm66, %v2020, -3.4028235e+38
  %v2076 = vsel %vm67, %v2021, -3.4028235e+38
  %v2077 = vsel %vm68, %v2022, -3.4028235e+38
  %v2078 = vsel %vm69, %v2023, -3.4028235e+38
  %v2079 = vsel %vm70, %v2024, -3.4028235e+38
  %v2080 = vsel %vm71, %v2025, -3.4028235e+38
  %v2081 = vsel %vm72, %v2026, -3.4028235e+38
  %v2082 = vsel %vm73, %v2027, -3.4028235e+38
  %v2083 = vsel %vm74, %v2028, -3.4028235e+38
  %v2084 = vsel %vm75, %v2029, -3.4028235e+38
  %v2085 = vsel %vm609, %v2075, -inf
  %v2086 = vsel %vm609, %v2076, -inf
  %v2087 = vsel %vm609, %v2077, -inf
  %v2088 = vsel %vm609, %v2078, -inf
  %v2089 = vsel %vm609, %v2079, -inf
  %v2090 = vmax.f32 %v2085, %v2089
  %v2091 = vsel %vm609, %v2080, -inf
  %v2092 = vmax.f32 %v2086, %v2091
  %v2093 = vsel %vm609, %v2081, -inf
  %v2094 = vmax.f32 %v2087, %v2093
  %v2095 = vsel %vm609, %v2082, -inf
  %v2096 = vmax.f32 %v2088, %v2095
  %v2097 = vsel %vm609, %v2083, -inf
  %v2098 = vmax.f32 %v2090, %v2097
  %v2099 = vsel %vm627, %v2084, -inf
  %v2100 = vmax.f32 %v2092, %v2099
  %v2101 = vmax.f32 %v2098, %v2100
  %v2102 = vmax.f32 %v2094, %v2096
  %v2103 = vmax.f32 %v2101, %v2102
  %v2104 = vrot.slane %v2103, 4
  %v2105 = vmax.f32 %v2103, %v2104
  %v2106 = vrot.slane %v2105, 2
  %v2107 = vmax.f32 %v2105, %v2106
  %v2108 = vrot.slane %v2107, 1
  %v2109 = vmax.f32 %v2107, %v2108
  %v2110 = vsel %vm166, %v1913, 0.0
  %v2111 = vsel %vm167, %v1913, 0.0
  %v2112 = vsel %vm168, %v1913, 0.0
  %v2113 = vsel %vm169, %v1913, 0.0
  %v2114 = vsel %vm170, %v1913, 0.0
  %v2115 = vsel %vm171, %v1913, 0.0
  %v2116 = vsel %vm172, %v1913, 0.0
  %v2117 = vsel %vm173, %v1913, 0.0
  %v2118 = vsel %vm174, %v1913, 0.0
  %v2119 = vsel %vm175, %v1913, 0.0
  %v2120 = vsel %vm609, %v2110, 0.0
  %2121 = vadd.xlane.f32.xlu0 %v2120
  %v2122 = vpop.xlane.xlu0 %2121
  %v2123 = vsel %vm609, %v2111, 0.0
  %2124 = vadd.xlane.f32.xlu0 %v2123
  %v2125 = vpop.xlane.xlu0 %2124
  %v2126 = vsel %vm609, %v2112, 0.0
  %2127 = vadd.xlane.f32.xlu0 %v2126
  %v2128 = vpop.xlane.xlu0 %2127
  %v2129 = vsel %vm609, %v2113, 0.0
  %2130 = vadd.xlane.f32.xlu0 %v2129
  %v2131 = vpop.xlane.xlu0 %2130
  %v2132 = vsel %vm609, %v2114, 0.0
  %2133 = vadd.xlane.f32.xlu0 %v2132
  %v2134 = vpop.xlane.xlu0 %2133
  %v2135 = vsel %vm609, %v2115, 0.0
  %2136 = vadd.xlane.f32.xlu0 %v2135
  %v2137 = vpop.xlane.xlu0 %2136
  %v2138 = vsel %vm609, %v2116, 0.0
  %2139 = vadd.xlane.f32.xlu0 %v2138
  %v2140 = vpop.xlane.xlu0 %2139
  %v2141 = vsel %vm609, %v2117, 0.0
  %2142 = vadd.xlane.f32.xlu0 %v2141
  %v2143 = vpop.xlane.xlu0 %2142
  %v2144 = vsel %vm609, %v2118, 0.0
  %2145 = vadd.xlane.f32.xlu0 %v2144
  %v2146 = vpop.xlane.xlu0 %2145
  %v2147 = vsel %vm627, %v2119, 0.0
  %2148 = vadd.xlane.f32.xlu0 %v2147
  %v2149 = vpop.xlane.xlu0 %2148
  %v2150 = vsel %vm166, %v2074, 0.0
  %v2151 = vsel %vm167, %v2074, 0.0
  %v2152 = vsel %vm168, %v2074, 0.0
  %v2153 = vsel %vm169, %v2074, 0.0
  %v2154 = vsel %vm170, %v2074, 0.0
  %v2155 = vsel %vm171, %v2074, 0.0
  %v2156 = vsel %vm172, %v2074, 0.0
  %v2157 = vsel %vm173, %v2074, 0.0
  %v2158 = vsel %vm174, %v2074, 0.0
  %v2159 = vsel %vm175, %v2074, 0.0
  %v2160 = vsel %vm609, %v2150, 0.0
  %2161 = vadd.xlane.f32.xlu0 %v2160
  %v2162 = vpop.xlane.xlu0 %2161
  %v2163 = vsel %vm609, %v2151, 0.0
  %2164 = vadd.xlane.f32.xlu0 %v2163
  %v2165 = vpop.xlane.xlu0 %2164
  %v2166 = vsel %vm609, %v2152, 0.0
  %2167 = vadd.xlane.f32.xlu0 %v2166
  %v2168 = vpop.xlane.xlu0 %2167
  %v2169 = vsel %vm609, %v2153, 0.0
  %2170 = vadd.xlane.f32.xlu0 %v2169
  %v2171 = vpop.xlane.xlu0 %2170
  %v2172 = vsel %vm609, %v2154, 0.0
  %2173 = vadd.xlane.f32.xlu0 %v2172
  %v2174 = vpop.xlane.xlu0 %2173
  %v2175 = vsel %vm609, %v2155, 0.0
  %2176 = vadd.xlane.f32.xlu0 %v2175
  %v2177 = vpop.xlane.xlu0 %2176
  %v2178 = vsel %vm609, %v2156, 0.0
  %2179 = vadd.xlane.f32.xlu0 %v2178
  %v2180 = vpop.xlane.xlu0 %2179
  %v2181 = vsel %vm609, %v2157, 0.0
  %2182 = vadd.xlane.f32.xlu0 %v2181
  %v2183 = vpop.xlane.xlu0 %2182
  %v2184 = vsel %vm609, %v2158, 0.0
  %2185 = vadd.xlane.f32.xlu0 %v2184
  %v2186 = vpop.xlane.xlu0 %2185
  %v2187 = vsel %vm627, %v2159, 0.0
  %2188 = vadd.xlane.f32.xlu0 %v2187
  %v2189 = vpop.xlane.xlu0 %2188
  %v2190 = vadd.f32 %v2122, %v2162
  %v2191 = vadd.f32 %v2125, %v2165
  %v2192 = vadd.f32 %v2128, %v2168
  %v2193 = vadd.f32 %v2131, %v2171
  %v2194 = vadd.f32 %v2134, %v2174
  %v2195 = vadd.f32 %v2137, %v2177
  %v2196 = vadd.f32 %v2140, %v2180
  %v2197 = vadd.f32 %v2143, %v2183
  %v2198 = vadd.f32 %v2146, %v2186
  %v2199 = vadd.f32 %v2149, %v2189
  %v2200 = vsel %vm166, %v1948, -3.4028235e+38
  %v2201 = vsel %vm167, %v1948, -3.4028235e+38
  %v2202 = vsel %vm168, %v1948, -3.4028235e+38
  %v2203 = vsel %vm169, %v1948, -3.4028235e+38
  %v2204 = vsel %vm170, %v1948, -3.4028235e+38
  %v2205 = vsel %vm171, %v1948, -3.4028235e+38
  %v2206 = vsel %vm172, %v1948, -3.4028235e+38
  %v2207 = vsel %vm173, %v1948, -3.4028235e+38
  %v2208 = vsel %vm174, %v1948, -3.4028235e+38
  %v2209 = vsel %vm175, %v1948, -3.4028235e+38
  %v2210 = vsel %vm609, %v2200, -inf
  %2211 = vmax.xlane.f32.xlu0 %v2210
  %v2212 = vpop.xlane.xlu0 %2211
  %v2213 = vsel %vm609, %v2201, -inf
  %2214 = vmax.xlane.f32.xlu0 %v2213
  %v2215 = vpop.xlane.xlu0 %2214
  %v2216 = vsel %vm609, %v2202, -inf
  %2217 = vmax.xlane.f32.xlu0 %v2216
  %v2218 = vpop.xlane.xlu0 %2217
  %v2219 = vsel %vm609, %v2203, -inf
  %2220 = vmax.xlane.f32.xlu0 %v2219
  %v2221 = vpop.xlane.xlu0 %2220
  %v2222 = vsel %vm609, %v2204, -inf
  %2223 = vmax.xlane.f32.xlu0 %v2222
  %v2224 = vpop.xlane.xlu0 %2223
  %v2225 = vsel %vm609, %v2205, -inf
  %2226 = vmax.xlane.f32.xlu0 %v2225
  %v2227 = vpop.xlane.xlu0 %2226
  %v2228 = vsel %vm609, %v2206, -inf
  %2229 = vmax.xlane.f32.xlu0 %v2228
  %v2230 = vpop.xlane.xlu0 %2229
  %v2231 = vsel %vm609, %v2207, -inf
  %2232 = vmax.xlane.f32.xlu0 %v2231
  %v2233 = vpop.xlane.xlu0 %2232
  %v2234 = vsel %vm609, %v2208, -inf
  %2235 = vmax.xlane.f32.xlu0 %v2234
  %v2236 = vpop.xlane.xlu0 %2235
  %v2237 = vsel %vm627, %v2209, -inf
  %2238 = vmax.xlane.f32.xlu0 %v2237
  %v2239 = vpop.xlane.xlu0 %2238
  %v2240 = vsel %vm166, %v2109, -3.4028235e+38
  %v2241 = vsel %vm167, %v2109, -3.4028235e+38
  %v2242 = vsel %vm168, %v2109, -3.4028235e+38
  %v2243 = vsel %vm169, %v2109, -3.4028235e+38
  %v2244 = vsel %vm170, %v2109, -3.4028235e+38
  %v2245 = vsel %vm171, %v2109, -3.4028235e+38
  %v2246 = vsel %vm172, %v2109, -3.4028235e+38
  %v2247 = vsel %vm173, %v2109, -3.4028235e+38
  %v2248 = vsel %vm174, %v2109, -3.4028235e+38
  %v2249 = vsel %vm175, %v2109, -3.4028235e+38
  %v2250 = vsel %vm609, %v2240, -inf
  %2251 = vmax.xlane.f32.xlu0 %v2250
  %v2252 = vpop.xlane.xlu0 %2251
  %v2253 = vsel %vm609, %v2241, -inf
  %2254 = vmax.xlane.f32.xlu0 %v2253
  %v2255 = vpop.xlane.xlu0 %2254
  %v2256 = vsel %vm609, %v2242, -inf
  %2257 = vmax.xlane.f32.xlu0 %v2256
  %v2258 = vpop.xlane.xlu0 %2257
  %v2259 = vsel %vm609, %v2243, -inf
  %2260 = vmax.xlane.f32.xlu0 %v2259
  %v2261 = vpop.xlane.xlu0 %2260
  %v2262 = vsel %vm609, %v2244, -inf
  %2263 = vmax.xlane.f32.xlu0 %v2262
  %v2264 = vpop.xlane.xlu0 %2263
  %v2265 = vsel %vm609, %v2245, -inf
  %2266 = vmax.xlane.f32.xlu0 %v2265
  %v2267 = vpop.xlane.xlu0 %2266
  %v2268 = vsel %vm609, %v2246, -inf
  %2269 = vmax.xlane.f32.xlu0 %v2268
  %v2270 = vpop.xlane.xlu0 %2269
  %v2271 = vsel %vm609, %v2247, -inf
  %2272 = vmax.xlane.f32.xlu0 %v2271
  %v2273 = vpop.xlane.xlu0 %2272
  %v2274 = vsel %vm609, %v2248, -inf
  %2275 = vmax.xlane.f32.xlu0 %v2274
  %v2276 = vpop.xlane.xlu0 %2275
  %v2277 = vsel %vm627, %v2249, -inf
  %2278 = vmax.xlane.f32.xlu0 %v2277
  %v2279 = vpop.xlane.xlu0 %2278
  %v2280 = vmax.f32 %v2212, %v2252
  %v2281 = vmax.f32 %v2215, %v2255
  %v2282 = vmax.f32 %v2218, %v2258
  %v2283 = vmax.f32 %v2221, %v2261
  %v2284 = vmax.f32 %v2224, %v2264
  %v2285 = vmax.f32 %v2227, %v2267
  %v2286 = vmax.f32 %v2230, %v2270
  %v2287 = vmax.f32 %v2233, %v2273
  %v2288 = vmax.f32 %v2236, %v2276
  %v2289 = vmax.f32 %v2239, %v2279
  %v2290 = vsel %vm609, %v2020, 0.0
  %v2291 = vsel %vm609, %v2021, 0.0
  %v2292 = vadd.f32 %v2290, %v2291
  %v2293 = vsel %vm609, %v2022, 0.0
  %v2294 = vadd.f32 %v2292, %v2293
  %v2295 = vsel %vm609, %v2023, 0.0
  %v2296 = vadd.f32 %v2294, %v2295
  %v2297 = vsel %vm609, %v2024, 0.0
  %v2298 = vadd.f32 %v2296, %v2297
  %v2299 = vsel %vm609, %v2025, 0.0
  %v2300 = vadd.f32 %v2298, %v2299
  %v2301 = vsel %vm609, %v2026, 0.0
  %v2302 = vadd.f32 %v2300, %v2301
  %v2303 = vsel %vm609, %v2027, 0.0
  %v2304 = vadd.f32 %v2302, %v2303
  %v2305 = vsel %vm609, %v2028, 0.0
  %v2306 = vadd.f32 %v2304, %v2305
  %v2307 = vsel %vm627, %v2029, 0.0
  %v2308 = vadd.f32 %v2306, %v2307
  %2309 = vadd.xlane.f32.xlu0 %v2308
  %v2310 = vpop.xlane.xlu0 %2309
  %v2311 = vrot.slane %v2310, 4
  %v2312 = vadd.f32 %v2310, %v2311
  %v2313 = vrot.slane %v2312, 2
  %v2314 = vadd.f32 %v2312, %v2313
  %v2315 = vrot.slane %v2314, 1
  %v2316 = vadd.f32 %v2314, %v2315
  %s2317 = vtos %v2316
  %v2318 = vstv %s2317
  %v2319 = vsel %vm186, %v2318, %v2190
  %v2320 = vsel %vm187, %v2318, %v2191
  %v2321 = vsel %vm188, %v2318, %v2192
  %v2322 = vsel %vm189, %v2318, %v2193
  %v2323 = vsel %vm190, %v2318, %v2194
  %v2324 = vsel %vm191, %v2318, %v2195
  %v2325 = vsel %vm192, %v2318, %v2196
  %v2326 = vsel %vm193, %v2318, %v2197
  %v2327 = vsel %vm194, %v2318, %v2198
  %v2328 = vsel %vm195, %v2318, %v2199
  %vm2329 = vcmask 1048182
  %v2330 = vsel %vm2329, %v224, -inf
  %vm2331 = vcmask 228358
  %v2332 = vsel %vm2331, %v225, -inf
  %v2333 = vsel %vm1183, %v226, -inf
  %v2334 = vsel %vm1185, %v227, -inf
  %v2335 = vsel %vm1183, %v228, -inf
  %v2336 = vmax.f32 %v2330, %v2335
  %v2337 = vsel %vm1185, %v229, -inf
  %v2338 = vmax.f32 %v2332, %v2337
  %v2339 = vsel %vm1183, %v230, -inf
  %v2340 = vmax.f32 %v2333, %v2339
  %v2341 = vsel %vm1185, %v231, -inf
  %v2342 = vmax.f32 %v2334, %v2341
  %v2343 = vsel %vm1183, %v232, -inf
  %v2344 = vmax.f32 %v2336, %v2343
  %v2345 = vsel %vm1185, %v233, -inf
  %v2346 = vmax.f32 %v2338, %v2345
  %v2347 = vsel %vm1183, %v234, -inf
  %v2348 = vmax.f32 %v2340, %v2347
  %v2349 = vsel %vm1185, %v235, -inf
  %v2350 = vmax.f32 %v2342, %v2349
  %v2351 = vsel %vm1183, %v236, -inf
  %v2352 = vmax.f32 %v2344, %v2351
  %v2353 = vsel %vm1185, %v237, -inf
  %v2354 = vmax.f32 %v2346, %v2353
  %v2355 = vsel %vm1183, %v238, -inf
  %v2356 = vmax.f32 %v2348, %v2355
  %v2357 = vsel %vm1185, %v239, -inf
  %v2358 = vmax.f32 %v2350, %v2357
  %v2359 = vsel %vm1183, %v240, -inf
  %v2360 = vmax.f32 %v2352, %v2359
  %v2361 = vsel %vm1185, %v241, -inf
  %v2362 = vmax.f32 %v2354, %v2361
  %v2363 = vsel %vm1183, %v242, -inf
  %v2364 = vmax.f32 %v2356, %v2363
  %v2365 = vsel %vm1185, %v243, -inf
  %v2366 = vmax.f32 %v2358, %v2365
  %vm2367 = vcmask 1044080
  %v2368 = vsel %vm2367, %v244, -inf
  %v2369 = vmax.f32 %v2360, %v2368
  %vm2370 = vcmask 224256
  %v2371 = vsel %vm2370, %v245, -inf
  %v2372 = vmax.f32 %v2362, %v2371
  %v2373 = vmax.f32 %v2369, %v2372
  %v2374 = vmax.f32 %v2364, %v2366
  %v2375 = vmax.f32 %v2373, %v2374
  %2376 = vmax.xlane.f32.xlu0 %v2375
  %v2377 = vpop.xlane.xlu0 %2376
  %v2378 = vrot.slane %v2377, 4
  %v2379 = vmax.f32 %v2377, %v2378
  %v2380 = vrot.slane %v2379, 2
  %v2381 = vmax.f32 %v2379, %v2380
  %v2382 = vrot.slane %v2381, 1
  %v2383 = vmax.f32 %v2381, %v2382
  %s2384 = vtos %v2383
  %v2385 = vstv %s2384
  %v2386 = vsel %vm186, %v2385, %v2280
  %v2387 = vsel %vm187, %v2385, %v2281
  %v2388 = vsel %vm188, %v2385, %v2282
  %v2389 = vsel %vm189, %v2385, %v2283
  %v2390 = vsel %vm190, %v2385, %v2284
  %v2391 = vsel %vm191, %v2385, %v2285
  %v2392 = vsel %vm192, %v2385, %v2286
  %v2393 = vsel %vm193, %v2385, %v2287
  %v2394 = vsel %vm194, %v2385, %v2288
  %v2395 = vsel %vm195, %v2385, %v2289
  %v2396 = vmul.f32 %v2319, %v196
  %v2397 = vmul.f32 %v2320, %v197
  %v2398 = vmul.f32 %v2321, %v198
  %v2399 = vmul.f32 %v2322, %v199
  %v2400 = vmul.f32 %v2323, %v200
  %v2401 = vmul.f32 %v2324, %v201
  %v2402 = vmul.f32 %v2325, %v202
  %v2403 = vmul.f32 %v2326, %v203
  %v2404 = vmul.f32 %v2327, %v204
  %v2405 = vmul.f32 %v2328, %v205
  %2416 = vrot.lane.b32.xlu0 %v1246, 1
  %v2417 = vpop.permute.xlu0 %2416
  %2418 = vrot.lane.b32.xlu0 %v1247, 1
  %v2419 = vpop.permute.xlu0 %2418
  %2420 = vrot.lane.b32.xlu0 %v1248, 1
  %v2421 = vpop.permute.xlu0 %2420
  %2422 = vrot.lane.b32.xlu0 %v1249, 1
  %v2423 = vpop.permute.xlu0 %2422
  %2424 = vrot.lane.b32.xlu0 %v1250, 1
  %v2425 = vpop.permute.xlu0 %2424
  %2426 = vrot.lane.b32.xlu0 %v1251, 1
  %v2427 = vpop.permute.xlu0 %2426
  %2428 = vrot.lane.b32.xlu0 %v1252, 1
  %v2429 = vpop.permute.xlu0 %2428
  %2430 = vrot.lane.b32.xlu0 %v1253, 1
  %v2431 = vpop.permute.xlu0 %2430
  %2432 = vrot.lane.b32.xlu0 %v1254, 1
  %v2433 = vpop.permute.xlu0 %2432
  %2434 = vrot.lane.b32.xlu0 %v1255, 1
  %v2435 = vpop.permute.xlu0 %2434
  %2456 = vrot.lane.b32.xlu0 %v1778, 2
  %v2457 = vpop.permute.xlu0 %2456
  %2458 = vrot.lane.b32.xlu0 %v1779, 2
  %v2459 = vpop.permute.xlu0 %2458
  %2460 = vrot.lane.b32.xlu0 %v1780, 2
  %v2461 = vpop.permute.xlu0 %2460
  %2462 = vrot.lane.b32.xlu0 %v1781, 2
  %v2463 = vpop.permute.xlu0 %2462
  %2464 = vrot.lane.b32.xlu0 %v1782, 2
  %v2465 = vpop.permute.xlu0 %2464
  %2466 = vrot.lane.b32.xlu0 %v1783, 2
  %v2467 = vpop.permute.xlu0 %2466
  %2468 = vrot.lane.b32.xlu0 %v1784, 2
  %v2469 = vpop.permute.xlu0 %2468
  %2470 = vrot.lane.b32.xlu0 %v1785, 2
  %v2471 = vpop.permute.xlu0 %2470
  %2472 = vrot.lane.b32.xlu0 %v1786, 2
  %v2473 = vpop.permute.xlu0 %2472
  %2474 = vrot.lane.b32.xlu0 %v1787, 2
  %v2475 = vpop.permute.xlu0 %2474
  %2496 = vrot.lane.b32.xlu0 %v2396, 3
  %v2497 = vpop.permute.xlu0 %2496
  %2498 = vrot.lane.b32.xlu0 %v2397, 3
  %v2499 = vpop.permute.xlu0 %2498
  %2500 = vrot.lane.b32.xlu0 %v2398, 3
  %v2501 = vpop.permute.xlu0 %2500
  %2502 = vrot.lane.b32.xlu0 %v2399, 3
  %v2503 = vpop.permute.xlu0 %2502
  %2504 = vrot.lane.b32.xlu0 %v2400, 3
  %v2505 = vpop.permute.xlu0 %2504
  %2506 = vrot.lane.b32.xlu0 %v2401, 3
  %v2507 = vpop.permute.xlu0 %2506
  %2508 = vrot.lane.b32.xlu0 %v2402, 3
  %v2509 = vpop.permute.xlu0 %2508
  %2510 = vrot.lane.b32.xlu0 %v2403, 3
  %v2511 = vpop.permute.xlu0 %2510
  %2512 = vrot.lane.b32.xlu0 %v2404, 3
  %v2513 = vpop.permute.xlu0 %2512
  %2514 = vrot.lane.b32.xlu0 %v2405, 3
  %v2515 = vpop.permute.xlu0 %2514
  %vm2526 = vcmask 7168
  %v2527 = vsel %vm2526, %v689, %v2417
  %v2528 = vsel %vm2526, %v690, %v2419
  %v2529 = vsel %vm2526, %v691, %v2421
  %v2530 = vsel %vm2526, %v692, %v2423
  %v2531 = vsel %vm2526, %v693, %v2425
  %v2532 = vsel %vm2526, %v694, %v2427
  %v2533 = vsel %vm2526, %v695, %v2429
  %v2534 = vsel %vm2526, %v696, %v2431
  %v2535 = vsel %vm2526, %v697, %v2433
  %v2536 = vsel %vm2526, %v698, %v2435
  %vm2537 = vcmask 15360
  %v2538 = vsel %vm2537, %v2527, %v2457
  %v2539 = vsel %vm2537, %v2528, %v2459
  %v2540 = vsel %vm2537, %v2529, %v2461
  %v2541 = vsel %vm2537, %v2530, %v2463
  %v2542 = vsel %vm2537, %v2531, %v2465
  %v2543 = vsel %vm2537, %v2532, %v2467
  %v2544 = vsel %vm2537, %v2533, %v2469
  %v2545 = vsel %vm2537, %v2534, %v2471
  %v2546 = vsel %vm2537, %v2535, %v2473
  %v2547 = vsel %vm2537, %v2536, %v2475
  %vm2548 = vcmask 23552
  %v2549 = vsel %vm2548, %v2538, %v2497
  %v2550 = vsel %vm2548, %v2539, %v2499
  %v2551 = vsel %vm2548, %v2540, %v2501
  %v2552 = vsel %vm2548, %v2541, %v2503
  %v2553 = vsel %vm2548, %v2542, %v2505
  %v2554 = vsel %vm2548, %v2543, %v2507
  %v2555 = vsel %vm2548, %v2544, %v2509
  %v2556 = vsel %vm2548, %v2545, %v2511
  %v2557 = vsel %vm2548, %v2546, %v2513
  %v2558 = vsel %vm2548, %v2547, %v2515
  %v2559 = vsel %vm2526, %v679, %v1236
  %v2560 = vsel %vm2526, %v680, %v1237
  %v2561 = vsel %vm2526, %v681, %v1238
  %v2562 = vsel %vm2526, %v682, %v1239
  %v2563 = vsel %vm2526, %v683, %v1240
  %v2564 = vsel %vm2526, %v684, %v1241
  %v2565 = vsel %vm2526, %v685, %v1242
  %v2566 = vsel %vm2526, %v686, %v1243
  %v2567 = vsel %vm2526, %v687, %v1244
  %v2568 = vsel %vm2526, %v688, %v1245
  %v2569 = vsel %vm2537, %v2559, %v1768
  %v2570 = vsel %vm2537, %v2560, %v1769
  %v2571 = vsel %vm2537, %v2561, %v1770
  %v2572 = vsel %vm2537, %v2562, %v1771
  %v2573 = vsel %vm2537, %v2563, %v1772
  %v2574 = vsel %vm2537, %v2564, %v1773
  %v2575 = vsel %vm2537, %v2565, %v1774
  %v2576 = vsel %vm2537, %v2566, %v1775
  %v2577 = vsel %vm2537, %v2567, %v1776
  %v2578 = vsel %vm2537, %v2568, %v1777
  %v2579 = vsel %vm2548, %v2569, %v2386
  %v2580 = vsel %vm2548, %v2570, %v2387
  %v2581 = vsel %vm2548, %v2571, %v2388
  %v2582 = vsel %vm2548, %v2572, %v2389
  %v2583 = vsel %vm2548, %v2573, %v2390
  %v2584 = vsel %vm2548, %v2574, %v2391
  %v2585 = vsel %vm2548, %v2575, %v2392
  %v2586 = vsel %vm2548, %v2576, %v2393
  %v2587 = vsel %vm2548, %v2577, %v2394
  %v2588 = vsel %vm2548, %v2578, %v2395
  %vm2599 = vcmask 1045504
  %v2600 = vrot.slane %v2579, 2
  %v2601 = vrot.slane %v2580, 2
  %v2602 = vsel %vm2599, %v2600, %v2601
  %v2603 = vrot.slane %v2581, 2
  %v2604 = vsel %vm2599, %v2601, %v2603
  %v2605 = vrot.slane %v2582, 2
  %v2606 = vsel %vm2599, %v2603, %v2605
  %v2607 = vrot.slane %v2583, 2
  %v2608 = vsel %vm2599, %v2605, %v2607
  %v2609 = vrot.slane %v2584, 2
  %v2610 = vsel %vm2599, %v2607, %v2609
  %v2611 = vrot.slane %v2585, 2
  %v2612 = vsel %vm2599, %v2609, %v2611
  %v2613 = vrot.slane %v2586, 2
  %v2614 = vsel %vm2599, %v2611, %v2613
  %v2615 = vrot.slane %v2587, 2
  %v2616 = vsel %vm2599, %v2613, %v2615
  %v2617 = vrot.slane %v2588, 2
  %v2618 = vsel %vm2599, %v2615, %v2617
  %v2630 = vsel %vm2599, %v2558, %v2600
  %s2631 = scalar_lea.vmem %s0, 320
  %v2632 = vld [vmem:[%s2631] sm:$0xff]
  %v2633 = vld [vmem:[%s2631 + $0x8] sm:$0xff]
  %v2634 = vld [vmem:[%s2631 + $0x10] sm:$0xff]
  %v2635 = vld [vmem:[%s2631 + $0x18] sm:$0xff]
  %v2636 = vld [vmem:[%s2631 + $0x20] sm:$0xff]
  %v2637 = vld [vmem:[%s2631 + $0x28] sm:$0xff]
  %v2638 = vld [vmem:[%s2631 + $0x30] sm:$0xff]
  %v2639 = vld [vmem:[%s2631 + $0x38] sm:$0xff]
  %v2640 = vld [vmem:[%s2631 + $0x40] sm:$0xff]
  %v2641 = vld [vmem:[%s2631 + $0x48] sm:$0xff]
  %v2642 = vld [vmem:[%s2631 + $0x50] sm:$0xff]
  %v2643 = vld [vmem:[%s2631 + $0x58] sm:$0xff]
  %v2644 = vld [vmem:[%s2631 + $0x60] sm:$0xff]
  %v2645 = vld [vmem:[%s2631 + $0x68] sm:$0xff]
  %v2646 = vld [vmem:[%s2631 + $0x70] sm:$0xff]
  %v2647 = vld [vmem:[%s2631 + $0x78] sm:$0xff]
  %v2648 = vld [vmem:[%s2631 + $0x80] sm:$0xff]
  %v2649 = vld [vmem:[%s2631 + $0x88] sm:$0xff]
  %v2650 = vld [vmem:[%s2631 + $0x90] sm:$0xff]
  %v2651 = vld [vmem:[%s2631 + $0x98] sm:$0xff]
  %v2652 = vld [vmem:[%s2631 + $0xa0] sm:$0xff]
  %v2653 = vld [vmem:[%s2631 + $0xa8] sm:$0xff]
  %v2654 = vld [vmem:[%s2631 + $0xb0] sm:$0xff]
  %v2655 = vld [vmem:[%s2631 + $0xb8] sm:$0xff]
  %v2656 = vld [vmem:[%s2631 + $0xc0] sm:$0xff]
  %v2657 = vld [vmem:[%s2631 + $0xc8] sm:$0xff]
  %v2658 = vld [vmem:[%s2631 + $0xd0] sm:$0xff]
  %v2659 = vld [vmem:[%s2631 + $0xd8] sm:$0xff]
  %v2660 = vld [vmem:[%s2631 + $0xe0] sm:$0xff]
  %v2661 = vld [vmem:[%s2631 + $0xe8] sm:$0xff]
  %v2662 = vld [vmem:[%s2631 + $0xf0] sm:$0xff]
  %v2663 = vld [vmem:[%s2631 + $0xf8] sm:$0xff]
  %v2664 = vld [vmem:[%s2631 + $0x100] sm:$0xff]
  %v2665 = vld [vmem:[%s2631 + $0x108] sm:$0xff]
  %v2666 = vld [vmem:[%s2631 + $0x110] sm:$0xff]
  %v2667 = vld [vmem:[%s2631 + $0x118] sm:$0xff]
  %v2668 = vld [vmem:[%s2631 + $0x120] sm:$0xff]
  %v2669 = vld [vmem:[%s2631 + $0x128] sm:$0xff]
  %v2670 = vld [vmem:[%s2631 + $0x130] sm:$0xf]
  %v2671 = vld [vmem:[%s2631 + $0x138] sm:$0xf]
  %s2672 = scalar_lea.vmem %s1, 320
  %v2673 = vld [vmem:[%s2672] sm:$0xff]
  %v2674 = vld [vmem:[%s2672 + $0x8] sm:$0xff]
  %v2675 = vld [vmem:[%s2672 + $0x10] sm:$0xff]
  %v2676 = vld [vmem:[%s2672 + $0x18] sm:$0xff]
  %v2677 = vld [vmem:[%s2672 + $0x20] sm:$0xff]
  %v2678 = vld [vmem:[%s2672 + $0x28] sm:$0xff]
  %v2679 = vld [vmem:[%s2672 + $0x30] sm:$0xff]
  %v2680 = vld [vmem:[%s2672 + $0x38] sm:$0xff]
  %v2681 = vld [vmem:[%s2672 + $0x40] sm:$0xff]
  %v2682 = vld [vmem:[%s2672 + $0x48] sm:$0xff]
  %v2683 = vld [vmem:[%s2672 + $0x50] sm:$0xff]
  %v2684 = vld [vmem:[%s2672 + $0x58] sm:$0xff]
  %v2685 = vld [vmem:[%s2672 + $0x60] sm:$0xff]
  %v2686 = vld [vmem:[%s2672 + $0x68] sm:$0xff]
  %v2687 = vld [vmem:[%s2672 + $0x70] sm:$0xff]
  %v2688 = vld [vmem:[%s2672 + $0x78] sm:$0xff]
  %v2689 = vld [vmem:[%s2672 + $0x80] sm:$0xff]
  %v2690 = vld [vmem:[%s2672 + $0x88] sm:$0xff]
  %v2691 = vld [vmem:[%s2672 + $0x90] sm:$0xff]
  %v2692 = vld [vmem:[%s2672 + $0x98] sm:$0xff]
  %v2693 = vld [vmem:[%s2672 + $0xa0] sm:$0xff]
  %v2694 = vld [vmem:[%s2672 + $0xa8] sm:$0xff]
  %v2695 = vld [vmem:[%s2672 + $0xb0] sm:$0xff]
  %v2696 = vld [vmem:[%s2672 + $0xb8] sm:$0xff]
  %v2697 = vld [vmem:[%s2672 + $0xc0] sm:$0xff]
  %v2698 = vld [vmem:[%s2672 + $0xc8] sm:$0xff]
  %v2699 = vld [vmem:[%s2672 + $0xd0] sm:$0xff]
  %v2700 = vld [vmem:[%s2672 + $0xd8] sm:$0xff]
  %v2701 = vld [vmem:[%s2672 + $0xe0] sm:$0xff]
  %v2702 = vld [vmem:[%s2672 + $0xe8] sm:$0xff]
  %v2703 = vld [vmem:[%s2672 + $0xf0] sm:$0xff]
  %v2704 = vld [vmem:[%s2672 + $0xf8] sm:$0xff]
  %v2705 = vld [vmem:[%s2672 + $0x100] sm:$0xff]
  %v2706 = vld [vmem:[%s2672 + $0x108] sm:$0xff]
  %v2707 = vld [vmem:[%s2672 + $0x110] sm:$0xff]
  %v2708 = vld [vmem:[%s2672 + $0x118] sm:$0xff]
  %v2709 = vld [vmem:[%s2672 + $0x120] sm:$0xff]
  %v2710 = vld [vmem:[%s2672 + $0x128] sm:$0xff]
  %v2711 = vld [vmem:[%s2672 + $0x130] sm:$0xf]
  %v2712 = vld [vmem:[%s2672 + $0x138] sm:$0xf]
  %v2713 = vsel %vm86, %v2673, 0.0
  %v2714 = vsel %vm87, %v2675, 0.0
  %v2715 = vsel %vm88, %v2677, 0.0
  %v2716 = vsel %vm89, %v2679, 0.0
  %v2717 = vsel %vm90, %v2681, 0.0
  %v2718 = vsel %vm91, %v2683, 0.0
  %v2719 = vsel %vm92, %v2685, 0.0
  %v2720 = vsel %vm93, %v2687, 0.0
  %v2721 = vsel %vm94, %v2689, 0.0
  %v2722 = vsel %vm95, %v2691, 0.0
  %v2723 = vsel %vm296, %v2713, 0.0
  %v2724 = vsel %vm296, %v2714, 0.0
  %v2725 = vadd.f32 %v2723, %v2724
  %v2726 = vsel %vm296, %v2715, 0.0
  %v2727 = vadd.f32 %v2725, %v2726
  %v2728 = vsel %vm296, %v2716, 0.0
  %v2729 = vadd.f32 %v2727, %v2728
  %v2730 = vsel %vm296, %v2717, 0.0
  %v2731 = vadd.f32 %v2729, %v2730
  %v2732 = vsel %vm296, %v2718, 0.0
  %v2733 = vadd.f32 %v2731, %v2732
  %v2734 = vsel %vm296, %v2719, 0.0
  %v2735 = vadd.f32 %v2733, %v2734
  %v2736 = vsel %vm296, %v2720, 0.0
  %v2737 = vadd.f32 %v2735, %v2736
  %v2738 = vsel %vm296, %v2721, 0.0
  %v2739 = vadd.f32 %v2737, %v2738
  %v2740 = vsel %vm314, %v2722, 0.0
  %v2741 = vadd.f32 %v2739, %v2740
  %v2742 = vrot.slane %v2741, 4
  %v2743 = vadd.f32 %v2741, %v2742
  %v2744 = vrot.slane %v2743, 2
  %v2745 = vadd.f32 %v2743, %v2744
  %v2746 = vrot.slane %v2745, 1
  %v2747 = vadd.f32 %v2745, %v2746
  %v2748 = vsel %vm86, %v2673, -3.4028235e+38
  %v2749 = vsel %vm87, %v2675, -3.4028235e+38
  %v2750 = vsel %vm88, %v2677, -3.4028235e+38
  %v2751 = vsel %vm89, %v2679, -3.4028235e+38
  %v2752 = vsel %vm90, %v2681, -3.4028235e+38
  %v2753 = vsel %vm91, %v2683, -3.4028235e+38
  %v2754 = vsel %vm92, %v2685, -3.4028235e+38
  %v2755 = vsel %vm93, %v2687, -3.4028235e+38
  %v2756 = vsel %vm94, %v2689, -3.4028235e+38
  %v2757 = vsel %vm95, %v2691, -3.4028235e+38
  %v2758 = vsel %vm296, %v2748, -inf
  %v2759 = vsel %vm296, %v2749, -inf
  %v2760 = vsel %vm296, %v2750, -inf
  %v2761 = vsel %vm296, %v2751, -inf
  %v2762 = vsel %vm296, %v2752, -inf
  %v2763 = vmax.f32 %v2758, %v2762
  %v2764 = vsel %vm296, %v2753, -inf
  %v2765 = vmax.f32 %v2759, %v2764
  %v2766 = vsel %vm296, %v2754, -inf
  %v2767 = vmax.f32 %v2760, %v2766
  %v2768 = vsel %vm296, %v2755, -inf
  %v2769 = vmax.f32 %v2761, %v2768
  %v2770 = vsel %vm296, %v2756, -inf
  %v2771 = vmax.f32 %v2763, %v2770
  %v2772 = vsel %vm314, %v2757, -inf
  %v2773 = vmax.f32 %v2765, %v2772
  %v2774 = vmax.f32 %v2771, %v2773
  %v2775 = vmax.f32 %v2767, %v2769
  %v2776 = vmax.f32 %v2774, %v2775
  %v2777 = vrot.slane %v2776, 4
  %v2778 = vmax.f32 %v2776, %v2777
  %v2779 = vrot.slane %v2778, 2
  %v2780 = vmax.f32 %v2778, %v2779
  %v2781 = vrot.slane %v2780, 1
  %v2782 = vmax.f32 %v2780, %v2781
  %v2783 = vsel %vm96, %v2632, 0.0
  %v2784 = vsel %vm97, %v2634, 0.0
  %v2785 = vsel %vm98, %v2636, 0.0
  %v2786 = vsel %vm99, %v2638, 0.0
  %v2787 = vsel %vm100, %v2640, 0.0
  %v2788 = vsel %vm101, %v2642, 0.0
  %v2789 = vsel %vm102, %v2644, 0.0
  %v2790 = vsel %vm103, %v2646, 0.0
  %v2791 = vsel %vm104, %v2648, 0.0
  %v2792 = vsel %vm105, %v2650, 0.0
  %v2793 = vsel %vm296, %v2783, 0.0
  %v2794 = vsel %vm296, %v2784, 0.0
  %v2795 = vadd.f32 %v2793, %v2794
  %v2796 = vsel %vm296, %v2785, 0.0
  %v2797 = vadd.f32 %v2795, %v2796
  %v2798 = vsel %vm296, %v2786, 0.0
  %v2799 = vadd.f32 %v2797, %v2798
  %v2800 = vsel %vm296, %v2787, 0.0
  %v2801 = vadd.f32 %v2799, %v2800
  %v2802 = vsel %vm296, %v2788, 0.0
  %v2803 = vadd.f32 %v2801, %v2802
  %v2804 = vsel %vm296, %v2789, 0.0
  %v2805 = vadd.f32 %v2803, %v2804
  %v2806 = vsel %vm296, %v2790, 0.0
  %v2807 = vadd.f32 %v2805, %v2806
  %v2808 = vsel %vm296, %v2791, 0.0
  %v2809 = vadd.f32 %v2807, %v2808
  %v2810 = vsel %vm314, %v2792, 0.0
  %v2811 = vadd.f32 %v2809, %v2810
  %v2812 = vrot.slane %v2811, 4
  %v2813 = vadd.f32 %v2811, %v2812
  %v2814 = vrot.slane %v2813, 2
  %v2815 = vadd.f32 %v2813, %v2814
  %v2816 = vrot.slane %v2815, 1
  %v2817 = vadd.f32 %v2815, %v2816
  %v2818 = vsel %vm86, %v2632, -3.4028235e+38
  %v2819 = vsel %vm87, %v2634, -3.4028235e+38
  %v2820 = vsel %vm88, %v2636, -3.4028235e+38
  %v2821 = vsel %vm89, %v2638, -3.4028235e+38
  %v2822 = vsel %vm90, %v2640, -3.4028235e+38
  %v2823 = vsel %vm91, %v2642, -3.4028235e+38
  %v2824 = vsel %vm92, %v2644, -3.4028235e+38
  %v2825 = vsel %vm93, %v2646, -3.4028235e+38
  %v2826 = vsel %vm94, %v2648, -3.4028235e+38
  %v2827 = vsel %vm95, %v2650, -3.4028235e+38
  %v2828 = vsel %vm296, %v2818, -inf
  %v2829 = vsel %vm296, %v2819, -inf
  %v2830 = vsel %vm296, %v2820, -inf
  %v2831 = vsel %vm296, %v2821, -inf
  %v2832 = vsel %vm296, %v2822, -inf
  %v2833 = vmax.f32 %v2828, %v2832
  %v2834 = vsel %vm296, %v2823, -inf
  %v2835 = vmax.f32 %v2829, %v2834
  %v2836 = vsel %vm296, %v2824, -inf
  %v2837 = vmax.f32 %v2830, %v2836
  %v2838 = vsel %vm296, %v2825, -inf
  %v2839 = vmax.f32 %v2831, %v2838
  %v2840 = vsel %vm296, %v2826, -inf
  %v2841 = vmax.f32 %v2833, %v2840
  %v2842 = vsel %vm314, %v2827, -inf
  %v2843 = vmax.f32 %v2835, %v2842
  %v2844 = vmax.f32 %v2841, %v2843
  %v2845 = vmax.f32 %v2837, %v2839
  %v2846 = vmax.f32 %v2844, %v2845
  %v2847 = vrot.slane %v2846, 4
  %v2848 = vmax.f32 %v2846, %v2847
  %v2849 = vrot.slane %v2848, 2
  %v2850 = vmax.f32 %v2848, %v2849
  %v2851 = vrot.slane %v2850, 1
  %v2852 = vmax.f32 %v2850, %v2851
  %v2853 = vsel %vm176, %v2747, 0.0
  %v2854 = vsel %vm177, %v2747, 0.0
  %v2855 = vsel %vm178, %v2747, 0.0
  %v2856 = vsel %vm179, %v2747, 0.0
  %v2857 = vsel %vm180, %v2747, 0.0
  %v2858 = vsel %vm181, %v2747, 0.0
  %v2859 = vsel %vm182, %v2747, 0.0
  %v2860 = vsel %vm183, %v2747, 0.0
  %v2861 = vsel %vm184, %v2747, 0.0
  %v2862 = vsel %vm185, %v2747, 0.0
  %v2863 = vsel %vm296, %v2853, 0.0
  %2864 = vadd.xlane.f32.xlu0 %v2863
  %v2865 = vpop.xlane.xlu0 %2864
  %v2866 = vsel %vm296, %v2854, 0.0
  %2867 = vadd.xlane.f32.xlu0 %v2866
  %v2868 = vpop.xlane.xlu0 %2867
  %v2869 = vsel %vm296, %v2855, 0.0
  %2870 = vadd.xlane.f32.xlu0 %v2869
  %v2871 = vpop.xlane.xlu0 %2870
  %v2872 = vsel %vm296, %v2856, 0.0
  %2873 = vadd.xlane.f32.xlu0 %v2872
  %v2874 = vpop.xlane.xlu0 %2873
  %v2875 = vsel %vm296, %v2857, 0.0
  %2876 = vadd.xlane.f32.xlu0 %v2875
  %v2877 = vpop.xlane.xlu0 %2876
  %v2878 = vsel %vm296, %v2858, 0.0
  %2879 = vadd.xlane.f32.xlu0 %v2878
  %v2880 = vpop.xlane.xlu0 %2879
  %v2881 = vsel %vm296, %v2859, 0.0
  %2882 = vadd.xlane.f32.xlu0 %v2881
  %v2883 = vpop.xlane.xlu0 %2882
  %v2884 = vsel %vm296, %v2860, 0.0
  %2885 = vadd.xlane.f32.xlu0 %v2884
  %v2886 = vpop.xlane.xlu0 %2885
  %v2887 = vsel %vm296, %v2861, 0.0
  %2888 = vadd.xlane.f32.xlu0 %v2887
  %v2889 = vpop.xlane.xlu0 %2888
  %v2890 = vsel %vm465, %v2862, 0.0
  %2891 = vadd.xlane.f32.xlu0 %v2890
  %v2892 = vpop.xlane.xlu0 %2891
  %v2893 = vsel %vm176, %v2817, 0.0
  %v2894 = vsel %vm177, %v2817, 0.0
  %v2895 = vsel %vm178, %v2817, 0.0
  %v2896 = vsel %vm179, %v2817, 0.0
  %v2897 = vsel %vm180, %v2817, 0.0
  %v2898 = vsel %vm181, %v2817, 0.0
  %v2899 = vsel %vm182, %v2817, 0.0
  %v2900 = vsel %vm183, %v2817, 0.0
  %v2901 = vsel %vm184, %v2817, 0.0
  %v2902 = vsel %vm185, %v2817, 0.0
  %v2903 = vsel %vm296, %v2893, 0.0
  %2904 = vadd.xlane.f32.xlu0 %v2903
  %v2905 = vpop.xlane.xlu0 %2904
  %v2906 = vsel %vm296, %v2894, 0.0
  %2907 = vadd.xlane.f32.xlu0 %v2906
  %v2908 = vpop.xlane.xlu0 %2907
  %v2909 = vsel %vm296, %v2895, 0.0
  %2910 = vadd.xlane.f32.xlu0 %v2909
  %v2911 = vpop.xlane.xlu0 %2910
  %v2912 = vsel %vm296, %v2896, 0.0
  %2913 = vadd.xlane.f32.xlu0 %v2912
  %v2914 = vpop.xlane.xlu0 %2913
  %v2915 = vsel %vm296, %v2897, 0.0
  %2916 = vadd.xlane.f32.xlu0 %v2915
  %v2917 = vpop.xlane.xlu0 %2916
  %v2918 = vsel %vm296, %v2898, 0.0
  %2919 = vadd.xlane.f32.xlu0 %v2918
  %v2920 = vpop.xlane.xlu0 %2919
  %v2921 = vsel %vm296, %v2899, 0.0
  %2922 = vadd.xlane.f32.xlu0 %v2921
  %v2923 = vpop.xlane.xlu0 %2922
  %v2924 = vsel %vm296, %v2900, 0.0
  %2925 = vadd.xlane.f32.xlu0 %v2924
  %v2926 = vpop.xlane.xlu0 %2925
  %v2927 = vsel %vm296, %v2901, 0.0
  %2928 = vadd.xlane.f32.xlu0 %v2927
  %v2929 = vpop.xlane.xlu0 %2928
  %v2930 = vsel %vm465, %v2902, 0.0
  %2931 = vadd.xlane.f32.xlu0 %v2930
  %v2932 = vpop.xlane.xlu0 %2931
  %v2933 = vadd.f32 %v2865, %v2905
  %v2934 = vadd.f32 %v2868, %v2908
  %v2935 = vadd.f32 %v2871, %v2911
  %v2936 = vadd.f32 %v2874, %v2914
  %v2937 = vadd.f32 %v2877, %v2917
  %v2938 = vadd.f32 %v2880, %v2920
  %v2939 = vadd.f32 %v2883, %v2923
  %v2940 = vadd.f32 %v2886, %v2926
  %v2941 = vadd.f32 %v2889, %v2929
  %v2942 = vadd.f32 %v2892, %v2932
  %v2943 = vsel %vm176, %v2782, -3.4028235e+38
  %v2944 = vsel %vm177, %v2782, -3.4028235e+38
  %v2945 = vsel %vm178, %v2782, -3.4028235e+38
  %v2946 = vsel %vm179, %v2782, -3.4028235e+38
  %v2947 = vsel %vm180, %v2782, -3.4028235e+38
  %v2948 = vsel %vm181, %v2782, -3.4028235e+38
  %v2949 = vsel %vm182, %v2782, -3.4028235e+38
  %v2950 = vsel %vm183, %v2782, -3.4028235e+38
  %v2951 = vsel %vm184, %v2782, -3.4028235e+38
  %v2952 = vsel %vm185, %v2782, -3.4028235e+38
  %v2953 = vsel %vm296, %v2943, -inf
  %2954 = vmax.xlane.f32.xlu0 %v2953
  %v2955 = vpop.xlane.xlu0 %2954
  %v2956 = vsel %vm296, %v2944, -inf
  %2957 = vmax.xlane.f32.xlu0 %v2956
  %v2958 = vpop.xlane.xlu0 %2957
  %v2959 = vsel %vm296, %v2945, -inf
  %2960 = vmax.xlane.f32.xlu0 %v2959
  %v2961 = vpop.xlane.xlu0 %2960
  %v2962 = vsel %vm296, %v2946, -inf
  %2963 = vmax.xlane.f32.xlu0 %v2962
  %v2964 = vpop.xlane.xlu0 %2963
  %v2965 = vsel %vm296, %v2947, -inf
  %2966 = vmax.xlane.f32.xlu0 %v2965
  %v2967 = vpop.xlane.xlu0 %2966
  %v2968 = vsel %vm296, %v2948, -inf
  %2969 = vmax.xlane.f32.xlu0 %v2968
  %v2970 = vpop.xlane.xlu0 %2969
  %v2971 = vsel %vm296, %v2949, -inf
  %2972 = vmax.xlane.f32.xlu0 %v2971
  %v2973 = vpop.xlane.xlu0 %2972
  %v2974 = vsel %vm296, %v2950, -inf
  %2975 = vmax.xlane.f32.xlu0 %v2974
  %v2976 = vpop.xlane.xlu0 %2975
  %v2977 = vsel %vm296, %v2951, -inf
  %2978 = vmax.xlane.f32.xlu0 %v2977
  %v2979 = vpop.xlane.xlu0 %2978
  %v2980 = vsel %vm465, %v2952, -inf
  %2981 = vmax.xlane.f32.xlu0 %v2980
  %v2982 = vpop.xlane.xlu0 %2981
  %v2983 = vsel %vm176, %v2852, -3.4028235e+38
  %v2984 = vsel %vm177, %v2852, -3.4028235e+38
  %v2985 = vsel %vm178, %v2852, -3.4028235e+38
  %v2986 = vsel %vm179, %v2852, -3.4028235e+38
  %v2987 = vsel %vm180, %v2852, -3.4028235e+38
  %v2988 = vsel %vm181, %v2852, -3.4028235e+38
  %v2989 = vsel %vm182, %v2852, -3.4028235e+38
  %v2990 = vsel %vm183, %v2852, -3.4028235e+38
  %v2991 = vsel %vm184, %v2852, -3.4028235e+38
  %v2992 = vsel %vm185, %v2852, -3.4028235e+38
  %v2993 = vsel %vm296, %v2983, -inf
  %2994 = vmax.xlane.f32.xlu0 %v2993
  %v2995 = vpop.xlane.xlu0 %2994
  %v2996 = vsel %vm296, %v2984, -inf
  %2997 = vmax.xlane.f32.xlu0 %v2996
  %v2998 = vpop.xlane.xlu0 %2997
  %v2999 = vsel %vm296, %v2985, -inf
  %3000 = vmax.xlane.f32.xlu0 %v2999
  %v3001 = vpop.xlane.xlu0 %3000
  %v3002 = vsel %vm296, %v2986, -inf
  %3003 = vmax.xlane.f32.xlu0 %v3002
  %v3004 = vpop.xlane.xlu0 %3003
  %v3005 = vsel %vm296, %v2987, -inf
  %3006 = vmax.xlane.f32.xlu0 %v3005
  %v3007 = vpop.xlane.xlu0 %3006
  %v3008 = vsel %vm296, %v2988, -inf
  %3009 = vmax.xlane.f32.xlu0 %v3008
  %v3010 = vpop.xlane.xlu0 %3009
  %v3011 = vsel %vm296, %v2989, -inf
  %3012 = vmax.xlane.f32.xlu0 %v3011
  %v3013 = vpop.xlane.xlu0 %3012
  %v3014 = vsel %vm296, %v2990, -inf
  %3015 = vmax.xlane.f32.xlu0 %v3014
  %v3016 = vpop.xlane.xlu0 %3015
  %v3017 = vsel %vm296, %v2991, -inf
  %3018 = vmax.xlane.f32.xlu0 %v3017
  %v3019 = vpop.xlane.xlu0 %3018
  %v3020 = vsel %vm465, %v2992, -inf
  %3021 = vmax.xlane.f32.xlu0 %v3020
  %v3022 = vpop.xlane.xlu0 %3021
  %v3023 = vmax.f32 %v2955, %v2995
  %v3024 = vmax.f32 %v2958, %v2998
  %v3025 = vmax.f32 %v2961, %v3001
  %v3026 = vmax.f32 %v2964, %v3004
  %v3027 = vmax.f32 %v2967, %v3007
  %v3028 = vmax.f32 %v2970, %v3010
  %v3029 = vmax.f32 %v2973, %v3013
  %v3030 = vmax.f32 %v2976, %v3016
  %v3031 = vmax.f32 %v2979, %v3019
  %v3032 = vmax.f32 %v2982, %v3022
  %v3033 = vsel %vm609, %v2632, 0.0
  %v3034 = vsel %vm609, %v2634, 0.0
  %v3035 = vadd.f32 %v3033, %v3034
  %v3036 = vsel %vm609, %v2636, 0.0
  %v3037 = vadd.f32 %v3035, %v3036
  %v3038 = vsel %vm609, %v2638, 0.0
  %v3039 = vadd.f32 %v3037, %v3038
  %v3040 = vsel %vm609, %v2640, 0.0
  %v3041 = vadd.f32 %v3039, %v3040
  %v3042 = vsel %vm609, %v2642, 0.0
  %v3043 = vadd.f32 %v3041, %v3042
  %v3044 = vsel %vm609, %v2644, 0.0
  %v3045 = vadd.f32 %v3043, %v3044
  %v3046 = vsel %vm609, %v2646, 0.0
  %v3047 = vadd.f32 %v3045, %v3046
  %v3048 = vsel %vm609, %v2648, 0.0
  %v3049 = vadd.f32 %v3047, %v3048
  %v3050 = vsel %vm627, %v2650, 0.0
  %v3051 = vadd.f32 %v3049, %v3050
  %3052 = vadd.xlane.f32.xlu0 %v3051
  %v3053 = vpop.xlane.xlu0 %3052
  %v3054 = vrot.slane %v3053, 4
  %v3055 = vadd.f32 %v3053, %v3054
  %v3056 = vrot.slane %v3055, 2
  %v3057 = vadd.f32 %v3055, %v3056
  %v3058 = vrot.slane %v3057, 1
  %v3059 = vadd.f32 %v3057, %v3058
  %s3060 = vtos %v3059
  %v3061 = vstv %s3060
  %v3062 = vsel %vm186, %v3061, %v2933
  %v3063 = vsel %vm187, %v3061, %v2934
  %v3064 = vsel %vm188, %v3061, %v2935
  %v3065 = vsel %vm189, %v3061, %v2936
  %v3066 = vsel %vm190, %v3061, %v2937
  %v3067 = vsel %vm191, %v3061, %v2938
  %v3068 = vsel %vm192, %v3061, %v2939
  %v3069 = vsel %vm193, %v3061, %v2940
  %v3070 = vsel %vm194, %v3061, %v2941
  %v3071 = vsel %vm195, %v3061, %v2942
  %v3072 = vsel %vm609, %v2632, -inf
  %v3073 = vsel %vm609, %v2634, -inf
  %v3074 = vsel %vm609, %v2636, -inf
  %v3075 = vsel %vm609, %v2638, -inf
  %v3076 = vsel %vm609, %v2640, -inf
  %v3077 = vmax.f32 %v3072, %v3076
  %v3078 = vsel %vm609, %v2642, -inf
  %v3079 = vmax.f32 %v3073, %v3078
  %v3080 = vsel %vm609, %v2644, -inf
  %v3081 = vmax.f32 %v3074, %v3080
  %v3082 = vsel %vm609, %v2646, -inf
  %v3083 = vmax.f32 %v3075, %v3082
  %v3084 = vsel %vm609, %v2648, -inf
  %v3085 = vmax.f32 %v3077, %v3084
  %v3086 = vsel %vm627, %v2650, -inf
  %v3087 = vmax.f32 %v3079, %v3086
  %v3088 = vmax.f32 %v3085, %v3087
  %v3089 = vmax.f32 %v3081, %v3083
  %v3090 = vmax.f32 %v3088, %v3089
  %3091 = vmax.xlane.f32.xlu0 %v3090
  %v3092 = vpop.xlane.xlu0 %3091
  %v3093 = vrot.slane %v3092, 4
  %v3094 = vmax.f32 %v3092, %v3093
  %v3095 = vrot.slane %v3094, 2
  %v3096 = vmax.f32 %v3094, %v3095
  %v3097 = vrot.slane %v3096, 1
  %v3098 = vmax.f32 %v3096, %v3097
  %s3099 = vtos %v3098
  %v3100 = vstv %s3099
  %v3101 = vsel %vm186, %v3100, %v3023
  %v3102 = vsel %vm187, %v3100, %v3024
  %v3103 = vsel %vm188, %v3100, %v3025
  %v3104 = vsel %vm189, %v3100, %v3026
  %v3105 = vsel %vm190, %v3100, %v3027
  %v3106 = vsel %vm191, %v3100, %v3028
  %v3107 = vsel %vm192, %v3100, %v3029
  %v3108 = vsel %vm193, %v3100, %v3030
  %v3109 = vsel %vm194, %v3100, %v3031
  %v3110 = vsel %vm195, %v3100, %v3032
  %v3111 = vmul.f32 %v3062, %v196
  %v3112 = vmul.f32 %v3063, %v197
  %v3113 = vmul.f32 %v3064, %v198
  %v3114 = vmul.f32 %v3065, %v199
  %v3115 = vmul.f32 %v3066, %v200
  %v3116 = vmul.f32 %v3067, %v201
  %v3117 = vmul.f32 %v3068, %v202
  %v3118 = vmul.f32 %v3069, %v203
  %v3119 = vmul.f32 %v3070, %v204
  %v3120 = vmul.f32 %v3071, %v205
  %v3132 = vrot.slane %v2691, 6
  %v3133 = vrot.slane %v2693, 6
  %v3134 = vsel %vm710, %v3132, %v3133
  %v3135 = vrot.slane %v2695, 6
  %v3136 = vsel %vm710, %v3133, %v3135
  %v3137 = vrot.slane %v2697, 6
  %v3138 = vsel %vm710, %v3135, %v3137
  %v3139 = vrot.slane %v2699, 6
  %v3140 = vsel %vm710, %v3137, %v3139
  %v3141 = vrot.slane %v2701, 6
  %v3142 = vsel %vm710, %v3139, %v3141
  %v3143 = vrot.slane %v2703, 6
  %v3144 = vsel %vm710, %v3141, %v3143
  %v3145 = vrot.slane %v2705, 6
  %v3146 = vsel %vm710, %v3143, %v3145
  %v3147 = vrot.slane %v2707, 6
  %v3148 = vsel %vm710, %v3145, %v3147
  %v3149 = vrot.slane %v2709, 6
  %v3150 = vsel %vm710, %v3147, %v3149
  %v3151 = vrot.slane %v2711, 6
  %v3152 = vsel %vm710, %v3149, %v3151
  %v3163 = vsel %vm116, %v3134, 0.0
  %v3164 = vsel %vm117, %v3136, 0.0
  %v3165 = vsel %vm118, %v3138, 0.0
  %v3166 = vsel %vm119, %v3140, 0.0
  %v3167 = vsel %vm120, %v3142, 0.0
  %v3168 = vsel %vm121, %v3144, 0.0
  %v3169 = vsel %vm122, %v3146, 0.0
  %v3170 = vsel %vm123, %v3148, 0.0
  %v3171 = vsel %vm124, %v3150, 0.0
  %v3172 = vsel %vm125, %v3152, 0.0
  %v3173 = vsel %vm296, %v3163, 0.0
  %v3174 = vsel %vm296, %v3164, 0.0
  %v3175 = vadd.f32 %v3173, %v3174
  %v3176 = vsel %vm296, %v3165, 0.0
  %v3177 = vadd.f32 %v3175, %v3176
  %v3178 = vsel %vm296, %v3166, 0.0
  %v3179 = vadd.f32 %v3177, %v3178
  %v3180 = vsel %vm296, %v3167, 0.0
  %v3181 = vadd.f32 %v3179, %v3180
  %v3182 = vsel %vm296, %v3168, 0.0
  %v3183 = vadd.f32 %v3181, %v3182
  %v3184 = vsel %vm296, %v3169, 0.0
  %v3185 = vadd.f32 %v3183, %v3184
  %v3186 = vsel %vm296, %v3170, 0.0
  %v3187 = vadd.f32 %v3185, %v3186
  %v3188 = vsel %vm296, %v3171, 0.0
  %v3189 = vadd.f32 %v3187, %v3188
  %v3190 = vsel %vm465, %v3172, 0.0
  %v3191 = vadd.f32 %v3189, %v3190
  %v3192 = vrot.slane %v3191, 4
  %v3193 = vadd.f32 %v3191, %v3192
  %v3194 = vrot.slane %v3193, 2
  %v3195 = vadd.f32 %v3193, %v3194
  %v3196 = vrot.slane %v3195, 1
  %v3197 = vadd.f32 %v3195, %v3196
  %v3198 = vsel %vm116, %v3134, -3.4028235e+38
  %v3199 = vsel %vm117, %v3136, -3.4028235e+38
  %v3200 = vsel %vm118, %v3138, -3.4028235e+38
  %v3201 = vsel %vm119, %v3140, -3.4028235e+38
  %v3202 = vsel %vm120, %v3142, -3.4028235e+38
  %v3203 = vsel %vm121, %v3144, -3.4028235e+38
  %v3204 = vsel %vm122, %v3146, -3.4028235e+38
  %v3205 = vsel %vm123, %v3148, -3.4028235e+38
  %v3206 = vsel %vm124, %v3150, -3.4028235e+38
  %v3207 = vsel %vm125, %v3152, -3.4028235e+38
  %v3208 = vsel %vm296, %v3198, -inf
  %v3209 = vsel %vm296, %v3199, -inf
  %v3210 = vsel %vm296, %v3200, -inf
  %v3211 = vsel %vm296, %v3201, -inf
  %v3212 = vsel %vm296, %v3202, -inf
  %v3213 = vmax.f32 %v3208, %v3212
  %v3214 = vsel %vm296, %v3203, -inf
  %v3215 = vmax.f32 %v3209, %v3214
  %v3216 = vsel %vm296, %v3204, -inf
  %v3217 = vmax.f32 %v3210, %v3216
  %v3218 = vsel %vm296, %v3205, -inf
  %v3219 = vmax.f32 %v3211, %v3218
  %v3220 = vsel %vm296, %v3206, -inf
  %v3221 = vmax.f32 %v3213, %v3220
  %v3222 = vsel %vm465, %v3207, -inf
  %v3223 = vmax.f32 %v3215, %v3222
  %v3224 = vmax.f32 %v3221, %v3223
  %v3225 = vmax.f32 %v3217, %v3219
  %v3226 = vmax.f32 %v3224, %v3225
  %v3227 = vrot.slane %v3226, 4
  %v3228 = vmax.f32 %v3226, %v3227
  %v3229 = vrot.slane %v3228, 2
  %v3230 = vmax.f32 %v3228, %v3229
  %v3231 = vrot.slane %v3230, 1
  %v3232 = vmax.f32 %v3230, %v3231
  %3253 = vrot.lane.b32.xlu0 %v2632, 50
  %v3254 = vpop.permute.xlu0 %3253
  %3255 = vrot.lane.b32.xlu0 %v2633, 50
  %v3256 = vpop.permute.xlu0 %3255
  %3257 = vrot.lane.b32.xlu0 %v2634, 50
  %v3258 = vpop.permute.xlu0 %3257
  %3259 = vrot.lane.b32.xlu0 %v2635, 50
  %v3260 = vpop.permute.xlu0 %3259
  %3261 = vrot.lane.b32.xlu0 %v2636, 50
  %v3262 = vpop.permute.xlu0 %3261
  %3263 = vrot.lane.b32.xlu0 %v2637, 50
  %v3264 = vpop.permute.xlu0 %3263
  %3265 = vrot.lane.b32.xlu0 %v2638, 50
  %v3266 = vpop.permute.xlu0 %3265
  %3267 = vrot.lane.b32.xlu0 %v2639, 50
  %v3268 = vpop.permute.xlu0 %3267
  %3269 = vrot.lane.b32.xlu0 %v2640, 50
  %v3270 = vpop.permute.xlu0 %3269
  %3271 = vrot.lane.b32.xlu0 %v2641, 50
  %v3272 = vpop.permute.xlu0 %3271
  %3273 = vrot.lane.b32.xlu0 %v2642, 50
  %v3274 = vpop.permute.xlu0 %3273
  %3275 = vrot.lane.b32.xlu0 %v2643, 50
  %v3276 = vpop.permute.xlu0 %3275
  %3277 = vrot.lane.b32.xlu0 %v2644, 50
  %v3278 = vpop.permute.xlu0 %3277
  %3279 = vrot.lane.b32.xlu0 %v2645, 50
  %v3280 = vpop.permute.xlu0 %3279
  %3281 = vrot.lane.b32.xlu0 %v2646, 50
  %v3282 = vpop.permute.xlu0 %3281
  %3283 = vrot.lane.b32.xlu0 %v2647, 50
  %v3284 = vpop.permute.xlu0 %3283
  %3285 = vrot.lane.b32.xlu0 %v2648, 50
  %v3286 = vpop.permute.xlu0 %3285
  %3287 = vrot.lane.b32.xlu0 %v2649, 50
  %v3288 = vpop.permute.xlu0 %3287
  %3289 = vrot.lane.b32.xlu0 %v2650, 50
  %v3290 = vpop.permute.xlu0 %3289
  %3291 = vrot.lane.b32.xlu0 %v2651, 50
  %v3292 = vpop.permute.xlu0 %3291
  %v3293 = vsel %vm872, %v3254, %v3256
  %v3294 = vsel %vm872, %v3258, %v3260
  %v3295 = vsel %vm872, %v3262, %v3264
  %v3296 = vsel %vm872, %v3266, %v3268
  %v3297 = vsel %vm872, %v3270, %v3272
  %v3298 = vsel %vm872, %v3274, %v3276
  %v3299 = vsel %vm872, %v3278, %v3280
  %v3300 = vsel %vm872, %v3282, %v3284
  %v3301 = vsel %vm872, %v3286, %v3288
  %v3302 = vsel %vm872, %v3290, %v3292
  %v3313 = vsel %vm146, %v3293, 0.0
  %v3314 = vsel %vm147, %v3294, 0.0
  %v3315 = vsel %vm148, %v3295, 0.0
  %v3316 = vsel %vm149, %v3296, 0.0
  %v3317 = vsel %vm150, %v3297, 0.0
  %v3318 = vsel %vm151, %v3298, 0.0
  %v3319 = vsel %vm152, %v3299, 0.0
  %v3320 = vsel %vm153, %v3300, 0.0
  %v3321 = vsel %vm154, %v3301, 0.0
  %v3322 = vsel %vm155, %v3302, 0.0
  %v3323 = vsel %vm609, %v3313, 0.0
  %v3324 = vsel %vm609, %v3314, 0.0
  %v3325 = vadd.f32 %v3323, %v3324
  %v3326 = vsel %vm609, %v3315, 0.0
  %v3327 = vadd.f32 %v3325, %v3326
  %v3328 = vsel %vm609, %v3316, 0.0
  %v3329 = vadd.f32 %v3327, %v3328
  %v3330 = vsel %vm609, %v3317, 0.0
  %v3331 = vadd.f32 %v3329, %v3330
  %v3332 = vsel %vm609, %v3318, 0.0
  %v3333 = vadd.f32 %v3331, %v3332
  %v3334 = vsel %vm609, %v3319, 0.0
  %v3335 = vadd.f32 %v3333, %v3334
  %v3336 = vsel %vm609, %v3320, 0.0
  %v3337 = vadd.f32 %v3335, %v3336
  %v3338 = vsel %vm609, %v3321, 0.0
  %v3339 = vadd.f32 %v3337, %v3338
  %v3340 = vsel %vm920, %v3322, 0.0
  %v3341 = vadd.f32 %v3339, %v3340
  %v3342 = vrot.slane %v3341, 4
  %v3343 = vadd.f32 %v3341, %v3342
  %v3344 = vrot.slane %v3343, 2
  %v3345 = vadd.f32 %v3343, %v3344
  %v3346 = vrot.slane %v3345, 1
  %v3347 = vadd.f32 %v3345, %v3346
  %v3348 = vsel %vm136, %v3293, -3.4028235e+38
  %v3349 = vsel %vm137, %v3294, -3.4028235e+38
  %v3350 = vsel %vm138, %v3295, -3.4028235e+38
  %v3351 = vsel %vm139, %v3296, -3.4028235e+38
  %v3352 = vsel %vm140, %v3297, -3.4028235e+38
  %v3353 = vsel %vm141, %v3298, -3.4028235e+38
  %v3354 = vsel %vm142, %v3299, -3.4028235e+38
  %v3355 = vsel %vm143, %v3300, -3.4028235e+38
  %v3356 = vsel %vm144, %v3301, -3.4028235e+38
  %v3357 = vsel %vm145, %v3302, -3.4028235e+38
  %v3358 = vsel %vm609, %v3348, -inf
  %v3359 = vsel %vm609, %v3349, -inf
  %v3360 = vsel %vm609, %v3350, -inf
  %v3361 = vsel %vm609, %v3351, -inf
  %v3362 = vsel %vm609, %v3352, -inf
  %v3363 = vmax.f32 %v3358, %v3362
  %v3364 = vsel %vm609, %v3353, -inf
  %v3365 = vmax.f32 %v3359, %v3364
  %v3366 = vsel %vm609, %v3354, -inf
  %v3367 = vmax.f32 %v3360, %v3366
  %v3368 = vsel %vm609, %v3355, -inf
  %v3369 = vmax.f32 %v3361, %v3368
  %v3370 = vsel %vm609, %v3356, -inf
  %v3371 = vmax.f32 %v3363, %v3370
  %v3372 = vsel %vm920, %v3357, -inf
  %v3373 = vmax.f32 %v3365, %v3372
  %v3374 = vmax.f32 %v3371, %v3373
  %v3375 = vmax.f32 %v3367, %v3369
  %v3376 = vmax.f32 %v3374, %v3375
  %v3377 = vrot.slane %v3376, 4
  %v3378 = vmax.f32 %v3376, %v3377
  %v3379 = vrot.slane %v3378, 2
  %v3380 = vmax.f32 %v3378, %v3379
  %v3381 = vrot.slane %v3380, 1
  %v3382 = vmax.f32 %v3380, %v3381
  %v3383 = vsel %vm176, %v3197, 0.0
  %v3384 = vsel %vm177, %v3197, 0.0
  %v3385 = vsel %vm178, %v3197, 0.0
  %v3386 = vsel %vm179, %v3197, 0.0
  %v3387 = vsel %vm180, %v3197, 0.0
  %v3388 = vsel %vm181, %v3197, 0.0
  %v3389 = vsel %vm182, %v3197, 0.0
  %v3390 = vsel %vm183, %v3197, 0.0
  %v3391 = vsel %vm184, %v3197, 0.0
  %v3392 = vsel %vm185, %v3197, 0.0
  %v3393 = vsel %vm296, %v3383, 0.0
  %3394 = vadd.xlane.f32.xlu0 %v3393
  %v3395 = vpop.xlane.xlu0 %3394
  %v3396 = vsel %vm296, %v3384, 0.0
  %3397 = vadd.xlane.f32.xlu0 %v3396
  %v3398 = vpop.xlane.xlu0 %3397
  %v3399 = vsel %vm296, %v3385, 0.0
  %3400 = vadd.xlane.f32.xlu0 %v3399
  %v3401 = vpop.xlane.xlu0 %3400
  %v3402 = vsel %vm296, %v3386, 0.0
  %3403 = vadd.xlane.f32.xlu0 %v3402
  %v3404 = vpop.xlane.xlu0 %3403
  %v3405 = vsel %vm296, %v3387, 0.0
  %3406 = vadd.xlane.f32.xlu0 %v3405
  %v3407 = vpop.xlane.xlu0 %3406
  %v3408 = vsel %vm296, %v3388, 0.0
  %3409 = vadd.xlane.f32.xlu0 %v3408
  %v3410 = vpop.xlane.xlu0 %3409
  %v3411 = vsel %vm296, %v3389, 0.0
  %3412 = vadd.xlane.f32.xlu0 %v3411
  %v3413 = vpop.xlane.xlu0 %3412
  %v3414 = vsel %vm296, %v3390, 0.0
  %3415 = vadd.xlane.f32.xlu0 %v3414
  %v3416 = vpop.xlane.xlu0 %3415
  %v3417 = vsel %vm296, %v3391, 0.0
  %3418 = vadd.xlane.f32.xlu0 %v3417
  %v3419 = vpop.xlane.xlu0 %3418
  %v3420 = vsel %vm465, %v3392, 0.0
  %3421 = vadd.xlane.f32.xlu0 %v3420
  %v3422 = vpop.xlane.xlu0 %3421
  %v3423 = vsel %vm166, %v3347, 0.0
  %v3424 = vsel %vm167, %v3347, 0.0
  %v3425 = vsel %vm168, %v3347, 0.0
  %v3426 = vsel %vm169, %v3347, 0.0
  %v3427 = vsel %vm170, %v3347, 0.0
  %v3428 = vsel %vm171, %v3347, 0.0
  %v3429 = vsel %vm172, %v3347, 0.0
  %v3430 = vsel %vm173, %v3347, 0.0
  %v3431 = vsel %vm174, %v3347, 0.0
  %v3432 = vsel %vm175, %v3347, 0.0
  %v3433 = vsel %vm609, %v3423, 0.0
  %3434 = vadd.xlane.f32.xlu0 %v3433
  %v3435 = vpop.xlane.xlu0 %3434
  %v3436 = vsel %vm609, %v3424, 0.0
  %3437 = vadd.xlane.f32.xlu0 %v3436
  %v3438 = vpop.xlane.xlu0 %3437
  %v3439 = vsel %vm609, %v3425, 0.0
  %3440 = vadd.xlane.f32.xlu0 %v3439
  %v3441 = vpop.xlane.xlu0 %3440
  %v3442 = vsel %vm609, %v3426, 0.0
  %3443 = vadd.xlane.f32.xlu0 %v3442
  %v3444 = vpop.xlane.xlu0 %3443
  %v3445 = vsel %vm609, %v3427, 0.0
  %3446 = vadd.xlane.f32.xlu0 %v3445
  %v3447 = vpop.xlane.xlu0 %3446
  %v3448 = vsel %vm609, %v3428, 0.0
  %3449 = vadd.xlane.f32.xlu0 %v3448
  %v3450 = vpop.xlane.xlu0 %3449
  %v3451 = vsel %vm609, %v3429, 0.0
  %3452 = vadd.xlane.f32.xlu0 %v3451
  %v3453 = vpop.xlane.xlu0 %3452
  %v3454 = vsel %vm609, %v3430, 0.0
  %3455 = vadd.xlane.f32.xlu0 %v3454
  %v3456 = vpop.xlane.xlu0 %3455
  %v3457 = vsel %vm609, %v3431, 0.0
  %3458 = vadd.xlane.f32.xlu0 %v3457
  %v3459 = vpop.xlane.xlu0 %3458
  %v3460 = vsel %vm627, %v3432, 0.0
  %3461 = vadd.xlane.f32.xlu0 %v3460
  %v3462 = vpop.xlane.xlu0 %3461
  %v3463 = vadd.f32 %v3395, %v3435
  %v3464 = vadd.f32 %v3398, %v3438
  %v3465 = vadd.f32 %v3401, %v3441
  %v3466 = vadd.f32 %v3404, %v3444
  %v3467 = vadd.f32 %v3407, %v3447
  %v3468 = vadd.f32 %v3410, %v3450
  %v3469 = vadd.f32 %v3413, %v3453
  %v3470 = vadd.f32 %v3416, %v3456
  %v3471 = vadd.f32 %v3419, %v3459
  %v3472 = vadd.f32 %v3422, %v3462
  %v3473 = vsel %vm176, %v3232, -3.4028235e+38
  %v3474 = vsel %vm177, %v3232, -3.4028235e+38
  %v3475 = vsel %vm178, %v3232, -3.4028235e+38
  %v3476 = vsel %vm179, %v3232, -3.4028235e+38
  %v3477 = vsel %vm180, %v3232, -3.4028235e+38
  %v3478 = vsel %vm181, %v3232, -3.4028235e+38
  %v3479 = vsel %vm182, %v3232, -3.4028235e+38
  %v3480 = vsel %vm183, %v3232, -3.4028235e+38
  %v3481 = vsel %vm184, %v3232, -3.4028235e+38
  %v3482 = vsel %vm185, %v3232, -3.4028235e+38
  %v3483 = vsel %vm296, %v3473, -inf
  %3484 = vmax.xlane.f32.xlu0 %v3483
  %v3485 = vpop.xlane.xlu0 %3484
  %v3486 = vsel %vm296, %v3474, -inf
  %3487 = vmax.xlane.f32.xlu0 %v3486
  %v3488 = vpop.xlane.xlu0 %3487
  %v3489 = vsel %vm296, %v3475, -inf
  %3490 = vmax.xlane.f32.xlu0 %v3489
  %v3491 = vpop.xlane.xlu0 %3490
  %v3492 = vsel %vm296, %v3476, -inf
  %3493 = vmax.xlane.f32.xlu0 %v3492
  %v3494 = vpop.xlane.xlu0 %3493
  %v3495 = vsel %vm296, %v3477, -inf
  %3496 = vmax.xlane.f32.xlu0 %v3495
  %v3497 = vpop.xlane.xlu0 %3496
  %v3498 = vsel %vm296, %v3478, -inf
  %3499 = vmax.xlane.f32.xlu0 %v3498
  %v3500 = vpop.xlane.xlu0 %3499
  %v3501 = vsel %vm296, %v3479, -inf
  %3502 = vmax.xlane.f32.xlu0 %v3501
  %v3503 = vpop.xlane.xlu0 %3502
  %v3504 = vsel %vm296, %v3480, -inf
  %3505 = vmax.xlane.f32.xlu0 %v3504
  %v3506 = vpop.xlane.xlu0 %3505
  %v3507 = vsel %vm296, %v3481, -inf
  %3508 = vmax.xlane.f32.xlu0 %v3507
  %v3509 = vpop.xlane.xlu0 %3508
  %v3510 = vsel %vm465, %v3482, -inf
  %3511 = vmax.xlane.f32.xlu0 %v3510
  %v3512 = vpop.xlane.xlu0 %3511
  %v3513 = vsel %vm166, %v3382, -3.4028235e+38
  %v3514 = vsel %vm167, %v3382, -3.4028235e+38
  %v3515 = vsel %vm168, %v3382, -3.4028235e+38
  %v3516 = vsel %vm169, %v3382, -3.4028235e+38
  %v3517 = vsel %vm170, %v3382, -3.4028235e+38
  %v3518 = vsel %vm171, %v3382, -3.4028235e+38
  %v3519 = vsel %vm172, %v3382, -3.4028235e+38
  %v3520 = vsel %vm173, %v3382, -3.4028235e+38
  %v3521 = vsel %vm174, %v3382, -3.4028235e+38
  %v3522 = vsel %vm175, %v3382, -3.4028235e+38
  %v3523 = vsel %vm609, %v3513, -inf
  %3524 = vmax.xlane.f32.xlu0 %v3523
  %v3525 = vpop.xlane.xlu0 %3524
  %v3526 = vsel %vm609, %v3514, -inf
  %3527 = vmax.xlane.f32.xlu0 %v3526
  %v3528 = vpop.xlane.xlu0 %3527
  %v3529 = vsel %vm609, %v3515, -inf
  %3530 = vmax.xlane.f32.xlu0 %v3529
  %v3531 = vpop.xlane.xlu0 %3530
  %v3532 = vsel %vm609, %v3516, -inf
  %3533 = vmax.xlane.f32.xlu0 %v3532
  %v3534 = vpop.xlane.xlu0 %3533
  %v3535 = vsel %vm609, %v3517, -inf
  %3536 = vmax.xlane.f32.xlu0 %v3535
  %v3537 = vpop.xlane.xlu0 %3536
  %v3538 = vsel %vm609, %v3518, -inf
  %3539 = vmax.xlane.f32.xlu0 %v3538
  %v3540 = vpop.xlane.xlu0 %3539
  %v3541 = vsel %vm609, %v3519, -inf
  %3542 = vmax.xlane.f32.xlu0 %v3541
  %v3543 = vpop.xlane.xlu0 %3542
  %v3544 = vsel %vm609, %v3520, -inf
  %3545 = vmax.xlane.f32.xlu0 %v3544
  %v3546 = vpop.xlane.xlu0 %3545
  %v3547 = vsel %vm609, %v3521, -inf
  %3548 = vmax.xlane.f32.xlu0 %v3547
  %v3549 = vpop.xlane.xlu0 %3548
  %v3550 = vsel %vm627, %v3522, -inf
  %3551 = vmax.xlane.f32.xlu0 %v3550
  %v3552 = vpop.xlane.xlu0 %3551
  %v3553 = vmax.f32 %v3485, %v3525
  %v3554 = vmax.f32 %v3488, %v3528
  %v3555 = vmax.f32 %v3491, %v3531
  %v3556 = vmax.f32 %v3494, %v3534
  %v3557 = vmax.f32 %v3497, %v3537
  %v3558 = vmax.f32 %v3500, %v3540
  %v3559 = vmax.f32 %v3503, %v3543
  %v3560 = vmax.f32 %v3506, %v3546
  %v3561 = vmax.f32 %v3509, %v3549
  %v3562 = vmax.f32 %v3512, %v3552
  %v3563 = vsel %vm609, %v3293, 0.0
  %v3564 = vsel %vm609, %v3294, 0.0
  %v3565 = vadd.f32 %v3563, %v3564
  %v3566 = vsel %vm609, %v3295, 0.0
  %v3567 = vadd.f32 %v3565, %v3566
  %v3568 = vsel %vm609, %v3296, 0.0
  %v3569 = vadd.f32 %v3567, %v3568
  %v3570 = vsel %vm609, %v3297, 0.0
  %v3571 = vadd.f32 %v3569, %v3570
  %v3572 = vsel %vm609, %v3298, 0.0
  %v3573 = vadd.f32 %v3571, %v3572
  %v3574 = vsel %vm609, %v3299, 0.0
  %v3575 = vadd.f32 %v3573, %v3574
  %v3576 = vsel %vm609, %v3300, 0.0
  %v3577 = vadd.f32 %v3575, %v3576
  %v3578 = vsel %vm609, %v3301, 0.0
  %v3579 = vadd.f32 %v3577, %v3578
  %v3580 = vsel %vm627, %v3302, 0.0
  %v3581 = vadd.f32 %v3579, %v3580
  %3582 = vadd.xlane.f32.xlu0 %v3581
  %v3583 = vpop.xlane.xlu0 %3582
  %v3584 = vrot.slane %v3583, 4
  %v3585 = vadd.f32 %v3583, %v3584
  %v3586 = vrot.slane %v3585, 2
  %v3587 = vadd.f32 %v3585, %v3586
  %v3588 = vrot.slane %v3587, 1
  %v3589 = vadd.f32 %v3587, %v3588
  %s3590 = vtos %v3589
  %v3591 = vstv %s3590
  %v3592 = vsel %vm186, %v3591, %v3463
  %v3593 = vsel %vm187, %v3591, %v3464
  %v3594 = vsel %vm188, %v3591, %v3465
  %v3595 = vsel %vm189, %v3591, %v3466
  %v3596 = vsel %vm190, %v3591, %v3467
  %v3597 = vsel %vm191, %v3591, %v3468
  %v3598 = vsel %vm192, %v3591, %v3469
  %v3599 = vsel %vm193, %v3591, %v3470
  %v3600 = vsel %vm194, %v3591, %v3471
  %v3601 = vsel %vm195, %v3591, %v3472
  %v3602 = vsel %vm1183, %v2632, -inf
  %v3603 = vsel %vm1185, %v2633, -inf
  %v3604 = vsel %vm1183, %v2634, -inf
  %v3605 = vsel %vm1185, %v2635, -inf
  %v3606 = vsel %vm1183, %v2636, -inf
  %v3607 = vmax.f32 %v3602, %v3606
  %v3608 = vsel %vm1185, %v2637, -inf
  %v3609 = vmax.f32 %v3603, %v3608
  %v3610 = vsel %vm1183, %v2638, -inf
  %v3611 = vmax.f32 %v3604, %v3610
  %v3612 = vsel %vm1185, %v2639, -inf
  %v3613 = vmax.f32 %v3605, %v3612
  %v3614 = vsel %vm1183, %v2640, -inf
  %v3615 = vmax.f32 %v3607, %v3614
  %v3616 = vsel %vm1185, %v2641, -inf
  %v3617 = vmax.f32 %v3609, %v3616
  %v3618 = vsel %vm1183, %v2642, -inf
  %v3619 = vmax.f32 %v3611, %v3618
  %v3620 = vsel %vm1185, %v2643, -inf
  %v3621 = vmax.f32 %v3613, %v3620
  %v3622 = vsel %vm1183, %v2644, -inf
  %v3623 = vmax.f32 %v3615, %v3622
  %v3624 = vsel %vm1185, %v2645, -inf
  %v3625 = vmax.f32 %v3617, %v3624
  %v3626 = vsel %vm1183, %v2646, -inf
  %v3627 = vmax.f32 %v3619, %v3626
  %v3628 = vsel %vm1185, %v2647, -inf
  %v3629 = vmax.f32 %v3621, %v3628
  %v3630 = vsel %vm1183, %v2648, -inf
  %v3631 = vmax.f32 %v3623, %v3630
  %v3632 = vsel %vm1185, %v2649, -inf
  %v3633 = vmax.f32 %v3625, %v3632
  %v3634 = vsel %vm1217, %v2650, -inf
  %v3635 = vmax.f32 %v3627, %v3634
  %v3636 = vsel %vm1220, %v2651, -inf
  %v3637 = vmax.f32 %v3629, %v3636
  %v3638 = vmax.f32 %v3631, %v3633
  %v3639 = vmax.f32 %v3635, %v3637
  %v3640 = vmax.f32 %v3638, %v3639
  %3641 = vmax.xlane.f32.xlu0 %v3640
  %v3642 = vpop.xlane.xlu0 %3641
  %v3643 = vrot.slane %v3642, 4
  %v3644 = vmax.f32 %v3642, %v3643
  %v3645 = vrot.slane %v3644, 2
  %v3646 = vmax.f32 %v3644, %v3645
  %v3647 = vrot.slane %v3646, 1
  %v3648 = vmax.f32 %v3646, %v3647
  %s3649 = vtos %v3648
  %v3650 = vstv %s3649
  %v3651 = vsel %vm186, %v3650, %v3553
  %v3652 = vsel %vm187, %v3650, %v3554
  %v3653 = vsel %vm188, %v3650, %v3555
  %v3654 = vsel %vm189, %v3650, %v3556
  %v3655 = vsel %vm190, %v3650, %v3557
  %v3656 = vsel %vm191, %v3650, %v3558
  %v3657 = vsel %vm192, %v3650, %v3559
  %v3658 = vsel %vm193, %v3650, %v3560
  %v3659 = vsel %vm194, %v3650, %v3561
  %v3660 = vsel %vm195, %v3650, %v3562
  %v3661 = vmul.f32 %v3592, %v196
  %v3662 = vmul.f32 %v3593, %v197
  %v3663 = vmul.f32 %v3594, %v198
  %v3664 = vmul.f32 %v3595, %v199
  %v3665 = vmul.f32 %v3596, %v200
  %v3666 = vmul.f32 %v3597, %v201
  %v3667 = vmul.f32 %v3598, %v202
  %v3668 = vmul.f32 %v3599, %v203
  %v3669 = vmul.f32 %v3600, %v204
  %v3670 = vmul.f32 %v3601, %v205
  %3690 = vrot.lane.b32.xlu0 %v2673, 50
  %v3691 = vpop.permute.xlu0 %3690
  %3692 = vrot.lane.b32.xlu0 %v2674, 50
  %v3693 = vpop.permute.xlu0 %3692
  %3694 = vrot.lane.b32.xlu0 %v2675, 50
  %v3695 = vpop.permute.xlu0 %3694
  %3696 = vrot.lane.b32.xlu0 %v2676, 50
  %v3697 = vpop.permute.xlu0 %3696
  %3698 = vrot.lane.b32.xlu0 %v2677, 50
  %v3699 = vpop.permute.xlu0 %3698
  %3700 = vrot.lane.b32.xlu0 %v2678, 50
  %v3701 = vpop.permute.xlu0 %3700
  %3702 = vrot.lane.b32.xlu0 %v2679, 50
  %v3703 = vpop.permute.xlu0 %3702
  %3704 = vrot.lane.b32.xlu0 %v2680, 50
  %v3705 = vpop.permute.xlu0 %3704
  %3706 = vrot.lane.b32.xlu0 %v2681, 50
  %v3707 = vpop.permute.xlu0 %3706
  %3708 = vrot.lane.b32.xlu0 %v2682, 50
  %v3709 = vpop.permute.xlu0 %3708
  %3710 = vrot.lane.b32.xlu0 %v2683, 50
  %v3711 = vpop.permute.xlu0 %3710
  %3712 = vrot.lane.b32.xlu0 %v2684, 50
  %v3713 = vpop.permute.xlu0 %3712
  %3714 = vrot.lane.b32.xlu0 %v2685, 50
  %v3715 = vpop.permute.xlu0 %3714
  %3716 = vrot.lane.b32.xlu0 %v2686, 50
  %v3717 = vpop.permute.xlu0 %3716
  %3718 = vrot.lane.b32.xlu0 %v2687, 50
  %v3719 = vpop.permute.xlu0 %3718
  %3720 = vrot.lane.b32.xlu0 %v2688, 50
  %v3721 = vpop.permute.xlu0 %3720
  %3722 = vrot.lane.b32.xlu0 %v2689, 50
  %v3723 = vpop.permute.xlu0 %3722
  %3724 = vrot.lane.b32.xlu0 %v2690, 50
  %v3725 = vpop.permute.xlu0 %3724
  %3726 = vrot.lane.b32.xlu0 %v2691, 50
  %v3727 = vpop.permute.xlu0 %3726
  %3728 = vrot.lane.b32.xlu0 %v2692, 50
  %v3729 = vpop.permute.xlu0 %3728
  %v3730 = vsel %vm872, %v3691, %v3693
  %v3731 = vsel %vm872, %v3695, %v3697
  %v3732 = vsel %vm872, %v3699, %v3701
  %v3733 = vsel %vm872, %v3703, %v3705
  %v3734 = vsel %vm872, %v3707, %v3709
  %v3735 = vsel %vm872, %v3711, %v3713
  %v3736 = vsel %vm872, %v3715, %v3717
  %v3737 = vsel %vm872, %v3719, %v3721
  %v3738 = vsel %vm872, %v3723, %v3725
  %v3739 = vsel %vm872, %v3727, %v3729
  %v3750 = vsel %vm136, %v3730, 0.0
  %v3751 = vsel %vm137, %v3731, 0.0
  %v3752 = vsel %vm138, %v3732, 0.0
  %v3753 = vsel %vm139, %v3733, 0.0
  %v3754 = vsel %vm140, %v3734, 0.0
  %v3755 = vsel %vm141, %v3735, 0.0
  %v3756 = vsel %vm142, %v3736, 0.0
  %v3757 = vsel %vm143, %v3737, 0.0
  %v3758 = vsel %vm144, %v3738, 0.0
  %v3759 = vsel %vm145, %v3739, 0.0
  %v3760 = vsel %vm609, %v3750, 0.0
  %v3761 = vsel %vm609, %v3751, 0.0
  %v3762 = vadd.f32 %v3760, %v3761
  %v3763 = vsel %vm609, %v3752, 0.0
  %v3764 = vadd.f32 %v3762, %v3763
  %v3765 = vsel %vm609, %v3753, 0.0
  %v3766 = vadd.f32 %v3764, %v3765
  %v3767 = vsel %vm609, %v3754, 0.0
  %v3768 = vadd.f32 %v3766, %v3767
  %v3769 = vsel %vm609, %v3755, 0.0
  %v3770 = vadd.f32 %v3768, %v3769
  %v3771 = vsel %vm609, %v3756, 0.0
  %v3772 = vadd.f32 %v3770, %v3771
  %v3773 = vsel %vm609, %v3757, 0.0
  %v3774 = vadd.f32 %v3772, %v3773
  %v3775 = vsel %vm609, %v3758, 0.0
  %v3776 = vadd.f32 %v3774, %v3775
  %v3777 = vsel %vm920, %v3759, 0.0
  %v3778 = vadd.f32 %v3776, %v3777
  %v3779 = vrot.slane %v3778, 4
  %v3780 = vadd.f32 %v3778, %v3779
  %v3781 = vrot.slane %v3780, 2
  %v3782 = vadd.f32 %v3780, %v3781
  %v3783 = vrot.slane %v3782, 1
  %v3784 = vadd.f32 %v3782, %v3783
  %v3785 = vsel %vm136, %v3730, -3.4028235e+38
  %v3786 = vsel %vm137, %v3731, -3.4028235e+38
  %v3787 = vsel %vm138, %v3732, -3.4028235e+38
  %v3788 = vsel %vm139, %v3733, -3.4028235e+38
  %v3789 = vsel %vm140, %v3734, -3.4028235e+38
  %v3790 = vsel %vm141, %v3735, -3.4028235e+38
  %v3791 = vsel %vm142, %v3736, -3.4028235e+38
  %v3792 = vsel %vm143, %v3737, -3.4028235e+38
  %v3793 = vsel %vm144, %v3738, -3.4028235e+38
  %v3794 = vsel %vm145, %v3739, -3.4028235e+38
  %v3795 = vsel %vm609, %v3785, -inf
  %v3796 = vsel %vm609, %v3786, -inf
  %v3797 = vsel %vm609, %v3787, -inf
  %v3798 = vsel %vm609, %v3788, -inf
  %v3799 = vsel %vm609, %v3789, -inf
  %v3800 = vmax.f32 %v3795, %v3799
  %v3801 = vsel %vm609, %v3790, -inf
  %v3802 = vmax.f32 %v3796, %v3801
  %v3803 = vsel %vm609, %v3791, -inf
  %v3804 = vmax.f32 %v3797, %v3803
  %v3805 = vsel %vm609, %v3792, -inf
  %v3806 = vmax.f32 %v3798, %v3805
  %v3807 = vsel %vm609, %v3793, -inf
  %v3808 = vmax.f32 %v3800, %v3807
  %v3809 = vsel %vm920, %v3794, -inf
  %v3810 = vmax.f32 %v3802, %v3809
  %v3811 = vmax.f32 %v3808, %v3810
  %v3812 = vmax.f32 %v3804, %v3806
  %v3813 = vmax.f32 %v3811, %v3812
  %v3814 = vrot.slane %v3813, 4
  %v3815 = vmax.f32 %v3813, %v3814
  %v3816 = vrot.slane %v3815, 2
  %v3817 = vmax.f32 %v3815, %v3816
  %v3818 = vrot.slane %v3817, 1
  %v3819 = vmax.f32 %v3817, %v3818
  %v3830 = vrot.slane %v2650, 6
  %v3831 = vrot.slane %v2652, 6
  %v3832 = vsel %vm710, %v3830, %v3831
  %v3833 = vrot.slane %v2654, 6
  %v3834 = vsel %vm710, %v3831, %v3833
  %v3835 = vrot.slane %v2656, 6
  %v3836 = vsel %vm710, %v3833, %v3835
  %v3837 = vrot.slane %v2658, 6
  %v3838 = vsel %vm710, %v3835, %v3837
  %v3839 = vrot.slane %v2660, 6
  %v3840 = vsel %vm710, %v3837, %v3839
  %v3841 = vrot.slane %v2662, 6
  %v3842 = vsel %vm710, %v3839, %v3841
  %v3843 = vrot.slane %v2664, 6
  %v3844 = vsel %vm710, %v3841, %v3843
  %v3845 = vrot.slane %v2666, 6
  %v3846 = vsel %vm710, %v3843, %v3845
  %v3847 = vrot.slane %v2668, 6
  %v3848 = vsel %vm710, %v3845, %v3847
  %v3849 = vrot.slane %v2670, 6
  %v3850 = vsel %vm710, %v3847, %v3849
  %v3861 = vsel %vm126, %v3832, 0.0
  %v3862 = vsel %vm127, %v3834, 0.0
  %v3863 = vsel %vm128, %v3836, 0.0
  %v3864 = vsel %vm129, %v3838, 0.0
  %v3865 = vsel %vm130, %v3840, 0.0
  %v3866 = vsel %vm131, %v3842, 0.0
  %v3867 = vsel %vm132, %v3844, 0.0
  %v3868 = vsel %vm133, %v3846, 0.0
  %v3869 = vsel %vm134, %v3848, 0.0
  %v3870 = vsel %vm135, %v3850, 0.0
  %v3871 = vsel %vm296, %v3861, 0.0
  %v3872 = vsel %vm296, %v3862, 0.0
  %v3873 = vadd.f32 %v3871, %v3872
  %v3874 = vsel %vm296, %v3863, 0.0
  %v3875 = vadd.f32 %v3873, %v3874
  %v3876 = vsel %vm296, %v3864, 0.0
  %v3877 = vadd.f32 %v3875, %v3876
  %v3878 = vsel %vm296, %v3865, 0.0
  %v3879 = vadd.f32 %v3877, %v3878
  %v3880 = vsel %vm296, %v3866, 0.0
  %v3881 = vadd.f32 %v3879, %v3880
  %v3882 = vsel %vm296, %v3867, 0.0
  %v3883 = vadd.f32 %v3881, %v3882
  %v3884 = vsel %vm296, %v3868, 0.0
  %v3885 = vadd.f32 %v3883, %v3884
  %v3886 = vsel %vm296, %v3869, 0.0
  %v3887 = vadd.f32 %v3885, %v3886
  %v3888 = vsel %vm465, %v3870, 0.0
  %v3889 = vadd.f32 %v3887, %v3888
  %v3890 = vrot.slane %v3889, 4
  %v3891 = vadd.f32 %v3889, %v3890
  %v3892 = vrot.slane %v3891, 2
  %v3893 = vadd.f32 %v3891, %v3892
  %v3894 = vrot.slane %v3893, 1
  %v3895 = vadd.f32 %v3893, %v3894
  %v3896 = vsel %vm116, %v3832, -3.4028235e+38
  %v3897 = vsel %vm117, %v3834, -3.4028235e+38
  %v3898 = vsel %vm118, %v3836, -3.4028235e+38
  %v3899 = vsel %vm119, %v3838, -3.4028235e+38
  %v3900 = vsel %vm120, %v3840, -3.4028235e+38
  %v3901 = vsel %vm121, %v3842, -3.4028235e+38
  %v3902 = vsel %vm122, %v3844, -3.4028235e+38
  %v3903 = vsel %vm123, %v3846, -3.4028235e+38
  %v3904 = vsel %vm124, %v3848, -3.4028235e+38
  %v3905 = vsel %vm125, %v3850, -3.4028235e+38
  %v3906 = vsel %vm296, %v3896, -inf
  %v3907 = vsel %vm296, %v3897, -inf
  %v3908 = vsel %vm296, %v3898, -inf
  %v3909 = vsel %vm296, %v3899, -inf
  %v3910 = vsel %vm296, %v3900, -inf
  %v3911 = vmax.f32 %v3906, %v3910
  %v3912 = vsel %vm296, %v3901, -inf
  %v3913 = vmax.f32 %v3907, %v3912
  %v3914 = vsel %vm296, %v3902, -inf
  %v3915 = vmax.f32 %v3908, %v3914
  %v3916 = vsel %vm296, %v3903, -inf
  %v3917 = vmax.f32 %v3909, %v3916
  %v3918 = vsel %vm296, %v3904, -inf
  %v3919 = vmax.f32 %v3911, %v3918
  %v3920 = vsel %vm465, %v3905, -inf
  %v3921 = vmax.f32 %v3913, %v3920
  %v3922 = vmax.f32 %v3919, %v3921
  %v3923 = vmax.f32 %v3915, %v3917
  %v3924 = vmax.f32 %v3922, %v3923
  %v3925 = vrot.slane %v3924, 4
  %v3926 = vmax.f32 %v3924, %v3925
  %v3927 = vrot.slane %v3926, 2
  %v3928 = vmax.f32 %v3926, %v3927
  %v3929 = vrot.slane %v3928, 1
  %v3930 = vmax.f32 %v3928, %v3929
  %v3931 = vsel %vm166, %v3784, 0.0
  %v3932 = vsel %vm167, %v3784, 0.0
  %v3933 = vsel %vm168, %v3784, 0.0
  %v3934 = vsel %vm169, %v3784, 0.0
  %v3935 = vsel %vm170, %v3784, 0.0
  %v3936 = vsel %vm171, %v3784, 0.0
  %v3937 = vsel %vm172, %v3784, 0.0
  %v3938 = vsel %vm173, %v3784, 0.0
  %v3939 = vsel %vm174, %v3784, 0.0
  %v3940 = vsel %vm175, %v3784, 0.0
  %v3941 = vsel %vm609, %v3931, 0.0
  %3942 = vadd.xlane.f32.xlu0 %v3941
  %v3943 = vpop.xlane.xlu0 %3942
  %v3944 = vsel %vm609, %v3932, 0.0
  %3945 = vadd.xlane.f32.xlu0 %v3944
  %v3946 = vpop.xlane.xlu0 %3945
  %v3947 = vsel %vm609, %v3933, 0.0
  %3948 = vadd.xlane.f32.xlu0 %v3947
  %v3949 = vpop.xlane.xlu0 %3948
  %v3950 = vsel %vm609, %v3934, 0.0
  %3951 = vadd.xlane.f32.xlu0 %v3950
  %v3952 = vpop.xlane.xlu0 %3951
  %v3953 = vsel %vm609, %v3935, 0.0
  %3954 = vadd.xlane.f32.xlu0 %v3953
  %v3955 = vpop.xlane.xlu0 %3954
  %v3956 = vsel %vm609, %v3936, 0.0
  %3957 = vadd.xlane.f32.xlu0 %v3956
  %v3958 = vpop.xlane.xlu0 %3957
  %v3959 = vsel %vm609, %v3937, 0.0
  %3960 = vadd.xlane.f32.xlu0 %v3959
  %v3961 = vpop.xlane.xlu0 %3960
  %v3962 = vsel %vm609, %v3938, 0.0
  %3963 = vadd.xlane.f32.xlu0 %v3962
  %v3964 = vpop.xlane.xlu0 %3963
  %v3965 = vsel %vm609, %v3939, 0.0
  %3966 = vadd.xlane.f32.xlu0 %v3965
  %v3967 = vpop.xlane.xlu0 %3966
  %v3968 = vsel %vm627, %v3940, 0.0
  %3969 = vadd.xlane.f32.xlu0 %v3968
  %v3970 = vpop.xlane.xlu0 %3969
  %v3971 = vsel %vm176, %v3895, 0.0
  %v3972 = vsel %vm177, %v3895, 0.0
  %v3973 = vsel %vm178, %v3895, 0.0
  %v3974 = vsel %vm179, %v3895, 0.0
  %v3975 = vsel %vm180, %v3895, 0.0
  %v3976 = vsel %vm181, %v3895, 0.0
  %v3977 = vsel %vm182, %v3895, 0.0
  %v3978 = vsel %vm183, %v3895, 0.0
  %v3979 = vsel %vm184, %v3895, 0.0
  %v3980 = vsel %vm185, %v3895, 0.0
  %v3981 = vsel %vm296, %v3971, 0.0
  %3982 = vadd.xlane.f32.xlu0 %v3981
  %v3983 = vpop.xlane.xlu0 %3982
  %v3984 = vsel %vm296, %v3972, 0.0
  %3985 = vadd.xlane.f32.xlu0 %v3984
  %v3986 = vpop.xlane.xlu0 %3985
  %v3987 = vsel %vm296, %v3973, 0.0
  %3988 = vadd.xlane.f32.xlu0 %v3987
  %v3989 = vpop.xlane.xlu0 %3988
  %v3990 = vsel %vm296, %v3974, 0.0
  %3991 = vadd.xlane.f32.xlu0 %v3990
  %v3992 = vpop.xlane.xlu0 %3991
  %v3993 = vsel %vm296, %v3975, 0.0
  %3994 = vadd.xlane.f32.xlu0 %v3993
  %v3995 = vpop.xlane.xlu0 %3994
  %v3996 = vsel %vm296, %v3976, 0.0
  %3997 = vadd.xlane.f32.xlu0 %v3996
  %v3998 = vpop.xlane.xlu0 %3997
  %v3999 = vsel %vm296, %v3977, 0.0
  %4000 = vadd.xlane.f32.xlu0 %v3999
  %v4001 = vpop.xlane.xlu0 %4000
  %v4002 = vsel %vm296, %v3978, 0.0
  %4003 = vadd.xlane.f32.xlu0 %v4002
  %v4004 = vpop.xlane.xlu0 %4003
  %v4005 = vsel %vm296, %v3979, 0.0
  %4006 = vadd.xlane.f32.xlu0 %v4005
  %v4007 = vpop.xlane.xlu0 %4006
  %v4008 = vsel %vm465, %v3980, 0.0
  %4009 = vadd.xlane.f32.xlu0 %v4008
  %v4010 = vpop.xlane.xlu0 %4009
  %v4011 = vadd.f32 %v3943, %v3983
  %v4012 = vadd.f32 %v3946, %v3986
  %v4013 = vadd.f32 %v3949, %v3989
  %v4014 = vadd.f32 %v3952, %v3992
  %v4015 = vadd.f32 %v3955, %v3995
  %v4016 = vadd.f32 %v3958, %v3998
  %v4017 = vadd.f32 %v3961, %v4001
  %v4018 = vadd.f32 %v3964, %v4004
  %v4019 = vadd.f32 %v3967, %v4007
  %v4020 = vadd.f32 %v3970, %v4010
  %v4021 = vsel %vm166, %v3819, -3.4028235e+38
  %v4022 = vsel %vm167, %v3819, -3.4028235e+38
  %v4023 = vsel %vm168, %v3819, -3.4028235e+38
  %v4024 = vsel %vm169, %v3819, -3.4028235e+38
  %v4025 = vsel %vm170, %v3819, -3.4028235e+38
  %v4026 = vsel %vm171, %v3819, -3.4028235e+38
  %v4027 = vsel %vm172, %v3819, -3.4028235e+38
  %v4028 = vsel %vm173, %v3819, -3.4028235e+38
  %v4029 = vsel %vm174, %v3819, -3.4028235e+38
  %v4030 = vsel %vm175, %v3819, -3.4028235e+38
  %v4031 = vsel %vm609, %v4021, -inf
  %4032 = vmax.xlane.f32.xlu0 %v4031
  %v4033 = vpop.xlane.xlu0 %4032
  %v4034 = vsel %vm609, %v4022, -inf
  %4035 = vmax.xlane.f32.xlu0 %v4034
  %v4036 = vpop.xlane.xlu0 %4035
  %v4037 = vsel %vm609, %v4023, -inf
  %4038 = vmax.xlane.f32.xlu0 %v4037
  %v4039 = vpop.xlane.xlu0 %4038
  %v4040 = vsel %vm609, %v4024, -inf
  %4041 = vmax.xlane.f32.xlu0 %v4040
  %v4042 = vpop.xlane.xlu0 %4041
  %v4043 = vsel %vm609, %v4025, -inf
  %4044 = vmax.xlane.f32.xlu0 %v4043
  %v4045 = vpop.xlane.xlu0 %4044
  %v4046 = vsel %vm609, %v4026, -inf
  %4047 = vmax.xlane.f32.xlu0 %v4046
  %v4048 = vpop.xlane.xlu0 %4047
  %v4049 = vsel %vm609, %v4027, -inf
  %4050 = vmax.xlane.f32.xlu0 %v4049
  %v4051 = vpop.xlane.xlu0 %4050
  %v4052 = vsel %vm609, %v4028, -inf
  %4053 = vmax.xlane.f32.xlu0 %v4052
  %v4054 = vpop.xlane.xlu0 %4053
  %v4055 = vsel %vm609, %v4029, -inf
  %4056 = vmax.xlane.f32.xlu0 %v4055
  %v4057 = vpop.xlane.xlu0 %4056
  %v4058 = vsel %vm627, %v4030, -inf
  %4059 = vmax.xlane.f32.xlu0 %v4058
  %v4060 = vpop.xlane.xlu0 %4059
  %v4061 = vsel %vm176, %v3930, -3.4028235e+38
  %v4062 = vsel %vm177, %v3930, -3.4028235e+38
  %v4063 = vsel %vm178, %v3930, -3.4028235e+38
  %v4064 = vsel %vm179, %v3930, -3.4028235e+38
  %v4065 = vsel %vm180, %v3930, -3.4028235e+38
  %v4066 = vsel %vm181, %v3930, -3.4028235e+38
  %v4067 = vsel %vm182, %v3930, -3.4028235e+38
  %v4068 = vsel %vm183, %v3930, -3.4028235e+38
  %v4069 = vsel %vm184, %v3930, -3.4028235e+38
  %v4070 = vsel %vm185, %v3930, -3.4028235e+38
  %v4071 = vsel %vm296, %v4061, -inf
  %4072 = vmax.xlane.f32.xlu0 %v4071
  %v4073 = vpop.xlane.xlu0 %4072
  %v4074 = vsel %vm296, %v4062, -inf
  %4075 = vmax.xlane.f32.xlu0 %v4074
  %v4076 = vpop.xlane.xlu0 %4075
  %v4077 = vsel %vm296, %v4063, -inf
  %4078 = vmax.xlane.f32.xlu0 %v4077
  %v4079 = vpop.xlane.xlu0 %4078
  %v4080 = vsel %vm296, %v4064, -inf
  %4081 = vmax.xlane.f32.xlu0 %v4080
  %v4082 = vpop.xlane.xlu0 %4081
  %v4083 = vsel %vm296, %v4065, -inf
  %4084 = vmax.xlane.f32.xlu0 %v4083
  %v4085 = vpop.xlane.xlu0 %4084
  %v4086 = vsel %vm296, %v4066, -inf
  %4087 = vmax.xlane.f32.xlu0 %v4086
  %v4088 = vpop.xlane.xlu0 %4087
  %v4089 = vsel %vm296, %v4067, -inf
  %4090 = vmax.xlane.f32.xlu0 %v4089
  %v4091 = vpop.xlane.xlu0 %4090
  %v4092 = vsel %vm296, %v4068, -inf
  %4093 = vmax.xlane.f32.xlu0 %v4092
  %v4094 = vpop.xlane.xlu0 %4093
  %v4095 = vsel %vm296, %v4069, -inf
  %4096 = vmax.xlane.f32.xlu0 %v4095
  %v4097 = vpop.xlane.xlu0 %4096
  %v4098 = vsel %vm465, %v4070, -inf
  %4099 = vmax.xlane.f32.xlu0 %v4098
  %v4100 = vpop.xlane.xlu0 %4099
  %v4101 = vmax.f32 %v4033, %v4073
  %v4102 = vmax.f32 %v4036, %v4076
  %v4103 = vmax.f32 %v4039, %v4079
  %v4104 = vmax.f32 %v4042, %v4082
  %v4105 = vmax.f32 %v4045, %v4085
  %v4106 = vmax.f32 %v4048, %v4088
  %v4107 = vmax.f32 %v4051, %v4091
  %v4108 = vmax.f32 %v4054, %v4094
  %v4109 = vmax.f32 %v4057, %v4097
  %v4110 = vmax.f32 %v4060, %v4100
  %v4111 = vsel %vm609, %v3832, 0.0
  %v4112 = vsel %vm609, %v3834, 0.0
  %v4113 = vadd.f32 %v4111, %v4112
  %v4114 = vsel %vm609, %v3836, 0.0
  %v4115 = vadd.f32 %v4113, %v4114
  %v4116 = vsel %vm609, %v3838, 0.0
  %v4117 = vadd.f32 %v4115, %v4116
  %v4118 = vsel %vm609, %v3840, 0.0
  %v4119 = vadd.f32 %v4117, %v4118
  %v4120 = vsel %vm609, %v3842, 0.0
  %v4121 = vadd.f32 %v4119, %v4120
  %v4122 = vsel %vm609, %v3844, 0.0
  %v4123 = vadd.f32 %v4121, %v4122
  %v4124 = vsel %vm609, %v3846, 0.0
  %v4125 = vadd.f32 %v4123, %v4124
  %v4126 = vsel %vm609, %v3848, 0.0
  %v4127 = vadd.f32 %v4125, %v4126
  %v4128 = vsel %vm627, %v3850, 0.0
  %v4129 = vadd.f32 %v4127, %v4128
  %4130 = vadd.xlane.f32.xlu0 %v4129
  %v4131 = vpop.xlane.xlu0 %4130
  %v4132 = vrot.slane %v4131, 4
  %v4133 = vadd.f32 %v4131, %v4132
  %v4134 = vrot.slane %v4133, 2
  %v4135 = vadd.f32 %v4133, %v4134
  %v4136 = vrot.slane %v4135, 1
  %v4137 = vadd.f32 %v4135, %v4136
  %s4138 = vtos %v4137
  %v4139 = vstv %s4138
  %v4140 = vsel %vm186, %v4139, %v4011
  %v4141 = vsel %vm187, %v4139, %v4012
  %v4142 = vsel %vm188, %v4139, %v4013
  %v4143 = vsel %vm189, %v4139, %v4014
  %v4144 = vsel %vm190, %v4139, %v4015
  %v4145 = vsel %vm191, %v4139, %v4016
  %v4146 = vsel %vm192, %v4139, %v4017
  %v4147 = vsel %vm193, %v4139, %v4018
  %v4148 = vsel %vm194, %v4139, %v4019
  %v4149 = vsel %vm195, %v4139, %v4020
  %v4150 = vsel %vm1735, %v2650, -inf
  %v4151 = vsel %vm609, %v2652, -inf
  %v4152 = vsel %vm609, %v2654, -inf
  %v4153 = vsel %vm609, %v2656, -inf
  %v4154 = vsel %vm609, %v2658, -inf
  %v4155 = vmax.f32 %v4150, %v4154
  %v4156 = vsel %vm609, %v2660, -inf
  %v4157 = vmax.f32 %v4151, %v4156
  %v4158 = vsel %vm609, %v2662, -inf
  %v4159 = vmax.f32 %v4152, %v4158
  %v4160 = vsel %vm609, %v2664, -inf
  %v4161 = vmax.f32 %v4153, %v4160
  %v4162 = vsel %vm609, %v2666, -inf
  %v4163 = vmax.f32 %v4155, %v4162
  %v4164 = vsel %vm609, %v2668, -inf
  %v4165 = vmax.f32 %v4157, %v4164
  %v4166 = vsel %vm1752, %v2670, -inf
  %v4167 = vmax.f32 %v4159, %v4166
  %v4168 = vmax.f32 %v4163, %v4165
  %v4169 = vmax.f32 %v4167, %v4161
  %v4170 = vmax.f32 %v4168, %v4169
  %4171 = vmax.xlane.f32.xlu0 %v4170
  %v4172 = vpop.xlane.xlu0 %4171
  %v4173 = vrot.slane %v4172, 4
  %v4174 = vmax.f32 %v4172, %v4173
  %v4175 = vrot.slane %v4174, 2
  %v4176 = vmax.f32 %v4174, %v4175
  %v4177 = vrot.slane %v4176, 1
  %v4178 = vmax.f32 %v4176, %v4177
  %s4179 = vtos %v4178
  %v4180 = vstv %s4179
  %v4181 = vsel %vm186, %v4180, %v4101
  %v4182 = vsel %vm187, %v4180, %v4102
  %v4183 = vsel %vm188, %v4180, %v4103
  %v4184 = vsel %vm189, %v4180, %v4104
  %v4185 = vsel %vm190, %v4180, %v4105
  %v4186 = vsel %vm191, %v4180, %v4106
  %v4187 = vsel %vm192, %v4180, %v4107
  %v4188 = vsel %vm193, %v4180, %v4108
  %v4189 = vsel %vm194, %v4180, %v4109
  %v4190 = vsel %vm195, %v4180, %v4110
  %v4191 = vmul.f32 %v4140, %v196
  %v4192 = vmul.f32 %v4141, %v197
  %v4193 = vmul.f32 %v4142, %v198
  %v4194 = vmul.f32 %v4143, %v199
  %v4195 = vmul.f32 %v4144, %v200
  %v4196 = vmul.f32 %v4145, %v201
  %v4197 = vmul.f32 %v4146, %v202
  %v4198 = vmul.f32 %v4147, %v203
  %v4199 = vmul.f32 %v4148, %v204
  %v4200 = vmul.f32 %v4149, %v205
  %v4211 = vrot.slane %v2692, 6
  %v4212 = vrot.slane %v2694, 6
  %v4213 = vsel %vm710, %v4211, %v4212
  %v4214 = vrot.slane %v2696, 6
  %v4215 = vsel %vm710, %v4212, %v4214
  %v4216 = vrot.slane %v2698, 6
  %v4217 = vsel %vm710, %v4214, %v4216
  %v4218 = vrot.slane %v2700, 6
  %v4219 = vsel %vm710, %v4216, %v4218
  %v4220 = vrot.slane %v2702, 6
  %v4221 = vsel %vm710, %v4218, %v4220
  %v4222 = vrot.slane %v2704, 6
  %v4223 = vsel %vm710, %v4220, %v4222
  %v4224 = vrot.slane %v2706, 6
  %v4225 = vsel %vm710, %v4222, %v4224
  %v4226 = vrot.slane %v2708, 6
  %v4227 = vsel %vm710, %v4224, %v4226
  %v4228 = vrot.slane %v2710, 6
  %v4229 = vsel %vm710, %v4226, %v4228
  %v4230 = vrot.slane %v2712, 6
  %v4231 = vsel %vm710, %v4228, %v4230
  %4232 = vrot.lane.b32.xlu0 %v3134, 50
  %v4233 = vpop.permute.xlu0 %4232
  %4234 = vrot.lane.b32.xlu0 %v4213, 50
  %v4235 = vpop.permute.xlu0 %4234
  %4236 = vrot.lane.b32.xlu0 %v3136, 50
  %v4237 = vpop.permute.xlu0 %4236
  %4238 = vrot.lane.b32.xlu0 %v4215, 50
  %v4239 = vpop.permute.xlu0 %4238
  %4240 = vrot.lane.b32.xlu0 %v3138, 50
  %v4241 = vpop.permute.xlu0 %4240
  %4242 = vrot.lane.b32.xlu0 %v4217, 50
  %v4243 = vpop.permute.xlu0 %4242
  %4244 = vrot.lane.b32.xlu0 %v3140, 50
  %v4245 = vpop.permute.xlu0 %4244
  %4246 = vrot.lane.b32.xlu0 %v4219, 50
  %v4247 = vpop.permute.xlu0 %4246
  %4248 = vrot.lane.b32.xlu0 %v3142, 50
  %v4249 = vpop.permute.xlu0 %4248
  %4250 = vrot.lane.b32.xlu0 %v4221, 50
  %v4251 = vpop.permute.xlu0 %4250
  %4252 = vrot.lane.b32.xlu0 %v3144, 50
  %v4253 = vpop.permute.xlu0 %4252
  %4254 = vrot.lane.b32.xlu0 %v4223, 50
  %v4255 = vpop.permute.xlu0 %4254
  %4256 = vrot.lane.b32.xlu0 %v3146, 50
  %v4257 = vpop.permute.xlu0 %4256
  %4258 = vrot.lane.b32.xlu0 %v4225, 50
  %v4259 = vpop.permute.xlu0 %4258
  %4260 = vrot.lane.b32.xlu0 %v3148, 50
  %v4261 = vpop.permute.xlu0 %4260
  %4262 = vrot.lane.b32.xlu0 %v4227, 50
  %v4263 = vpop.permute.xlu0 %4262
  %4264 = vrot.lane.b32.xlu0 %v3150, 50
  %v4265 = vpop.permute.xlu0 %4264
  %4266 = vrot.lane.b32.xlu0 %v4229, 50
  %v4267 = vpop.permute.xlu0 %4266
  %4268 = vrot.lane.b32.xlu0 %v3152, 50
  %v4269 = vpop.permute.xlu0 %4268
  %4270 = vrot.lane.b32.xlu0 %v4231, 50
  %v4271 = vpop.permute.xlu0 %4270
  %v4272 = vsel %vm872, %v4233, %v4235
  %v4273 = vsel %vm872, %v4237, %v4239
  %v4274 = vsel %vm872, %v4241, %v4243
  %v4275 = vsel %vm872, %v4245, %v4247
  %v4276 = vsel %vm872, %v4249, %v4251
  %v4277 = vsel %vm872, %v4253, %v4255
  %v4278 = vsel %vm872, %v4257, %v4259
  %v4279 = vsel %vm872, %v4261, %v4263
  %v4280 = vsel %vm872, %v4265, %v4267
  %v4281 = vsel %vm872, %v4269, %v4271
  %v4292 = vsel %vm66, %v4272, 0.0
  %v4293 = vsel %vm67, %v4273, 0.0
  %v4294 = vsel %vm68, %v4274, 0.0
  %v4295 = vsel %vm69, %v4275, 0.0
  %v4296 = vsel %vm70, %v4276, 0.0
  %v4297 = vsel %vm71, %v4277, 0.0
  %v4298 = vsel %vm72, %v4278, 0.0
  %v4299 = vsel %vm73, %v4279, 0.0
  %v4300 = vsel %vm74, %v4280, 0.0
  %v4301 = vsel %vm75, %v4281, 0.0
  %v4302 = vsel %vm609, %v4292, 0.0
  %v4303 = vsel %vm609, %v4293, 0.0
  %v4304 = vadd.f32 %v4302, %v4303
  %v4305 = vsel %vm609, %v4294, 0.0
  %v4306 = vadd.f32 %v4304, %v4305
  %v4307 = vsel %vm609, %v4295, 0.0
  %v4308 = vadd.f32 %v4306, %v4307
  %v4309 = vsel %vm609, %v4296, 0.0
  %v4310 = vadd.f32 %v4308, %v4309
  %v4311 = vsel %vm609, %v4297, 0.0
  %v4312 = vadd.f32 %v4310, %v4311
  %v4313 = vsel %vm609, %v4298, 0.0
  %v4314 = vadd.f32 %v4312, %v4313
  %v4315 = vsel %vm609, %v4299, 0.0
  %v4316 = vadd.f32 %v4314, %v4315
  %v4317 = vsel %vm609, %v4300, 0.0
  %v4318 = vadd.f32 %v4316, %v4317
  %v4319 = vsel %vm627, %v4301, 0.0
  %v4320 = vadd.f32 %v4318, %v4319
  %v4321 = vrot.slane %v4320, 4
  %v4322 = vadd.f32 %v4320, %v4321
  %v4323 = vrot.slane %v4322, 2
  %v4324 = vadd.f32 %v4322, %v4323
  %v4325 = vrot.slane %v4324, 1
  %v4326 = vadd.f32 %v4324, %v4325
  %v4327 = vsel %vm66, %v4272, -3.4028235e+38
  %v4328 = vsel %vm67, %v4273, -3.4028235e+38
  %v4329 = vsel %vm68, %v4274, -3.4028235e+38
  %v4330 = vsel %vm69, %v4275, -3.4028235e+38
  %v4331 = vsel %vm70, %v4276, -3.4028235e+38
  %v4332 = vsel %vm71, %v4277, -3.4028235e+38
  %v4333 = vsel %vm72, %v4278, -3.4028235e+38
  %v4334 = vsel %vm73, %v4279, -3.4028235e+38
  %v4335 = vsel %vm74, %v4280, -3.4028235e+38
  %v4336 = vsel %vm75, %v4281, -3.4028235e+38
  %v4337 = vsel %vm609, %v4327, -inf
  %v4338 = vsel %vm609, %v4328, -inf
  %v4339 = vsel %vm609, %v4329, -inf
  %v4340 = vsel %vm609, %v4330, -inf
  %v4341 = vsel %vm609, %v4331, -inf
  %v4342 = vmax.f32 %v4337, %v4341
  %v4343 = vsel %vm609, %v4332, -inf
  %v4344 = vmax.f32 %v4338, %v4343
  %v4345 = vsel %vm609, %v4333, -inf
  %v4346 = vmax.f32 %v4339, %v4345
  %v4347 = vsel %vm609, %v4334, -inf
  %v4348 = vmax.f32 %v4340, %v4347
  %v4349 = vsel %vm609, %v4335, -inf
  %v4350 = vmax.f32 %v4342, %v4349
  %v4351 = vsel %vm627, %v4336, -inf
  %v4352 = vmax.f32 %v4344, %v4351
  %v4353 = vmax.f32 %v4350, %v4352
  %v4354 = vmax.f32 %v4346, %v4348
  %v4355 = vmax.f32 %v4353, %v4354
  %v4356 = vrot.slane %v4355, 4
  %v4357 = vmax.f32 %v4355, %v4356
  %v4358 = vrot.slane %v4357, 2
  %v4359 = vmax.f32 %v4357, %v4358
  %v4360 = vrot.slane %v4359, 1
  %v4361 = vmax.f32 %v4359, %v4360
  %v4372 = vrot.slane %v2651, 6
  %v4373 = vrot.slane %v2653, 6
  %v4374 = vsel %vm710, %v4372, %v4373
  %v4375 = vrot.slane %v2655, 6
  %v4376 = vsel %vm710, %v4373, %v4375
  %v4377 = vrot.slane %v2657, 6
  %v4378 = vsel %vm710, %v4375, %v4377
  %v4379 = vrot.slane %v2659, 6
  %v4380 = vsel %vm710, %v4377, %v4379
  %v4381 = vrot.slane %v2661, 6
  %v4382 = vsel %vm710, %v4379, %v4381
  %v4383 = vrot.slane %v2663, 6
  %v4384 = vsel %vm710, %v4381, %v4383
  %v4385 = vrot.slane %v2665, 6
  %v4386 = vsel %vm710, %v4383, %v4385
  %v4387 = vrot.slane %v2667, 6
  %v4388 = vsel %vm710, %v4385, %v4387
  %v4389 = vrot.slane %v2669, 6
  %v4390 = vsel %vm710, %v4387, %v4389
  %v4391 = vrot.slane %v2671, 6
  %v4392 = vsel %vm710, %v4389, %v4391
  %4393 = vrot.lane.b32.xlu0 %v3832, 50
  %v4394 = vpop.permute.xlu0 %4393
  %4395 = vrot.lane.b32.xlu0 %v4374, 50
  %v4396 = vpop.permute.xlu0 %4395
  %4397 = vrot.lane.b32.xlu0 %v3834, 50
  %v4398 = vpop.permute.xlu0 %4397
  %4399 = vrot.lane.b32.xlu0 %v4376, 50
  %v4400 = vpop.permute.xlu0 %4399
  %4401 = vrot.lane.b32.xlu0 %v3836, 50
  %v4402 = vpop.permute.xlu0 %4401
  %4403 = vrot.lane.b32.xlu0 %v4378, 50
  %v4404 = vpop.permute.xlu0 %4403
  %4405 = vrot.lane.b32.xlu0 %v3838, 50
  %v4406 = vpop.permute.xlu0 %4405
  %4407 = vrot.lane.b32.xlu0 %v4380, 50
  %v4408 = vpop.permute.xlu0 %4407
  %4409 = vrot.lane.b32.xlu0 %v3840, 50
  %v4410 = vpop.permute.xlu0 %4409
  %4411 = vrot.lane.b32.xlu0 %v4382, 50
  %v4412 = vpop.permute.xlu0 %4411
  %4413 = vrot.lane.b32.xlu0 %v3842, 50
  %v4414 = vpop.permute.xlu0 %4413
  %4415 = vrot.lane.b32.xlu0 %v4384, 50
  %v4416 = vpop.permute.xlu0 %4415
  %4417 = vrot.lane.b32.xlu0 %v3844, 50
  %v4418 = vpop.permute.xlu0 %4417
  %4419 = vrot.lane.b32.xlu0 %v4386, 50
  %v4420 = vpop.permute.xlu0 %4419
  %4421 = vrot.lane.b32.xlu0 %v3846, 50
  %v4422 = vpop.permute.xlu0 %4421
  %4423 = vrot.lane.b32.xlu0 %v4388, 50
  %v4424 = vpop.permute.xlu0 %4423
  %4425 = vrot.lane.b32.xlu0 %v3848, 50
  %v4426 = vpop.permute.xlu0 %4425
  %4427 = vrot.lane.b32.xlu0 %v4390, 50
  %v4428 = vpop.permute.xlu0 %4427
  %4429 = vrot.lane.b32.xlu0 %v3850, 50
  %v4430 = vpop.permute.xlu0 %4429
  %4431 = vrot.lane.b32.xlu0 %v4392, 50
  %v4432 = vpop.permute.xlu0 %4431
  %v4433 = vsel %vm872, %v4394, %v4396
  %v4434 = vsel %vm872, %v4398, %v4400
  %v4435 = vsel %vm872, %v4402, %v4404
  %v4436 = vsel %vm872, %v4406, %v4408
  %v4437 = vsel %vm872, %v4410, %v4412
  %v4438 = vsel %vm872, %v4414, %v4416
  %v4439 = vsel %vm872, %v4418, %v4420
  %v4440 = vsel %vm872, %v4422, %v4424
  %v4441 = vsel %vm872, %v4426, %v4428
  %v4442 = vsel %vm872, %v4430, %v4432
  %v4453 = vsel %vm76, %v4433, 0.0
  %v4454 = vsel %vm77, %v4434, 0.0
  %v4455 = vsel %vm78, %v4435, 0.0
  %v4456 = vsel %vm79, %v4436, 0.0
  %v4457 = vsel %vm80, %v4437, 0.0
  %v4458 = vsel %vm81, %v4438, 0.0
  %v4459 = vsel %vm82, %v4439, 0.0
  %v4460 = vsel %vm83, %v4440, 0.0
  %v4461 = vsel %vm84, %v4441, 0.0
  %v4462 = vsel %vm85, %v4442, 0.0
  %v4463 = vsel %vm609, %v4453, 0.0
  %v4464 = vsel %vm609, %v4454, 0.0
  %v4465 = vadd.f32 %v4463, %v4464
  %v4466 = vsel %vm609, %v4455, 0.0
  %v4467 = vadd.f32 %v4465, %v4466
  %v4468 = vsel %vm609, %v4456, 0.0
  %v4469 = vadd.f32 %v4467, %v4468
  %v4470 = vsel %vm609, %v4457, 0.0
  %v4471 = vadd.f32 %v4469, %v4470
  %v4472 = vsel %vm609, %v4458, 0.0
  %v4473 = vadd.f32 %v4471, %v4472
  %v4474 = vsel %vm609, %v4459, 0.0
  %v4475 = vadd.f32 %v4473, %v4474
  %v4476 = vsel %vm609, %v4460, 0.0
  %v4477 = vadd.f32 %v4475, %v4476
  %v4478 = vsel %vm609, %v4461, 0.0
  %v4479 = vadd.f32 %v4477, %v4478
  %v4480 = vsel %vm627, %v4462, 0.0
  %v4481 = vadd.f32 %v4479, %v4480
  %v4482 = vrot.slane %v4481, 4
  %v4483 = vadd.f32 %v4481, %v4482
  %v4484 = vrot.slane %v4483, 2
  %v4485 = vadd.f32 %v4483, %v4484
  %v4486 = vrot.slane %v4485, 1
  %v4487 = vadd.f32 %v4485, %v4486
  %v4488 = vsel %vm66, %v4433, -3.4028235e+38
  %v4489 = vsel %vm67, %v4434, -3.4028235e+38
  %v4490 = vsel %vm68, %v4435, -3.4028235e+38
  %v4491 = vsel %vm69, %v4436, -3.4028235e+38
  %v4492 = vsel %vm70, %v4437, -3.4028235e+38
  %v4493 = vsel %vm71, %v4438, -3.4028235e+38
  %v4494 = vsel %vm72, %v4439, -3.4028235e+38
  %v4495 = vsel %vm73, %v4440, -3.4028235e+38
  %v4496 = vsel %vm74, %v4441, -3.4028235e+38
  %v4497 = vsel %vm75, %v4442, -3.4028235e+38
  %v4498 = vsel %vm609, %v4488, -inf
  %v4499 = vsel %vm609, %v4489, -inf
  %v4500 = vsel %vm609, %v4490, -inf
  %v4501 = vsel %vm609, %v4491, -inf
  %v4502 = vsel %vm609, %v4492, -inf
  %v4503 = vmax.f32 %v4498, %v4502
  %v4504 = vsel %vm609, %v4493, -inf
  %v4505 = vmax.f32 %v4499, %v4504
  %v4506 = vsel %vm609, %v4494, -inf
  %v4507 = vmax.f32 %v4500, %v4506
  %v4508 = vsel %vm609, %v4495, -inf
  %v4509 = vmax.f32 %v4501, %v4508
  %v4510 = vsel %vm609, %v4496, -inf
  %v4511 = vmax.f32 %v4503, %v4510
  %v4512 = vsel %vm627, %v4497, -inf
  %v4513 = vmax.f32 %v4505, %v4512
  %v4514 = vmax.f32 %v4511, %v4513
  %v4515 = vmax.f32 %v4507, %v4509
  %v4516 = vmax.f32 %v4514, %v4515
  %v4517 = vrot.slane %v4516, 4
  %v4518 = vmax.f32 %v4516, %v4517
  %v4519 = vrot.slane %v4518, 2
  %v4520 = vmax.f32 %v4518, %v4519
  %v4521 = vrot.slane %v4520, 1
  %v4522 = vmax.f32 %v4520, %v4521
  %v4523 = vsel %vm166, %v4326, 0.0
  %v4524 = vsel %vm167, %v4326, 0.0
  %v4525 = vsel %vm168, %v4326, 0.0
  %v4526 = vsel %vm169, %v4326, 0.0
  %v4527 = vsel %vm170, %v4326, 0.0
  %v4528 = vsel %vm171, %v4326, 0.0
  %v4529 = vsel %vm172, %v4326, 0.0
  %v4530 = vsel %vm173, %v4326, 0.0
  %v4531 = vsel %vm174, %v4326, 0.0
  %v4532 = vsel %vm175, %v4326, 0.0
  %v4533 = vsel %vm609, %v4523, 0.0
  %4534 = vadd.xlane.f32.xlu0 %v4533
  %v4535 = vpop.xlane.xlu0 %4534
  %v4536 = vsel %vm609, %v4524, 0.0
  %4537 = vadd.xlane.f32.xlu0 %v4536
  %v4538 = vpop.xlane.xlu0 %4537
  %v4539 = vsel %vm609, %v4525, 0.0
  %4540 = vadd.xlane.f32.xlu0 %v4539
  %v4541 = vpop.xlane.xlu0 %4540
  %v4542 = vsel %vm609, %v4526, 0.0
  %4543 = vadd.xlane.f32.xlu0 %v4542
  %v4544 = vpop.xlane.xlu0 %4543
  %v4545 = vsel %vm609, %v4527, 0.0
  %4546 = vadd.xlane.f32.xlu0 %v4545
  %v4547 = vpop.xlane.xlu0 %4546
  %v4548 = vsel %vm609, %v4528, 0.0
  %4549 = vadd.xlane.f32.xlu0 %v4548
  %v4550 = vpop.xlane.xlu0 %4549
  %v4551 = vsel %vm609, %v4529, 0.0
  %4552 = vadd.xlane.f32.xlu0 %v4551
  %v4553 = vpop.xlane.xlu0 %4552
  %v4554 = vsel %vm609, %v4530, 0.0
  %4555 = vadd.xlane.f32.xlu0 %v4554
  %v4556 = vpop.xlane.xlu0 %4555
  %v4557 = vsel %vm609, %v4531, 0.0
  %4558 = vadd.xlane.f32.xlu0 %v4557
  %v4559 = vpop.xlane.xlu0 %4558
  %v4560 = vsel %vm627, %v4532, 0.0
  %4561 = vadd.xlane.f32.xlu0 %v4560
  %v4562 = vpop.xlane.xlu0 %4561
  %v4563 = vsel %vm166, %v4487, 0.0
  %v4564 = vsel %vm167, %v4487, 0.0
  %v4565 = vsel %vm168, %v4487, 0.0
  %v4566 = vsel %vm169, %v4487, 0.0
  %v4567 = vsel %vm170, %v4487, 0.0
  %v4568 = vsel %vm171, %v4487, 0.0
  %v4569 = vsel %vm172, %v4487, 0.0
  %v4570 = vsel %vm173, %v4487, 0.0
  %v4571 = vsel %vm174, %v4487, 0.0
  %v4572 = vsel %vm175, %v4487, 0.0
  %v4573 = vsel %vm609, %v4563, 0.0
  %4574 = vadd.xlane.f32.xlu0 %v4573
  %v4575 = vpop.xlane.xlu0 %4574
  %v4576 = vsel %vm609, %v4564, 0.0
  %4577 = vadd.xlane.f32.xlu0 %v4576
  %v4578 = vpop.xlane.xlu0 %4577
  %v4579 = vsel %vm609, %v4565, 0.0
  %4580 = vadd.xlane.f32.xlu0 %v4579
  %v4581 = vpop.xlane.xlu0 %4580
  %v4582 = vsel %vm609, %v4566, 0.0
  %4583 = vadd.xlane.f32.xlu0 %v4582
  %v4584 = vpop.xlane.xlu0 %4583
  %v4585 = vsel %vm609, %v4567, 0.0
  %4586 = vadd.xlane.f32.xlu0 %v4585
  %v4587 = vpop.xlane.xlu0 %4586
  %v4588 = vsel %vm609, %v4568, 0.0
  %4589 = vadd.xlane.f32.xlu0 %v4588
  %v4590 = vpop.xlane.xlu0 %4589
  %v4591 = vsel %vm609, %v4569, 0.0
  %4592 = vadd.xlane.f32.xlu0 %v4591
  %v4593 = vpop.xlane.xlu0 %4592
  %v4594 = vsel %vm609, %v4570, 0.0
  %4595 = vadd.xlane.f32.xlu0 %v4594
  %v4596 = vpop.xlane.xlu0 %4595
  %v4597 = vsel %vm609, %v4571, 0.0
  %4598 = vadd.xlane.f32.xlu0 %v4597
  %v4599 = vpop.xlane.xlu0 %4598
  %v4600 = vsel %vm627, %v4572, 0.0
  %4601 = vadd.xlane.f32.xlu0 %v4600
  %v4602 = vpop.xlane.xlu0 %4601
  %v4603 = vadd.f32 %v4535, %v4575
  %v4604 = vadd.f32 %v4538, %v4578
  %v4605 = vadd.f32 %v4541, %v4581
  %v4606 = vadd.f32 %v4544, %v4584
  %v4607 = vadd.f32 %v4547, %v4587
  %v4608 = vadd.f32 %v4550, %v4590
  %v4609 = vadd.f32 %v4553, %v4593
  %v4610 = vadd.f32 %v4556, %v4596
  %v4611 = vadd.f32 %v4559, %v4599
  %v4612 = vadd.f32 %v4562, %v4602
  %v4613 = vsel %vm166, %v4361, -3.4028235e+38
  %v4614 = vsel %vm167, %v4361, -3.4028235e+38
  %v4615 = vsel %vm168, %v4361, -3.4028235e+38
  %v4616 = vsel %vm169, %v4361, -3.4028235e+38
  %v4617 = vsel %vm170, %v4361, -3.4028235e+38
  %v4618 = vsel %vm171, %v4361, -3.4028235e+38
  %v4619 = vsel %vm172, %v4361, -3.4028235e+38
  %v4620 = vsel %vm173, %v4361, -3.4028235e+38
  %v4621 = vsel %vm174, %v4361, -3.4028235e+38
  %v4622 = vsel %vm175, %v4361, -3.4028235e+38
  %v4623 = vsel %vm609, %v4613, -inf
  %4624 = vmax.xlane.f32.xlu0 %v4623
  %v4625 = vpop.xlane.xlu0 %4624
  %v4626 = vsel %vm609, %v4614, -inf
  %4627 = vmax.xlane.f32.xlu0 %v4626
  %v4628 = vpop.xlane.xlu0 %4627
  %v4629 = vsel %vm609, %v4615, -inf
  %4630 = vmax.xlane.f32.xlu0 %v4629
  %v4631 = vpop.xlane.xlu0 %4630
  %v4632 = vsel %vm609, %v4616, -inf
  %4633 = vmax.xlane.f32.xlu0 %v4632
  %v4634 = vpop.xlane.xlu0 %4633
  %v4635 = vsel %vm609, %v4617, -inf
  %4636 = vmax.xlane.f32.xlu0 %v4635
  %v4637 = vpop.xlane.xlu0 %4636
  %v4638 = vsel %vm609, %v4618, -inf
  %4639 = vmax.xlane.f32.xlu0 %v4638
  %v4640 = vpop.xlane.xlu0 %4639
  %v4641 = vsel %vm609, %v4619, -inf
  %4642 = vmax.xlane.f32.xlu0 %v4641
  %v4643 = vpop.xlane.xlu0 %4642
  %v4644 = vsel %vm609, %v4620, -inf
  %4645 = vmax.xlane.f32.xlu0 %v4644
  %v4646 = vpop.xlane.xlu0 %4645
  %v4647 = vsel %vm609, %v4621, -inf
  %4648 = vmax.xlane.f32.xlu0 %v4647
  %v4649 = vpop.xlane.xlu0 %4648
  %v4650 = vsel %vm627, %v4622, -inf
  %4651 = vmax.xlane.f32.xlu0 %v4650
  %v4652 = vpop.xlane.xlu0 %4651
  %v4653 = vsel %vm166, %v4522, -3.4028235e+38
  %v4654 = vsel %vm167, %v4522, -3.4028235e+38
  %v4655 = vsel %vm168, %v4522, -3.4028235e+38
  %v4656 = vsel %vm169, %v4522, -3.4028235e+38
  %v4657 = vsel %vm170, %v4522, -3.4028235e+38
  %v4658 = vsel %vm171, %v4522, -3.4028235e+38
  %v4659 = vsel %vm172, %v4522, -3.4028235e+38
  %v4660 = vsel %vm173, %v4522, -3.4028235e+38
  %v4661 = vsel %vm174, %v4522, -3.4028235e+38
  %v4662 = vsel %vm175, %v4522, -3.4028235e+38
  %v4663 = vsel %vm609, %v4653, -inf
  %4664 = vmax.xlane.f32.xlu0 %v4663
  %v4665 = vpop.xlane.xlu0 %4664
  %v4666 = vsel %vm609, %v4654, -inf
  %4667 = vmax.xlane.f32.xlu0 %v4666
  %v4668 = vpop.xlane.xlu0 %4667
  %v4669 = vsel %vm609, %v4655, -inf
  %4670 = vmax.xlane.f32.xlu0 %v4669
  %v4671 = vpop.xlane.xlu0 %4670
  %v4672 = vsel %vm609, %v4656, -inf
  %4673 = vmax.xlane.f32.xlu0 %v4672
  %v4674 = vpop.xlane.xlu0 %4673
  %v4675 = vsel %vm609, %v4657, -inf
  %4676 = vmax.xlane.f32.xlu0 %v4675
  %v4677 = vpop.xlane.xlu0 %4676
  %v4678 = vsel %vm609, %v4658, -inf
  %4679 = vmax.xlane.f32.xlu0 %v4678
  %v4680 = vpop.xlane.xlu0 %4679
  %v4681 = vsel %vm609, %v4659, -inf
  %4682 = vmax.xlane.f32.xlu0 %v4681
  %v4683 = vpop.xlane.xlu0 %4682
  %v4684 = vsel %vm609, %v4660, -inf
  %4685 = vmax.xlane.f32.xlu0 %v4684
  %v4686 = vpop.xlane.xlu0 %4685
  %v4687 = vsel %vm609, %v4661, -inf
  %4688 = vmax.xlane.f32.xlu0 %v4687
  %v4689 = vpop.xlane.xlu0 %4688
  %v4690 = vsel %vm627, %v4662, -inf
  %4691 = vmax.xlane.f32.xlu0 %v4690
  %v4692 = vpop.xlane.xlu0 %4691
  %v4693 = vmax.f32 %v4625, %v4665
  %v4694 = vmax.f32 %v4628, %v4668
  %v4695 = vmax.f32 %v4631, %v4671
  %v4696 = vmax.f32 %v4634, %v4674
  %v4697 = vmax.f32 %v4637, %v4677
  %v4698 = vmax.f32 %v4640, %v4680
  %v4699 = vmax.f32 %v4643, %v4683
  %v4700 = vmax.f32 %v4646, %v4686
  %v4701 = vmax.f32 %v4649, %v4689
  %v4702 = vmax.f32 %v4652, %v4692
  %v4703 = vsel %vm609, %v4433, 0.0
  %v4704 = vsel %vm609, %v4434, 0.0
  %v4705 = vadd.f32 %v4703, %v4704
  %v4706 = vsel %vm609, %v4435, 0.0
  %v4707 = vadd.f32 %v4705, %v4706
  %v4708 = vsel %vm609, %v4436, 0.0
  %v4709 = vadd.f32 %v4707, %v4708
  %v4710 = vsel %vm609, %v4437, 0.0
  %v4711 = vadd.f32 %v4709, %v4710
  %v4712 = vsel %vm609, %v4438, 0.0
  %v4713 = vadd.f32 %v4711, %v4712
  %v4714 = vsel %vm609, %v4439, 0.0
  %v4715 = vadd.f32 %v4713, %v4714
  %v4716 = vsel %vm609, %v4440, 0.0
  %v4717 = vadd.f32 %v4715, %v4716
  %v4718 = vsel %vm609, %v4441, 0.0
  %v4719 = vadd.f32 %v4717, %v4718
  %v4720 = vsel %vm627, %v4442, 0.0
  %v4721 = vadd.f32 %v4719, %v4720
  %4722 = vadd.xlane.f32.xlu0 %v4721
  %v4723 = vpop.xlane.xlu0 %4722
  %v4724 = vrot.slane %v4723, 4
  %v4725 = vadd.f32 %v4723, %v4724
  %v4726 = vrot.slane %v4725, 2
  %v4727 = vadd.f32 %v4725, %v4726
  %v4728 = vrot.slane %v4727, 1
  %v4729 = vadd.f32 %v4727, %v4728
  %s4730 = vtos %v4729
  %v4731 = vstv %s4730
  %v4732 = vsel %vm186, %v4731, %v4603
  %v4733 = vsel %vm187, %v4731, %v4604
  %v4734 = vsel %vm188, %v4731, %v4605
  %v4735 = vsel %vm189, %v4731, %v4606
  %v4736 = vsel %vm190, %v4731, %v4607
  %v4737 = vsel %vm191, %v4731, %v4608
  %v4738 = vsel %vm192, %v4731, %v4609
  %v4739 = vsel %vm193, %v4731, %v4610
  %v4740 = vsel %vm194, %v4731, %v4611
  %v4741 = vsel %vm195, %v4731, %v4612
  %v4742 = vsel %vm2329, %v2650, -inf
  %v4743 = vsel %vm2331, %v2651, -inf
  %v4744 = vsel %vm1183, %v2652, -inf
  %v4745 = vsel %vm1185, %v2653, -inf
  %v4746 = vsel %vm1183, %v2654, -inf
  %v4747 = vmax.f32 %v4742, %v4746
  %v4748 = vsel %vm1185, %v2655, -inf
  %v4749 = vmax.f32 %v4743, %v4748
  %v4750 = vsel %vm1183, %v2656, -inf
  %v4751 = vmax.f32 %v4744, %v4750
  %v4752 = vsel %vm1185, %v2657, -inf
  %v4753 = vmax.f32 %v4745, %v4752
  %v4754 = vsel %vm1183, %v2658, -inf
  %v4755 = vmax.f32 %v4747, %v4754
  %v4756 = vsel %vm1185, %v2659, -inf
  %v4757 = vmax.f32 %v4749, %v4756
  %v4758 = vsel %vm1183, %v2660, -inf
  %v4759 = vmax.f32 %v4751, %v4758
  %v4760 = vsel %vm1185, %v2661, -inf
  %v4761 = vmax.f32 %v4753, %v4760
  %v4762 = vsel %vm1183, %v2662, -inf
  %v4763 = vmax.f32 %v4755, %v4762
  %v4764 = vsel %vm1185, %v2663, -inf
  %v4765 = vmax.f32 %v4757, %v4764
  %v4766 = vsel %vm1183, %v2664, -inf
  %v4767 = vmax.f32 %v4759, %v4766
  %v4768 = vsel %vm1185, %v2665, -inf
  %v4769 = vmax.f32 %v4761, %v4768
  %v4770 = vsel %vm1183, %v2666, -inf
  %v4771 = vmax.f32 %v4763, %v4770
  %v4772 = vsel %vm1185, %v2667, -inf
  %v4773 = vmax.f32 %v4765, %v4772
  %v4774 = vsel %vm1183, %v2668, -inf
  %v4775 = vmax.f32 %v4767, %v4774
  %v4776 = vsel %vm1185, %v2669, -inf
  %v4777 = vmax.f32 %v4769, %v4776
  %v4778 = vsel %vm2367, %v2670, -inf
  %v4779 = vmax.f32 %v4771, %v4778
  %v4780 = vsel %vm2370, %v2671, -inf
  %v4781 = vmax.f32 %v4773, %v4780
  %v4782 = vmax.f32 %v4779, %v4781
  %v4783 = vmax.f32 %v4775, %v4777
  %v4784 = vmax.f32 %v4782, %v4783
  %4785 = vmax.xlane.f32.xlu0 %v4784
  %v4786 = vpop.xlane.xlu0 %4785
  %v4787 = vrot.slane %v4786, 4
  %v4788 = vmax.f32 %v4786, %v4787
  %v4789 = vrot.slane %v4788, 2
  %v4790 = vmax.f32 %v4788, %v4789
  %v4791 = vrot.slane %v4790, 1
  %v4792 = vmax.f32 %v4790, %v4791
  %s4793 = vtos %v4792
  %v4794 = vstv %s4793
  %v4795 = vsel %vm186, %v4794, %v4693
  %v4796 = vsel %vm187, %v4794, %v4694
  %v4797 = vsel %vm188, %v4794, %v4695
  %v4798 = vsel %vm189, %v4794, %v4696
  %v4799 = vsel %vm190, %v4794, %v4697
  %v4800 = vsel %vm191, %v4794, %v4698
  %v4801 = vsel %vm192, %v4794, %v4699
  %v4802 = vsel %vm193, %v4794, %v4700
  %v4803 = vsel %vm194, %v4794, %v4701
  %v4804 = vsel %vm195, %v4794, %v4702
  %v4805 = vmul.f32 %v4732, %v196
  %v4806 = vmul.f32 %v4733, %v197
  %v4807 = vmul.f32 %v4734, %v198
  %v4808 = vmul.f32 %v4735, %v199
  %v4809 = vmul.f32 %v4736, %v200
  %v4810 = vmul.f32 %v4737, %v201
  %v4811 = vmul.f32 %v4738, %v202
  %v4812 = vmul.f32 %v4739, %v203
  %v4813 = vmul.f32 %v4740, %v204
  %v4814 = vmul.f32 %v4741, %v205
  %4825 = vrot.lane.b32.xlu0 %v3661, 1
  %v4826 = vpop.permute.xlu0 %4825
  %4827 = vrot.lane.b32.xlu0 %v3662, 1
  %v4828 = vpop.permute.xlu0 %4827
  %4829 = vrot.lane.b32.xlu0 %v3663, 1
  %v4830 = vpop.permute.xlu0 %4829
  %4831 = vrot.lane.b32.xlu0 %v3664, 1
  %v4832 = vpop.permute.xlu0 %4831
  %4833 = vrot.lane.b32.xlu0 %v3665, 1
  %v4834 = vpop.permute.xlu0 %4833
  %4835 = vrot.lane.b32.xlu0 %v3666, 1
  %v4836 = vpop.permute.xlu0 %4835
  %4837 = vrot.lane.b32.xlu0 %v3667, 1
  %v4838 = vpop.permute.xlu0 %4837
  %4839 = vrot.lane.b32.xlu0 %v3668, 1
  %v4840 = vpop.permute.xlu0 %4839
  %4841 = vrot.lane.b32.xlu0 %v3669, 1
  %v4842 = vpop.permute.xlu0 %4841
  %4843 = vrot.lane.b32.xlu0 %v3670, 1
  %v4844 = vpop.permute.xlu0 %4843
  %4865 = vrot.lane.b32.xlu0 %v4191, 2
  %v4866 = vpop.permute.xlu0 %4865
  %4867 = vrot.lane.b32.xlu0 %v4192, 2
  %v4868 = vpop.permute.xlu0 %4867
  %4869 = vrot.lane.b32.xlu0 %v4193, 2
  %v4870 = vpop.permute.xlu0 %4869
  %4871 = vrot.lane.b32.xlu0 %v4194, 2
  %v4872 = vpop.permute.xlu0 %4871
  %4873 = vrot.lane.b32.xlu0 %v4195, 2
  %v4874 = vpop.permute.xlu0 %4873
  %4875 = vrot.lane.b32.xlu0 %v4196, 2
  %v4876 = vpop.permute.xlu0 %4875
  %4877 = vrot.lane.b32.xlu0 %v4197, 2
  %v4878 = vpop.permute.xlu0 %4877
  %4879 = vrot.lane.b32.xlu0 %v4198, 2
  %v4880 = vpop.permute.xlu0 %4879
  %4881 = vrot.lane.b32.xlu0 %v4199, 2
  %v4882 = vpop.permute.xlu0 %4881
  %4883 = vrot.lane.b32.xlu0 %v4200, 2
  %v4884 = vpop.permute.xlu0 %4883
  %4905 = vrot.lane.b32.xlu0 %v4805, 3
  %v4906 = vpop.permute.xlu0 %4905
  %4907 = vrot.lane.b32.xlu0 %v4806, 3
  %v4908 = vpop.permute.xlu0 %4907
  %4909 = vrot.lane.b32.xlu0 %v4807, 3
  %v4910 = vpop.permute.xlu0 %4909
  %4911 = vrot.lane.b32.xlu0 %v4808, 3
  %v4912 = vpop.permute.xlu0 %4911
  %4913 = vrot.lane.b32.xlu0 %v4809, 3
  %v4914 = vpop.permute.xlu0 %4913
  %4915 = vrot.lane.b32.xlu0 %v4810, 3
  %v4916 = vpop.permute.xlu0 %4915
  %4917 = vrot.lane.b32.xlu0 %v4811, 3
  %v4918 = vpop.permute.xlu0 %4917
  %4919 = vrot.lane.b32.xlu0 %v4812, 3
  %v4920 = vpop.permute.xlu0 %4919
  %4921 = vrot.lane.b32.xlu0 %v4813, 3
  %v4922 = vpop.permute.xlu0 %4921
  %4923 = vrot.lane.b32.xlu0 %v4814, 3
  %v4924 = vpop.permute.xlu0 %4923
  %v4935 = vsel %vm2526, %v3111, %v4826
  %v4936 = vsel %vm2526, %v3112, %v4828
  %v4937 = vsel %vm2526, %v3113, %v4830
  %v4938 = vsel %vm2526, %v3114, %v4832
  %v4939 = vsel %vm2526, %v3115, %v4834
  %v4940 = vsel %vm2526, %v3116, %v4836
  %v4941 = vsel %vm2526, %v3117, %v4838
  %v4942 = vsel %vm2526, %v3118, %v4840
  %v4943 = vsel %vm2526, %v3119, %v4842
  %v4944 = vsel %vm2526, %v3120, %v4844
  %v4945 = vsel %vm2537, %v4935, %v4866
  %v4946 = vsel %vm2537, %v4936, %v4868
  %v4947 = vsel %vm2537, %v4937, %v4870
  %v4948 = vsel %vm2537, %v4938, %v4872
  %v4949 = vsel %vm2537, %v4939, %v4874
  %v4950 = vsel %vm2537, %v4940, %v4876
  %v4951 = vsel %vm2537, %v4941, %v4878
  %v4952 = vsel %vm2537, %v4942, %v4880
  %v4953 = vsel %vm2537, %v4943, %v4882
  %v4954 = vsel %vm2537, %v4944, %v4884
  %v4955 = vsel %vm2548, %v4945, %v4906
  %v4956 = vsel %vm2548, %v4946, %v4908
  %v4957 = vsel %vm2548, %v4947, %v4910
  %v4958 = vsel %vm2548, %v4948, %v4912
  %v4959 = vsel %vm2548, %v4949, %v4914
  %v4960 = vsel %vm2548, %v4950, %v4916
  %v4961 = vsel %vm2548, %v4951, %v4918
  %v4962 = vsel %vm2548, %v4952, %v4920
  %v4963 = vsel %vm2548, %v4953, %v4922
  %v4964 = vsel %vm2548, %v4954, %v4924
  %v4965 = vsel %vm2526, %v3101, %v3651
  %v4966 = vsel %vm2526, %v3102, %v3652
  %v4967 = vsel %vm2526, %v3103, %v3653
  %v4968 = vsel %vm2526, %v3104, %v3654
  %v4969 = vsel %vm2526, %v3105, %v3655
  %v4970 = vsel %vm2526, %v3106, %v3656
  %v4971 = vsel %vm2526, %v3107, %v3657
  %v4972 = vsel %vm2526, %v3108, %v3658
  %v4973 = vsel %vm2526, %v3109, %v3659
  %v4974 = vsel %vm2526, %v3110, %v3660
  %v4975 = vsel %vm2537, %v4965, %v4181
  %v4976 = vsel %vm2537, %v4966, %v4182
  %v4977 = vsel %vm2537, %v4967, %v4183
  %v4978 = vsel %vm2537, %v4968, %v4184
  %v4979 = vsel %vm2537, %v4969, %v4185
  %v4980 = vsel %vm2537, %v4970, %v4186
  %v4981 = vsel %vm2537, %v4971, %v4187
  %v4982 = vsel %vm2537, %v4972, %v4188
  %v4983 = vsel %vm2537, %v4973, %v4189
  %v4984 = vsel %vm2537, %v4974, %v4190
  %v4985 = vsel %vm2548, %v4975, %v4795
  %v4986 = vsel %vm2548, %v4976, %v4796
  %v4987 = vsel %vm2548, %v4977, %v4797
  %v4988 = vsel %vm2548, %v4978, %v4798
  %v4989 = vsel %vm2548, %v4979, %v4799
  %v4990 = vsel %vm2548, %v4980, %v4800
  %v4991 = vsel %vm2548, %v4981, %v4801
  %v4992 = vsel %vm2548, %v4982, %v4802
  %v4993 = vsel %vm2548, %v4983, %v4803
  %v4994 = vsel %vm2548, %v4984, %v4804
  %v5005 = vrot.slane %v4985, 2
  %v5006 = vrot.slane %v4986, 2
  %v5007 = vsel %vm2599, %v5005, %v5006
  %v5008 = vrot.slane %v4987, 2
  %v5009 = vsel %vm2599, %v5006, %v5008
  %v5010 = vrot.slane %v4988, 2
  %v5011 = vsel %vm2599, %v5008, %v5010
  %v5012 = vrot.slane %v4989, 2
  %v5013 = vsel %vm2599, %v5010, %v5012
  %v5014 = vrot.slane %v4990, 2
  %v5015 = vsel %vm2599, %v5012, %v5014
  %v5016 = vrot.slane %v4991, 2
  %v5017 = vsel %vm2599, %v5014, %v5016
  %v5018 = vrot.slane %v4992, 2
  %v5019 = vsel %vm2599, %v5016, %v5018
  %v5020 = vrot.slane %v4993, 2
  %v5021 = vsel %vm2599, %v5018, %v5020
  %v5022 = vrot.slane %v4994, 2
  %v5023 = vsel %vm2599, %v5020, %v5022
  %v5025 = vsel %vm2599, %v4964, %v5005
  %5036 = vrot.lane.b32.xlu0 %v4955, 4
  %v5037 = vpop.permute.xlu0 %5036
  %5038 = vrot.lane.b32.xlu0 %v4956, 4
  %v5039 = vpop.permute.xlu0 %5038
  %5040 = vrot.lane.b32.xlu0 %v4957, 4
  %v5041 = vpop.permute.xlu0 %5040
  %5042 = vrot.lane.b32.xlu0 %v4958, 4
  %v5043 = vpop.permute.xlu0 %5042
  %5044 = vrot.lane.b32.xlu0 %v4959, 4
  %v5045 = vpop.permute.xlu0 %5044
  %5046 = vrot.lane.b32.xlu0 %v4960, 4
  %v5047 = vpop.permute.xlu0 %5046
  %5048 = vrot.lane.b32.xlu0 %v4961, 4
  %v5049 = vpop.permute.xlu0 %5048
  %5050 = vrot.lane.b32.xlu0 %v4962, 4
  %v5051 = vpop.permute.xlu0 %5050
  %5052 = vrot.lane.b32.xlu0 %v4963, 4
  %v5053 = vpop.permute.xlu0 %5052
  %5054 = vrot.lane.b32.xlu0 %v5025, 4
  %v5055 = vpop.permute.xlu0 %5054
  %5056 = vrot.lane.b32.xlu0 %v5007, 4
  %v5057 = vpop.permute.xlu0 %5056
  %5058 = vrot.lane.b32.xlu0 %v5009, 4
  %v5059 = vpop.permute.xlu0 %5058
  %5060 = vrot.lane.b32.xlu0 %v5011, 4
  %v5061 = vpop.permute.xlu0 %5060
  %5062 = vrot.lane.b32.xlu0 %v5013, 4
  %v5063 = vpop.permute.xlu0 %5062
  %5064 = vrot.lane.b32.xlu0 %v5015, 4
  %v5065 = vpop.permute.xlu0 %5064
  %5066 = vrot.lane.b32.xlu0 %v5017, 4
  %v5067 = vpop.permute.xlu0 %5066
  %5068 = vrot.lane.b32.xlu0 %v5019, 4
  %v5069 = vpop.permute.xlu0 %5068
  %5070 = vrot.lane.b32.xlu0 %v5021, 4
  %v5071 = vpop.permute.xlu0 %5070
  %5072 = vrot.lane.b32.xlu0 %v5023, 4
  %v5073 = vpop.permute.xlu0 %5072
  %5074 = vrot.lane.b32.xlu0 %v5022, 4
  %v5075 = vpop.permute.xlu0 %5074
  %vm5096 = vcmask 31744
  %v5097 = vsel %vm5096, %v2549, %v5037
  %v5098 = vsel %vm5096, %v2550, %v5039
  %v5099 = vsel %vm5096, %v2551, %v5041
  %v5100 = vsel %vm5096, %v2552, %v5043
  %v5101 = vsel %vm5096, %v2553, %v5045
  %v5102 = vsel %vm5096, %v2554, %v5047
  %v5103 = vsel %vm5096, %v2555, %v5049
  %v5104 = vsel %vm5096, %v2556, %v5051
  %v5105 = vsel %vm5096, %v2557, %v5053
  %v5106 = vsel %vm5096, %v2630, %v5055
  %v5107 = vsel %vm5096, %v2602, %v5057
  %v5108 = vsel %vm5096, %v2604, %v5059
  %v5109 = vsel %vm5096, %v2606, %v5061
  %v5110 = vsel %vm5096, %v2608, %v5063
  %v5111 = vsel %vm5096, %v2610, %v5065
  %v5112 = vsel %vm5096, %v2612, %v5067
  %v5113 = vsel %vm5096, %v2614, %v5069
  %v5114 = vsel %vm5096, %v2616, %v5071
  %v5115 = vsel %vm5096, %v2618, %v5073
  %v5116 = vsel %vm5096, %v2617, %v5075
  %v5117 = vld [vmem:[%s4] sm:$0xff]
  %v5118 = vld [vmem:[%s4 + $0x8] sm:$0xff]
  %v5119 = vld [vmem:[%s4 + $0x10] sm:$0xff]
  %v5120 = vld [vmem:[%s4 + $0x18] sm:$0xff]
  %v5121 = vld [vmem:[%s4 + $0x20] sm:$0xff]
  %v5122 = vld [vmem:[%s4 + $0x28] sm:$0xff]
  %v5123 = vld [vmem:[%s4 + $0x30] sm:$0xff]
  %v5124 = vld [vmem:[%s4 + $0x38] sm:$0xff]
  %v5125 = vld [vmem:[%s4 + $0x40] sm:$0xff]
  %v5126 = vld [vmem:[%s4 + $0x48] sm:$0xff]
  %v5127 = vld [vmem:[%s4 + $0x50] sm:$0xff]
  %v5128 = vld [vmem:[%s4 + $0x58] sm:$0xff]
  %v5129 = vld [vmem:[%s4 + $0x60] sm:$0xff]
  %v5130 = vld [vmem:[%s4 + $0x68] sm:$0xff]
  %v5131 = vld [vmem:[%s4 + $0x70] sm:$0xff]
  %v5132 = vld [vmem:[%s4 + $0x78] sm:$0xff]
  %v5133 = vld [vmem:[%s4 + $0x80] sm:$0xff]
  %v5134 = vld [vmem:[%s4 + $0x88] sm:$0xff]
  %v5135 = vld [vmem:[%s4 + $0x90] sm:$0x3f]
  %v5136 = vld [vmem:[%s4 + $0x98] sm:$0x3f]
  %v5137 = vld [vmem:[%s5] sm:$0xff]
  %v5138 = vld [vmem:[%s5 + $0x8] sm:$0xff]
  %v5139 = vld [vmem:[%s5 + $0x10] sm:$0xff]
  %v5140 = vld [vmem:[%s5 + $0x18] sm:$0xff]
  %v5141 = vld [vmem:[%s5 + $0x20] sm:$0xff]
  %v5142 = vld [vmem:[%s5 + $0x28] sm:$0xff]
  %v5143 = vld [vmem:[%s5 + $0x30] sm:$0xff]
  %v5144 = vld [vmem:[%s5 + $0x38] sm:$0xff]
  %v5145 = vld [vmem:[%s5 + $0x40] sm:$0xff]
  %v5146 = vld [vmem:[%s5 + $0x48] sm:$0x3f]
  %5148 = vset.pattern.permute.xlu0 0
  %5149 = vperm.xlu0 %5148, %v5137
  %v5150 = vpop.permute.xlu0 %5149
  %5153 = vset.pattern.permute.xlu0 0
  %5154 = vperm.xlu0 %5153, %v5138
  %v5155 = vpop.permute.xlu0 %5154
  %5158 = vset.pattern.permute.xlu0 0
  %5159 = vperm.xlu0 %5158, %v5139
  %v5160 = vpop.permute.xlu0 %5159
  %5163 = vset.pattern.permute.xlu0 0
  %5164 = vperm.xlu0 %5163, %v5140
  %v5165 = vpop.permute.xlu0 %5164
  %5168 = vset.pattern.permute.xlu0 0
  %5169 = vperm.xlu0 %5168, %v5141
  %v5170 = vpop.permute.xlu0 %5169
  %5173 = vset.pattern.permute.xlu0 0
  %5174 = vperm.xlu0 %5173, %v5142
  %v5175 = vpop.permute.xlu0 %5174
  %5178 = vset.pattern.permute.xlu0 0
  %5179 = vperm.xlu0 %5178, %v5143
  %v5180 = vpop.permute.xlu0 %5179
  %5183 = vset.pattern.permute.xlu0 0
  %5184 = vperm.xlu0 %5183, %v5144
  %v5185 = vpop.permute.xlu0 %5184
  %5188 = vset.pattern.permute.xlu0 0
  %5189 = vperm.xlu0 %5188, %v5145
  %v5190 = vpop.permute.xlu0 %5189
  %5193 = vset.pattern.permute.xlu0 0
  %5194 = vperm.xlu0 %5193, %v5146
  %v5195 = vpop.permute.xlu0 %5194
  %v5198 = vsel %vm1185, %v5118, 0
  %v5201 = vsel %vm1185, %v5120, 0
  %v5204 = vsel %vm1185, %v5122, 0
  %v5207 = vsel %vm1185, %v5124, 0
  %v5210 = vsel %vm1185, %v5126, 0
  %v5213 = vsel %vm1185, %v5128, 0
  %v5216 = vsel %vm1185, %v5130, 0
  %v5219 = vsel %vm1185, %v5132, 0
  %v5222 = vsel %vm1185, %v5134, 0
  %v5225 = vsel %vm1185, %v5136, 0
  %vm5227 = vcmask 1043456
  %v5229 = vsel %vm5227, %v5116, 0
  %5231 = vmatprep.subr.mxu0 0.0
  %5232 = vmatpush1.msra.mxu0 %v5097
  %5233 = vmatprep.subr.mxu0 0.0
  %5234 = vmatpush1.msra.mxu0 %v5098
  %5235 = vmatprep.subr.mxu0 0.0
  %5236 = vmatpush1.msra.mxu0 %v5099
  %5237 = vmatprep.subr.mxu0 0.0
  %5238 = vmatpush1.msra.mxu0 %v5100
  %5239 = vmatprep.subr.mxu0 0.0
  %5240 = vmatpush1.msra.mxu0 %v5101
  %5241 = vmatprep.subr.mxu0 0.0
  %5242 = vmatpush1.msra.mxu0 %v5102
  %5243 = vmatprep.subr.mxu0 0.0
  %5244 = vmatpush1.msra.mxu0 %v5103
  %5245 = vmatprep.subr.mxu0 0.0
  %5246 = vmatpush1.msra.mxu0 %v5104
  %5247 = vmatprep.subr.mxu0 0.0
  %5248 = vmatpush1.msra.mxu0 %v5105
  %5249 = vmatprep.subr.mxu0 0.0
  %5250 = vmatpush1.msra.mxu0 %v5106
  %5251 = vmatprep.subr.mxu0 0.0
  %5252 = vmatpush1.msra.mxu0 %v5107
  %5253 = vmatprep.subr.mxu0 0.0
  %5254 = vmatpush1.msra.mxu0 %v5108
  %5255 = vmatprep.subr.mxu0 0.0
  %5256 = vmatpush1.msra.mxu0 %v5109
  %5257 = vmatprep.subr.mxu0 0.0
  %5258 = vmatpush1.msra.mxu0 %v5110
  %5259 = vmatprep.subr.mxu0 0.0
  %5260 = vmatpush1.msra.mxu0 %v5111
  %5261 = vmatprep.subr.mxu0 0.0
  %5262 = vmatpush1.msra.mxu0 %v5112
  %5263 = vmatprep.subr.mxu0 0.0
  %5264 = vmatpush1.msra.mxu0 %v5113
  %5265 = vmatprep.subr.mxu0 0.0
  %5266 = vmatpush1.msra.mxu0 %v5114
  %5267 = vmatprep.subr.mxu0 0.0
  %5268 = vmatpush1.msra.mxu0 %v5115
  %5269 = vmatprep.subr.mxu0 0.0
  %5270 = vmatpush1.msra.mxu0 %v5229
  %5271 = vmatprep.subr.mxu0 0.0
  %5272 = vmatpush1.msra.mxu0 0.0
  %5273 = vmatprep.subr.mxu0 0.0
  %5274 = vmatpush1.msra.mxu0 0.0
  %5275 = vmatprep.subr.mxu0 0.0
  %5276 = vmatpush1.msra.mxu0 0.0
  %5277 = vmatprep.subr.mxu0 0.0
  %5278 = vmatpush1.msra.mxu0 0.0
  %5279 = vmatprep.subr.mxu0 0.0
  %5280 = vmatpush1.msra.mxu0 0.0
  %5281 = vmatprep.subr.mxu0 0.0
  %5282 = vmatpush1.msra.mxu0 0.0
  %5283 = vmatprep.subr.mxu0 0.0
  %5284 = vmatpush1.msra.mxu0 0.0
  %5285 = vmatprep.subr.mxu0 0.0
  %5286 = vmatpush1.msra.mxu0 0.0
  %5287 = vmatprep.subr.mxu0 0.0
  %5288 = vmatpush1.msra.mxu0 0.0
  %5289 = vmatprep.subr.mxu0 0.0
  %5290 = vmatpush1.msra.mxu0 0.0
  %5291 = vmatprep.subr.mxu0 0.0
  %5292 = vmatpush1.msra.mxu0 0.0
  %5293 = vmatprep.subr.mxu0 0.0
  %5294 = vmatpush1.msra.mxu0 0.0
  %5295 = vmatprep.mubr.f32.mxu0 %v5198
  %5296 = vmatmul.mubr.f32.gmra.mrb[0].mxu0 %v5117
  %v5297 = vpop.f32.mrb[0].mxu0
  %v5298 = vadd.f32 %v5150, %v5297
  %v5299 = vpop.f32.mrb[0].mxu0
  %5300 = vmatprep.mubr.f32.mxu0 %v5201
  %5301 = vmatmul.mubr.f32.gmra.mrb[0].mxu0 %v5119
  %v5302 = vpop.f32.mrb[0].mxu0
  %v5303 = vadd.f32 %v5155, %v5302
  %v5304 = vpop.f32.mrb[0].mxu0
  %5305 = vmatprep.mubr.f32.mxu0 %v5204
  %5306 = vmatmul.mubr.f32.gmra.mrb[0].mxu0 %v5121
  %v5307 = vpop.f32.mrb[0].mxu0
  %v5308 = vadd.f32 %v5160, %v5307
  %v5309 = vpop.f32.mrb[0].mxu0
  %5310 = vmatprep.mubr.f32.mxu0 %v5207
  %5311 = vmatmul.mubr.f32.gmra.mrb[0].mxu0 %v5123
  %v5312 = vpop.f32.mrb[0].mxu0
  %v5313 = vadd.f32 %v5165, %v5312
  %v5314 = vpop.f32.mrb[0].mxu0
  %5315 = vmatprep.mubr.f32.mxu0 %v5210
  %5316 = vmatmul.mubr.f32.gmra.mrb[0].mxu0 %v5125
  %v5317 = vpop.f32.mrb[0].mxu0
  %v5318 = vadd.f32 %v5170, %v5317
  %v5319 = vpop.f32.mrb[0].mxu0
  %5320 = vmatprep.mubr.f32.mxu0 %v5213
  %5321 = vmatmul.mubr.f32.gmra.mrb[0].mxu0 %v5127
  %v5322 = vpop.f32.mrb[0].mxu0
  %v5323 = vadd.f32 %v5175, %v5322
  %v5324 = vpop.f32.mrb[0].mxu0
  %5325 = vmatprep.mubr.f32.mxu0 %v5216
  %5326 = vmatmul.mubr.f32.gmra.mrb[0].mxu0 %v5129
  %v5327 = vpop.f32.mrb[0].mxu0
  %v5328 = vadd.f32 %v5180, %v5327
  %v5329 = vpop.f32.mrb[0].mxu0
  %5330 = vmatprep.mubr.f32.mxu0 %v5219
  %5331 = vmatmul.mubr.f32.gmra.mrb[0].mxu0 %v5131
  %v5332 = vpop.f32.mrb[0].mxu0
  %v5333 = vadd.f32 %v5185, %v5332
  %v5334 = vpop.f32.mrb[0].mxu0
  %5335 = vmatprep.mubr.f32.mxu0 %v5222
  %5336 = vmatmul.mubr.f32.gmra.mrb[0].mxu0 %v5133
  %v5337 = vpop.f32.mrb[0].mxu0
  %v5338 = vadd.f32 %v5190, %v5337
  %v5339 = vpop.f32.mrb[0].mxu0
  %5340 = vmatprep.mubr.f32.mxu0 %v5225
  %5341 = vmatmul.mubr.f32.gmra.mrb[0].mxu0 %v5135
  %v5342 = vpop.f32.mrb[0].mxu0
  %v5343 = vadd.f32 %v5195, %v5342
  %v5344 = vpop.f32.mrb[0].mxu0
  %5345 = vdwg.mxu0
  %v5346 = vmax.f32 %v5298, 0.0
  %v5347 = vmax.f32 %v5303, 0.0
  %v5348 = vmax.f32 %v5308, 0.0
  %v5349 = vmax.f32 %v5313, 0.0
  %v5350 = vmax.f32 %v5318, 0.0
  %v5351 = vmax.f32 %v5323, 0.0
  %v5352 = vmax.f32 %v5328, 0.0
  %v5353 = vmax.f32 %v5333, 0.0
  %v5354 = vmax.f32 %v5338, 0.0
  %v5355 = vmax.f32 %v5343, 0.0
  %v5356 = vld [vmem:[%s6] sm:$0xff]
  %v5358 = vsel %vm5096, %v5346, 0
  %v5361 = vsel %vm5096, %v5347, 0
  %v5364 = vsel %vm5096, %v5348, 0
  %v5367 = vsel %vm5096, %v5349, 0
  %v5370 = vsel %vm5096, %v5350, 0
  %v5373 = vsel %vm5096, %v5351, 0
  %v5376 = vsel %vm5096, %v5352, 0
  %v5379 = vsel %vm5096, %v5353, 0
  %v5382 = vsel %vm5096, %v5354, 0
  %v5385 = vsel %vm5096, %v5355, 0
  %v5388 = vsel %vm5096, %v5356, 0
  %5390 = vmatprep.subr.mxu0 0.0
  %5391 = vmatpush1.xpose.msra.mxu0 %v5388
  %5392 = vmatprep.subr.mxu0 0.0
  %5393 = vmatpush1.xpose.msra.mxu0 0.0
  %5394 = vmatprep.subr.mxu0 0.0
  %5395 = vmatpush1.xpose.msra.mxu0 0.0
  %5396 = vmatprep.subr.mxu0 0.0
  %5397 = vmatpush1.xpose.msra.mxu0 0.0
  %5398 = vmatprep.subr.mxu0 0.0
  %5399 = vmatpush1.xpose.msra.mxu0 0.0
  %5400 = vmatprep.subr.mxu0 0.0
  %5401 = vmatpush1.xpose.msra.mxu0 0.0
  %5402 = vmatprep.subr.mxu0 0.0
  %5403 = vmatpush1.xpose.msra.mxu0 0.0
  %5404 = vmatprep.subr.mxu0 0.0
  %5405 = vmatpush1.xpose.msra.mxu0 0.0
  %5406 = vmatprep.subr.mxu0 0.0
  %5407 = vmatpush1.xpose.msra.mxu0 0.0
  %5408 = vmatprep.subr.mxu0 0.0
  %5409 = vmatpush1.xpose.msra.mxu0 0.0
  %5410 = vmatprep.subr.mxu0 0.0
  %5411 = vmatpush1.xpose.msra.mxu0 0.0
  %5412 = vmatprep.subr.mxu0 0.0
  %5413 = vmatpush1.xpose.msra.mxu0 0.0
  %5414 = vmatprep.subr.mxu0 0.0
  %5415 = vmatpush1.xpose.msra.mxu0 0.0
  %5416 = vmatprep.subr.mxu0 0.0
  %5417 = vmatpush1.xpose.msra.mxu0 0.0
  %5418 = vmatprep.subr.mxu0 0.0
  %5419 = vmatpush1.xpose.msra.mxu0 0.0
  %5420 = vmatprep.subr.mxu0 0.0
  %5421 = vmatpush1.xpose.msra.mxu0 0.0
  %5422 = vmatprep.subr.mxu0 0.0
  %5423 = vmatpush1.xpose.msra.mxu0 0.0
  %5424 = vmatprep.subr.mxu0 0.0
  %5425 = vmatpush1.xpose.msra.mxu0 0.0
  %5426 = vmatprep.subr.mxu0 0.0
  %5427 = vmatpush1.xpose.msra.mxu0 0.0
  %5428 = vmatprep.subr.mxu0 0.0
  %5429 = vmatpush1.xpose.msra.mxu0 0.0
  %5430 = vmatprep.subr.mxu0 0.0
  %5431 = vmatpush1.xpose.msra.mxu0 0.0
  %5432 = vmatprep.subr.mxu0 0.0
  %5433 = vmatpush1.xpose.msra.mxu0 0.0
  %5434 = vmatprep.subr.mxu0 0.0
  %5435 = vmatpush1.xpose.msra.mxu0 0.0
  %5436 = vmatprep.subr.mxu0 0.0
  %5437 = vmatpush1.xpose.msra.mxu0 0.0
  %5438 = vmatprep.subr.mxu0 0.0
  %5439 = vmatpush1.xpose.msra.mxu0 0.0
  %5440 = vmatprep.subr.mxu0 0.0
  %5441 = vmatpush1.xpose.msra.mxu0 0.0
  %5442 = vmatprep.subr.mxu0 0.0
  %5443 = vmatpush1.xpose.msra.mxu0 0.0
  %5444 = vmatprep.subr.mxu0 0.0
  %5445 = vmatpush1.xpose.msra.mxu0 0.0
  %5446 = vmatprep.subr.mxu0 0.0
  %5447 = vmatpush1.xpose.msra.mxu0 0.0
  %5448 = vmatprep.subr.mxu0 0.0
  %5449 = vmatpush1.xpose.msra.mxu0 0.0
  %5450 = vmatprep.subr.mxu0 0.0
  %5451 = vmatpush1.xpose.msra.mxu0 0.0
  %5452 = vmatprep.subr.mxu0 0.0
  %5453 = vmatpush1.xpose.msra.mxu0 0.0
  %5454 = vmatprep.mubr.f32.mxu0 0.0
  %5455 = vmatmul.mubr.f32.gmra.mrb[0].mxu0 %v5358
  %v5456 = vpop.f32.mrb[0].mxu0
  %v5457 = vadd.f32 0.0, %v5456
  %v5458 = vpop.f32.mrb[0].mxu0
  %5459 = vmatprep.mubr.f32.mxu0 0.0
  %5460 = vmatmul.mubr.f32.gmra.mrb[0].mxu0 %v5361
  %v5461 = vpop.f32.mrb[0].mxu0
  %v5462 = vadd.f32 0.0, %v5461
  %v5463 = vpop.f32.mrb[0].mxu0
  %5464 = vmatprep.mubr.f32.mxu0 0.0
  %5465 = vmatmul.mubr.f32.gmra.mrb[0].mxu0 %v5364
  %v5466 = vpop.f32.mrb[0].mxu0
  %v5467 = vadd.f32 0.0, %v5466
  %v5468 = vpop.f32.mrb[0].mxu0
  %5469 = vmatprep.mubr.f32.mxu0 0.0
  %5470 = vmatmul.mubr.f32.gmra.mrb[0].mxu0 %v5367
  %v5471 = vpop.f32.mrb[0].mxu0
  %v5472 = vadd.f32 0.0, %v5471
  %v5473 = vpop.f32.mrb[0].mxu0
  %5474 = vmatprep.mubr.f32.mxu0 0.0
  %5475 = vmatmul.mubr.f32.gmra.mrb[0].mxu0 %v5370
  %v5476 = vpop.f32.mrb[0].mxu0
  %v5477 = vadd.f32 0.0, %v5476
  %v5478 = vpop.f32.mrb[0].mxu0
  %5479 = vmatprep.mubr.f32.mxu0 0.0
  %5480 = vmatmul.mubr.f32.gmra.mrb[0].mxu0 %v5373
  %v5481 = vpop.f32.mrb[0].mxu0
  %v5482 = vadd.f32 0.0, %v5481
  %v5483 = vpop.f32.mrb[0].mxu0
  %5484 = vmatprep.mubr.f32.mxu0 0.0
  %5485 = vmatmul.mubr.f32.gmra.mrb[0].mxu0 %v5376
  %v5486 = vpop.f32.mrb[0].mxu0
  %v5487 = vadd.f32 0.0, %v5486
  %v5488 = vpop.f32.mrb[0].mxu0
  %5489 = vmatprep.mubr.f32.mxu0 0.0
  %5490 = vmatmul.mubr.f32.gmra.mrb[0].mxu0 %v5379
  %v5491 = vpop.f32.mrb[0].mxu0
  %v5492 = vadd.f32 0.0, %v5491
  %v5493 = vpop.f32.mrb[0].mxu0
  %5494 = vmatprep.mubr.f32.mxu0 0.0
  %5495 = vmatmul.mubr.f32.gmra.mrb[0].mxu0 %v5382
  %v5496 = vpop.f32.mrb[0].mxu0
  %v5497 = vadd.f32 0.0, %v5496
  %v5498 = vpop.f32.mrb[0].mxu0
  %5499 = vmatprep.mubr.f32.mxu0 0.0
  %5500 = vmatmul.mubr.f32.gmra.mrb[0].mxu0 %v5385
  %v5501 = vpop.f32.mrb[0].mxu0
  %v5502 = vadd.f32 0.0, %v5501
  %v5503 = vpop.f32.mrb[0].mxu0
  %5504 = vdwg.mxu0
  %v5505 = vld [vmem:[%s9] sm:$0x1]
  %v5506 = vld [vmem:[%s7] sm:$0xff]
  %v5507 = vld [vmem:[%s7 + $0x8] sm:$0xff]
  %v5508 = vld [vmem:[%s7 + $0x10] sm:$0xff]
  %v5509 = vld [vmem:[%s7 + $0x18] sm:$0xff]
  %v5510 = vld [vmem:[%s7 + $0x20] sm:$0xff]
  %v5511 = vld [vmem:[%s7 + $0x28] sm:$0xff]
  %v5512 = vld [vmem:[%s7 + $0x30] sm:$0xff]
  %v5513 = vld [vmem:[%s7 + $0x38] sm:$0xff]
  %v5514 = vld [vmem:[%s7 + $0x40] sm:$0xff]
  %v5515 = vld [vmem:[%s7 + $0x48] sm:$0x3f]
  %v5517 = vsel %vm2537, %v5457, 0
  %v5520 = vsel %vm2537, %v5462, 0
  %v5523 = vsel %vm2537, %v5467, 0
  %v5526 = vsel %vm2537, %v5472, 0
  %v5529 = vsel %vm2537, %v5477, 0
  %v5532 = vsel %vm2537, %v5482, 0
  %v5535 = vsel %vm2537, %v5487, 0
  %v5538 = vsel %vm2537, %v5492, 0
  %v5541 = vsel %vm2537, %v5497, 0
  %v5544 = vsel %vm2537, %v5502, 0
  %v5547 = vsel %vm2537, %v5506, 0
  %v5550 = vsel %vm2537, %v5507, 0
  %v5553 = vsel %vm2537, %v5508, 0
  %v5556 = vsel %vm2537, %v5509, 0
  %v5559 = vsel %vm2537, %v5510, 0
  %v5562 = vsel %vm2537, %v5511, 0
  %v5565 = vsel %vm2537, %v5512, 0
  %v5568 = vsel %vm2537, %v5513, 0
  %v5571 = vsel %vm2537, %v5514, 0
  %v5574 = vsel %vm2537, %v5515, 0
  %5576 = vmatprep.subr.mxu0 0.0
  %5577 = vmatpush1.xpose.msra.mxu0 %v5547
  %5578 = vmatprep.subr.mxu0 0.0
  %5579 = vmatpush1.xpose.msra.mxu0 %v5550
  %5580 = vmatprep.subr.mxu0 0.0
  %5581 = vmatpush1.xpose.msra.mxu0 %v5553
  %5582 = vmatprep.subr.mxu0 0.0
  %5583 = vmatpush1.xpose.msra.mxu0 %v5556
  %5584 = vmatprep.subr.mxu0 0.0
  %5585 = vmatpush1.xpose.msra.mxu0 %v5559
  %5586 = vmatprep.subr.mxu0 0.0
  %5587 = vmatpush1.xpose.msra.mxu0 %v5562
  %5588 = vmatprep.subr.mxu0 0.0
  %5589 = vmatpush1.xpose.msra.mxu0 %v5565
  %5590 = vmatprep.subr.mxu0 0.0
  %5591 = vmatpush1.xpose.msra.mxu0 %v5568
  %5592 = vmatprep.subr.mxu0 0.0
  %5593 = vmatpush1.xpose.msra.mxu0 %v5571
  %5594 = vmatprep.subr.mxu0 0.0
  %5595 = vmatpush1.xpose.msra.mxu0 %v5574
  %5596 = vmatprep.subr.mxu0 0.0
  %5597 = vmatpush1.xpose.msra.mxu0 0.0
  %5598 = vmatprep.subr.mxu0 0.0
  %5599 = vmatpush1.xpose.msra.mxu0 0.0
  %5600 = vmatprep.subr.mxu0 0.0
  %5601 = vmatpush1.xpose.msra.mxu0 0.0
  %5602 = vmatprep.subr.mxu0 0.0
  %5603 = vmatpush1.xpose.msra.mxu0 0.0
  %5604 = vmatprep.subr.mxu0 0.0
  %5605 = vmatpush1.xpose.msra.mxu0 0.0
  %5606 = vmatprep.subr.mxu0 0.0
  %5607 = vmatpush1.xpose.msra.mxu0 0.0
  %5608 = vmatprep.subr.mxu0 0.0
  %5609 = vmatpush1.xpose.msra.mxu0 0.0
  %5610 = vmatprep.subr.mxu0 0.0
  %5611 = vmatpush1.xpose.msra.mxu0 0.0
  %5612 = vmatprep.subr.mxu0 0.0
  %5613 = vmatpush1.xpose.msra.mxu0 0.0
  %5614 = vmatprep.subr.mxu0 0.0
  %5615 = vmatpush1.xpose.msra.mxu0 0.0
  %5616 = vmatprep.subr.mxu0 0.0
  %5617 = vmatpush1.xpose.msra.mxu0 0.0
  %5618 = vmatprep.subr.mxu0 0.0
  %5619 = vmatpush1.xpose.msra.mxu0 0.0
  %5620 = vmatprep.subr.mxu0 0.0
  %5621 = vmatpush1.xpose.msra.mxu0 0.0
  %5622 = vmatprep.subr.mxu0 0.0
  %5623 = vmatpush1.xpose.msra.mxu0 0.0
  %5624 = vmatprep.subr.mxu0 0.0
  %5625 = vmatpush1.xpose.msra.mxu0 0.0
  %5626 = vmatprep.subr.mxu0 0.0
  %5627 = vmatpush1.xpose.msra.mxu0 0.0
  %5628 = vmatprep.subr.mxu0 0.0
  %5629 = vmatpush1.xpose.msra.mxu0 0.0
  %5630 = vmatprep.subr.mxu0 0.0
  %5631 = vmatpush1.xpose.msra.mxu0 0.0
  %5632 = vmatprep.subr.mxu0 0.0
  %5633 = vmatpush1.xpose.msra.mxu0 0.0
  %5634 = vmatprep.subr.mxu0 0.0
  %5635 = vmatpush1.xpose.msra.mxu0 0.0
  %5636 = vmatprep.subr.mxu0 0.0
  %5637 = vmatpush1.xpose.msra.mxu0 0.0
  %5638 = vmatprep.subr.mxu0 0.0
  %5639 = vmatpush1.xpose.msra.mxu0 0.0
  %5640 = vmatprep.mubr.f32.mxu0 0.0
  %5641 = vmatmul.mubr.f32.gmra.mrb[0].mxu0 %v5517
  %v5642 = vpop.f32.mrb[0].mxu0
  %v5643 = vadd.f32 0.0, %v5642
  %v5644 = vpop.f32.mrb[0].mxu0
  %5645 = vmatprep.mubr.f32.mxu0 0.0
  %5646 = vmatmul.mubr.f32.gmra.mrb[0].mxu0 %v5520
  %v5647 = vpop.f32.mrb[0].mxu0
  %v5648 = vadd.f32 0.0, %v5647
  %v5649 = vpop.f32.mrb[0].mxu0
  %5650 = vmatprep.mubr.f32.mxu0 0.0
  %5651 = vmatmul.mubr.f32.gmra.mrb[0].mxu0 %v5523
  %v5652 = vpop.f32.mrb[0].mxu0
  %v5653 = vadd.f32 0.0, %v5652
  %v5654 = vpop.f32.mrb[0].mxu0
  %5655 = vmatprep.mubr.f32.mxu0 0.0
  %5656 = vmatmul.mubr.f32.gmra.mrb[0].mxu0 %v5526
  %v5657 = vpop.f32.mrb[0].mxu0
  %v5658 = vadd.f32 0.0, %v5657
  %v5659 = vpop.f32.mrb[0].mxu0
  %5660 = vmatprep.mubr.f32.mxu0 0.0
  %5661 = vmatmul.mubr.f32.gmra.mrb[0].mxu0 %v5529
  %v5662 = vpop.f32.mrb[0].mxu0
  %v5663 = vadd.f32 0.0, %v5662
  %v5664 = vpop.f32.mrb[0].mxu0
  %5665 = vmatprep.mubr.f32.mxu0 0.0
  %5666 = vmatmul.mubr.f32.gmra.mrb[0].mxu0 %v5532
  %v5667 = vpop.f32.mrb[0].mxu0
  %v5668 = vadd.f32 0.0, %v5667
  %v5669 = vpop.f32.mrb[0].mxu0
  %5670 = vmatprep.mubr.f32.mxu0 0.0
  %5671 = vmatmul.mubr.f32.gmra.mrb[0].mxu0 %v5535
  %v5672 = vpop.f32.mrb[0].mxu0
  %v5673 = vadd.f32 0.0, %v5672
  %v5674 = vpop.f32.mrb[0].mxu0
  %5675 = vmatprep.mubr.f32.mxu0 0.0
  %5676 = vmatmul.mubr.f32.gmra.mrb[0].mxu0 %v5538
  %v5677 = vpop.f32.mrb[0].mxu0
  %v5678 = vadd.f32 0.0, %v5677
  %v5679 = vpop.f32.mrb[0].mxu0
  %5680 = vmatprep.mubr.f32.mxu0 0.0
  %5681 = vmatmul.mubr.f32.gmra.mrb[0].mxu0 %v5541
  %v5682 = vpop.f32.mrb[0].mxu0
  %v5683 = vadd.f32 0.0, %v5682
  %v5684 = vpop.f32.mrb[0].mxu0
  %5685 = vmatprep.mubr.f32.mxu0 0.0
  %5686 = vmatmul.mubr.f32.gmra.mrb[0].mxu0 %v5544
  %v5687 = vpop.f32.mrb[0].mxu0
  %v5688 = vadd.f32 0.0, %v5687
  %v5689 = vpop.f32.mrb[0].mxu0
  %5690 = vdwg.mxu0
  %v5691 = vmul.f32 %v5643, 0.70710677
  %v5692 = vmul.f32 %v5648, 0.70710677
  %v5693 = vmul.f32 %v5653, 0.70710677
  %v5694 = vmul.f32 %v5658, 0.70710677
  %v5695 = vmul.f32 %v5663, 0.70710677
  %v5696 = vmul.f32 %v5668, 0.70710677
  %v5697 = vmul.f32 %v5673, 0.70710677
  %v5698 = vmul.f32 %v5678, 0.70710677
  %v5699 = vmul.f32 %v5683, 0.70710677
  %v5700 = vmul.f32 %v5688, 0.70710677
  %v5701 = vsel %vm609, %v5691, -inf
  %5702 = vmax.xlane.f32.xlu0 %v5701
  %v5703 = vpop.xlane.xlu0 %5702
  %v5704 = vsel %vm609, %v5692, -inf
  %5705 = vmax.xlane.f32.xlu0 %v5704
  %v5706 = vpop.xlane.xlu0 %5705
  %v5707 = vsel %vm609, %v5693, -inf
  %5708 = vmax.xlane.f32.xlu0 %v5707
  %v5709 = vpop.xlane.xlu0 %5708
  %v5710 = vsel %vm609, %v5694, -inf
  %5711 = vmax.xlane.f32.xlu0 %v5710
  %v5712 = vpop.xlane.xlu0 %5711
  %v5713 = vsel %vm609, %v5695, -inf
  %5714 = vmax.xlane.f32.xlu0 %v5713
  %v5715 = vpop.xlane.xlu0 %5714
  %v5716 = vsel %vm609, %v5696, -inf
  %5717 = vmax.xlane.f32.xlu0 %v5716
  %v5718 = vpop.xlane.xlu0 %5717
  %v5719 = vsel %vm609, %v5697, -inf
  %5720 = vmax.xlane.f32.xlu0 %v5719
  %v5721 = vpop.xlane.xlu0 %5720
  %v5722 = vsel %vm609, %v5698, -inf
  %5723 = vmax.xlane.f32.xlu0 %v5722
  %v5724 = vpop.xlane.xlu0 %5723
  %v5725 = vsel %vm609, %v5699, -inf
  %5726 = vmax.xlane.f32.xlu0 %v5725
  %v5727 = vpop.xlane.xlu0 %5726
  %v5728 = vsel %vm627, %v5700, -inf
  %5729 = vmax.xlane.f32.xlu0 %v5728
  %v5730 = vpop.xlane.xlu0 %5729
  %v5731 = vsub.f32 %v5691, %v5703
  %v5732 = vsub.f32 %v5692, %v5706
  %v5733 = vsub.f32 %v5693, %v5709
  %v5734 = vsub.f32 %v5694, %v5712
  %v5735 = vsub.f32 %v5695, %v5715
  %v5736 = vsub.f32 %v5696, %v5718
  %v5737 = vsub.f32 %v5697, %v5721
  %v5738 = vsub.f32 %v5698, %v5724
  %v5739 = vsub.f32 %v5699, %v5727
  %v5740 = vsub.f32 %v5700, %v5730
  %v5741 = vmul.f32 %v5731, 1.442695
  %v5742 = vpow.pop %v5741
  %v5743 = vmul.f32 %v5732, 1.442695
  %v5744 = vpow.pop %v5743
  %v5745 = vmul.f32 %v5733, 1.442695
  %v5746 = vpow.pop %v5745
  %v5747 = vmul.f32 %v5734, 1.442695
  %v5748 = vpow.pop %v5747
  %v5749 = vmul.f32 %v5735, 1.442695
  %v5750 = vpow.pop %v5749
  %v5751 = vmul.f32 %v5736, 1.442695
  %v5752 = vpow.pop %v5751
  %v5753 = vmul.f32 %v5737, 1.442695
  %v5754 = vpow.pop %v5753
  %v5755 = vmul.f32 %v5738, 1.442695
  %v5756 = vpow.pop %v5755
  %v5757 = vmul.f32 %v5739, 1.442695
  %v5758 = vpow.pop %v5757
  %v5759 = vmul.f32 %v5740, 1.442695
  %v5760 = vpow.pop %v5759
  %v5761 = vsel %vm609, %v5742, 0.0
  %5762 = vadd.xlane.f32.xlu0 %v5761
  %v5763 = vpop.xlane.xlu0 %5762
  %v5764 = vsel %vm609, %v5744, 0.0
  %5765 = vadd.xlane.f32.xlu0 %v5764
  %v5766 = vpop.xlane.xlu0 %5765
  %v5767 = vsel %vm609, %v5746, 0.0
  %5768 = vadd.xlane.f32.xlu0 %v5767
  %v5769 = vpop.xlane.xlu0 %5768
  %v5770 = vsel %vm609, %v5748, 0.0
  %5771 = vadd.xlane.f32.xlu0 %v5770
  %v5772 = vpop.xlane.xlu0 %5771
  %v5773 = vsel %vm609, %v5750, 0.0
  %5774 = vadd.xlane.f32.xlu0 %v5773
  %v5775 = vpop.xlane.xlu0 %5774
  %v5776 = vsel %vm609, %v5752, 0.0
  %5777 = vadd.xlane.f32.xlu0 %v5776
  %v5778 = vpop.xlane.xlu0 %5777
  %v5779 = vsel %vm609, %v5754, 0.0
  %5780 = vadd.xlane.f32.xlu0 %v5779
  %v5781 = vpop.xlane.xlu0 %5780
  %v5782 = vsel %vm609, %v5756, 0.0
  %5783 = vadd.xlane.f32.xlu0 %v5782
  %v5784 = vpop.xlane.xlu0 %5783
  %v5785 = vsel %vm609, %v5758, 0.0
  %5786 = vadd.xlane.f32.xlu0 %v5785
  %v5787 = vpop.xlane.xlu0 %5786
  %v5788 = vsel %vm627, %v5760, 0.0
  %5789 = vadd.xlane.f32.xlu0 %v5788
  %v5790 = vpop.xlane.xlu0 %5789
  %v5791 = vrcp.pop %v5763
  %v5792 = vrcp.pop %v5766
  %v5793 = vrcp.pop %v5769
  %v5794 = vrcp.pop %v5772
  %v5795 = vrcp.pop %v5775
  %v5796 = vrcp.pop %v5778
  %v5797 = vrcp.pop %v5781
  %v5798 = vrcp.pop %v5784
  %v5799 = vrcp.pop %v5787
  %v5800 = vrcp.pop %v5790
  %v5801 = vmul.f32 %v5742, %v5791
  %v5802 = vmul.f32 %v5744, %v5792
  %v5803 = vmul.f32 %v5746, %v5793
  %v5804 = vmul.f32 %v5748, %v5794
  %v5805 = vmul.f32 %v5750, %v5795
  %v5806 = vmul.f32 %v5752, %v5796
  %v5807 = vmul.f32 %v5754, %v5797
  %v5808 = vmul.f32 %v5756, %v5798
  %v5809 = vmul.f32 %v5758, %v5799
  %v5810 = vmul.f32 %v5760, %v5800
  %5811 = vrot.lane.b32.xlu0 %v5457, 124
  %v5812 = vpop.permute.xlu0 %5811
  %5813 = vrot.lane.b32.xlu0 %v5462, 124
  %v5814 = vpop.permute.xlu0 %5813
  %5815 = vrot.lane.b32.xlu0 %v5467, 124
  %v5816 = vpop.permute.xlu0 %5815
  %5817 = vrot.lane.b32.xlu0 %v5472, 124
  %v5818 = vpop.permute.xlu0 %5817
  %5819 = vrot.lane.b32.xlu0 %v5477, 124
  %v5820 = vpop.permute.xlu0 %5819
  %5821 = vrot.lane.b32.xlu0 %v5482, 124
  %v5822 = vpop.permute.xlu0 %5821
  %5823 = vrot.lane.b32.xlu0 %v5487, 124
  %v5824 = vpop.permute.xlu0 %5823
  %5825 = vrot.lane.b32.xlu0 %v5492, 124
  %v5826 = vpop.permute.xlu0 %5825
  %5827 = vrot.lane.b32.xlu0 %v5497, 124
  %v5828 = vpop.permute.xlu0 %5827
  %5829 = vrot.lane.b32.xlu0 %v5502, 124
  %v5830 = vpop.permute.xlu0 %5829
  %v5841 = vsel %vm609, %v5801, 0
  %v5844 = vsel %vm609, %v5802, 0
  %v5847 = vsel %vm609, %v5803, 0
  %v5850 = vsel %vm609, %v5804, 0
  %v5853 = vsel %vm609, %v5805, 0
  %v5856 = vsel %vm609, %v5806, 0
  %v5859 = vsel %vm609, %v5807, 0
  %v5862 = vsel %vm609, %v5808, 0
  %v5865 = vsel %vm609, %v5809, 0
  %v5868 = vsel %vm609, %v5810, 0
  %v5870 = vsel %vm2599, %v5830, 0
  %5872 = vmatprep.subr.mxu0 0.0
  %5873 = vmatpush1.msra.mxu0 %v5812
  %5874 = vmatprep.subr.mxu0 0.0
  %5875 = vmatpush1.msra.mxu0 %v5814
  %5876 = vmatprep.subr.mxu0 0.0
  %5877 = vmatpush1.msra.mxu0 %v5816
  %5878 = vmatprep.subr.mxu0 0.0
  %5879 = vmatpush1.msra.mxu0 %v5818
  %5880 = vmatprep.subr.mxu0 0.0
  %5881 = vmatpush1.msra.mxu0 %v5820
  %5882 = vmatprep.subr.mxu0 0.0
  %5883 = vmatpush1.msra.mxu0 %v5822
  %5884 = vmatprep.subr.mxu0 0.0
  %5885 = vmatpush1.msra.mxu0 %v5824
  %5886 = vmatprep.subr.mxu0 0.0
  %5887 = vmatpush1.msra.mxu0 %v5826
  %5888 = vmatprep.subr.mxu0 0.0
  %5889 = vmatpush1.msra.mxu0 %v5828
  %5890 = vmatprep.subr.mxu0 0.0
  %5891 = vmatpush1.msra.mxu0 %v5870
  %5892 = vmatprep.subr.mxu0 0.0
  %5893 = vmatpush1.msra.mxu0 0.0
  %5894 = vmatprep.subr.mxu0 0.0
  %5895 = vmatpush1.msra.mxu0 0.0
  %5896 = vmatprep.subr.mxu0 0.0
  %5897 = vmatpush1.msra.mxu0 0.0
  %5898 = vmatprep.subr.mxu0 0.0
  %5899 = vmatpush1.msra.mxu0 0.0
  %5900 = vmatprep.subr.mxu0 0.0
  %5901 = vmatpush1.msra.mxu0 0.0
  %5902 = vmatprep.subr.mxu0 0.0
  %5903 = vmatpush1.msra.mxu0 0.0
  %5904 = vmatprep.subr.mxu0 0.0
  %5905 = vmatpush1.msra.mxu0 0.0
  %5906 = vmatprep.subr.mxu0 0.0
  %5907 = vmatpush1.msra.mxu0 0.0
  %5908 = vmatprep.subr.mxu0 0.0
  %5909 = vmatpush1.msra.mxu0 0.0
  %5910 = vmatprep.subr.mxu0 0.0
  %5911 = vmatpush1.msra.mxu0 0.0
  %5912 = vmatprep.subr.mxu0 0.0
  %5913 = vmatpush1.msra.mxu0 0.0
  %5914 = vmatprep.subr.mxu0 0.0
  %5915 = vmatpush1.msra.mxu0 0.0
  %5916 = vmatprep.subr.mxu0 0.0
  %5917 = vmatpush1.msra.mxu0 0.0
  %5918 = vmatprep.subr.mxu0 0.0
  %5919 = vmatpush1.msra.mxu0 0.0
  %5920 = vmatprep.subr.mxu0 0.0
  %5921 = vmatpush1.msra.mxu0 0.0
  %5922 = vmatprep.subr.mxu0 0.0
  %5923 = vmatpush1.msra.mxu0 0.0
  %5924 = vmatprep.subr.mxu0 0.0
  %5925 = vmatpush1.msra.mxu0 0.0
  %5926 = vmatprep.subr.mxu0 0.0
  %5927 = vmatpush1.msra.mxu0 0.0
  %5928 = vmatprep.subr.mxu0 0.0
  %5929 = vmatpush1.msra.mxu0 0.0
  %5930 = vmatprep.subr.mxu0 0.0
  %5931 = vmatpush1.msra.mxu0 0.0
  %5932 = vmatprep.subr.mxu0 0.0
  %5933 = vmatpush1.msra.mxu0 0.0
  %5934 = vmatprep.subr.mxu0 0.0
  %5935 = vmatpush1.msra.mxu0 0.0
  %5936 = vmatprep.mubr.f32.mxu0 0.0
  %5937 = vmatmul.mubr.f32.gmra.mrb[0].mxu0 %v5841
  %v5938 = vpop.f32.mrb[0].mxu0
  %v5939 = vadd.f32 0.0, %v5938
  %v5940 = vpop.f32.mrb[0].mxu0
  %5941 = vmatprep.mubr.f32.mxu0 0.0
  %5942 = vmatmul.mubr.f32.gmra.mrb[0].mxu0 %v5844
  %v5943 = vpop.f32.mrb[0].mxu0
  %v5944 = vadd.f32 0.0, %v5943
  %v5945 = vpop.f32.mrb[0].mxu0
  %5946 = vmatprep.mubr.f32.mxu0 0.0
  %5947 = vmatmul.mubr.f32.gmra.mrb[0].mxu0 %v5847
  %v5948 = vpop.f32.mrb[0].mxu0
  %v5949 = vadd.f32 0.0, %v5948
  %v5950 = vpop.f32.mrb[0].mxu0
  %5951 = vmatprep.mubr.f32.mxu0 0.0
  %5952 = vmatmul.mubr.f32.gmra.mrb[0].mxu0 %v5850
  %v5953 = vpop.f32.mrb[0].mxu0
  %v5954 = vadd.f32 0.0, %v5953
  %v5955 = vpop.f32.mrb[0].mxu0
  %5956 = vmatprep.mubr.f32.mxu0 0.0
  %5957 = vmatmul.mubr.f32.gmra.mrb[0].mxu0 %v5853
  %v5958 = vpop.f32.mrb[0].mxu0
  %v5959 = vadd.f32 0.0, %v5958
  %v5960 = vpop.f32.mrb[0].mxu0
  %5961 = vmatprep.mubr.f32.mxu0 0.0
  %5962 = vmatmul.mubr.f32.gmra.mrb[0].mxu0 %v5856
  %v5963 = vpop.f32.mrb[0].mxu0
  %v5964 = vadd.f32 0.0, %v5963
  %v5965 = vpop.f32.mrb[0].mxu0
  %5966 = vmatprep.mubr.f32.mxu0 0.0
  %5967 = vmatmul.mubr.f32.gmra.mrb[0].mxu0 %v5859
  %v5968 = vpop.f32.mrb[0].mxu0
  %v5969 = vadd.f32 0.0, %v5968
  %v5970 = vpop.f32.mrb[0].mxu0
  %5971 = vmatprep.mubr.f32.mxu0 0.0
  %5972 = vmatmul.mubr.f32.gmra.mrb[0].mxu0 %v5862
  %v5973 = vpop.f32.mrb[0].mxu0
  %v5974 = vadd.f32 0.0, %v5973
  %v5975 = vpop.f32.mrb[0].mxu0
  %5976 = vmatprep.mubr.f32.mxu0 0.0
  %5977 = vmatmul.mubr.f32.gmra.mrb[0].mxu0 %v5865
  %v5978 = vpop.f32.mrb[0].mxu0
  %v5979 = vadd.f32 0.0, %v5978
  %v5980 = vpop.f32.mrb[0].mxu0
  %5981 = vmatprep.mubr.f32.mxu0 0.0
  %5982 = vmatmul.mubr.f32.gmra.mrb[0].mxu0 %v5868
  %v5983 = vpop.f32.mrb[0].mxu0
  %v5984 = vadd.f32 0.0, %v5983
  %v5985 = vpop.f32.mrb[0].mxu0
  %5986 = vdwg.mxu0
  %v5987 = vld [vmem:[%s8] sm:$0xf]
  %v5989 = vsel %vm2537, %v5939, 0
  %v5992 = vsel %vm2537, %v5944, 0
  %v5995 = vsel %vm2537, %v5949, 0
  %v5998 = vsel %vm2537, %v5954, 0
  %v6001 = vsel %vm2537, %v5959, 0
  %v6004 = vsel %vm2537, %v5964, 0
  %v6007 = vsel %vm2537, %v5969, 0
  %v6010 = vsel %vm2537, %v5974, 0
  %v6013 = vsel %vm2537, %v5979, 0
  %v6016 = vsel %vm2537, %v5984, 0
  %v6019 = vsel %vm2537, %v5987, 0
  %6021 = vmatprep.subr.mxu0 0.0
  %6022 = vmatpush1.xpose.msra.mxu0 %v6019
  %6023 = vmatprep.subr.mxu0 0.0
  %6024 = vmatpush1.xpose.msra.mxu0 0.0
  %6025 = vmatprep.subr.mxu0 0.0
  %6026 = vmatpush1.xpose.msra.mxu0 0.0
  %6027 = vmatprep.subr.mxu0 0.0
  %6028 = vmatpush1.xpose.msra.mxu0 0.0
  %6029 = vmatprep.subr.mxu0 0.0
  %6030 = vmatpush1.xpose.msra.mxu0 0.0
  %6031 = vmatprep.subr.mxu0 0.0
  %6032 = vmatpush1.xpose.msra.mxu0 0.0
  %6033 = vmatprep.subr.mxu0 0.0
  %6034 = vmatpush1.xpose.msra.mxu0 0.0
  %6035 = vmatprep.subr.mxu0 0.0
  %6036 = vmatpush1.xpose.msra.mxu0 0.0
  %6037 = vmatprep.subr.mxu0 0.0
  %6038 = vmatpush1.xpose.msra.mxu0 0.0
  %6039 = vmatprep.subr.mxu0 0.0
  %6040 = vmatpush1.xpose.msra.mxu0 0.0
  %6041 = vmatprep.subr.mxu0 0.0
  %6042 = vmatpush1.xpose.msra.mxu0 0.0
  %6043 = vmatprep.subr.mxu0 0.0
  %6044 = vmatpush1.xpose.msra.mxu0 0.0
  %6045 = vmatprep.subr.mxu0 0.0
  %6046 = vmatpush1.xpose.msra.mxu0 0.0
  %6047 = vmatprep.subr.mxu0 0.0
  %6048 = vmatpush1.xpose.msra.mxu0 0.0
  %6049 = vmatprep.subr.mxu0 0.0
  %6050 = vmatpush1.xpose.msra.mxu0 0.0
  %6051 = vmatprep.subr.mxu0 0.0
  %6052 = vmatpush1.xpose.msra.mxu0 0.0
  %6053 = vmatprep.subr.mxu0 0.0
  %6054 = vmatpush1.xpose.msra.mxu0 0.0
  %6055 = vmatprep.subr.mxu0 0.0
  %6056 = vmatpush1.xpose.msra.mxu0 0.0
  %6057 = vmatprep.subr.mxu0 0.0
  %6058 = vmatpush1.xpose.msra.mxu0 0.0
  %6059 = vmatprep.subr.mxu0 0.0
  %6060 = vmatpush1.xpose.msra.mxu0 0.0
  %6061 = vmatprep.subr.mxu0 0.0
  %6062 = vmatpush1.xpose.msra.mxu0 0.0
  %6063 = vmatprep.subr.mxu0 0.0
  %6064 = vmatpush1.xpose.msra.mxu0 0.0
  %6065 = vmatprep.subr.mxu0 0.0
  %6066 = vmatpush1.xpose.msra.mxu0 0.0
  %6067 = vmatprep.subr.mxu0 0.0
  %6068 = vmatpush1.xpose.msra.mxu0 0.0
  %6069 = vmatprep.subr.mxu0 0.0
  %6070 = vmatpush1.xpose.msra.mxu0 0.0
  %6071 = vmatprep.subr.mxu0 0.0
  %6072 = vmatpush1.xpose.msra.mxu0 0.0
  %6073 = vmatprep.subr.mxu0 0.0
  %6074 = vmatpush1.xpose.msra.mxu0 0.0
  %6075 = vmatprep.subr.mxu0 0.0
  %6076 = vmatpush1.xpose.msra.mxu0 0.0
  %6077 = vmatprep.subr.mxu0 0.0
  %6078 = vmatpush1.xpose.msra.mxu0 0.0
  %6079 = vmatprep.subr.mxu0 0.0
  %6080 = vmatpush1.xpose.msra.mxu0 0.0
  %6081 = vmatprep.subr.mxu0 0.0
  %6082 = vmatpush1.xpose.msra.mxu0 0.0
  %6083 = vmatprep.subr.mxu0 0.0
  %6084 = vmatpush1.xpose.msra.mxu0 0.0
  %6085 = vmatprep.mubr.f32.mxu0 0.0
  %6086 = vmatmul.mubr.f32.gmra.mrb[0].mxu0 %v5989
  %v6087 = vpop.f32.mrb[0].mxu0
  %v6088 = vadd.f32 0.0, %v6087
  %v6089 = vpop.f32.mrb[0].mxu0
  %6090 = vmatprep.mubr.f32.mxu0 0.0
  %6091 = vmatmul.mubr.f32.gmra.mrb[0].mxu0 %v5992
  %v6092 = vpop.f32.mrb[0].mxu0
  %v6093 = vadd.f32 0.0, %v6092
  %v6094 = vpop.f32.mrb[0].mxu0
  %6095 = vmatprep.mubr.f32.mxu0 0.0
  %6096 = vmatmul.mubr.f32.gmra.mrb[0].mxu0 %v5995
  %v6097 = vpop.f32.mrb[0].mxu0
  %v6098 = vadd.f32 0.0, %v6097
  %v6099 = vpop.f32.mrb[0].mxu0
  %6100 = vmatprep.mubr.f32.mxu0 0.0
  %6101 = vmatmul.mubr.f32.gmra.mrb[0].mxu0 %v5998
  %v6102 = vpop.f32.mrb[0].mxu0
  %v6103 = vadd.f32 0.0, %v6102
  %v6104 = vpop.f32.mrb[0].mxu0
  %6105 = vmatprep.mubr.f32.mxu0 0.0
  %6106 = vmatmul.mubr.f32.gmra.mrb[0].mxu0 %v6001
  %v6107 = vpop.f32.mrb[0].mxu0
  %v6108 = vadd.f32 0.0, %v6107
  %v6109 = vpop.f32.mrb[0].mxu0
  %6110 = vmatprep.mubr.f32.mxu0 0.0
  %6111 = vmatmul.mubr.f32.gmra.mrb[0].mxu0 %v6004
  %v6112 = vpop.f32.mrb[0].mxu0
  %v6113 = vadd.f32 0.0, %v6112
  %v6114 = vpop.f32.mrb[0].mxu0
  %6115 = vmatprep.mubr.f32.mxu0 0.0
  %6116 = vmatmul.mubr.f32.gmra.mrb[0].mxu0 %v6007
  %v6117 = vpop.f32.mrb[0].mxu0
  %v6118 = vadd.f32 0.0, %v6117
  %v6119 = vpop.f32.mrb[0].mxu0
  %6120 = vmatprep.mubr.f32.mxu0 0.0
  %6121 = vmatmul.mubr.f32.gmra.mrb[0].mxu0 %v6010
  %v6122 = vpop.f32.mrb[0].mxu0
  %v6123 = vadd.f32 0.0, %v6122
  %v6124 = vpop.f32.mrb[0].mxu0
  %6125 = vmatprep.mubr.f32.mxu0 0.0
  %6126 = vmatmul.mubr.f32.gmra.mrb[0].mxu0 %v6013
  %v6127 = vpop.f32.mrb[0].mxu0
  %v6128 = vadd.f32 0.0, %v6127
  %v6129 = vpop.f32.mrb[0].mxu0
  %6130 = vmatprep.mubr.f32.mxu0 0.0
  %6131 = vmatmul.mubr.f32.gmra.mrb[0].mxu0 %v6016
  %v6132 = vpop.f32.mrb[0].mxu0
  %v6133 = vadd.f32 0.0, %v6132
  %v6134 = vpop.f32.mrb[0].mxu0
  %6135 = vdwg.mxu0
  %v6137 = vlaneseq
  %v6138 = vshrl.u32 %v6137, 7
  %v6139 = vsub.s32 0, %v6138
  %v6140 = vrot.slane %v5505, %v6139
  %v6142 = vadd.f32 %v6140, %v6088
  %v6143 = vadd.f32 %v6140, %v6093
  %v6144 = vadd.f32 %v6140, %v6098
  %v6145 = vadd.f32 %v6140, %v6103
  %v6146 = vadd.f32 %v6140, %v6108
  %v6147 = vadd.f32 %v6140, %v6113
  %v6148 = vadd.f32 %v6140, %v6118
  %v6149 = vadd.f32 %v6140, %v6123
  %v6150 = vadd.f32 %v6140, %v6128
  %v6151 = vadd.f32 %v6140, %v6133
  %s6152 = scalar_lea.vmem %s7, 80
  %v6153 = vld [vmem:[%s6152] sm:$0xff]
  %v6154 = vld [vmem:[%s6152 + $0x8] sm:$0xff]
  %v6155 = vld [vmem:[%s6152 + $0x10] sm:$0xff]
  %v6156 = vld [vmem:[%s6152 + $0x18] sm:$0xff]
  %v6157 = vld [vmem:[%s6152 + $0x20] sm:$0xff]
  %v6158 = vld [vmem:[%s6152 + $0x28] sm:$0xff]
  %v6159 = vld [vmem:[%s6152 + $0x30] sm:$0xff]
  %v6160 = vld [vmem:[%s6152 + $0x38] sm:$0xff]
  %v6161 = vld [vmem:[%s6152 + $0x40] sm:$0xff]
  %v6162 = vld [vmem:[%s6152 + $0x48] sm:$0x3f]
  %6163 = vrot.lane.b32.xlu0 %v5457, 126
  %v6164 = vpop.permute.xlu0 %6163
  %6165 = vrot.lane.b32.xlu0 %v5462, 126
  %v6166 = vpop.permute.xlu0 %6165
  %6167 = vrot.lane.b32.xlu0 %v5467, 126
  %v6168 = vpop.permute.xlu0 %6167
  %6169 = vrot.lane.b32.xlu0 %v5472, 126
  %v6170 = vpop.permute.xlu0 %6169
  %6171 = vrot.lane.b32.xlu0 %v5477, 126
  %v6172 = vpop.permute.xlu0 %6171
  %6173 = vrot.lane.b32.xlu0 %v5482, 126
  %v6174 = vpop.permute.xlu0 %6173
  %6175 = vrot.lane.b32.xlu0 %v5487, 126
  %v6176 = vpop.permute.xlu0 %6175
  %6177 = vrot.lane.b32.xlu0 %v5492, 126
  %v6178 = vpop.permute.xlu0 %6177
  %6179 = vrot.lane.b32.xlu0 %v5497, 126
  %v6180 = vpop.permute.xlu0 %6179
  %6181 = vrot.lane.b32.xlu0 %v5502, 126
  %v6182 = vpop.permute.xlu0 %6181
  %v6183 = vsel %vm2537, %v6164, 0
  %v6185 = vsel %vm2537, %v6166, 0
  %v6187 = vsel %vm2537, %v6168, 0
  %v6189 = vsel %vm2537, %v6170, 0
  %v6191 = vsel %vm2537, %v6172, 0
  %v6193 = vsel %vm2537, %v6174, 0
  %v6195 = vsel %vm2537, %v6176, 0
  %v6197 = vsel %vm2537, %v6178, 0
  %v6199 = vsel %vm2537, %v6180, 0
  %v6201 = vsel %vm2537, %v6182, 0
  %v6204 = vsel %vm2537, %v6153, 0
  %v6207 = vsel %vm2537, %v6154, 0
  %v6210 = vsel %vm2537, %v6155, 0
  %v6213 = vsel %vm2537, %v6156, 0
  %v6216 = vsel %vm2537, %v6157, 0
  %v6219 = vsel %vm2537, %v6158, 0
  %v6222 = vsel %vm2537, %v6159, 0
  %v6225 = vsel %vm2537, %v6160, 0
  %v6228 = vsel %vm2537, %v6161, 0
  %v6231 = vsel %vm2537, %v6162, 0
  %6233 = vmatprep.subr.mxu0 0.0
  %6234 = vmatpush1.xpose.msra.mxu0 %v6204
  %6235 = vmatprep.subr.mxu0 0.0
  %6236 = vmatpush1.xpose.msra.mxu0 %v6207
  %6237 = vmatprep.subr.mxu0 0.0
  %6238 = vmatpush1.xpose.msra.mxu0 %v6210
  %6239 = vmatprep.subr.mxu0 0.0
  %6240 = vmatpush1.xpose.msra.mxu0 %v6213
  %6241 = vmatprep.subr.mxu0 0.0
  %6242 = vmatpush1.xpose.msra.mxu0 %v6216
  %6243 = vmatprep.subr.mxu0 0.0
  %6244 = vmatpush1.xpose.msra.mxu0 %v6219
  %6245 = vmatprep.subr.mxu0 0.0
  %6246 = vmatpush1.xpose.msra.mxu0 %v6222
  %6247 = vmatprep.subr.mxu0 0.0
  %6248 = vmatpush1.xpose.msra.mxu0 %v6225
  %6249 = vmatprep.subr.mxu0 0.0
  %6250 = vmatpush1.xpose.msra.mxu0 %v6228
  %6251 = vmatprep.subr.mxu0 0.0
  %6252 = vmatpush1.xpose.msra.mxu0 %v6231
  %6253 = vmatprep.subr.mxu0 0.0
  %6254 = vmatpush1.xpose.msra.mxu0 0.0
  %6255 = vmatprep.subr.mxu0 0.0
  %6256 = vmatpush1.xpose.msra.mxu0 0.0
  %6257 = vmatprep.subr.mxu0 0.0
  %6258 = vmatpush1.xpose.msra.mxu0 0.0
  %6259 = vmatprep.subr.mxu0 0.0
  %6260 = vmatpush1.xpose.msra.mxu0 0.0
  %6261 = vmatprep.subr.mxu0 0.0
  %6262 = vmatpush1.xpose.msra.mxu0 0.0
  %6263 = vmatprep.subr.mxu0 0.0
  %6264 = vmatpush1.xpose.msra.mxu0 0.0
  %6265 = vmatprep.subr.mxu0 0.0
  %6266 = vmatpush1.xpose.msra.mxu0 0.0
  %6267 = vmatprep.subr.mxu0 0.0
  %6268 = vmatpush1.xpose.msra.mxu0 0.0
  %6269 = vmatprep.subr.mxu0 0.0
  %6270 = vmatpush1.xpose.msra.mxu0 0.0
  %6271 = vmatprep.subr.mxu0 0.0
  %6272 = vmatpush1.xpose.msra.mxu0 0.0
  %6273 = vmatprep.subr.mxu0 0.0
  %6274 = vmatpush1.xpose.msra.mxu0 0.0
  %6275 = vmatprep.subr.mxu0 0.0
  %6276 = vmatpush1.xpose.msra.mxu0 0.0
  %6277 = vmatprep.subr.mxu0 0.0
  %6278 = vmatpush1.xpose.msra.mxu0 0.0
  %6279 = vmatprep.subr.mxu0 0.0
  %6280 = vmatpush1.xpose.msra.mxu0 0.0
  %6281 = vmatprep.subr.mxu0 0.0
  %6282 = vmatpush1.xpose.msra.mxu0 0.0
  %6283 = vmatprep.subr.mxu0 0.0
  %6284 = vmatpush1.xpose.msra.mxu0 0.0
  %6285 = vmatprep.subr.mxu0 0.0
  %6286 = vmatpush1.xpose.msra.mxu0 0.0
  %6287 = vmatprep.subr.mxu0 0.0
  %6288 = vmatpush1.xpose.msra.mxu0 0.0
  %6289 = vmatprep.subr.mxu0 0.0
  %6290 = vmatpush1.xpose.msra.mxu0 0.0
  %6291 = vmatprep.subr.mxu0 0.0
  %6292 = vmatpush1.xpose.msra.mxu0 0.0
  %6293 = vmatprep.subr.mxu0 0.0
  %6294 = vmatpush1.xpose.msra.mxu0 0.0
  %6295 = vmatprep.subr.mxu0 0.0
  %6296 = vmatpush1.xpose.msra.mxu0 0.0
  %6297 = vmatprep.mubr.f32.mxu0 0.0
  %6298 = vmatmul.mubr.f32.gmra.mrb[0].mxu0 %v6183
  %v6299 = vpop.f32.mrb[0].mxu0
  %v6300 = vadd.f32 0.0, %v6299
  %v6301 = vpop.f32.mrb[0].mxu0
  %6302 = vmatprep.mubr.f32.mxu0 0.0
  %6303 = vmatmul.mubr.f32.gmra.mrb[0].mxu0 %v6185
  %v6304 = vpop.f32.mrb[0].mxu0
  %v6305 = vadd.f32 0.0, %v6304
  %v6306 = vpop.f32.mrb[0].mxu0
  %6307 = vmatprep.mubr.f32.mxu0 0.0
  %6308 = vmatmul.mubr.f32.gmra.mrb[0].mxu0 %v6187
  %v6309 = vpop.f32.mrb[0].mxu0
  %v6310 = vadd.f32 0.0, %v6309
  %v6311 = vpop.f32.mrb[0].mxu0
  %6312 = vmatprep.mubr.f32.mxu0 0.0
  %6313 = vmatmul.mubr.f32.gmra.mrb[0].mxu0 %v6189
  %v6314 = vpop.f32.mrb[0].mxu0
  %v6315 = vadd.f32 0.0, %v6314
  %v6316 = vpop.f32.mrb[0].mxu0
  %6317 = vmatprep.mubr.f32.mxu0 0.0
  %6318 = vmatmul.mubr.f32.gmra.mrb[0].mxu0 %v6191
  %v6319 = vpop.f32.mrb[0].mxu0
  %v6320 = vadd.f32 0.0, %v6319
  %v6321 = vpop.f32.mrb[0].mxu0
  %6322 = vmatprep.mubr.f32.mxu0 0.0
  %6323 = vmatmul.mubr.f32.gmra.mrb[0].mxu0 %v6193
  %v6324 = vpop.f32.mrb[0].mxu0
  %v6325 = vadd.f32 0.0, %v6324
  %v6326 = vpop.f32.mrb[0].mxu0
  %6327 = vmatprep.mubr.f32.mxu0 0.0
  %6328 = vmatmul.mubr.f32.gmra.mrb[0].mxu0 %v6195
  %v6329 = vpop.f32.mrb[0].mxu0
  %v6330 = vadd.f32 0.0, %v6329
  %v6331 = vpop.f32.mrb[0].mxu0
  %6332 = vmatprep.mubr.f32.mxu0 0.0
  %6333 = vmatmul.mubr.f32.gmra.mrb[0].mxu0 %v6197
  %v6334 = vpop.f32.mrb[0].mxu0
  %v6335 = vadd.f32 0.0, %v6334
  %v6336 = vpop.f32.mrb[0].mxu0
  %6337 = vmatprep.mubr.f32.mxu0 0.0
  %6338 = vmatmul.mubr.f32.gmra.mrb[0].mxu0 %v6199
  %v6339 = vpop.f32.mrb[0].mxu0
  %v6340 = vadd.f32 0.0, %v6339
  %v6341 = vpop.f32.mrb[0].mxu0
  %6342 = vmatprep.mubr.f32.mxu0 0.0
  %6343 = vmatmul.mubr.f32.gmra.mrb[0].mxu0 %v6201
  %v6344 = vpop.f32.mrb[0].mxu0
  %v6345 = vadd.f32 0.0, %v6344
  %v6346 = vpop.f32.mrb[0].mxu0
  %6347 = vdwg.mxu0
  %v6348 = vmul.f32 %v6300, 0.70710677
  %v6349 = vmul.f32 %v6305, 0.70710677
  %v6350 = vmul.f32 %v6310, 0.70710677
  %v6351 = vmul.f32 %v6315, 0.70710677
  %v6352 = vmul.f32 %v6320, 0.70710677
  %v6353 = vmul.f32 %v6325, 0.70710677
  %v6354 = vmul.f32 %v6330, 0.70710677
  %v6355 = vmul.f32 %v6335, 0.70710677
  %v6356 = vmul.f32 %v6340, 0.70710677
  %v6357 = vmul.f32 %v6345, 0.70710677
  %v6358 = vsel %vm609, %v6348, -inf
  %6359 = vmax.xlane.f32.xlu0 %v6358
  %v6360 = vpop.xlane.xlu0 %6359
  %v6361 = vsel %vm609, %v6349, -inf
  %6362 = vmax.xlane.f32.xlu0 %v6361
  %v6363 = vpop.xlane.xlu0 %6362
  %v6364 = vsel %vm609, %v6350, -inf
  %6365 = vmax.xlane.f32.xlu0 %v6364
  %v6366 = vpop.xlane.xlu0 %6365
  %v6367 = vsel %vm609, %v6351, -inf
  %6368 = vmax.xlane.f32.xlu0 %v6367
  %v6369 = vpop.xlane.xlu0 %6368
  %v6370 = vsel %vm609, %v6352, -inf
  %6371 = vmax.xlane.f32.xlu0 %v6370
  %v6372 = vpop.xlane.xlu0 %6371
  %v6373 = vsel %vm609, %v6353, -inf
  %6374 = vmax.xlane.f32.xlu0 %v6373
  %v6375 = vpop.xlane.xlu0 %6374
  %v6376 = vsel %vm609, %v6354, -inf
  %6377 = vmax.xlane.f32.xlu0 %v6376
  %v6378 = vpop.xlane.xlu0 %6377
  %v6379 = vsel %vm609, %v6355, -inf
  %6380 = vmax.xlane.f32.xlu0 %v6379
  %v6381 = vpop.xlane.xlu0 %6380
  %v6382 = vsel %vm609, %v6356, -inf
  %6383 = vmax.xlane.f32.xlu0 %v6382
  %v6384 = vpop.xlane.xlu0 %6383
  %v6385 = vsel %vm627, %v6357, -inf
  %6386 = vmax.xlane.f32.xlu0 %v6385
  %v6387 = vpop.xlane.xlu0 %6386
  %v6388 = vsub.f32 %v6348, %v6360
  %v6389 = vsub.f32 %v6349, %v6363
  %v6390 = vsub.f32 %v6350, %v6366
  %v6391 = vsub.f32 %v6351, %v6369
  %v6392 = vsub.f32 %v6352, %v6372
  %v6393 = vsub.f32 %v6353, %v6375
  %v6394 = vsub.f32 %v6354, %v6378
  %v6395 = vsub.f32 %v6355, %v6381
  %v6396 = vsub.f32 %v6356, %v6384
  %v6397 = vsub.f32 %v6357, %v6387
  %v6398 = vmul.f32 %v6388, 1.442695
  %v6399 = vpow.pop %v6398
  %v6400 = vmul.f32 %v6389, 1.442695
  %v6401 = vpow.pop %v6400
  %v6402 = vmul.f32 %v6390, 1.442695
  %v6403 = vpow.pop %v6402
  %v6404 = vmul.f32 %v6391, 1.442695
  %v6405 = vpow.pop %v6404
  %v6406 = vmul.f32 %v6392, 1.442695
  %v6407 = vpow.pop %v6406
  %v6408 = vmul.f32 %v6393, 1.442695
  %v6409 = vpow.pop %v6408
  %v6410 = vmul.f32 %v6394, 1.442695
  %v6411 = vpow.pop %v6410
  %v6412 = vmul.f32 %v6395, 1.442695
  %v6413 = vpow.pop %v6412
  %v6414 = vmul.f32 %v6396, 1.442695
  %v6415 = vpow.pop %v6414
  %v6416 = vmul.f32 %v6397, 1.442695
  %v6417 = vpow.pop %v6416
  %v6418 = vsel %vm609, %v6399, 0.0
  %6419 = vadd.xlane.f32.xlu0 %v6418
  %v6420 = vpop.xlane.xlu0 %6419
  %v6421 = vsel %vm609, %v6401, 0.0
  %6422 = vadd.xlane.f32.xlu0 %v6421
  %v6423 = vpop.xlane.xlu0 %6422
  %v6424 = vsel %vm609, %v6403, 0.0
  %6425 = vadd.xlane.f32.xlu0 %v6424
  %v6426 = vpop.xlane.xlu0 %6425
  %v6427 = vsel %vm609, %v6405, 0.0
  %6428 = vadd.xlane.f32.xlu0 %v6427
  %v6429 = vpop.xlane.xlu0 %6428
  %v6430 = vsel %vm609, %v6407, 0.0
  %6431 = vadd.xlane.f32.xlu0 %v6430
  %v6432 = vpop.xlane.xlu0 %6431
  %v6433 = vsel %vm609, %v6409, 0.0
  %6434 = vadd.xlane.f32.xlu0 %v6433
  %v6435 = vpop.xlane.xlu0 %6434
  %v6436 = vsel %vm609, %v6411, 0.0
  %6437 = vadd.xlane.f32.xlu0 %v6436
  %v6438 = vpop.xlane.xlu0 %6437
  %v6439 = vsel %vm609, %v6413, 0.0
  %6440 = vadd.xlane.f32.xlu0 %v6439
  %v6441 = vpop.xlane.xlu0 %6440
  %v6442 = vsel %vm609, %v6415, 0.0
  %6443 = vadd.xlane.f32.xlu0 %v6442
  %v6444 = vpop.xlane.xlu0 %6443
  %v6445 = vsel %vm627, %v6417, 0.0
  %6446 = vadd.xlane.f32.xlu0 %v6445
  %v6447 = vpop.xlane.xlu0 %6446
  %v6448 = vrcp.pop %v6420
  %v6449 = vrcp.pop %v6423
  %v6450 = vrcp.pop %v6426
  %v6451 = vrcp.pop %v6429
  %v6452 = vrcp.pop %v6432
  %v6453 = vrcp.pop %v6435
  %v6454 = vrcp.pop %v6438
  %v6455 = vrcp.pop %v6441
  %v6456 = vrcp.pop %v6444
  %v6457 = vrcp.pop %v6447
  %v6458 = vmul.f32 %v6399, %v6448
  %v6459 = vmul.f32 %v6401, %v6449
  %v6460 = vmul.f32 %v6403, %v6450
  %v6461 = vmul.f32 %v6405, %v6451
  %v6462 = vmul.f32 %v6407, %v6452
  %v6463 = vmul.f32 %v6409, %v6453
  %v6464 = vmul.f32 %v6411, %v6454
  %v6465 = vmul.f32 %v6413, %v6455
  %v6466 = vmul.f32 %v6415, %v6456
  %v6467 = vmul.f32 %v6417, %v6457
  %6468 = vrot.lane.b32.xlu0 %v5457, 122
  %v6469 = vpop.permute.xlu0 %6468
  %6470 = vrot.lane.b32.xlu0 %v5462, 122
  %v6471 = vpop.permute.xlu0 %6470
  %6472 = vrot.lane.b32.xlu0 %v5467, 122
  %v6473 = vpop.permute.xlu0 %6472
  %6474 = vrot.lane.b32.xlu0 %v5472, 122
  %v6475 = vpop.permute.xlu0 %6474
  %6476 = vrot.lane.b32.xlu0 %v5477, 122
  %v6477 = vpop.permute.xlu0 %6476
  %6478 = vrot.lane.b32.xlu0 %v5482, 122
  %v6479 = vpop.permute.xlu0 %6478
  %6480 = vrot.lane.b32.xlu0 %v5487, 122
  %v6481 = vpop.permute.xlu0 %6480
  %6482 = vrot.lane.b32.xlu0 %v5492, 122
  %v6483 = vpop.permute.xlu0 %6482
  %6484 = vrot.lane.b32.xlu0 %v5497, 122
  %v6485 = vpop.permute.xlu0 %6484
  %6486 = vrot.lane.b32.xlu0 %v5502, 122
  %v6487 = vpop.permute.xlu0 %6486
  %v6498 = vsel %vm609, %v6458, 0
  %v6501 = vsel %vm609, %v6459, 0
  %v6504 = vsel %vm609, %v6460, 0
  %v6507 = vsel %vm609, %v6461, 0
  %v6510 = vsel %vm609, %v6462, 0
  %v6513 = vsel %vm609, %v6463, 0
  %v6516 = vsel %vm609, %v6464, 0
  %v6519 = vsel %vm609, %v6465, 0
  %v6522 = vsel %vm609, %v6466, 0
  %v6525 = vsel %vm609, %v6467, 0
  %v6527 = vsel %vm2599, %v6487, 0
  %6529 = vmatprep.subr.mxu0 0.0
  %6530 = vmatpush1.msra.mxu0 %v6469
  %6531 = vmatprep.subr.mxu0 0.0
  %6532 = vmatpush1.msra.mxu0 %v6471
  %6533 = vmatprep.subr.mxu0 0.0
  %6534 = vmatpush1.msra.mxu0 %v6473
  %6535 = vmatprep.subr.mxu0 0.0
  %6536 = vmatpush1.msra.mxu0 %v6475
  %6537 = vmatprep.subr.mxu0 0.0
  %6538 = vmatpush1.msra.mxu0 %v6477
  %6539 = vmatprep.subr.mxu0 0.0
  %6540 = vmatpush1.msra.mxu0 %v6479
  %6541 = vmatprep.subr.mxu0 0.0
  %6542 = vmatpush1.msra.mxu0 %v6481
  %6543 = vmatprep.subr.mxu0 0.0
  %6544 = vmatpush1.msra.mxu0 %v6483
  %6545 = vmatprep.subr.mxu0 0.0
  %6546 = vmatpush1.msra.mxu0 %v6485
  %6547 = vmatprep.subr.mxu0 0.0
  %6548 = vmatpush1.msra.mxu0 %v6527
  %6549 = vmatprep.subr.mxu0 0.0
  %6550 = vmatpush1.msra.mxu0 0.0
  %6551 = vmatprep.subr.mxu0 0.0
  %6552 = vmatpush1.msra.mxu0 0.0
  %6553 = vmatprep.subr.mxu0 0.0
  %6554 = vmatpush1.msra.mxu0 0.0
  %6555 = vmatprep.subr.mxu0 0.0
  %6556 = vmatpush1.msra.mxu0 0.0
  %6557 = vmatprep.subr.mxu0 0.0
  %6558 = vmatpush1.msra.mxu0 0.0
  %6559 = vmatprep.subr.mxu0 0.0
  %6560 = vmatpush1.msra.mxu0 0.0
  %6561 = vmatprep.subr.mxu0 0.0
  %6562 = vmatpush1.msra.mxu0 0.0
  %6563 = vmatprep.subr.mxu0 0.0
  %6564 = vmatpush1.msra.mxu0 0.0
  %6565 = vmatprep.subr.mxu0 0.0
  %6566 = vmatpush1.msra.mxu0 0.0
  %6567 = vmatprep.subr.mxu0 0.0
  %6568 = vmatpush1.msra.mxu0 0.0
  %6569 = vmatprep.subr.mxu0 0.0
  %6570 = vmatpush1.msra.mxu0 0.0
  %6571 = vmatprep.subr.mxu0 0.0
  %6572 = vmatpush1.msra.mxu0 0.0
  %6573 = vmatprep.subr.mxu0 0.0
  %6574 = vmatpush1.msra.mxu0 0.0
  %6575 = vmatprep.subr.mxu0 0.0
  %6576 = vmatpush1.msra.mxu0 0.0
  %6577 = vmatprep.subr.mxu0 0.0
  %6578 = vmatpush1.msra.mxu0 0.0
  %6579 = vmatprep.subr.mxu0 0.0
  %6580 = vmatpush1.msra.mxu0 0.0
  %6581 = vmatprep.subr.mxu0 0.0
  %6582 = vmatpush1.msra.mxu0 0.0
  %6583 = vmatprep.subr.mxu0 0.0
  %6584 = vmatpush1.msra.mxu0 0.0
  %6585 = vmatprep.subr.mxu0 0.0
  %6586 = vmatpush1.msra.mxu0 0.0
  %6587 = vmatprep.subr.mxu0 0.0
  %6588 = vmatpush1.msra.mxu0 0.0
  %6589 = vmatprep.subr.mxu0 0.0
  %6590 = vmatpush1.msra.mxu0 0.0
  %6591 = vmatprep.subr.mxu0 0.0
  %6592 = vmatpush1.msra.mxu0 0.0
  %6593 = vmatprep.mubr.f32.mxu0 0.0
  %6594 = vmatmul.mubr.f32.gmra.mrb[0].mxu0 %v6498
  %v6595 = vpop.f32.mrb[0].mxu0
  %v6596 = vadd.f32 0.0, %v6595
  %v6597 = vpop.f32.mrb[0].mxu0
  %6598 = vmatprep.mubr.f32.mxu0 0.0
  %6599 = vmatmul.mubr.f32.gmra.mrb[0].mxu0 %v6501
  %v6600 = vpop.f32.mrb[0].mxu0
  %v6601 = vadd.f32 0.0, %v6600
  %v6602 = vpop.f32.mrb[0].mxu0
  %6603 = vmatprep.mubr.f32.mxu0 0.0
  %6604 = vmatmul.mubr.f32.gmra.mrb[0].mxu0 %v6504
  %v6605 = vpop.f32.mrb[0].mxu0
  %v6606 = vadd.f32 0.0, %v6605
  %v6607 = vpop.f32.mrb[0].mxu0
  %6608 = vmatprep.mubr.f32.mxu0 0.0
  %6609 = vmatmul.mubr.f32.gmra.mrb[0].mxu0 %v6507
  %v6610 = vpop.f32.mrb[0].mxu0
  %v6611 = vadd.f32 0.0, %v6610
  %v6612 = vpop.f32.mrb[0].mxu0
  %6613 = vmatprep.mubr.f32.mxu0 0.0
  %6614 = vmatmul.mubr.f32.gmra.mrb[0].mxu0 %v6510
  %v6615 = vpop.f32.mrb[0].mxu0
  %v6616 = vadd.f32 0.0, %v6615
  %v6617 = vpop.f32.mrb[0].mxu0
  %6618 = vmatprep.mubr.f32.mxu0 0.0
  %6619 = vmatmul.mubr.f32.gmra.mrb[0].mxu0 %v6513
  %v6620 = vpop.f32.mrb[0].mxu0
  %v6621 = vadd.f32 0.0, %v6620
  %v6622 = vpop.f32.mrb[0].mxu0
  %6623 = vmatprep.mubr.f32.mxu0 0.0
  %6624 = vmatmul.mubr.f32.gmra.mrb[0].mxu0 %v6516
  %v6625 = vpop.f32.mrb[0].mxu0
  %v6626 = vadd.f32 0.0, %v6625
  %v6627 = vpop.f32.mrb[0].mxu0
  %6628 = vmatprep.mubr.f32.mxu0 0.0
  %6629 = vmatmul.mubr.f32.gmra.mrb[0].mxu0 %v6519
  %v6630 = vpop.f32.mrb[0].mxu0
  %v6631 = vadd.f32 0.0, %v6630
  %v6632 = vpop.f32.mrb[0].mxu0
  %6633 = vmatprep.mubr.f32.mxu0 0.0
  %6634 = vmatmul.mubr.f32.gmra.mrb[0].mxu0 %v6522
  %v6635 = vpop.f32.mrb[0].mxu0
  %v6636 = vadd.f32 0.0, %v6635
  %v6637 = vpop.f32.mrb[0].mxu0
  %6638 = vmatprep.mubr.f32.mxu0 0.0
  %6639 = vmatmul.mubr.f32.gmra.mrb[0].mxu0 %v6525
  %v6640 = vpop.f32.mrb[0].mxu0
  %v6641 = vadd.f32 0.0, %v6640
  %v6642 = vpop.f32.mrb[0].mxu0
  %6643 = vdwg.mxu0
  %s6644 = scalar_lea.vmem %s8, 4
  %v6645 = vld [vmem:[%s6644] sm:$0xf]
  %v6647 = vsel %vm2537, %v6596, 0
  %v6650 = vsel %vm2537, %v6601, 0
  %v6653 = vsel %vm2537, %v6606, 0
  %v6656 = vsel %vm2537, %v6611, 0
  %v6659 = vsel %vm2537, %v6616, 0
  %v6662 = vsel %vm2537, %v6621, 0
  %v6665 = vsel %vm2537, %v6626, 0
  %v6668 = vsel %vm2537, %v6631, 0
  %v6671 = vsel %vm2537, %v6636, 0
  %v6674 = vsel %vm2537, %v6641, 0
  %v6677 = vsel %vm2537, %v6645, 0
  %6679 = vmatprep.subr.mxu0 0.0
  %6680 = vmatpush1.xpose.msra.mxu0 %v6677
  %6681 = vmatprep.subr.mxu0 0.0
  %6682 = vmatpush1.xpose.msra.mxu0 0.0
  %6683 = vmatprep.subr.mxu0 0.0
  %6684 = vmatpush1.xpose.msra.mxu0 0.0
  %6685 = vmatprep.subr.mxu0 0.0
  %6686 = vmatpush1.xpose.msra.mxu0 0.0
  %6687 = vmatprep.subr.mxu0 0.0
  %6688 = vmatpush1.xpose.msra.mxu0 0.0
  %6689 = vmatprep.subr.mxu0 0.0
  %6690 = vmatpush1.xpose.msra.mxu0 0.0
  %6691 = vmatprep.subr.mxu0 0.0
  %6692 = vmatpush1.xpose.msra.mxu0 0.0
  %6693 = vmatprep.subr.mxu0 0.0
  %6694 = vmatpush1.xpose.msra.mxu0 0.0
  %6695 = vmatprep.subr.mxu0 0.0
  %6696 = vmatpush1.xpose.msra.mxu0 0.0
  %6697 = vmatprep.subr.mxu0 0.0
  %6698 = vmatpush1.xpose.msra.mxu0 0.0
  %6699 = vmatprep.subr.mxu0 0.0
  %6700 = vmatpush1.xpose.msra.mxu0 0.0
  %6701 = vmatprep.subr.mxu0 0.0
  %6702 = vmatpush1.xpose.msra.mxu0 0.0
  %6703 = vmatprep.subr.mxu0 0.0
  %6704 = vmatpush1.xpose.msra.mxu0 0.0
  %6705 = vmatprep.subr.mxu0 0.0
  %6706 = vmatpush1.xpose.msra.mxu0 0.0
  %6707 = vmatprep.subr.mxu0 0.0
  %6708 = vmatpush1.xpose.msra.mxu0 0.0
  %6709 = vmatprep.subr.mxu0 0.0
  %6710 = vmatpush1.xpose.msra.mxu0 0.0
  %6711 = vmatprep.subr.mxu0 0.0
  %6712 = vmatpush1.xpose.msra.mxu0 0.0
  %6713 = vmatprep.subr.mxu0 0.0
  %6714 = vmatpush1.xpose.msra.mxu0 0.0
  %6715 = vmatprep.subr.mxu0 0.0
  %6716 = vmatpush1.xpose.msra.mxu0 0.0
  %6717 = vmatprep.subr.mxu0 0.0
  %6718 = vmatpush1.xpose.msra.mxu0 0.0
  %6719 = vmatprep.subr.mxu0 0.0
  %6720 = vmatpush1.xpose.msra.mxu0 0.0
  %6721 = vmatprep.subr.mxu0 0.0
  %6722 = vmatpush1.xpose.msra.mxu0 0.0
  %6723 = vmatprep.subr.mxu0 0.0
  %6724 = vmatpush1.xpose.msra.mxu0 0.0
  %6725 = vmatprep.subr.mxu0 0.0
  %6726 = vmatpush1.xpose.msra.mxu0 0.0
  %6727 = vmatprep.subr.mxu0 0.0
  %6728 = vmatpush1.xpose.msra.mxu0 0.0
  %6729 = vmatprep.subr.mxu0 0.0
  %6730 = vmatpush1.xpose.msra.mxu0 0.0
  %6731 = vmatprep.subr.mxu0 0.0
  %6732 = vmatpush1.xpose.msra.mxu0 0.0
  %6733 = vmatprep.subr.mxu0 0.0
  %6734 = vmatpush1.xpose.msra.mxu0 0.0
  %6735 = vmatprep.subr.mxu0 0.0
  %6736 = vmatpush1.xpose.msra.mxu0 0.0
  %6737 = vmatprep.subr.mxu0 0.0
  %6738 = vmatpush1.xpose.msra.mxu0 0.0
  %6739 = vmatprep.subr.mxu0 0.0
  %6740 = vmatpush1.xpose.msra.mxu0 0.0
  %6741 = vmatprep.subr.mxu0 0.0
  %6742 = vmatpush1.xpose.msra.mxu0 0.0
  %6743 = vmatprep.mubr.f32.mxu0 0.0
  %6744 = vmatmul.mubr.f32.gmra.mrb[0].mxu0 %v6647
  %v6745 = vpop.f32.mrb[0].mxu0
  %v6746 = vadd.f32 0.0, %v6745
  %v6747 = vpop.f32.mrb[0].mxu0
  %6748 = vmatprep.mubr.f32.mxu0 0.0
  %6749 = vmatmul.mubr.f32.gmra.mrb[0].mxu0 %v6650
  %v6750 = vpop.f32.mrb[0].mxu0
  %v6751 = vadd.f32 0.0, %v6750
  %v6752 = vpop.f32.mrb[0].mxu0
  %6753 = vmatprep.mubr.f32.mxu0 0.0
  %6754 = vmatmul.mubr.f32.gmra.mrb[0].mxu0 %v6653
  %v6755 = vpop.f32.mrb[0].mxu0
  %v6756 = vadd.f32 0.0, %v6755
  %v6757 = vpop.f32.mrb[0].mxu0
  %6758 = vmatprep.mubr.f32.mxu0 0.0
  %6759 = vmatmul.mubr.f32.gmra.mrb[0].mxu0 %v6656
  %v6760 = vpop.f32.mrb[0].mxu0
  %v6761 = vadd.f32 0.0, %v6760
  %v6762 = vpop.f32.mrb[0].mxu0
  %6763 = vmatprep.mubr.f32.mxu0 0.0
  %6764 = vmatmul.mubr.f32.gmra.mrb[0].mxu0 %v6659
  %v6765 = vpop.f32.mrb[0].mxu0
  %v6766 = vadd.f32 0.0, %v6765
  %v6767 = vpop.f32.mrb[0].mxu0
  %6768 = vmatprep.mubr.f32.mxu0 0.0
  %6769 = vmatmul.mubr.f32.gmra.mrb[0].mxu0 %v6662
  %v6770 = vpop.f32.mrb[0].mxu0
  %v6771 = vadd.f32 0.0, %v6770
  %v6772 = vpop.f32.mrb[0].mxu0
  %6773 = vmatprep.mubr.f32.mxu0 0.0
  %6774 = vmatmul.mubr.f32.gmra.mrb[0].mxu0 %v6665
  %v6775 = vpop.f32.mrb[0].mxu0
  %v6776 = vadd.f32 0.0, %v6775
  %v6777 = vpop.f32.mrb[0].mxu0
  %6778 = vmatprep.mubr.f32.mxu0 0.0
  %6779 = vmatmul.mubr.f32.gmra.mrb[0].mxu0 %v6668
  %v6780 = vpop.f32.mrb[0].mxu0
  %v6781 = vadd.f32 0.0, %v6780
  %v6782 = vpop.f32.mrb[0].mxu0
  %6783 = vmatprep.mubr.f32.mxu0 0.0
  %6784 = vmatmul.mubr.f32.gmra.mrb[0].mxu0 %v6671
  %v6785 = vpop.f32.mrb[0].mxu0
  %v6786 = vadd.f32 0.0, %v6785
  %v6787 = vpop.f32.mrb[0].mxu0
  %6788 = vmatprep.mubr.f32.mxu0 0.0
  %6789 = vmatmul.mubr.f32.gmra.mrb[0].mxu0 %v6674
  %v6790 = vpop.f32.mrb[0].mxu0
  %v6791 = vadd.f32 0.0, %v6790
  %v6792 = vpop.f32.mrb[0].mxu0
  %6793 = vdwg.mxu0
  %v6794 = vadd.f32 %v6142, %v6746
  %v6795 = vadd.f32 %v6143, %v6751
  %v6796 = vadd.f32 %v6144, %v6756
  %v6797 = vadd.f32 %v6145, %v6761
  %v6798 = vadd.f32 %v6146, %v6766
  %v6799 = vadd.f32 %v6147, %v6771
  %v6800 = vadd.f32 %v6148, %v6776
  %v6801 = vadd.f32 %v6149, %v6781
  %v6802 = vadd.f32 %v6150, %v6786
  %v6803 = vadd.f32 %v6151, %v6791
  %6804 = vrot.lane.b32.xlu0 %v5346, 124
  %v6805 = vpop.permute.xlu0 %6804
  %6806 = vrot.lane.b32.xlu0 %v5347, 124
  %v6807 = vpop.permute.xlu0 %6806
  %6808 = vrot.lane.b32.xlu0 %v5348, 124
  %v6809 = vpop.permute.xlu0 %6808
  %6810 = vrot.lane.b32.xlu0 %v5349, 124
  %v6811 = vpop.permute.xlu0 %6810
  %6812 = vrot.lane.b32.xlu0 %v5350, 124
  %v6813 = vpop.permute.xlu0 %6812
  %6814 = vrot.lane.b32.xlu0 %v5351, 124
  %v6815 = vpop.permute.xlu0 %6814
  %6816 = vrot.lane.b32.xlu0 %v5352, 124
  %v6817 = vpop.permute.xlu0 %6816
  %6818 = vrot.lane.b32.xlu0 %v5353, 124
  %v6819 = vpop.permute.xlu0 %6818
  %6820 = vrot.lane.b32.xlu0 %v5354, 124
  %v6821 = vpop.permute.xlu0 %6820
  %6822 = vrot.lane.b32.xlu0 %v5355, 124
  %v6823 = vpop.permute.xlu0 %6822
  %v6824 = vsel %vm5096, %v6805, 0
  %v6826 = vsel %vm5096, %v6807, 0
  %v6828 = vsel %vm5096, %v6809, 0
  %v6830 = vsel %vm5096, %v6811, 0
  %v6832 = vsel %vm5096, %v6813, 0
  %v6834 = vsel %vm5096, %v6815, 0
  %v6836 = vsel %vm5096, %v6817, 0
  %v6838 = vsel %vm5096, %v6819, 0
  %v6840 = vsel %vm5096, %v6821, 0
  %v6842 = vsel %vm5096, %v6823, 0
  %6844 = vmatprep.subr.mxu0 0.0
  %6845 = vmatpush1.xpose.msra.mxu0 %v5388
  %6846 = vmatprep.subr.mxu0 0.0
  %6847 = vmatpush1.xpose.msra.mxu0 0.0
  %6848 = vmatprep.subr.mxu0 0.0
  %6849 = vmatpush1.xpose.msra.mxu0 0.0
  %6850 = vmatprep.subr.mxu0 0.0
  %6851 = vmatpush1.xpose.msra.mxu0 0.0
  %6852 = vmatprep.subr.mxu0 0.0
  %6853 = vmatpush1.xpose.msra.mxu0 0.0
  %6854 = vmatprep.subr.mxu0 0.0
  %6855 = vmatpush1.xpose.msra.mxu0 0.0
  %6856 = vmatprep.subr.mxu0 0.0
  %6857 = vmatpush1.xpose.msra.mxu0 0.0
  %6858 = vmatprep.subr.mxu0 0.0
  %6859 = vmatpush1.xpose.msra.mxu0 0.0
  %6860 = vmatprep.subr.mxu0 0.0
  %6861 = vmatpush1.xpose.msra.mxu0 0.0
  %6862 = vmatprep.subr.mxu0 0.0
  %6863 = vmatpush1.xpose.msra.mxu0 0.0
  %6864 = vmatprep.subr.mxu0 0.0
  %6865 = vmatpush1.xpose.msra.mxu0 0.0
  %6866 = vmatprep.subr.mxu0 0.0
  %6867 = vmatpush1.xpose.msra.mxu0 0.0
  %6868 = vmatprep.subr.mxu0 0.0
  %6869 = vmatpush1.xpose.msra.mxu0 0.0
  %6870 = vmatprep.subr.mxu0 0.0
  %6871 = vmatpush1.xpose.msra.mxu0 0.0
  %6872 = vmatprep.subr.mxu0 0.0
  %6873 = vmatpush1.xpose.msra.mxu0 0.0
  %6874 = vmatprep.subr.mxu0 0.0
  %6875 = vmatpush1.xpose.msra.mxu0 0.0
  %6876 = vmatprep.subr.mxu0 0.0
  %6877 = vmatpush1.xpose.msra.mxu0 0.0
  %6878 = vmatprep.subr.mxu0 0.0
  %6879 = vmatpush1.xpose.msra.mxu0 0.0
  %6880 = vmatprep.subr.mxu0 0.0
  %6881 = vmatpush1.xpose.msra.mxu0 0.0
  %6882 = vmatprep.subr.mxu0 0.0
  %6883 = vmatpush1.xpose.msra.mxu0 0.0
  %6884 = vmatprep.subr.mxu0 0.0
  %6885 = vmatpush1.xpose.msra.mxu0 0.0
  %6886 = vmatprep.subr.mxu0 0.0
  %6887 = vmatpush1.xpose.msra.mxu0 0.0
  %6888 = vmatprep.subr.mxu0 0.0
  %6889 = vmatpush1.xpose.msra.mxu0 0.0
  %6890 = vmatprep.subr.mxu0 0.0
  %6891 = vmatpush1.xpose.msra.mxu0 0.0
  %6892 = vmatprep.subr.mxu0 0.0
  %6893 = vmatpush1.xpose.msra.mxu0 0.0
  %6894 = vmatprep.subr.mxu0 0.0
  %6895 = vmatpush1.xpose.msra.mxu0 0.0
  %6896 = vmatprep.subr.mxu0 0.0
  %6897 = vmatpush1.xpose.msra.mxu0 0.0
  %6898 = vmatprep.subr.mxu0 0.0
  %6899 = vmatpush1.xpose.msra.mxu0 0.0
  %6900 = vmatprep.subr.mxu0 0.0
  %6901 = vmatpush1.xpose.msra.mxu0 0.0
  %6902 = vmatprep.subr.mxu0 0.0
  %6903 = vmatpush1.xpose.msra.mxu0 0.0
  %6904 = vmatprep.subr.mxu0 0.0
  %6905 = vmatpush1.xpose.msra.mxu0 0.0
  %6906 = vmatprep.subr.mxu0 0.0
  %6907 = vmatpush1.xpose.msra.mxu0 0.0
  %6908 = vmatprep.mubr.f32.mxu0 0.0
  %6909 = vmatmul.mubr.f32.gmra.mrb[0].mxu0 %v6824
  %v6910 = vpop.f32.mrb[0].mxu0
  %v6911 = vadd.f32 0.0, %v6910
  %v6912 = vpop.f32.mrb[0].mxu0
  %6913 = vmatprep.mubr.f32.mxu0 0.0
  %6914 = vmatmul.mubr.f32.gmra.mrb[0].mxu0 %v6826
  %v6915 = vpop.f32.mrb[0].mxu0
  %v6916 = vadd.f32 0.0, %v6915
  %v6917 = vpop.f32.mrb[0].mxu0
  %6918 = vmatprep.mubr.f32.mxu0 0.0
  %6919 = vmatmul.mubr.f32.gmra.mrb[0].mxu0 %v6828
  %v6920 = vpop.f32.mrb[0].mxu0
  %v6921 = vadd.f32 0.0, %v6920
  %v6922 = vpop.f32.mrb[0].mxu0
  %6923 = vmatprep.mubr.f32.mxu0 0.0
  %6924 = vmatmul.mubr.f32.gmra.mrb[0].mxu0 %v6830
  %v6925 = vpop.f32.mrb[0].mxu0
  %v6926 = vadd.f32 0.0, %v6925
  %v6927 = vpop.f32.mrb[0].mxu0
  %6928 = vmatprep.mubr.f32.mxu0 0.0
  %6929 = vmatmul.mubr.f32.gmra.mrb[0].mxu0 %v6832
  %v6930 = vpop.f32.mrb[0].mxu0
  %v6931 = vadd.f32 0.0, %v6930
  %v6932 = vpop.f32.mrb[0].mxu0
  %6933 = vmatprep.mubr.f32.mxu0 0.0
  %6934 = vmatmul.mubr.f32.gmra.mrb[0].mxu0 %v6834
  %v6935 = vpop.f32.mrb[0].mxu0
  %v6936 = vadd.f32 0.0, %v6935
  %v6937 = vpop.f32.mrb[0].mxu0
  %6938 = vmatprep.mubr.f32.mxu0 0.0
  %6939 = vmatmul.mubr.f32.gmra.mrb[0].mxu0 %v6836
  %v6940 = vpop.f32.mrb[0].mxu0
  %v6941 = vadd.f32 0.0, %v6940
  %v6942 = vpop.f32.mrb[0].mxu0
  %6943 = vmatprep.mubr.f32.mxu0 0.0
  %6944 = vmatmul.mubr.f32.gmra.mrb[0].mxu0 %v6838
  %v6945 = vpop.f32.mrb[0].mxu0
  %v6946 = vadd.f32 0.0, %v6945
  %v6947 = vpop.f32.mrb[0].mxu0
  %6948 = vmatprep.mubr.f32.mxu0 0.0
  %6949 = vmatmul.mubr.f32.gmra.mrb[0].mxu0 %v6840
  %v6950 = vpop.f32.mrb[0].mxu0
  %v6951 = vadd.f32 0.0, %v6950
  %v6952 = vpop.f32.mrb[0].mxu0
  %6953 = vmatprep.mubr.f32.mxu0 0.0
  %6954 = vmatmul.mubr.f32.gmra.mrb[0].mxu0 %v6842
  %v6955 = vpop.f32.mrb[0].mxu0
  %v6956 = vadd.f32 0.0, %v6955
  %v6957 = vpop.f32.mrb[0].mxu0
  %6958 = vdwg.mxu0
  %v6960 = vsel %vm2537, %v6911, 0
  %v6963 = vsel %vm2537, %v6916, 0
  %v6966 = vsel %vm2537, %v6921, 0
  %v6969 = vsel %vm2537, %v6926, 0
  %v6972 = vsel %vm2537, %v6931, 0
  %v6975 = vsel %vm2537, %v6936, 0
  %v6978 = vsel %vm2537, %v6941, 0
  %v6981 = vsel %vm2537, %v6946, 0
  %v6984 = vsel %vm2537, %v6951, 0
  %v6987 = vsel %vm2537, %v6956, 0
  %6989 = vmatprep.subr.mxu0 0.0
  %6990 = vmatpush1.xpose.msra.mxu0 %v5547
  %6991 = vmatprep.subr.mxu0 0.0
  %6992 = vmatpush1.xpose.msra.mxu0 %v5550
  %6993 = vmatprep.subr.mxu0 0.0
  %6994 = vmatpush1.xpose.msra.mxu0 %v5553
  %6995 = vmatprep.subr.mxu0 0.0
  %6996 = vmatpush1.xpose.msra.mxu0 %v5556
  %6997 = vmatprep.subr.mxu0 0.0
  %6998 = vmatpush1.xpose.msra.mxu0 %v5559
  %6999 = vmatprep.subr.mxu0 0.0
  %7000 = vmatpush1.xpose.msra.mxu0 %v5562
  %7001 = vmatprep.subr.mxu0 0.0
  %7002 = vmatpush1.xpose.msra.mxu0 %v5565
  %7003 = vmatprep.subr.mxu0 0.0
  %7004 = vmatpush1.xpose.msra.mxu0 %v5568
  %7005 = vmatprep.subr.mxu0 0.0
  %7006 = vmatpush1.xpose.msra.mxu0 %v5571
  %7007 = vmatprep.subr.mxu0 0.0
  %7008 = vmatpush1.xpose.msra.mxu0 %v5574
  %7009 = vmatprep.subr.mxu0 0.0
  %7010 = vmatpush1.xpose.msra.mxu0 0.0
  %7011 = vmatprep.subr.mxu0 0.0
  %7012 = vmatpush1.xpose.msra.mxu0 0.0
  %7013 = vmatprep.subr.mxu0 0.0
  %7014 = vmatpush1.xpose.msra.mxu0 0.0
  %7015 = vmatprep.subr.mxu0 0.0
  %7016 = vmatpush1.xpose.msra.mxu0 0.0
  %7017 = vmatprep.subr.mxu0 0.0
  %7018 = vmatpush1.xpose.msra.mxu0 0.0
  %7019 = vmatprep.subr.mxu0 0.0
  %7020 = vmatpush1.xpose.msra.mxu0 0.0
  %7021 = vmatprep.subr.mxu0 0.0
  %7022 = vmatpush1.xpose.msra.mxu0 0.0
  %7023 = vmatprep.subr.mxu0 0.0
  %7024 = vmatpush1.xpose.msra.mxu0 0.0
  %7025 = vmatprep.subr.mxu0 0.0
  %7026 = vmatpush1.xpose.msra.mxu0 0.0
  %7027 = vmatprep.subr.mxu0 0.0
  %7028 = vmatpush1.xpose.msra.mxu0 0.0
  %7029 = vmatprep.subr.mxu0 0.0
  %7030 = vmatpush1.xpose.msra.mxu0 0.0
  %7031 = vmatprep.subr.mxu0 0.0
  %7032 = vmatpush1.xpose.msra.mxu0 0.0
  %7033 = vmatprep.subr.mxu0 0.0
  %7034 = vmatpush1.xpose.msra.mxu0 0.0
  %7035 = vmatprep.subr.mxu0 0.0
  %7036 = vmatpush1.xpose.msra.mxu0 0.0
  %7037 = vmatprep.subr.mxu0 0.0
  %7038 = vmatpush1.xpose.msra.mxu0 0.0
  %7039 = vmatprep.subr.mxu0 0.0
  %7040 = vmatpush1.xpose.msra.mxu0 0.0
  %7041 = vmatprep.subr.mxu0 0.0
  %7042 = vmatpush1.xpose.msra.mxu0 0.0
  %7043 = vmatprep.subr.mxu0 0.0
  %7044 = vmatpush1.xpose.msra.mxu0 0.0
  %7045 = vmatprep.subr.mxu0 0.0
  %7046 = vmatpush1.xpose.msra.mxu0 0.0
  %7047 = vmatprep.subr.mxu0 0.0
  %7048 = vmatpush1.xpose.msra.mxu0 0.0
  %7049 = vmatprep.subr.mxu0 0.0
  %7050 = vmatpush1.xpose.msra.mxu0 0.0
  %7051 = vmatprep.subr.mxu0 0.0
  %7052 = vmatpush1.xpose.msra.mxu0 0.0
  %7053 = vmatprep.mubr.f32.mxu0 0.0
  %7054 = vmatmul.mubr.f32.gmra.mrb[0].mxu0 %v6960
  %v7055 = vpop.f32.mrb[0].mxu0
  %v7056 = vadd.f32 0.0, %v7055
  %v7057 = vpop.f32.mrb[0].mxu0
  %7058 = vmatprep.mubr.f32.mxu0 0.0
  %7059 = vmatmul.mubr.f32.gmra.mrb[0].mxu0 %v6963
  %v7060 = vpop.f32.mrb[0].mxu0
  %v7061 = vadd.f32 0.0, %v7060
  %v7062 = vpop.f32.mrb[0].mxu0
  %7063 = vmatprep.mubr.f32.mxu0 0.0
  %7064 = vmatmul.mubr.f32.gmra.mrb[0].mxu0 %v6966
  %v7065 = vpop.f32.mrb[0].mxu0
  %v7066 = vadd.f32 0.0, %v7065
  %v7067 = vpop.f32.mrb[0].mxu0
  %7068 = vmatprep.mubr.f32.mxu0 0.0
  %7069 = vmatmul.mubr.f32.gmra.mrb[0].mxu0 %v6969
  %v7070 = vpop.f32.mrb[0].mxu0
  %v7071 = vadd.f32 0.0, %v7070
  %v7072 = vpop.f32.mrb[0].mxu0
  %7073 = vmatprep.mubr.f32.mxu0 0.0
  %7074 = vmatmul.mubr.f32.gmra.mrb[0].mxu0 %v6972
  %v7075 = vpop.f32.mrb[0].mxu0
  %v7076 = vadd.f32 0.0, %v7075
  %v7077 = vpop.f32.mrb[0].mxu0
  %7078 = vmatprep.mubr.f32.mxu0 0.0
  %7079 = vmatmul.mubr.f32.gmra.mrb[0].mxu0 %v6975
  %v7080 = vpop.f32.mrb[0].mxu0
  %v7081 = vadd.f32 0.0, %v7080
  %v7082 = vpop.f32.mrb[0].mxu0
  %7083 = vmatprep.mubr.f32.mxu0 0.0
  %7084 = vmatmul.mubr.f32.gmra.mrb[0].mxu0 %v6978
  %v7085 = vpop.f32.mrb[0].mxu0
  %v7086 = vadd.f32 0.0, %v7085
  %v7087 = vpop.f32.mrb[0].mxu0
  %7088 = vmatprep.mubr.f32.mxu0 0.0
  %7089 = vmatmul.mubr.f32.gmra.mrb[0].mxu0 %v6981
  %v7090 = vpop.f32.mrb[0].mxu0
  %v7091 = vadd.f32 0.0, %v7090
  %v7092 = vpop.f32.mrb[0].mxu0
  %7093 = vmatprep.mubr.f32.mxu0 0.0
  %7094 = vmatmul.mubr.f32.gmra.mrb[0].mxu0 %v6984
  %v7095 = vpop.f32.mrb[0].mxu0
  %v7096 = vadd.f32 0.0, %v7095
  %v7097 = vpop.f32.mrb[0].mxu0
  %7098 = vmatprep.mubr.f32.mxu0 0.0
  %7099 = vmatmul.mubr.f32.gmra.mrb[0].mxu0 %v6987
  %v7100 = vpop.f32.mrb[0].mxu0
  %v7101 = vadd.f32 0.0, %v7100
  %v7102 = vpop.f32.mrb[0].mxu0
  %7103 = vdwg.mxu0
  %v7104 = vmul.f32 %v7056, 0.70710677
  %v7105 = vmul.f32 %v7061, 0.70710677
  %v7106 = vmul.f32 %v7066, 0.70710677
  %v7107 = vmul.f32 %v7071, 0.70710677
  %v7108 = vmul.f32 %v7076, 0.70710677
  %v7109 = vmul.f32 %v7081, 0.70710677
  %v7110 = vmul.f32 %v7086, 0.70710677
  %v7111 = vmul.f32 %v7091, 0.70710677
  %v7112 = vmul.f32 %v7096, 0.70710677
  %v7113 = vmul.f32 %v7101, 0.70710677
  %v7114 = vsel %vm609, %v7104, -inf
  %7115 = vmax.xlane.f32.xlu0 %v7114
  %v7116 = vpop.xlane.xlu0 %7115
  %v7117 = vsel %vm609, %v7105, -inf
  %7118 = vmax.xlane.f32.xlu0 %v7117
  %v7119 = vpop.xlane.xlu0 %7118
  %v7120 = vsel %vm609, %v7106, -inf
  %7121 = vmax.xlane.f32.xlu0 %v7120
  %v7122 = vpop.xlane.xlu0 %7121
  %v7123 = vsel %vm609, %v7107, -inf
  %7124 = vmax.xlane.f32.xlu0 %v7123
  %v7125 = vpop.xlane.xlu0 %7124
  %v7126 = vsel %vm609, %v7108, -inf
  %7127 = vmax.xlane.f32.xlu0 %v7126
  %v7128 = vpop.xlane.xlu0 %7127
  %v7129 = vsel %vm609, %v7109, -inf
  %7130 = vmax.xlane.f32.xlu0 %v7129
  %v7131 = vpop.xlane.xlu0 %7130
  %v7132 = vsel %vm609, %v7110, -inf
  %7133 = vmax.xlane.f32.xlu0 %v7132
  %v7134 = vpop.xlane.xlu0 %7133
  %v7135 = vsel %vm609, %v7111, -inf
  %7136 = vmax.xlane.f32.xlu0 %v7135
  %v7137 = vpop.xlane.xlu0 %7136
  %v7138 = vsel %vm609, %v7112, -inf
  %7139 = vmax.xlane.f32.xlu0 %v7138
  %v7140 = vpop.xlane.xlu0 %7139
  %v7141 = vsel %vm627, %v7113, -inf
  %7142 = vmax.xlane.f32.xlu0 %v7141
  %v7143 = vpop.xlane.xlu0 %7142
  %v7144 = vsub.f32 %v7104, %v7116
  %v7145 = vsub.f32 %v7105, %v7119
  %v7146 = vsub.f32 %v7106, %v7122
  %v7147 = vsub.f32 %v7107, %v7125
  %v7148 = vsub.f32 %v7108, %v7128
  %v7149 = vsub.f32 %v7109, %v7131
  %v7150 = vsub.f32 %v7110, %v7134
  %v7151 = vsub.f32 %v7111, %v7137
  %v7152 = vsub.f32 %v7112, %v7140
  %v7153 = vsub.f32 %v7113, %v7143
  %v7154 = vmul.f32 %v7144, 1.442695
  %v7155 = vpow.pop %v7154
  %v7156 = vmul.f32 %v7145, 1.442695
  %v7157 = vpow.pop %v7156
  %v7158 = vmul.f32 %v7146, 1.442695
  %v7159 = vpow.pop %v7158
  %v7160 = vmul.f32 %v7147, 1.442695
  %v7161 = vpow.pop %v7160
  %v7162 = vmul.f32 %v7148, 1.442695
  %v7163 = vpow.pop %v7162
  %v7164 = vmul.f32 %v7149, 1.442695
  %v7165 = vpow.pop %v7164
  %v7166 = vmul.f32 %v7150, 1.442695
  %v7167 = vpow.pop %v7166
  %v7168 = vmul.f32 %v7151, 1.442695
  %v7169 = vpow.pop %v7168
  %v7170 = vmul.f32 %v7152, 1.442695
  %v7171 = vpow.pop %v7170
  %v7172 = vmul.f32 %v7153, 1.442695
  %v7173 = vpow.pop %v7172
  %v7174 = vsel %vm609, %v7155, 0.0
  %7175 = vadd.xlane.f32.xlu0 %v7174
  %v7176 = vpop.xlane.xlu0 %7175
  %v7177 = vsel %vm609, %v7157, 0.0
  %7178 = vadd.xlane.f32.xlu0 %v7177
  %v7179 = vpop.xlane.xlu0 %7178
  %v7180 = vsel %vm609, %v7159, 0.0
  %7181 = vadd.xlane.f32.xlu0 %v7180
  %v7182 = vpop.xlane.xlu0 %7181
  %v7183 = vsel %vm609, %v7161, 0.0
  %7184 = vadd.xlane.f32.xlu0 %v7183
  %v7185 = vpop.xlane.xlu0 %7184
  %v7186 = vsel %vm609, %v7163, 0.0
  %7187 = vadd.xlane.f32.xlu0 %v7186
  %v7188 = vpop.xlane.xlu0 %7187
  %v7189 = vsel %vm609, %v7165, 0.0
  %7190 = vadd.xlane.f32.xlu0 %v7189
  %v7191 = vpop.xlane.xlu0 %7190
  %v7192 = vsel %vm609, %v7167, 0.0
  %7193 = vadd.xlane.f32.xlu0 %v7192
  %v7194 = vpop.xlane.xlu0 %7193
  %v7195 = vsel %vm609, %v7169, 0.0
  %7196 = vadd.xlane.f32.xlu0 %v7195
  %v7197 = vpop.xlane.xlu0 %7196
  %v7198 = vsel %vm609, %v7171, 0.0
  %7199 = vadd.xlane.f32.xlu0 %v7198
  %v7200 = vpop.xlane.xlu0 %7199
  %v7201 = vsel %vm627, %v7173, 0.0
  %7202 = vadd.xlane.f32.xlu0 %v7201
  %v7203 = vpop.xlane.xlu0 %7202
  %v7204 = vrcp.pop %v7176
  %v7205 = vrcp.pop %v7179
  %v7206 = vrcp.pop %v7182
  %v7207 = vrcp.pop %v7185
  %v7208 = vrcp.pop %v7188
  %v7209 = vrcp.pop %v7191
  %v7210 = vrcp.pop %v7194
  %v7211 = vrcp.pop %v7197
  %v7212 = vrcp.pop %v7200
  %v7213 = vrcp.pop %v7203
  %v7214 = vmul.f32 %v7155, %v7204
  %v7215 = vmul.f32 %v7157, %v7205
  %v7216 = vmul.f32 %v7159, %v7206
  %v7217 = vmul.f32 %v7161, %v7207
  %v7218 = vmul.f32 %v7163, %v7208
  %v7219 = vmul.f32 %v7165, %v7209
  %v7220 = vmul.f32 %v7167, %v7210
  %v7221 = vmul.f32 %v7169, %v7211
  %v7222 = vmul.f32 %v7171, %v7212
  %v7223 = vmul.f32 %v7173, %v7213
  %7224 = vrot.lane.b32.xlu0 %v6911, 124
  %v7225 = vpop.permute.xlu0 %7224
  %7226 = vrot.lane.b32.xlu0 %v6916, 124
  %v7227 = vpop.permute.xlu0 %7226
  %7228 = vrot.lane.b32.xlu0 %v6921, 124
  %v7229 = vpop.permute.xlu0 %7228
  %7230 = vrot.lane.b32.xlu0 %v6926, 124
  %v7231 = vpop.permute.xlu0 %7230
  %7232 = vrot.lane.b32.xlu0 %v6931, 124
  %v7233 = vpop.permute.xlu0 %7232
  %7234 = vrot.lane.b32.xlu0 %v6936, 124
  %v7235 = vpop.permute.xlu0 %7234
  %7236 = vrot.lane.b32.xlu0 %v6941, 124
  %v7237 = vpop.permute.xlu0 %7236
  %7238 = vrot.lane.b32.xlu0 %v6946, 124
  %v7239 = vpop.permute.xlu0 %7238
  %7240 = vrot.lane.b32.xlu0 %v6951, 124
  %v7241 = vpop.permute.xlu0 %7240
  %7242 = vrot.lane.b32.xlu0 %v6956, 124
  %v7243 = vpop.permute.xlu0 %7242
  %v7254 = vsel %vm609, %v7214, 0
  %v7257 = vsel %vm609, %v7215, 0
  %v7260 = vsel %vm609, %v7216, 0
  %v7263 = vsel %vm609, %v7217, 0
  %v7266 = vsel %vm609, %v7218, 0
  %v7269 = vsel %vm609, %v7219, 0
  %v7272 = vsel %vm609, %v7220, 0
  %v7275 = vsel %vm609, %v7221, 0
  %v7278 = vsel %vm609, %v7222, 0
  %v7281 = vsel %vm609, %v7223, 0
  %v7283 = vsel %vm2599, %v7243, 0
  %7285 = vmatprep.subr.mxu0 0.0
  %7286 = vmatpush1.msra.mxu0 %v7225
  %7287 = vmatprep.subr.mxu0 0.0
  %7288 = vmatpush1.msra.mxu0 %v7227
  %7289 = vmatprep.subr.mxu0 0.0
  %7290 = vmatpush1.msra.mxu0 %v7229
  %7291 = vmatprep.subr.mxu0 0.0
  %7292 = vmatpush1.msra.mxu0 %v7231
  %7293 = vmatprep.subr.mxu0 0.0
  %7294 = vmatpush1.msra.mxu0 %v7233
  %7295 = vmatprep.subr.mxu0 0.0
  %7296 = vmatpush1.msra.mxu0 %v7235
  %7297 = vmatprep.subr.mxu0 0.0
  %7298 = vmatpush1.msra.mxu0 %v7237
  %7299 = vmatprep.subr.mxu0 0.0
  %7300 = vmatpush1.msra.mxu0 %v7239
  %7301 = vmatprep.subr.mxu0 0.0
  %7302 = vmatpush1.msra.mxu0 %v7241
  %7303 = vmatprep.subr.mxu0 0.0
  %7304 = vmatpush1.msra.mxu0 %v7283
  %7305 = vmatprep.subr.mxu0 0.0
  %7306 = vmatpush1.msra.mxu0 0.0
  %7307 = vmatprep.subr.mxu0 0.0
  %7308 = vmatpush1.msra.mxu0 0.0
  %7309 = vmatprep.subr.mxu0 0.0
  %7310 = vmatpush1.msra.mxu0 0.0
  %7311 = vmatprep.subr.mxu0 0.0
  %7312 = vmatpush1.msra.mxu0 0.0
  %7313 = vmatprep.subr.mxu0 0.0
  %7314 = vmatpush1.msra.mxu0 0.0
  %7315 = vmatprep.subr.mxu0 0.0
  %7316 = vmatpush1.msra.mxu0 0.0
  %7317 = vmatprep.subr.mxu0 0.0
  %7318 = vmatpush1.msra.mxu0 0.0
  %7319 = vmatprep.subr.mxu0 0.0
  %7320 = vmatpush1.msra.mxu0 0.0
  %7321 = vmatprep.subr.mxu0 0.0
  %7322 = vmatpush1.msra.mxu0 0.0
  %7323 = vmatprep.subr.mxu0 0.0
  %7324 = vmatpush1.msra.mxu0 0.0
  %7325 = vmatprep.subr.mxu0 0.0
  %7326 = vmatpush1.msra.mxu0 0.0
  %7327 = vmatprep.subr.mxu0 0.0
  %7328 = vmatpush1.msra.mxu0 0.0
  %7329 = vmatprep.subr.mxu0 0.0
  %7330 = vmatpush1.msra.mxu0 0.0
  %7331 = vmatprep.subr.mxu0 0.0
  %7332 = vmatpush1.msra.mxu0 0.0
  %7333 = vmatprep.subr.mxu0 0.0
  %7334 = vmatpush1.msra.mxu0 0.0
  %7335 = vmatprep.subr.mxu0 0.0
  %7336 = vmatpush1.msra.mxu0 0.0
  %7337 = vmatprep.subr.mxu0 0.0
  %7338 = vmatpush1.msra.mxu0 0.0
  %7339 = vmatprep.subr.mxu0 0.0
  %7340 = vmatpush1.msra.mxu0 0.0
  %7341 = vmatprep.subr.mxu0 0.0
  %7342 = vmatpush1.msra.mxu0 0.0
  %7343 = vmatprep.subr.mxu0 0.0
  %7344 = vmatpush1.msra.mxu0 0.0
  %7345 = vmatprep.subr.mxu0 0.0
  %7346 = vmatpush1.msra.mxu0 0.0
  %7347 = vmatprep.subr.mxu0 0.0
  %7348 = vmatpush1.msra.mxu0 0.0
  %7349 = vmatprep.mubr.f32.mxu0 0.0
  %7350 = vmatmul.mubr.f32.gmra.mrb[0].mxu0 %v7254
  %v7351 = vpop.f32.mrb[0].mxu0
  %v7352 = vadd.f32 0.0, %v7351
  %v7353 = vpop.f32.mrb[0].mxu0
  %7354 = vmatprep.mubr.f32.mxu0 0.0
  %7355 = vmatmul.mubr.f32.gmra.mrb[0].mxu0 %v7257
  %v7356 = vpop.f32.mrb[0].mxu0
  %v7357 = vadd.f32 0.0, %v7356
  %v7358 = vpop.f32.mrb[0].mxu0
  %7359 = vmatprep.mubr.f32.mxu0 0.0
  %7360 = vmatmul.mubr.f32.gmra.mrb[0].mxu0 %v7260
  %v7361 = vpop.f32.mrb[0].mxu0
  %v7362 = vadd.f32 0.0, %v7361
  %v7363 = vpop.f32.mrb[0].mxu0
  %7364 = vmatprep.mubr.f32.mxu0 0.0
  %7365 = vmatmul.mubr.f32.gmra.mrb[0].mxu0 %v7263
  %v7366 = vpop.f32.mrb[0].mxu0
  %v7367 = vadd.f32 0.0, %v7366
  %v7368 = vpop.f32.mrb[0].mxu0
  %7369 = vmatprep.mubr.f32.mxu0 0.0
  %7370 = vmatmul.mubr.f32.gmra.mrb[0].mxu0 %v7266
  %v7371 = vpop.f32.mrb[0].mxu0
  %v7372 = vadd.f32 0.0, %v7371
  %v7373 = vpop.f32.mrb[0].mxu0
  %7374 = vmatprep.mubr.f32.mxu0 0.0
  %7375 = vmatmul.mubr.f32.gmra.mrb[0].mxu0 %v7269
  %v7376 = vpop.f32.mrb[0].mxu0
  %v7377 = vadd.f32 0.0, %v7376
  %v7378 = vpop.f32.mrb[0].mxu0
  %7379 = vmatprep.mubr.f32.mxu0 0.0
  %7380 = vmatmul.mubr.f32.gmra.mrb[0].mxu0 %v7272
  %v7381 = vpop.f32.mrb[0].mxu0
  %v7382 = vadd.f32 0.0, %v7381
  %v7383 = vpop.f32.mrb[0].mxu0
  %7384 = vmatprep.mubr.f32.mxu0 0.0
  %7385 = vmatmul.mubr.f32.gmra.mrb[0].mxu0 %v7275
  %v7386 = vpop.f32.mrb[0].mxu0
  %v7387 = vadd.f32 0.0, %v7386
  %v7388 = vpop.f32.mrb[0].mxu0
  %7389 = vmatprep.mubr.f32.mxu0 0.0
  %7390 = vmatmul.mubr.f32.gmra.mrb[0].mxu0 %v7278
  %v7391 = vpop.f32.mrb[0].mxu0
  %v7392 = vadd.f32 0.0, %v7391
  %v7393 = vpop.f32.mrb[0].mxu0
  %7394 = vmatprep.mubr.f32.mxu0 0.0
  %7395 = vmatmul.mubr.f32.gmra.mrb[0].mxu0 %v7281
  %v7396 = vpop.f32.mrb[0].mxu0
  %v7397 = vadd.f32 0.0, %v7396
  %v7398 = vpop.f32.mrb[0].mxu0
  %7399 = vdwg.mxu0
  %v7401 = vsel %vm2537, %v7352, 0
  %v7404 = vsel %vm2537, %v7357, 0
  %v7407 = vsel %vm2537, %v7362, 0
  %v7410 = vsel %vm2537, %v7367, 0
  %v7413 = vsel %vm2537, %v7372, 0
  %v7416 = vsel %vm2537, %v7377, 0
  %v7419 = vsel %vm2537, %v7382, 0
  %v7422 = vsel %vm2537, %v7387, 0
  %v7425 = vsel %vm2537, %v7392, 0
  %v7428 = vsel %vm2537, %v7397, 0
  %7430 = vmatprep.subr.mxu0 0.0
  %7431 = vmatpush1.xpose.msra.mxu0 %v6019
  %7432 = vmatprep.subr.mxu0 0.0
  %7433 = vmatpush1.xpose.msra.mxu0 0.0
  %7434 = vmatprep.subr.mxu0 0.0
  %7435 = vmatpush1.xpose.msra.mxu0 0.0
  %7436 = vmatprep.subr.mxu0 0.0
  %7437 = vmatpush1.xpose.msra.mxu0 0.0
  %7438 = vmatprep.subr.mxu0 0.0
  %7439 = vmatpush1.xpose.msra.mxu0 0.0
  %7440 = vmatprep.subr.mxu0 0.0
  %7441 = vmatpush1.xpose.msra.mxu0 0.0
  %7442 = vmatprep.subr.mxu0 0.0
  %7443 = vmatpush1.xpose.msra.mxu0 0.0
  %7444 = vmatprep.subr.mxu0 0.0
  %7445 = vmatpush1.xpose.msra.mxu0 0.0
  %7446 = vmatprep.subr.mxu0 0.0
  %7447 = vmatpush1.xpose.msra.mxu0 0.0
  %7448 = vmatprep.subr.mxu0 0.0
  %7449 = vmatpush1.xpose.msra.mxu0 0.0
  %7450 = vmatprep.subr.mxu0 0.0
  %7451 = vmatpush1.xpose.msra.mxu0 0.0
  %7452 = vmatprep.subr.mxu0 0.0
  %7453 = vmatpush1.xpose.msra.mxu0 0.0
  %7454 = vmatprep.subr.mxu0 0.0
  %7455 = vmatpush1.xpose.msra.mxu0 0.0
  %7456 = vmatprep.subr.mxu0 0.0
  %7457 = vmatpush1.xpose.msra.mxu0 0.0
  %7458 = vmatprep.subr.mxu0 0.0
  %7459 = vmatpush1.xpose.msra.mxu0 0.0
  %7460 = vmatprep.subr.mxu0 0.0
  %7461 = vmatpush1.xpose.msra.mxu0 0.0
  %7462 = vmatprep.subr.mxu0 0.0
  %7463 = vmatpush1.xpose.msra.mxu0 0.0
  %7464 = vmatprep.subr.mxu0 0.0
  %7465 = vmatpush1.xpose.msra.mxu0 0.0
  %7466 = vmatprep.subr.mxu0 0.0
  %7467 = vmatpush1.xpose.msra.mxu0 0.0
  %7468 = vmatprep.subr.mxu0 0.0
  %7469 = vmatpush1.xpose.msra.mxu0 0.0
  %7470 = vmatprep.subr.mxu0 0.0
  %7471 = vmatpush1.xpose.msra.mxu0 0.0
  %7472 = vmatprep.subr.mxu0 0.0
  %7473 = vmatpush1.xpose.msra.mxu0 0.0
  %7474 = vmatprep.subr.mxu0 0.0
  %7475 = vmatpush1.xpose.msra.mxu0 0.0
  %7476 = vmatprep.subr.mxu0 0.0
  %7477 = vmatpush1.xpose.msra.mxu0 0.0
  %7478 = vmatprep.subr.mxu0 0.0
  %7479 = vmatpush1.xpose.msra.mxu0 0.0
  %7480 = vmatprep.subr.mxu0 0.0
  %7481 = vmatpush1.xpose.msra.mxu0 0.0
  %7482 = vmatprep.subr.mxu0 0.0
  %7483 = vmatpush1.xpose.msra.mxu0 0.0
  %7484 = vmatprep.subr.mxu0 0.0
  %7485 = vmatpush1.xpose.msra.mxu0 0.0
  %7486 = vmatprep.subr.mxu0 0.0
  %7487 = vmatpush1.xpose.msra.mxu0 0.0
  %7488 = vmatprep.subr.mxu0 0.0
  %7489 = vmatpush1.xpose.msra.mxu0 0.0
  %7490 = vmatprep.subr.mxu0 0.0
  %7491 = vmatpush1.xpose.msra.mxu0 0.0
  %7492 = vmatprep.subr.mxu0 0.0
  %7493 = vmatpush1.xpose.msra.mxu0 0.0
  %7494 = vmatprep.mubr.f32.mxu0 0.0
  %7495 = vmatmul.mubr.f32.gmra.mrb[0].mxu0 %v7401
  %v7496 = vpop.f32.mrb[0].mxu0
  %v7497 = vadd.f32 0.0, %v7496
  %v7498 = vpop.f32.mrb[0].mxu0
  %7499 = vmatprep.mubr.f32.mxu0 0.0
  %7500 = vmatmul.mubr.f32.gmra.mrb[0].mxu0 %v7404
  %v7501 = vpop.f32.mrb[0].mxu0
  %v7502 = vadd.f32 0.0, %v7501
  %v7503 = vpop.f32.mrb[0].mxu0
  %7504 = vmatprep.mubr.f32.mxu0 0.0
  %7505 = vmatmul.mubr.f32.gmra.mrb[0].mxu0 %v7407
  %v7506 = vpop.f32.mrb[0].mxu0
  %v7507 = vadd.f32 0.0, %v7506
  %v7508 = vpop.f32.mrb[0].mxu0
  %7509 = vmatprep.mubr.f32.mxu0 0.0
  %7510 = vmatmul.mubr.f32.gmra.mrb[0].mxu0 %v7410
  %v7511 = vpop.f32.mrb[0].mxu0
  %v7512 = vadd.f32 0.0, %v7511
  %v7513 = vpop.f32.mrb[0].mxu0
  %7514 = vmatprep.mubr.f32.mxu0 0.0
  %7515 = vmatmul.mubr.f32.gmra.mrb[0].mxu0 %v7413
  %v7516 = vpop.f32.mrb[0].mxu0
  %v7517 = vadd.f32 0.0, %v7516
  %v7518 = vpop.f32.mrb[0].mxu0
  %7519 = vmatprep.mubr.f32.mxu0 0.0
  %7520 = vmatmul.mubr.f32.gmra.mrb[0].mxu0 %v7416
  %v7521 = vpop.f32.mrb[0].mxu0
  %v7522 = vadd.f32 0.0, %v7521
  %v7523 = vpop.f32.mrb[0].mxu0
  %7524 = vmatprep.mubr.f32.mxu0 0.0
  %7525 = vmatmul.mubr.f32.gmra.mrb[0].mxu0 %v7419
  %v7526 = vpop.f32.mrb[0].mxu0
  %v7527 = vadd.f32 0.0, %v7526
  %v7528 = vpop.f32.mrb[0].mxu0
  %7529 = vmatprep.mubr.f32.mxu0 0.0
  %7530 = vmatmul.mubr.f32.gmra.mrb[0].mxu0 %v7422
  %v7531 = vpop.f32.mrb[0].mxu0
  %v7532 = vadd.f32 0.0, %v7531
  %v7533 = vpop.f32.mrb[0].mxu0
  %7534 = vmatprep.mubr.f32.mxu0 0.0
  %7535 = vmatmul.mubr.f32.gmra.mrb[0].mxu0 %v7425
  %v7536 = vpop.f32.mrb[0].mxu0
  %v7537 = vadd.f32 0.0, %v7536
  %v7538 = vpop.f32.mrb[0].mxu0
  %7539 = vmatprep.mubr.f32.mxu0 0.0
  %7540 = vmatmul.mubr.f32.gmra.mrb[0].mxu0 %v7428
  %v7541 = vpop.f32.mrb[0].mxu0
  %v7542 = vadd.f32 0.0, %v7541
  %v7543 = vpop.f32.mrb[0].mxu0
  %7544 = vdwg.mxu0
  %v7545 = vadd.f32 %v6140, %v7497
  %v7546 = vadd.f32 %v6140, %v7502
  %v7547 = vadd.f32 %v6140, %v7507
  %v7548 = vadd.f32 %v6140, %v7512
  %v7549 = vadd.f32 %v6140, %v7517
  %v7550 = vadd.f32 %v6140, %v7522
  %v7551 = vadd.f32 %v6140, %v7527
  %v7552 = vadd.f32 %v6140, %v7532
  %v7553 = vadd.f32 %v6140, %v7537
  %v7554 = vadd.f32 %v6140, %v7542
  %7555 = vrot.lane.b32.xlu0 %v6911, 126
  %v7556 = vpop.permute.xlu0 %7555
  %7557 = vrot.lane.b32.xlu0 %v6916, 126
  %v7558 = vpop.permute.xlu0 %7557
  %7559 = vrot.lane.b32.xlu0 %v6921, 126
  %v7560 = vpop.permute.xlu0 %7559
  %7561 = vrot.lane.b32.xlu0 %v6926, 126
  %v7562 = vpop.permute.xlu0 %7561
  %7563 = vrot.lane.b32.xlu0 %v6931, 126
  %v7564 = vpop.permute.xlu0 %7563
  %7565 = vrot.lane.b32.xlu0 %v6936, 126
  %v7566 = vpop.permute.xlu0 %7565
  %7567 = vrot.lane.b32.xlu0 %v6941, 126
  %v7568 = vpop.permute.xlu0 %7567
  %7569 = vrot.lane.b32.xlu0 %v6946, 126
  %v7570 = vpop.permute.xlu0 %7569
  %7571 = vrot.lane.b32.xlu0 %v6951, 126
  %v7572 = vpop.permute.xlu0 %7571
  %7573 = vrot.lane.b32.xlu0 %v6956, 126
  %v7574 = vpop.permute.xlu0 %7573
  %v7575 = vsel %vm2537, %v7556, 0
  %v7577 = vsel %vm2537, %v7558, 0
  %v7579 = vsel %vm2537, %v7560, 0
  %v7581 = vsel %vm2537, %v7562, 0
  %v7583 = vsel %vm2537, %v7564, 0
  %v7585 = vsel %vm2537, %v7566, 0
  %v7587 = vsel %vm2537, %v7568, 0
  %v7589 = vsel %vm2537, %v7570, 0
  %v7591 = vsel %vm2537, %v7572, 0
  %v7593 = vsel %vm2537, %v7574, 0
  %7595 = vmatprep.subr.mxu0 0.0
  %7596 = vmatpush1.xpose.msra.mxu0 %v6204
  %7597 = vmatprep.subr.mxu0 0.0
  %7598 = vmatpush1.xpose.msra.mxu0 %v6207
  %7599 = vmatprep.subr.mxu0 0.0
  %7600 = vmatpush1.xpose.msra.mxu0 %v6210
  %7601 = vmatprep.subr.mxu0 0.0
  %7602 = vmatpush1.xpose.msra.mxu0 %v6213
  %7603 = vmatprep.subr.mxu0 0.0
  %7604 = vmatpush1.xpose.msra.mxu0 %v6216
  %7605 = vmatprep.subr.mxu0 0.0
  %7606 = vmatpush1.xpose.msra.mxu0 %v6219
  %7607 = vmatprep.subr.mxu0 0.0
  %7608 = vmatpush1.xpose.msra.mxu0 %v6222
  %7609 = vmatprep.subr.mxu0 0.0
  %7610 = vmatpush1.xpose.msra.mxu0 %v6225
  %7611 = vmatprep.subr.mxu0 0.0
  %7612 = vmatpush1.xpose.msra.mxu0 %v6228
  %7613 = vmatprep.subr.mxu0 0.0
  %7614 = vmatpush1.xpose.msra.mxu0 %v6231
  %7615 = vmatprep.subr.mxu0 0.0
  %7616 = vmatpush1.xpose.msra.mxu0 0.0
  %7617 = vmatprep.subr.mxu0 0.0
  %7618 = vmatpush1.xpose.msra.mxu0 0.0
  %7619 = vmatprep.subr.mxu0 0.0
  %7620 = vmatpush1.xpose.msra.mxu0 0.0
  %7621 = vmatprep.subr.mxu0 0.0
  %7622 = vmatpush1.xpose.msra.mxu0 0.0
  %7623 = vmatprep.subr.mxu0 0.0
  %7624 = vmatpush1.xpose.msra.mxu0 0.0
  %7625 = vmatprep.subr.mxu0 0.0
  %7626 = vmatpush1.xpose.msra.mxu0 0.0
  %7627 = vmatprep.subr.mxu0 0.0
  %7628 = vmatpush1.xpose.msra.mxu0 0.0
  %7629 = vmatprep.subr.mxu0 0.0
  %7630 = vmatpush1.xpose.msra.mxu0 0.0
  %7631 = vmatprep.subr.mxu0 0.0
  %7632 = vmatpush1.xpose.msra.mxu0 0.0
  %7633 = vmatprep.subr.mxu0 0.0
  %7634 = vmatpush1.xpose.msra.mxu0 0.0
  %7635 = vmatprep.subr.mxu0 0.0
  %7636 = vmatpush1.xpose.msra.mxu0 0.0
  %7637 = vmatprep.subr.mxu0 0.0
  %7638 = vmatpush1.xpose.msra.mxu0 0.0
  %7639 = vmatprep.subr.mxu0 0.0
  %7640 = vmatpush1.xpose.msra.mxu0 0.0
  %7641 = vmatprep.subr.mxu0 0.0
  %7642 = vmatpush1.xpose.msra.mxu0 0.0
  %7643 = vmatprep.subr.mxu0 0.0
  %7644 = vmatpush1.xpose.msra.mxu0 0.0
  %7645 = vmatprep.subr.mxu0 0.0
  %7646 = vmatpush1.xpose.msra.mxu0 0.0
  %7647 = vmatprep.subr.mxu0 0.0
  %7648 = vmatpush1.xpose.msra.mxu0 0.0
  %7649 = vmatprep.subr.mxu0 0.0
  %7650 = vmatpush1.xpose.msra.mxu0 0.0
  %7651 = vmatprep.subr.mxu0 0.0
  %7652 = vmatpush1.xpose.msra.mxu0 0.0
  %7653 = vmatprep.subr.mxu0 0.0
  %7654 = vmatpush1.xpose.msra.mxu0 0.0
  %7655 = vmatprep.subr.mxu0 0.0
  %7656 = vmatpush1.xpose.msra.mxu0 0.0
  %7657 = vmatprep.subr.mxu0 0.0
  %7658 = vmatpush1.xpose.msra.mxu0 0.0
  %7659 = vmatprep.mubr.f32.mxu0 0.0
  %7660 = vmatmul.mubr.f32.gmra.mrb[0].mxu0 %v7575
  %v7661 = vpop.f32.mrb[0].mxu0
  %v7662 = vadd.f32 0.0, %v7661
  %v7663 = vpop.f32.mrb[0].mxu0
  %7664 = vmatprep.mubr.f32.mxu0 0.0
  %7665 = vmatmul.mubr.f32.gmra.mrb[0].mxu0 %v7577
  %v7666 = vpop.f32.mrb[0].mxu0
  %v7667 = vadd.f32 0.0, %v7666
  %v7668 = vpop.f32.mrb[0].mxu0
  %7669 = vmatprep.mubr.f32.mxu0 0.0
  %7670 = vmatmul.mubr.f32.gmra.mrb[0].mxu0 %v7579
  %v7671 = vpop.f32.mrb[0].mxu0
  %v7672 = vadd.f32 0.0, %v7671
  %v7673 = vpop.f32.mrb[0].mxu0
  %7674 = vmatprep.mubr.f32.mxu0 0.0
  %7675 = vmatmul.mubr.f32.gmra.mrb[0].mxu0 %v7581
  %v7676 = vpop.f32.mrb[0].mxu0
  %v7677 = vadd.f32 0.0, %v7676
  %v7678 = vpop.f32.mrb[0].mxu0
  %7679 = vmatprep.mubr.f32.mxu0 0.0
  %7680 = vmatmul.mubr.f32.gmra.mrb[0].mxu0 %v7583
  %v7681 = vpop.f32.mrb[0].mxu0
  %v7682 = vadd.f32 0.0, %v7681
  %v7683 = vpop.f32.mrb[0].mxu0
  %7684 = vmatprep.mubr.f32.mxu0 0.0
  %7685 = vmatmul.mubr.f32.gmra.mrb[0].mxu0 %v7585
  %v7686 = vpop.f32.mrb[0].mxu0
  %v7687 = vadd.f32 0.0, %v7686
  %v7688 = vpop.f32.mrb[0].mxu0
  %7689 = vmatprep.mubr.f32.mxu0 0.0
  %7690 = vmatmul.mubr.f32.gmra.mrb[0].mxu0 %v7587
  %v7691 = vpop.f32.mrb[0].mxu0
  %v7692 = vadd.f32 0.0, %v7691
  %v7693 = vpop.f32.mrb[0].mxu0
  %7694 = vmatprep.mubr.f32.mxu0 0.0
  %7695 = vmatmul.mubr.f32.gmra.mrb[0].mxu0 %v7589
  %v7696 = vpop.f32.mrb[0].mxu0
  %v7697 = vadd.f32 0.0, %v7696
  %v7698 = vpop.f32.mrb[0].mxu0
  %7699 = vmatprep.mubr.f32.mxu0 0.0
  %7700 = vmatmul.mubr.f32.gmra.mrb[0].mxu0 %v7591
  %v7701 = vpop.f32.mrb[0].mxu0
  %v7702 = vadd.f32 0.0, %v7701
  %v7703 = vpop.f32.mrb[0].mxu0
  %7704 = vmatprep.mubr.f32.mxu0 0.0
  %7705 = vmatmul.mubr.f32.gmra.mrb[0].mxu0 %v7593
  %v7706 = vpop.f32.mrb[0].mxu0
  %v7707 = vadd.f32 0.0, %v7706
  %v7708 = vpop.f32.mrb[0].mxu0
  %7709 = vdwg.mxu0
  %v7710 = vmul.f32 %v7662, 0.70710677
  %v7711 = vmul.f32 %v7667, 0.70710677
  %v7712 = vmul.f32 %v7672, 0.70710677
  %v7713 = vmul.f32 %v7677, 0.70710677
  %v7714 = vmul.f32 %v7682, 0.70710677
  %v7715 = vmul.f32 %v7687, 0.70710677
  %v7716 = vmul.f32 %v7692, 0.70710677
  %v7717 = vmul.f32 %v7697, 0.70710677
  %v7718 = vmul.f32 %v7702, 0.70710677
  %v7719 = vmul.f32 %v7707, 0.70710677
  %v7720 = vsel %vm609, %v7710, -inf
  %7721 = vmax.xlane.f32.xlu0 %v7720
  %v7722 = vpop.xlane.xlu0 %7721
  %v7723 = vsel %vm609, %v7711, -inf
  %7724 = vmax.xlane.f32.xlu0 %v7723
  %v7725 = vpop.xlane.xlu0 %7724
  %v7726 = vsel %vm609, %v7712, -inf
  %7727 = vmax.xlane.f32.xlu0 %v7726
  %v7728 = vpop.xlane.xlu0 %7727
  %v7729 = vsel %vm609, %v7713, -inf
  %7730 = vmax.xlane.f32.xlu0 %v7729
  %v7731 = vpop.xlane.xlu0 %7730
  %v7732 = vsel %vm609, %v7714, -inf
  %7733 = vmax.xlane.f32.xlu0 %v7732
  %v7734 = vpop.xlane.xlu0 %7733
  %v7735 = vsel %vm609, %v7715, -inf
  %7736 = vmax.xlane.f32.xlu0 %v7735
  %v7737 = vpop.xlane.xlu0 %7736
  %v7738 = vsel %vm609, %v7716, -inf
  %7739 = vmax.xlane.f32.xlu0 %v7738
  %v7740 = vpop.xlane.xlu0 %7739
  %v7741 = vsel %vm609, %v7717, -inf
  %7742 = vmax.xlane.f32.xlu0 %v7741
  %v7743 = vpop.xlane.xlu0 %7742
  %v7744 = vsel %vm609, %v7718, -inf
  %7745 = vmax.xlane.f32.xlu0 %v7744
  %v7746 = vpop.xlane.xlu0 %7745
  %v7747 = vsel %vm627, %v7719, -inf
  %7748 = vmax.xlane.f32.xlu0 %v7747
  %v7749 = vpop.xlane.xlu0 %7748
  %v7750 = vsub.f32 %v7710, %v7722
  %v7751 = vsub.f32 %v7711, %v7725
  %v7752 = vsub.f32 %v7712, %v7728
  %v7753 = vsub.f32 %v7713, %v7731
  %v7754 = vsub.f32 %v7714, %v7734
  %v7755 = vsub.f32 %v7715, %v7737
  %v7756 = vsub.f32 %v7716, %v7740
  %v7757 = vsub.f32 %v7717, %v7743
  %v7758 = vsub.f32 %v7718, %v7746
  %v7759 = vsub.f32 %v7719, %v7749
  %v7760 = vmul.f32 %v7750, 1.442695
  %v7761 = vpow.pop %v7760
  %v7762 = vmul.f32 %v7751, 1.442695
  %v7763 = vpow.pop %v7762
  %v7764 = vmul.f32 %v7752, 1.442695
  %v7765 = vpow.pop %v7764
  %v7766 = vmul.f32 %v7753, 1.442695
  %v7767 = vpow.pop %v7766
  %v7768 = vmul.f32 %v7754, 1.442695
  %v7769 = vpow.pop %v7768
  %v7770 = vmul.f32 %v7755, 1.442695
  %v7771 = vpow.pop %v7770
  %v7772 = vmul.f32 %v7756, 1.442695
  %v7773 = vpow.pop %v7772
  %v7774 = vmul.f32 %v7757, 1.442695
  %v7775 = vpow.pop %v7774
  %v7776 = vmul.f32 %v7758, 1.442695
  %v7777 = vpow.pop %v7776
  %v7778 = vmul.f32 %v7759, 1.442695
  %v7779 = vpow.pop %v7778
  %v7780 = vsel %vm609, %v7761, 0.0
  %7781 = vadd.xlane.f32.xlu0 %v7780
  %v7782 = vpop.xlane.xlu0 %7781
  %v7783 = vsel %vm609, %v7763, 0.0
  %7784 = vadd.xlane.f32.xlu0 %v7783
  %v7785 = vpop.xlane.xlu0 %7784
  %v7786 = vsel %vm609, %v7765, 0.0
  %7787 = vadd.xlane.f32.xlu0 %v7786
  %v7788 = vpop.xlane.xlu0 %7787
  %v7789 = vsel %vm609, %v7767, 0.0
  %7790 = vadd.xlane.f32.xlu0 %v7789
  %v7791 = vpop.xlane.xlu0 %7790
  %v7792 = vsel %vm609, %v7769, 0.0
  %7793 = vadd.xlane.f32.xlu0 %v7792
  %v7794 = vpop.xlane.xlu0 %7793
  %v7795 = vsel %vm609, %v7771, 0.0
  %7796 = vadd.xlane.f32.xlu0 %v7795
  %v7797 = vpop.xlane.xlu0 %7796
  %v7798 = vsel %vm609, %v7773, 0.0
  %7799 = vadd.xlane.f32.xlu0 %v7798
  %v7800 = vpop.xlane.xlu0 %7799
  %v7801 = vsel %vm609, %v7775, 0.0
  %7802 = vadd.xlane.f32.xlu0 %v7801
  %v7803 = vpop.xlane.xlu0 %7802
  %v7804 = vsel %vm609, %v7777, 0.0
  %7805 = vadd.xlane.f32.xlu0 %v7804
  %v7806 = vpop.xlane.xlu0 %7805
  %v7807 = vsel %vm627, %v7779, 0.0
  %7808 = vadd.xlane.f32.xlu0 %v7807
  %v7809 = vpop.xlane.xlu0 %7808
  %v7810 = vrcp.pop %v7782
  %v7811 = vrcp.pop %v7785
  %v7812 = vrcp.pop %v7788
  %v7813 = vrcp.pop %v7791
  %v7814 = vrcp.pop %v7794
  %v7815 = vrcp.pop %v7797
  %v7816 = vrcp.pop %v7800
  %v7817 = vrcp.pop %v7803
  %v7818 = vrcp.pop %v7806
  %v7819 = vrcp.pop %v7809
  %v7820 = vmul.f32 %v7761, %v7810
  %v7821 = vmul.f32 %v7763, %v7811
  %v7822 = vmul.f32 %v7765, %v7812
  %v7823 = vmul.f32 %v7767, %v7813
  %v7824 = vmul.f32 %v7769, %v7814
  %v7825 = vmul.f32 %v7771, %v7815
  %v7826 = vmul.f32 %v7773, %v7816
  %v7827 = vmul.f32 %v7775, %v7817
  %v7828 = vmul.f32 %v7777, %v7818
  %v7829 = vmul.f32 %v7779, %v7819
  %7830 = vrot.lane.b32.xlu0 %v6911, 122
  %v7831 = vpop.permute.xlu0 %7830
  %7832 = vrot.lane.b32.xlu0 %v6916, 122
  %v7833 = vpop.permute.xlu0 %7832
  %7834 = vrot.lane.b32.xlu0 %v6921, 122
  %v7835 = vpop.permute.xlu0 %7834
  %7836 = vrot.lane.b32.xlu0 %v6926, 122
  %v7837 = vpop.permute.xlu0 %7836
  %7838 = vrot.lane.b32.xlu0 %v6931, 122
  %v7839 = vpop.permute.xlu0 %7838
  %7840 = vrot.lane.b32.xlu0 %v6936, 122
  %v7841 = vpop.permute.xlu0 %7840
  %7842 = vrot.lane.b32.xlu0 %v6941, 122
  %v7843 = vpop.permute.xlu0 %7842
  %7844 = vrot.lane.b32.xlu0 %v6946, 122
  %v7845 = vpop.permute.xlu0 %7844
  %7846 = vrot.lane.b32.xlu0 %v6951, 122
  %v7847 = vpop.permute.xlu0 %7846
  %7848 = vrot.lane.b32.xlu0 %v6956, 122
  %v7849 = vpop.permute.xlu0 %7848
  %v7860 = vsel %vm609, %v7820, 0
  %v7863 = vsel %vm609, %v7821, 0
  %v7866 = vsel %vm609, %v7822, 0
  %v7869 = vsel %vm609, %v7823, 0
  %v7872 = vsel %vm609, %v7824, 0
  %v7875 = vsel %vm609, %v7825, 0
  %v7878 = vsel %vm609, %v7826, 0
  %v7881 = vsel %vm609, %v7827, 0
  %v7884 = vsel %vm609, %v7828, 0
  %v7887 = vsel %vm609, %v7829, 0
  %v7889 = vsel %vm2599, %v7849, 0
  %7891 = vmatprep.subr.mxu0 0.0
  %7892 = vmatpush1.msra.mxu0 %v7831
  %7893 = vmatprep.subr.mxu0 0.0
  %7894 = vmatpush1.msra.mxu0 %v7833
  %7895 = vmatprep.subr.mxu0 0.0
  %7896 = vmatpush1.msra.mxu0 %v7835
  %7897 = vmatprep.subr.mxu0 0.0
  %7898 = vmatpush1.msra.mxu0 %v7837
  %7899 = vmatprep.subr.mxu0 0.0
  %7900 = vmatpush1.msra.mxu0 %v7839
  %7901 = vmatprep.subr.mxu0 0.0
  %7902 = vmatpush1.msra.mxu0 %v7841
  %7903 = vmatprep.subr.mxu0 0.0
  %7904 = vmatpush1.msra.mxu0 %v7843
  %7905 = vmatprep.subr.mxu0 0.0
  %7906 = vmatpush1.msra.mxu0 %v7845
  %7907 = vmatprep.subr.mxu0 0.0
  %7908 = vmatpush1.msra.mxu0 %v7847
  %7909 = vmatprep.subr.mxu0 0.0
  %7910 = vmatpush1.msra.mxu0 %v7889
  %7911 = vmatprep.subr.mxu0 0.0
  %7912 = vmatpush1.msra.mxu0 0.0
  %7913 = vmatprep.subr.mxu0 0.0
  %7914 = vmatpush1.msra.mxu0 0.0
  %7915 = vmatprep.subr.mxu0 0.0
  %7916 = vmatpush1.msra.mxu0 0.0
  %7917 = vmatprep.subr.mxu0 0.0
  %7918 = vmatpush1.msra.mxu0 0.0
  %7919 = vmatprep.subr.mxu0 0.0
  %7920 = vmatpush1.msra.mxu0 0.0
  %7921 = vmatprep.subr.mxu0 0.0
  %7922 = vmatpush1.msra.mxu0 0.0
  %7923 = vmatprep.subr.mxu0 0.0
  %7924 = vmatpush1.msra.mxu0 0.0
  %7925 = vmatprep.subr.mxu0 0.0
  %7926 = vmatpush1.msra.mxu0 0.0
  %7927 = vmatprep.subr.mxu0 0.0
  %7928 = vmatpush1.msra.mxu0 0.0
  %7929 = vmatprep.subr.mxu0 0.0
  %7930 = vmatpush1.msra.mxu0 0.0
  %7931 = vmatprep.subr.mxu0 0.0
  %7932 = vmatpush1.msra.mxu0 0.0
  %7933 = vmatprep.subr.mxu0 0.0
  %7934 = vmatpush1.msra.mxu0 0.0
  %7935 = vmatprep.subr.mxu0 0.0
  %7936 = vmatpush1.msra.mxu0 0.0
  %7937 = vmatprep.subr.mxu0 0.0
  %7938 = vmatpush1.msra.mxu0 0.0
  %7939 = vmatprep.subr.mxu0 0.0
  %7940 = vmatpush1.msra.mxu0 0.0
  %7941 = vmatprep.subr.mxu0 0.0
  %7942 = vmatpush1.msra.mxu0 0.0
  %7943 = vmatprep.subr.mxu0 0.0
  %7944 = vmatpush1.msra.mxu0 0.0
  %7945 = vmatprep.subr.mxu0 0.0
  %7946 = vmatpush1.msra.mxu0 0.0
  %7947 = vmatprep.subr.mxu0 0.0
  %7948 = vmatpush1.msra.mxu0 0.0
  %7949 = vmatprep.subr.mxu0 0.0
  %7950 = vmatpush1.msra.mxu0 0.0
  %7951 = vmatprep.subr.mxu0 0.0
  %7952 = vmatpush1.msra.mxu0 0.0
  %7953 = vmatprep.subr.mxu0 0.0
  %7954 = vmatpush1.msra.mxu0 0.0
  %7955 = vmatprep.mubr.f32.mxu0 0.0
  %7956 = vmatmul.mubr.f32.gmra.mrb[0].mxu0 %v7860
  %v7957 = vpop.f32.mrb[0].mxu0
  %v7958 = vadd.f32 0.0, %v7957
  %v7959 = vpop.f32.mrb[0].mxu0
  %7960 = vmatprep.mubr.f32.mxu0 0.0
  %7961 = vmatmul.mubr.f32.gmra.mrb[0].mxu0 %v7863
  %v7962 = vpop.f32.mrb[0].mxu0
  %v7963 = vadd.f32 0.0, %v7962
  %v7964 = vpop.f32.mrb[0].mxu0
  %7965 = vmatprep.mubr.f32.mxu0 0.0
  %7966 = vmatmul.mubr.f32.gmra.mrb[0].mxu0 %v7866
  %v7967 = vpop.f32.mrb[0].mxu0
  %v7968 = vadd.f32 0.0, %v7967
  %v7969 = vpop.f32.mrb[0].mxu0
  %7970 = vmatprep.mubr.f32.mxu0 0.0
  %7971 = vmatmul.mubr.f32.gmra.mrb[0].mxu0 %v7869
  %v7972 = vpop.f32.mrb[0].mxu0
  %v7973 = vadd.f32 0.0, %v7972
  %v7974 = vpop.f32.mrb[0].mxu0
  %7975 = vmatprep.mubr.f32.mxu0 0.0
  %7976 = vmatmul.mubr.f32.gmra.mrb[0].mxu0 %v7872
  %v7977 = vpop.f32.mrb[0].mxu0
  %v7978 = vadd.f32 0.0, %v7977
  %v7979 = vpop.f32.mrb[0].mxu0
  %7980 = vmatprep.mubr.f32.mxu0 0.0
  %7981 = vmatmul.mubr.f32.gmra.mrb[0].mxu0 %v7875
  %v7982 = vpop.f32.mrb[0].mxu0
  %v7983 = vadd.f32 0.0, %v7982
  %v7984 = vpop.f32.mrb[0].mxu0
  %7985 = vmatprep.mubr.f32.mxu0 0.0
  %7986 = vmatmul.mubr.f32.gmra.mrb[0].mxu0 %v7878
  %v7987 = vpop.f32.mrb[0].mxu0
  %v7988 = vadd.f32 0.0, %v7987
  %v7989 = vpop.f32.mrb[0].mxu0
  %7990 = vmatprep.mubr.f32.mxu0 0.0
  %7991 = vmatmul.mubr.f32.gmra.mrb[0].mxu0 %v7881
  %v7992 = vpop.f32.mrb[0].mxu0
  %v7993 = vadd.f32 0.0, %v7992
  %v7994 = vpop.f32.mrb[0].mxu0
  %7995 = vmatprep.mubr.f32.mxu0 0.0
  %7996 = vmatmul.mubr.f32.gmra.mrb[0].mxu0 %v7884
  %v7997 = vpop.f32.mrb[0].mxu0
  %v7998 = vadd.f32 0.0, %v7997
  %v7999 = vpop.f32.mrb[0].mxu0
  %8000 = vmatprep.mubr.f32.mxu0 0.0
  %8001 = vmatmul.mubr.f32.gmra.mrb[0].mxu0 %v7887
  %v8002 = vpop.f32.mrb[0].mxu0
  %v8003 = vadd.f32 0.0, %v8002
  %v8004 = vpop.f32.mrb[0].mxu0
  %8005 = vdwg.mxu0
  %v8007 = vsel %vm2537, %v7958, 0
  %v8010 = vsel %vm2537, %v7963, 0
  %v8013 = vsel %vm2537, %v7968, 0
  %v8016 = vsel %vm2537, %v7973, 0
  %v8019 = vsel %vm2537, %v7978, 0
  %v8022 = vsel %vm2537, %v7983, 0
  %v8025 = vsel %vm2537, %v7988, 0
  %v8028 = vsel %vm2537, %v7993, 0
  %v8031 = vsel %vm2537, %v7998, 0
  %v8034 = vsel %vm2537, %v8003, 0
  %8036 = vmatprep.subr.mxu0 0.0
  %8037 = vmatpush1.xpose.msra.mxu0 %v6677
  %8038 = vmatprep.subr.mxu0 0.0
  %8039 = vmatpush1.xpose.msra.mxu0 0.0
  %8040 = vmatprep.subr.mxu0 0.0
  %8041 = vmatpush1.xpose.msra.mxu0 0.0
  %8042 = vmatprep.subr.mxu0 0.0
  %8043 = vmatpush1.xpose.msra.mxu0 0.0
  %8044 = vmatprep.subr.mxu0 0.0
  %8045 = vmatpush1.xpose.msra.mxu0 0.0
  %8046 = vmatprep.subr.mxu0 0.0
  %8047 = vmatpush1.xpose.msra.mxu0 0.0
  %8048 = vmatprep.subr.mxu0 0.0
  %8049 = vmatpush1.xpose.msra.mxu0 0.0
  %8050 = vmatprep.subr.mxu0 0.0
  %8051 = vmatpush1.xpose.msra.mxu0 0.0
  %8052 = vmatprep.subr.mxu0 0.0
  %8053 = vmatpush1.xpose.msra.mxu0 0.0
  %8054 = vmatprep.subr.mxu0 0.0
  %8055 = vmatpush1.xpose.msra.mxu0 0.0
  %8056 = vmatprep.subr.mxu0 0.0
  %8057 = vmatpush1.xpose.msra.mxu0 0.0
  %8058 = vmatprep.subr.mxu0 0.0
  %8059 = vmatpush1.xpose.msra.mxu0 0.0
  %8060 = vmatprep.subr.mxu0 0.0
  %8061 = vmatpush1.xpose.msra.mxu0 0.0
  %8062 = vmatprep.subr.mxu0 0.0
  %8063 = vmatpush1.xpose.msra.mxu0 0.0
  %8064 = vmatprep.subr.mxu0 0.0
  %8065 = vmatpush1.xpose.msra.mxu0 0.0
  %8066 = vmatprep.subr.mxu0 0.0
  %8067 = vmatpush1.xpose.msra.mxu0 0.0
  %8068 = vmatprep.subr.mxu0 0.0
  %8069 = vmatpush1.xpose.msra.mxu0 0.0
  %8070 = vmatprep.subr.mxu0 0.0
  %8071 = vmatpush1.xpose.msra.mxu0 0.0
  %8072 = vmatprep.subr.mxu0 0.0
  %8073 = vmatpush1.xpose.msra.mxu0 0.0
  %8074 = vmatprep.subr.mxu0 0.0
  %8075 = vmatpush1.xpose.msra.mxu0 0.0
  %8076 = vmatprep.subr.mxu0 0.0
  %8077 = vmatpush1.xpose.msra.mxu0 0.0
  %8078 = vmatprep.subr.mxu0 0.0
  %8079 = vmatpush1.xpose.msra.mxu0 0.0
  %8080 = vmatprep.subr.mxu0 0.0
  %8081 = vmatpush1.xpose.msra.mxu0 0.0
  %8082 = vmatprep.subr.mxu0 0.0
  %8083 = vmatpush1.xpose.msra.mxu0 0.0
  %8084 = vmatprep.subr.mxu0 0.0
  %8085 = vmatpush1.xpose.msra.mxu0 0.0
  %8086 = vmatprep.subr.mxu0 0.0
  %8087 = vmatpush1.xpose.msra.mxu0 0.0
  %8088 = vmatprep.subr.mxu0 0.0
  %8089 = vmatpush1.xpose.msra.mxu0 0.0
  %8090 = vmatprep.subr.mxu0 0.0
  %8091 = vmatpush1.xpose.msra.mxu0 0.0
  %8092 = vmatprep.subr.mxu0 0.0
  %8093 = vmatpush1.xpose.msra.mxu0 0.0
  %8094 = vmatprep.subr.mxu0 0.0
  %8095 = vmatpush1.xpose.msra.mxu0 0.0
  %8096 = vmatprep.subr.mxu0 0.0
  %8097 = vmatpush1.xpose.msra.mxu0 0.0
  %8098 = vmatprep.subr.mxu0 0.0
  %8099 = vmatpush1.xpose.msra.mxu0 0.0
  %8100 = vmatprep.mubr.f32.mxu0 0.0
  %8101 = vmatmul.mubr.f32.gmra.mrb[0].mxu0 %v8007
  %v8102 = vpop.f32.mrb[0].mxu0
  %v8103 = vadd.f32 0.0, %v8102
  %v8104 = vpop.f32.mrb[0].mxu0
  %8105 = vmatprep.mubr.f32.mxu0 0.0
  %8106 = vmatmul.mubr.f32.gmra.mrb[0].mxu0 %v8010
  %v8107 = vpop.f32.mrb[0].mxu0
  %v8108 = vadd.f32 0.0, %v8107
  %v8109 = vpop.f32.mrb[0].mxu0
  %8110 = vmatprep.mubr.f32.mxu0 0.0
  %8111 = vmatmul.mubr.f32.gmra.mrb[0].mxu0 %v8013
  %v8112 = vpop.f32.mrb[0].mxu0
  %v8113 = vadd.f32 0.0, %v8112
  %v8114 = vpop.f32.mrb[0].mxu0
  %8115 = vmatprep.mubr.f32.mxu0 0.0
  %8116 = vmatmul.mubr.f32.gmra.mrb[0].mxu0 %v8016
  %v8117 = vpop.f32.mrb[0].mxu0
  %v8118 = vadd.f32 0.0, %v8117
  %v8119 = vpop.f32.mrb[0].mxu0
  %8120 = vmatprep.mubr.f32.mxu0 0.0
  %8121 = vmatmul.mubr.f32.gmra.mrb[0].mxu0 %v8019
  %v8122 = vpop.f32.mrb[0].mxu0
  %v8123 = vadd.f32 0.0, %v8122
  %v8124 = vpop.f32.mrb[0].mxu0
  %8125 = vmatprep.mubr.f32.mxu0 0.0
  %8126 = vmatmul.mubr.f32.gmra.mrb[0].mxu0 %v8022
  %v8127 = vpop.f32.mrb[0].mxu0
  %v8128 = vadd.f32 0.0, %v8127
  %v8129 = vpop.f32.mrb[0].mxu0
  %8130 = vmatprep.mubr.f32.mxu0 0.0
  %8131 = vmatmul.mubr.f32.gmra.mrb[0].mxu0 %v8025
  %v8132 = vpop.f32.mrb[0].mxu0
  %v8133 = vadd.f32 0.0, %v8132
  %v8134 = vpop.f32.mrb[0].mxu0
  %8135 = vmatprep.mubr.f32.mxu0 0.0
  %8136 = vmatmul.mubr.f32.gmra.mrb[0].mxu0 %v8028
  %v8137 = vpop.f32.mrb[0].mxu0
  %v8138 = vadd.f32 0.0, %v8137
  %v8139 = vpop.f32.mrb[0].mxu0
  %8140 = vmatprep.mubr.f32.mxu0 0.0
  %8141 = vmatmul.mubr.f32.gmra.mrb[0].mxu0 %v8031
  %v8142 = vpop.f32.mrb[0].mxu0
  %v8143 = vadd.f32 0.0, %v8142
  %v8144 = vpop.f32.mrb[0].mxu0
  %8145 = vmatprep.mubr.f32.mxu0 0.0
  %8146 = vmatmul.mubr.f32.gmra.mrb[0].mxu0 %v8034
  %v8147 = vpop.f32.mrb[0].mxu0
  %v8148 = vadd.f32 0.0, %v8147
  %v8149 = vpop.f32.mrb[0].mxu0
  %8150 = vdwg.mxu0
  %v8151 = vadd.f32 %v7545, %v8103
  %v8152 = vadd.f32 %v7546, %v8108
  %v8153 = vadd.f32 %v7547, %v8113
  %v8154 = vadd.f32 %v7548, %v8118
  %v8155 = vadd.f32 %v7549, %v8123
  %v8156 = vadd.f32 %v7550, %v8128
  %v8157 = vadd.f32 %v7551, %v8133
  %v8158 = vadd.f32 %v7552, %v8138
  %v8159 = vadd.f32 %v7553, %v8143
  %v8160 = vadd.f32 %v7554, %v8148
  %8171 = vrot.lane.b32.xlu0 %v8151, 4
  %v8172 = vpop.permute.xlu0 %8171
  %8173 = vrot.lane.b32.xlu0 %v8152, 4
  %v8174 = vpop.permute.xlu0 %8173
  %8175 = vrot.lane.b32.xlu0 %v8153, 4
  %v8176 = vpop.permute.xlu0 %8175
  %8177 = vrot.lane.b32.xlu0 %v8154, 4
  %v8178 = vpop.permute.xlu0 %8177
  %8179 = vrot.lane.b32.xlu0 %v8155, 4
  %v8180 = vpop.permute.xlu0 %8179
  %8181 = vrot.lane.b32.xlu0 %v8156, 4
  %v8182 = vpop.permute.xlu0 %8181
  %8183 = vrot.lane.b32.xlu0 %v8157, 4
  %v8184 = vpop.permute.xlu0 %8183
  %8185 = vrot.lane.b32.xlu0 %v8158, 4
  %v8186 = vpop.permute.xlu0 %8185
  %8187 = vrot.lane.b32.xlu0 %v8159, 4
  %v8188 = vpop.permute.xlu0 %8187
  %8189 = vrot.lane.b32.xlu0 %v8160, 4
  %v8190 = vpop.permute.xlu0 %8189
  %v8201 = vsel %vm5096, %v6794, %v8172
  %v8202 = vsel %vm5096, %v6795, %v8174
  %v8203 = vsel %vm5096, %v6796, %v8176
  %v8204 = vsel %vm5096, %v6797, %v8178
  %v8205 = vsel %vm5096, %v6798, %v8180
  %v8206 = vsel %vm5096, %v6799, %v8182
  %v8207 = vsel %vm5096, %v6800, %v8184
  %v8208 = vsel %vm5096, %v6801, %v8186
  %v8209 = vsel %vm5096, %v6802, %v8188
  %v8210 = vsel %vm5096, %v6803, %v8190
  %v8211 = vld [vmem:[%s10] sm:$0xff]
  %v8212 = vld [vmem:[%s10 + $0x8] sm:$0xff]
  %v8213 = vld [vmem:[%s10 + $0x10] sm:$0xff]
  %v8214 = vld [vmem:[%s10 + $0x18] sm:$0xff]
  %v8215 = vld [vmem:[%s10 + $0x20] sm:$0xff]
  %v8216 = vld [vmem:[%s10 + $0x28] sm:$0xff]
  %v8217 = vld [vmem:[%s10 + $0x30] sm:$0xff]
  %v8218 = vld [vmem:[%s10 + $0x38] sm:$0xff]
  %v8219 = vld [vmem:[%s11] sm:$0xff]
  %v8220 = vld [vmem:[%s11 + $0x8] sm:$0xff]
  %v8221 = vld [vmem:[%s11 + $0x10] sm:$0xff]
  %v8222 = vld [vmem:[%s11 + $0x18] sm:$0xff]
  %v8223 = vld [vmem:[%s11 + $0x20] sm:$0xff]
  %v8224 = vld [vmem:[%s11 + $0x28] sm:$0xff]
  %v8225 = vld [vmem:[%s11 + $0x30] sm:$0xff]
  %v8226 = vld [vmem:[%s11 + $0x38] sm:$0xff]
  %8228 = vset.pattern.permute.xlu0 0
  %8229 = vperm.xlu0 %8228, %v8219
  %v8230 = vpop.permute.xlu0 %8229
  %8233 = vset.pattern.permute.xlu0 0
  %8234 = vperm.xlu0 %8233, %v8220
  %v8235 = vpop.permute.xlu0 %8234
  %8238 = vset.pattern.permute.xlu0 0
  %8239 = vperm.xlu0 %8238, %v8221
  %v8240 = vpop.permute.xlu0 %8239
  %8243 = vset.pattern.permute.xlu0 0
  %8244 = vperm.xlu0 %8243, %v8222
  %v8245 = vpop.permute.xlu0 %8244
  %8248 = vset.pattern.permute.xlu0 0
  %8249 = vperm.xlu0 %8248, %v8223
  %v8250 = vpop.permute.xlu0 %8249
  %8253 = vset.pattern.permute.xlu0 0
  %8254 = vperm.xlu0 %8253, %v8224
  %v8255 = vpop.permute.xlu0 %8254
  %8258 = vset.pattern.permute.xlu0 0
  %8259 = vperm.xlu0 %8258, %v8225
  %v8260 = vpop.permute.xlu0 %8259
  %8263 = vset.pattern.permute.xlu0 0
  %8264 = vperm.xlu0 %8263, %v8226
  %v8265 = vpop.permute.xlu0 %8264
  %v8268 = vsel %vm609, %v8211, 0
  %v8271 = vsel %vm609, %v8212, 0
  %v8274 = vsel %vm609, %v8213, 0
  %v8277 = vsel %vm609, %v8214, 0
  %v8280 = vsel %vm609, %v8215, 0
  %v8283 = vsel %vm609, %v8216, 0
  %v8286 = vsel %vm609, %v8217, 0
  %v8289 = vsel %vm609, %v8218, 0
  %v8292 = vsel %vm2599, %v8210, 0
  %8294 = vmatprep.subr.mxu0 0.0
  %8295 = vmatpush1.msra.mxu0 %v8201
  %8296 = vmatprep.subr.mxu0 0.0
  %8297 = vmatpush1.msra.mxu0 %v8202
  %8298 = vmatprep.subr.mxu0 0.0
  %8299 = vmatpush1.msra.mxu0 %v8203
  %8300 = vmatprep.subr.mxu0 0.0
  %8301 = vmatpush1.msra.mxu0 %v8204
  %8302 = vmatprep.subr.mxu0 0.0
  %8303 = vmatpush1.msra.mxu0 %v8205
  %8304 = vmatprep.subr.mxu0 0.0
  %8305 = vmatpush1.msra.mxu0 %v8206
  %8306 = vmatprep.subr.mxu0 0.0
  %8307 = vmatpush1.msra.mxu0 %v8207
  %8308 = vmatprep.subr.mxu0 0.0
  %8309 = vmatpush1.msra.mxu0 %v8208
  %8310 = vmatprep.subr.mxu0 0.0
  %8311 = vmatpush1.msra.mxu0 %v8209
  %8312 = vmatprep.subr.mxu0 0.0
  %8313 = vmatpush1.msra.mxu0 %v8292
  %8314 = vmatprep.subr.mxu0 0.0
  %8315 = vmatpush1.msra.mxu0 0.0
  %8316 = vmatprep.subr.mxu0 0.0
  %8317 = vmatpush1.msra.mxu0 0.0
  %8318 = vmatprep.subr.mxu0 0.0
  %8319 = vmatpush1.msra.mxu0 0.0
  %8320 = vmatprep.subr.mxu0 0.0
  %8321 = vmatpush1.msra.mxu0 0.0
  %8322 = vmatprep.subr.mxu0 0.0
  %8323 = vmatpush1.msra.mxu0 0.0
  %8324 = vmatprep.subr.mxu0 0.0
  %8325 = vmatpush1.msra.mxu0 0.0
  %8326 = vmatprep.subr.mxu0 0.0
  %8327 = vmatpush1.msra.mxu0 0.0
  %8328 = vmatprep.subr.mxu0 0.0
  %8329 = vmatpush1.msra.mxu0 0.0
  %8330 = vmatprep.subr.mxu0 0.0
  %8331 = vmatpush1.msra.mxu0 0.0
  %8332 = vmatprep.subr.mxu0 0.0
  %8333 = vmatpush1.msra.mxu0 0.0
  %8334 = vmatprep.subr.mxu0 0.0
  %8335 = vmatpush1.msra.mxu0 0.0
  %8336 = vmatprep.subr.mxu0 0.0
  %8337 = vmatpush1.msra.mxu0 0.0
  %8338 = vmatprep.subr.mxu0 0.0
  %8339 = vmatpush1.msra.mxu0 0.0
  %8340 = vmatprep.subr.mxu0 0.0
  %8341 = vmatpush1.msra.mxu0 0.0
  %8342 = vmatprep.subr.mxu0 0.0
  %8343 = vmatpush1.msra.mxu0 0.0
  %8344 = vmatprep.subr.mxu0 0.0
  %8345 = vmatpush1.msra.mxu0 0.0
  %8346 = vmatprep.subr.mxu0 0.0
  %8347 = vmatpush1.msra.mxu0 0.0
  %8348 = vmatprep.subr.mxu0 0.0
  %8349 = vmatpush1.msra.mxu0 0.0
  %8350 = vmatprep.subr.mxu0 0.0
  %8351 = vmatpush1.msra.mxu0 0.0
  %8352 = vmatprep.subr.mxu0 0.0
  %8353 = vmatpush1.msra.mxu0 0.0
  %8354 = vmatprep.subr.mxu0 0.0
  %8355 = vmatpush1.msra.mxu0 0.0
  %8356 = vmatprep.subr.mxu0 0.0
  %8357 = vmatpush1.msra.mxu0 0.0
  %8358 = vmatprep.mubr.f32.mxu0 0.0
  %8359 = vmatmul.mubr.f32.gmra.mrb[0].mxu0 %v8268
  %v8360 = vpop.f32.mrb[0].mxu0
  %v8361 = vadd.f32 %v8230, %v8360
  %v8362 = vpop.f32.mrb[0].mxu0
  %8363 = vmatprep.mubr.f32.mxu0 0.0
  %8364 = vmatmul.mubr.f32.gmra.mrb[0].mxu0 %v8271
  %v8365 = vpop.f32.mrb[0].mxu0
  %v8366 = vadd.f32 %v8235, %v8365
  %v8367 = vpop.f32.mrb[0].mxu0
  %8368 = vmatprep.mubr.f32.mxu0 0.0
  %8369 = vmatmul.mubr.f32.gmra.mrb[0].mxu0 %v8274
  %v8370 = vpop.f32.mrb[0].mxu0
  %v8371 = vadd.f32 %v8240, %v8370
  %v8372 = vpop.f32.mrb[0].mxu0
  %8373 = vmatprep.mubr.f32.mxu0 0.0
  %8374 = vmatmul.mubr.f32.gmra.mrb[0].mxu0 %v8277
  %v8375 = vpop.f32.mrb[0].mxu0
  %v8376 = vadd.f32 %v8245, %v8375
  %v8377 = vpop.f32.mrb[0].mxu0
  %8378 = vmatprep.mubr.f32.mxu0 0.0
  %8379 = vmatmul.mubr.f32.gmra.mrb[0].mxu0 %v8280
  %v8380 = vpop.f32.mrb[0].mxu0
  %v8381 = vadd.f32 %v8250, %v8380
  %v8382 = vpop.f32.mrb[0].mxu0
  %8383 = vmatprep.mubr.f32.mxu0 0.0
  %8384 = vmatmul.mubr.f32.gmra.mrb[0].mxu0 %v8283
  %v8385 = vpop.f32.mrb[0].mxu0
  %v8386 = vadd.f32 %v8255, %v8385
  %v8387 = vpop.f32.mrb[0].mxu0
  %8388 = vmatprep.mubr.f32.mxu0 0.0
  %8389 = vmatmul.mubr.f32.gmra.mrb[0].mxu0 %v8286
  %v8390 = vpop.f32.mrb[0].mxu0
  %v8391 = vadd.f32 %v8260, %v8390
  %v8392 = vpop.f32.mrb[0].mxu0
  %8393 = vmatprep.mubr.f32.mxu0 0.0
  %8394 = vmatmul.mubr.f32.gmra.mrb[0].mxu0 %v8289
  %v8395 = vpop.f32.mrb[0].mxu0
  %v8396 = vadd.f32 %v8265, %v8395
  %v8397 = vpop.f32.mrb[0].mxu0
  %8398 = vdwg.mxu0
  %v8399 = vmax.f32 %v8361, 0.0
  %v8400 = vmax.f32 %v8366, 0.0
  %v8401 = vmax.f32 %v8371, 0.0
  %v8402 = vmax.f32 %v8376, 0.0
  %v8403 = vmax.f32 %v8381, 0.0
  %v8404 = vmax.f32 %v8386, 0.0
  %v8405 = vmax.f32 %v8391, 0.0
  %v8406 = vmax.f32 %v8396, 0.0
  %v8407 = vld [vmem:[%s2] sm:$0x3]
  %v8408 = vld [vmem:[%s12] sm:$0x1]
  %8410 = vset.pattern.permute.xlu0 0
  %8411 = vperm.xlu0 %8410, %v8407
  %v8412 = vpop.permute.xlu0 %8411
  %v8415 = vlaneseq
  %v8416 = vshrl.u32 %v8415, 7
  %v8417 = vsub.s32 0, %v8416
  %v8418 = vrot.slane %v8408, %v8417
  %v8420 = vmul.f32 %v8412, %v8418
  %v8421 = vld [vmem:[%s13] sm:$0x1]
  %v8423 = vlaneseq
  %v8424 = vshrl.u32 %v8423, 7
  %v8425 = vsub.s32 0, %v8424
  %v8426 = vrot.slane %v8421, %v8425
  %v8428 = vadd.f32 %v8420, %v8426
  %v8429 = vtanh.pop %v8428
  %v8430 = vld [vmem:[%s14] sm:$0xf]
  %v8431 = vld [vmem:[%s15] sm:$0x1]
  %v8433 = vlaneseq
  %v8434 = vshrl.u32 %v8433, 7
  %v8435 = vsub.s32 0, %v8434
  %v8436 = vrot.slane %v8431, %v8435
  %v8439 = vsel %vm2537, %v8429, 0
  %v8442 = vsel %vm2537, %v8430, 0
  %8444 = vmatprep.subr.mxu0 0.0
  %8445 = vmatpush1.xpose.msra.mxu0 %v8442
  %8446 = vmatprep.subr.mxu0 0.0
  %8447 = vmatpush1.xpose.msra.mxu0 0.0
  %8448 = vmatprep.subr.mxu0 0.0
  %8449 = vmatpush1.xpose.msra.mxu0 0.0
  %8450 = vmatprep.subr.mxu0 0.0
  %8451 = vmatpush1.xpose.msra.mxu0 0.0
  %8452 = vmatprep.subr.mxu0 0.0
  %8453 = vmatpush1.xpose.msra.mxu0 0.0
  %8454 = vmatprep.subr.mxu0 0.0
  %8455 = vmatpush1.xpose.msra.mxu0 0.0
  %8456 = vmatprep.subr.mxu0 0.0
  %8457 = vmatpush1.xpose.msra.mxu0 0.0
  %8458 = vmatprep.subr.mxu0 0.0
  %8459 = vmatpush1.xpose.msra.mxu0 0.0
  %8460 = vmatprep.subr.mxu0 0.0
  %8461 = vmatpush1.xpose.msra.mxu0 0.0
  %8462 = vmatprep.subr.mxu0 0.0
  %8463 = vmatpush1.xpose.msra.mxu0 0.0
  %8464 = vmatprep.subr.mxu0 0.0
  %8465 = vmatpush1.xpose.msra.mxu0 0.0
  %8466 = vmatprep.subr.mxu0 0.0
  %8467 = vmatpush1.xpose.msra.mxu0 0.0
  %8468 = vmatprep.subr.mxu0 0.0
  %8469 = vmatpush1.xpose.msra.mxu0 0.0
  %8470 = vmatprep.subr.mxu0 0.0
  %8471 = vmatpush1.xpose.msra.mxu0 0.0
  %8472 = vmatprep.subr.mxu0 0.0
  %8473 = vmatpush1.xpose.msra.mxu0 0.0
  %8474 = vmatprep.subr.mxu0 0.0
  %8475 = vmatpush1.xpose.msra.mxu0 0.0
  %8476 = vmatprep.subr.mxu0 0.0
  %8477 = vmatpush1.xpose.msra.mxu0 0.0
  %8478 = vmatprep.subr.mxu0 0.0
  %8479 = vmatpush1.xpose.msra.mxu0 0.0
  %8480 = vmatprep.subr.mxu0 0.0
  %8481 = vmatpush1.xpose.msra.mxu0 0.0
  %8482 = vmatprep.subr.mxu0 0.0
  %8483 = vmatpush1.xpose.msra.mxu0 0.0
  %8484 = vmatprep.subr.mxu0 0.0
  %8485 = vmatpush1.xpose.msra.mxu0 0.0
  %8486 = vmatprep.subr.mxu0 0.0
  %8487 = vmatpush1.xpose.msra.mxu0 0.0
  %8488 = vmatprep.subr.mxu0 0.0
  %8489 = vmatpush1.xpose.msra.mxu0 0.0
  %8490 = vmatprep.subr.mxu0 0.0
  %8491 = vmatpush1.xpose.msra.mxu0 0.0
  %8492 = vmatprep.subr.mxu0 0.0
  %8493 = vmatpush1.xpose.msra.mxu0 0.0
  %8494 = vmatprep.subr.mxu0 0.0
  %8495 = vmatpush1.xpose.msra.mxu0 0.0
  %8496 = vmatprep.subr.mxu0 0.0
  %8497 = vmatpush1.xpose.msra.mxu0 0.0
  %8498 = vmatprep.subr.mxu0 0.0
  %8499 = vmatpush1.xpose.msra.mxu0 0.0
  %8500 = vmatprep.subr.mxu0 0.0
  %8501 = vmatpush1.xpose.msra.mxu0 0.0
  %8502 = vmatprep.subr.mxu0 0.0
  %8503 = vmatpush1.xpose.msra.mxu0 0.0
  %8504 = vmatprep.subr.mxu0 0.0
  %8505 = vmatpush1.xpose.msra.mxu0 0.0
  %8506 = vmatprep.subr.mxu0 0.0
  %8507 = vmatpush1.xpose.msra.mxu0 0.0
  %8508 = vmatprep.mubr.f32.mxu0 0.0
  %8509 = vmatmul.mubr.f32.gmra.mrb[0].mxu0 %v8439
  %v8510 = vpop.f32.mrb[0].mxu0
  %v8511 = vadd.f32 %v8436, %v8510
  %v8512 = vpop.f32.mrb[0].mxu0
  %8513 = vdwg.mxu0
  %v8514 = vtanh.pop %v8511
  %v8516 = vrot.slane %v8514, 1
  %8517 = vrot.lane.b32.xlu0 %v8516, 4
  %v8518 = vpop.permute.xlu0 %8517
  %v8520 = vsel %vm5096, %v8514, %v8518
  %v8521 = vlaneseq
  %v8522 = vshrl.u32 %v8521, 7
  %v8523 = vsub.s32 0, %v8522
  %v8524 = vrot.slane %v8520, %v8523
  %v8525 = vmul.f32 %v8399, %v8524
  %v8526 = vmul.f32 %v8400, %v8524
  %v8527 = vmul.f32 %v8401, %v8524
  %v8528 = vmul.f32 %v8402, %v8524
  %v8529 = vmul.f32 %v8403, %v8524
  %v8530 = vmul.f32 %v8404, %v8524
  %v8531 = vmul.f32 %v8405, %v8524
  %v8532 = vmul.f32 %v8406, %v8524
  %vm8533 = vcmask 64512
  %8534 = vst.msk [vmem:[%s16] sm:$0xff] %vm8533, %v8525
  %8535 = vst.msk [vmem:[%s16 + $0x8] sm:$0xff] %vm8533, %v8526
  %8536 = vst.msk [vmem:[%s16 + $0x10] sm:$0xff] %vm8533, %v8527
  %8537 = vst.msk [vmem:[%s16 + $0x18] sm:$0xff] %vm8533, %v8528
  %8538 = vst.msk [vmem:[%s16 + $0x20] sm:$0xff] %vm8533, %v8529
  %8539 = vst.msk [vmem:[%s16 + $0x28] sm:$0xff] %vm8533, %v8530
  %8540 = vst.msk [vmem:[%s16 + $0x30] sm:$0xff] %vm8533, %v8531
  %8541 = vst.msk [vmem:[%s16 + $0x38] sm:$0xff] %vm8533, %v8532
  // Predicated region
  $region66: #{tpu_custom_call.1} parent=0 // pred_check
    _
  $region67: #{tpu_custom_call.1} parent=0 // pred_check_branch
    %8543 = sbr.rel (0) target = $region69
  $region68: #{tpu_custom_call.1} parent=0 // pred_region
    _
  $region69: #{tpu_custom_call.1} parent=0 // pred_fallthru
    _
  // Predicated region
  $region70: #{tpu_custom_call.1} parent=0 // pred_check
    _
  $region71: #{tpu_custom_call.1} parent=0 // pred_check_branch
    %8545 = sbr.rel (0) target = $region73
  $region72: #{tpu_custom_call.1} parent=0 // pred_region
    _
  $region73: #{tpu_custom_call.1} parent=0 // pred_fallthru
    _

</llo_original>
